<compile_context>
chip_gen: v5e
topology: v5e:2x2
jax: 0.10.0
libtpu: 0.0.40
codegen_flags: <defaults>
</compile_context>

<pallas_src>
import functools

import jax
import jax.numpy as jnp
from jax import lax
from jax.experimental import pallas as pl
from jax.experimental.pallas import tpu as pltpu

NUM_CLASSES = 40
CLS_PAD = 128       # lane-dense logits width (sliced to NUM_CLASSES in the wrapper)


# ---------------------------------------------------------------------------
# Fused DGCNN kernel: one grid step == Bt graphs of P points each.
# ---------------------------------------------------------------------------
def dgcnn_kernel(pos_ref,
                 wb1_ref, wd1_ref, bb1_ref,
                 wb2_ref, wd2_ref, bb2_ref,
                 wb3_ref, wd3_ref, bb3_ref,
                 wb4_ref, wd4_ref, bb4_ref,
                 cw1_ref, cb1_ref, cw2_ref, cb2_ref,
                 o_ref, *, k, points_per_graph):
    P = points_per_graph
    N = pos_ref.shape[0]          # Bt * P rows in this step
    bt = N // P

    row_ids = lax.broadcasted_iota(jnp.int32, (N, N), 0)
    col_ids = lax.broadcasted_iota(jnp.int32, (N, N), 1)
    if bt > 1:
        # Graphs are contiguous blocks of P (power of two) rows: same graph <=> (i^j) < P.
        xor_ids = row_ids ^ col_ids
        invalid = jnp.logical_or(xor_ids >= P, xor_ids == 0)   # other graph, or self-loop
    else:
        invalid = row_ids == col_ids                            # self-loop only

    def edge_conv(x_f32, wb_ref, wd_ref, bias_ref):
        cin = x_f32.shape[1]
        cout = wb_ref.shape[1]
        x_bf = x_f32.astype(jnp.bfloat16)

        # ---- pairwise-distance surrogate within each graph -------------------------------
        # NOTE(precision): the gram runs as bf16 MXU passes with f32 accumulation (the MXU's
        # native mode).  Exact-f32 KNN topology vs the PyTorch reference is therefore not
        # guaranteed on near-tie distances; this is an explicit speed/fidelity choice.
        gram = lax.dot_general(x_bf, x_bf, (((1,), (1,)), ((), ())),
                               preferred_element_type=jnp.float32)          # [N,N] <x_i,x_j>
        xsq = (x_f32 * x_f32).astype(jnp.bfloat16)                          # [N,cin]
        ones_row = jnp.ones((1, cin), jnp.bfloat16)
        sq_j = lax.dot_general(ones_row, xsq, (((1,), (1,)), ((), ())),
                               preferred_element_type=jnp.float32)          # [1,N] ||x_j||^2
        # ||x_i||^2 dropped: constant per row, so the per-row argmin order is preserved.
        dist = jnp.where(invalid, jnp.inf, sq_j - 2.0 * gram)               # [N,N] f32

        # ---- hoisted per-point term (eval BatchNorm already folded on the host) ----------
        base = (jnp.dot(x_bf, wb_ref[...], preferred_element_type=jnp.float32)
                + bias_ref[...])                                            # [N,cout] f32

        # Gather in output space when it is cheaper (Cout_pad <= Cin_pad: ec2, ec3);
        # otherwise gather x_j and apply w_delta per step (ec1, ec4).
        gather_in_cout = cout <= wd_ref.shape[0]
        if gather_in_cout:
            src = jnp.dot(x_bf, wd_ref[...],
                          preferred_element_type=jnp.float32).astype(jnp.bfloat16)  # [N,cout]
        else:
            src = x_bf                                                               # [N,cin]

        acc0 = jnp.full((N, cout), -jnp.inf, jnp.float32)

        def body(_, carry):
            dist_c, acc_c = carry
            # nearest remaining neighbour per row (smallest-index tiebreak)
            minval = jnp.min(dist_c, axis=-1, keepdims=True)                 # [N,1]
            idx = jnp.min(jnp.where(dist_c == minval, col_ids, N),
                          axis=-1, keepdims=True)                            # [N,1]
            sel = col_ids == idx                                             # [N,N]
            onehot = sel.astype(jnp.bfloat16)
            g = jnp.dot(onehot, src, preferred_element_type=jnp.float32)     # row gather
            if gather_in_cout:
                delta = g                                                    # [N,cout]
            else:
                delta = jnp.dot(g.astype(jnp.bfloat16), wd_ref[...],
                                preferred_element_type=jnp.float32)          # [N,cout]
            acc_c = jnp.maximum(acc_c, delta)                                # max aggregation
            dist_c = jnp.where(sel, jnp.inf, dist_c)                         # drop chosen j
            return dist_c, acc_c

        # TODO(synk): for very large P (>=2048) row-tile the [N,N] distance/selection work
        #             instead of holding it whole (v7x 64 MiB VMEM).
        _, acc = lax.fori_loop(0, k, body, (dist, acc0),
                               unroll=True if k <= 8 else 4)
        # ReLU(base + max_j delta_j) == max_j ReLU(base + delta_j) (monotone, exact in fp).
        return jnp.maximum(base + acc, 0.0)                                  # [N,cout] f32

    x = pos_ref[...].astype(jnp.float32)
    x = edge_conv(x, wb1_ref, wd1_ref, bb1_ref)        # [N,128]  (64 real + 64 zero-pad)
    x = edge_conv(x, wb2_ref, wd2_ref, bb2_ref)        # [N,128]
    x = edge_conv(x, wb3_ref, wd3_ref, bb3_ref)        # [N,128]
    x = edge_conv(x, wb4_ref, wd4_ref, bb4_ref)        # [N,EMB]

    # ---- fused global_max_pool over the points of each graph in this block ---------------
    if bt == 1:
        pooled = jnp.max(x, axis=0, keepdims=True)                           # [1,EMB]
    else:
        pooled = jnp.concatenate(
            [jnp.max(x[g * P:(g + 1) * P, :], axis=0, keepdims=True) for g in range(bt)],
            axis=0)                                                          # [bt,EMB]

    # ---- fused classifier head (Dropout(0.3) is eval-mode identity) ----------------------
    h = (jnp.dot(pooled.astype(jnp.bfloat16), cw1_ref[...],
                 preferred_element_type=jnp.float32) + cb1_ref[...])
    h = jnp.maximum(h, 0.0)
    logits = (jnp.dot(h.astype(jnp.bfloat16), cw2_ref[...],
                      preferred_element_type=jnp.float32) + cb2_ref[...])    # [bt,128]
    o_ref[0] = logits.astype(o_ref.dtype)


# ---------------------------------------------------------------------------
# Wrapper: tiling heuristics + pallas_call plumbing.
# ---------------------------------------------------------------------------
def _graphs_per_step(B, P, row_target=256, row_cap=512):
    """Batch graphs per grid step so per-step matmuls have >= row_target rows (MXU / lane
    utilisation) while keeping the [N,N] distance work bounded by row_cap rows."""
    divs = [d for d in range(1, B + 1) if B % d == 0 and d * P <= row_cap]
    if not divs:
        return 1
    reach = [d for d in divs if d * P >= row_target]
    return min(reach) if reach else max(divs)


def _vmem_limit_bytes(n_rows, emb, arrays):
    w_bytes = sum(int(a.size) * a.dtype.itemsize for a in arrays)
    act = n_rows * (2 * 128 + 2 * emb) * 4          # layer activations (f32)
    dist = 3 * n_rows * n_rows * 4                  # dist + neighbour-loop temporaries
    est = 2 * w_bytes + 2 * act + dist + (8 << 20)  # headroom for double-buffered IO etc.
    return int(min(max(est, 32 << 20), 48 << 20))   # fits v7x (64 MiB) and v5e/v6e (128 MiB)


def dgcnn_forward(pos, params, *, k, num_classes=NUM_CLASSES):
    B, P, Cin = pos.shape
    assert P % 8 == 0, "P must be a multiple of 8 (sublane alignment)"
    assert 0 < k < P, "k must be smaller than the number of points per graph"
    # TODO(synk): ragged / non-equal-size graphs (PyG `batch` vector) are not supported.

    bt = _graphs_per_step(B, P)
    if bt > 1 and (P & (P - 1)) != 0:
        bt = 1                                   # xor block-diag mask needs power-of-two P
    steps = B // bt
    n_rows = bt * P

    pos_flat = pos.reshape(B * P, Cin)

    inputs = [pos_flat]
    in_specs = [pl.BlockSpec((n_rows, Cin), lambda i: (i, 0))]
    for name in ("ec1", "ec2", "ec3", "ec4"):
        lp = params[name]
        for key in ("w_base", "w_delta", "b"):
            inputs.append(lp[key])
            in_specs.append(pl.BlockSpec(lp[key].shape, lambda i: (0, 0)))  # grid-invariant
    for key in ("cls_w1", "cls_b1", "cls_w2", "cls_b2"):
        inputs.append(params[key])
        in_specs.append(pl.BlockSpec(params[key].shape, lambda i: (0, 0)))

    emb = params["ec4"]["w_base"].shape[1]
    out_lanes = params["cls_w2"].shape[1]        # 128 (lane-dense padded logits)
    out_shape = jax.ShapeDtypeStruct((steps, bt, out_lanes), jnp.float32)
    out_spec = pl.BlockSpec((1, bt, out_lanes), lambda i: (i, 0, 0))

    out = pl.pallas_call(
        functools.partial(dgcnn_kernel, k=k, points_per_graph=P),
        out_shape=out_shape,
        grid=(steps,),
        in_specs=in_specs,
        out_specs=out_spec,
        compiler_params=pltpu.CompilerParams(
            dimension_semantics=("parallel",),
            vmem_limit_bytes=_vmem_limit_bytes(n_rows, emb, inputs),
        ),
    )(*inputs)
    return out.reshape(B, out_lanes)[:, :num_classes]


# ---------------------------------------------------------------------------
# Parameter construction (deterministic, synthetic).  Folds eval-mode BatchNorm into the
# Linear, hoists/splits the edge-MLP weights, zero-pads to lane-dense widths, casts to bf16.
# ---------------------------------------------------------------------------
def make_edgeconv_params(key, cin, cout, cin_pad=None, cout_pad=None):
    cin_pad = cin if cin_pad is None else cin_pad
    cout_pad = cout if cout_pad is None else cout_pad
    k1, k2 = jax.random.split(key, 2)
    w = jax.random.normal(k1, (2 * cin, cout), jnp.float32) * 0.1    # Linear(2*cin, cout)
    b = jax.random.normal(k2, (1, cout), jnp.float32) * 0.01
    # BatchNorm1d(cout), eval mode at init: gamma=1, beta=0, running_mean=0, running_var=1
    gamma = jnp.ones((cout,), jnp.float32)
    beta = jnp.zeros((cout,), jnp.float32)
    rmean = jnp.zeros((cout,), jnp.float32)
    rvar = jnp.ones((cout,), jnp.float32)
    scale = gamma / jnp.sqrt(rvar + 1e-5)
    shift = beta - rmean * scale
    w_diff, w_src = w[:cin, :], w[cin:, :]
    # hoist: Lin([x_i-x_j, x_j]) = x_i@Wd + x_j@(Ws-Wd) + b ; fold BN scale/shift.
    w_base = w_diff * scale
    w_delta = (w_src - w_diff) * scale
    b_fold = b * scale + shift
    # zero-pad to lane-dense shapes: padded channels stay exactly zero end-to-end.
    w_base = jnp.zeros((cin_pad, cout_pad), jnp.float32).at[:cin, :cout].set(w_base)
    w_delta = jnp.zeros((cin_pad, cout_pad), jnp.float32).at[:cin, :cout].set(w_delta)
    b_fold = jnp.zeros((1, cout_pad), jnp.float32).at[:, :cout].set(b_fold)
    return dict(w_base=w_base.astype(jnp.bfloat16),
                w_delta=w_delta.astype(jnp.bfloat16),
                b=b_fold)


def make_classifier_params(key, emb, hidden=512, num_classes=NUM_CLASSES, out_pad=CLS_PAD):
    k1, k2, k3, k4 = jax.random.split(key, 4)
    w1 = jax.random.normal(k1, (emb, hidden), jnp.float32) * 0.05
    b1 = jax.random.normal(k2, (1, hidden), jnp.float32) * 0.01
    w2 = jax.random.normal(k3, (hidden, num_classes), jnp.float32) * 0.05
    b2 = jax.random.normal(k4, (1, num_classes), jnp.float32) * 0.01
    w2p = jnp.zeros((hidden, out_pad), jnp.float32).at[:, :num_classes].set(w2)
    b2p = jnp.zeros((1, out_pad), jnp.float32).at[:, :num_classes].set(b2)
    return dict(cls_w1=w1.astype(jnp.bfloat16), cls_b1=b1,
                cls_w2=w2p.astype(jnp.bfloat16), cls_b2=b2p)


if __name__ == "__main__":
    K = 5
    EMB = 1024
    B, P = 2, 16                      # 2 graphs, 16 points each, 3-D coordinates

    root = jax.random.PRNGKey(0)
    keys = jax.random.split(root, 7)

    params = {
        # 64-wide layers zero-padded to 128 output lanes (lane-dense, exact).
        "ec1": make_edgeconv_params(keys[0], 3, 64, cout_pad=128),
        "ec2": make_edgeconv_params(keys[1], 64, 64, cin_pad=128, cout_pad=128),
        "ec3": make_edgeconv_params(keys[2], 64, 128, cin_pad=128),
        "ec4": make_edgeconv_params(keys[3], 128, EMB),
    }
    params.update(make_classifier_params(keys[4], EMB))

    pos = jax.random.normal(keys[5], (B, P, 3), jnp.float32)

    logits = dgcnn_forward(pos, params, k=K)
    logits = jax.block_until_ready(logits)
    assert logits.shape == (B, NUM_CLASSES)
    assert bool(jnp.all(jnp.isfinite(logits)))
    print("KERNEL_OK")
</pallas_src>

<mosaic_0001>
module attributes {stable_mosaic.version = 11 : i64} {
  func.func @dgcnn_kernel(%arg0: i32, %arg1: memref<32x3xf32, #tpu.memory_space<vmem>>, %arg2: memref<3x128xbf16, #tpu.memory_space<vmem>>, %arg3: memref<3x128xbf16, #tpu.memory_space<vmem>>, %arg4: memref<1x128xf32, #tpu.memory_space<vmem>>, %arg5: memref<128x128xbf16, #tpu.memory_space<vmem>>, %arg6: memref<128x128xbf16, #tpu.memory_space<vmem>>, %arg7: memref<1x128xf32, #tpu.memory_space<vmem>>, %arg8: memref<128x128xbf16, #tpu.memory_space<vmem>>, %arg9: memref<128x128xbf16, #tpu.memory_space<vmem>>, %arg10: memref<1x128xf32, #tpu.memory_space<vmem>>, %arg11: memref<128x1024xbf16, #tpu.memory_space<vmem>>, %arg12: memref<128x1024xbf16, #tpu.memory_space<vmem>>, %arg13: memref<1x1024xf32, #tpu.memory_space<vmem>>, %arg14: memref<1024x512xbf16, #tpu.memory_space<vmem>>, %arg15: memref<1x512xf32, #tpu.memory_space<vmem>>, %arg16: memref<512x128xbf16, #tpu.memory_space<vmem>>, %arg17: memref<1x128xf32, #tpu.memory_space<vmem>>, %arg18: memref<1x2x128xf32, #tpu.memory_space<vmem>>) attributes {dimension_semantics = [#tpu.dimension_semantics<parallel>], iteration_bounds = array<i64: 1>, scalar_prefetch = 0 : i64, scratch_operands = 0 : i64, tpu.core_type = #tpu.core_type<tc>, window_params = [{transform_indices = @transform_0, window_bounds = array<i64: 32, 3>}, {pipeline_mode = #tpu.pipeline_mode<synchronous>, transform_indices = @transform_1, window_bounds = array<i64: 3, 128>}, {pipeline_mode = #tpu.pipeline_mode<synchronous>, transform_indices = @transform_2, window_bounds = array<i64: 3, 128>}, {pipeline_mode = #tpu.pipeline_mode<synchronous>, transform_indices = @transform_3, window_bounds = array<i64: 1, 128>}, {pipeline_mode = #tpu.pipeline_mode<synchronous>, transform_indices = @transform_4, window_bounds = array<i64: 128, 128>}, {pipeline_mode = #tpu.pipeline_mode<synchronous>, transform_indices = @transform_5, window_bounds = array<i64: 128, 128>}, {pipeline_mode = #tpu.pipeline_mode<synchronous>, transform_indices = @transform_6, window_bounds = array<i64: 1, 128>}, {pipeline_mode = #tpu.pipeline_mode<synchronous>, transform_indices = @transform_7, window_bounds = array<i64: 128, 128>}, {pipeline_mode = #tpu.pipeline_mode<synchronous>, transform_indices = @transform_8, window_bounds = array<i64: 128, 128>}, {pipeline_mode = #tpu.pipeline_mode<synchronous>, transform_indices = @transform_9, window_bounds = array<i64: 1, 128>}, {pipeline_mode = #tpu.pipeline_mode<synchronous>, transform_indices = @transform_10, window_bounds = array<i64: 128, 1024>}, {pipeline_mode = #tpu.pipeline_mode<synchronous>, transform_indices = @transform_11, window_bounds = array<i64: 128, 1024>}, {pipeline_mode = #tpu.pipeline_mode<synchronous>, transform_indices = @transform_12, window_bounds = array<i64: 1, 1024>}, {pipeline_mode = #tpu.pipeline_mode<synchronous>, transform_indices = @transform_13, window_bounds = array<i64: 1024, 512>}, {pipeline_mode = #tpu.pipeline_mode<synchronous>, transform_indices = @transform_14, window_bounds = array<i64: 1, 512>}, {pipeline_mode = #tpu.pipeline_mode<synchronous>, transform_indices = @transform_15, window_bounds = array<i64: 512, 128>}, {pipeline_mode = #tpu.pipeline_mode<synchronous>, transform_indices = @transform_16, window_bounds = array<i64: 1, 128>}, {transform_indices = @transform_17, window_bounds = array<i64: 1, 2, 128>}]} {
    %0 = tpu.iota {dimensions = array<i32: 0>} : vector<32x32xi32>
    %1 = tpu.iota {dimensions = array<i32: 1>} : vector<32x32xi32>
    %2 = arith.xori %0, %1 : vector<32x32xi32>
    %c16_i32 = arith.constant 16 : i32
    %3 = vector.broadcast %c16_i32 : i32 to vector<32x32xi32>
    %4 = arith.cmpi sge, %2, %3 : vector<32x32xi32>
    %c0_i32 = arith.constant 0 : i32
    %5 = vector.broadcast %c0_i32 : i32 to vector<32x32xi32>
    %6 = arith.cmpi eq, %2, %5 : vector<32x32xi32>
    %7 = arith.ori %4, %6 : vector<32x32xi1>
    %c0 = arith.constant 0 : index
    %c0_0 = arith.constant 0 : index
    %8 = vector.load %arg1[%c0, %c0_0] : memref<32x3xf32, #tpu.memory_space<vmem>>, vector<32x3xf32>
    %9 = arith.truncf %8 : vector<32x3xf32> to vector<32x3xbf16>
    %cst = arith.constant dense<0.000000e+00> : vector<32x32xf32>
    %10 = tpu.matmul %9, %9, %cst {dimension_numbers = #tpu.dot_dimension_numbers<[1], [1], [0], [0], [0, 0, 1, 0], [], []>} : vector<32x3xbf16>, vector<32x3xbf16>, vector<32x32xf32> -> vector<32x32xf32>
    %11 = arith.mulf %8, %8 : vector<32x3xf32>
    %12 = arith.truncf %11 : vector<32x3xf32> to vector<32x3xbf16>
    %cst_1 = arith.constant 1.000000e+00 : bf16
    %13 = vector.broadcast %cst_1 : bf16 to vector<1x3xbf16>
    %cst_2 = arith.constant dense<0.000000e+00> : vector<1x32xf32>
    %14 = tpu.matmul %13, %12, %cst_2 {dimension_numbers = #tpu.dot_dimension_numbers<[1], [1], [0], [0], [0, 0, 1, 0], [], []>} : vector<1x3xbf16>, vector<32x3xbf16>, vector<1x32xf32> -> vector<1x32xf32>
    %cst_3 = arith.constant 2.000000e+00 : f32
    %15 = vector.broadcast %cst_3 : f32 to vector<32x32xf32>
    %16 = arith.mulf %15, %10 : vector<32x32xf32>
    %17 = vector.broadcast %14 : vector<1x32xf32> to vector<32x32xf32>
    %18 = arith.subf %17, %16 : vector<32x32xf32>
    %cst_4 = arith.constant 0x7F800000 : f32
    %19 = vector.broadcast %cst_4 : f32 to vector<32x32xf32>
    %20 = arith.select %7, %19, %18 : vector<32x32xi1>, vector<32x32xf32>
    %c0_5 = arith.constant 0 : index
    %c0_6 = arith.constant 0 : index
    %21 = vector.load %arg2[%c0_5, %c0_6] : memref<3x128xbf16, #tpu.memory_space<vmem>>, vector<3x128xbf16>
    %cst_7 = arith.constant dense<0.000000e+00> : vector<32x128xf32>
    %22 = tpu.matmul %9, %21, %cst_7 {dimension_numbers = #tpu.dot_dimension_numbers<[1], [0], [0], [1], [0, 0, 1, 1], [], []>} : vector<32x3xbf16>, vector<3x128xbf16>, vector<32x128xf32> -> vector<32x128xf32>
    %c0_8 = arith.constant 0 : index
    %c0_9 = arith.constant 0 : index
    %23 = vector.load %arg4[%c0_8, %c0_9] : memref<1x128xf32, #tpu.memory_space<vmem>>, vector<1x128xf32>
    %24 = vector.broadcast %23 : vector<1x128xf32> to vector<32x128xf32>
    %25 = arith.addf %22, %24 : vector<32x128xf32>
    %cst_10 = arith.constant 0xFF800000 : f32
    %26 = vector.broadcast %cst_10 : f32 to vector<32x128xf32>
    %c0_i32_11 = arith.constant 0 : i32
    %cst_12 = arith.constant dense<0x7F800000> : vector<32xf32>
    %27 = vector.multi_reduction <minimumf>, %20, %cst_12 [1] : vector<32x32xf32> to vector<32xf32>
    %28 = vector.shape_cast %27 : vector<32xf32> to vector<32x1xf32>
    %29 = vector.broadcast %28 : vector<32x1xf32> to vector<32x32xf32>
    %30 = arith.cmpf oeq, %20, %29 : vector<32x32xf32>
    %c32_i32 = arith.constant 32 : i32
    %31 = vector.broadcast %c32_i32 : i32 to vector<32x32xi32>
    %32 = arith.select %30, %1, %31 : vector<32x32xi1>, vector<32x32xi32>
    %cst_13 = arith.constant dense<2147483647> : vector<32xi32>
    %33 = vector.multi_reduction <minsi>, %32, %cst_13 [1] : vector<32x32xi32> to vector<32xi32>
    %34 = vector.shape_cast %33 : vector<32xi32> to vector<32x1xi32>
    %35 = vector.broadcast %34 : vector<32x1xi32> to vector<32x32xi32>
    %36 = arith.cmpi eq, %1, %35 : vector<32x32xi32>
    %37 = arith.extui %36 : vector<32x32xi1> to vector<32x32xi32>
    %38 = arith.sitofp %37 : vector<32x32xi32> to vector<32x32xf32>
    %39 = arith.truncf %38 : vector<32x32xf32> to vector<32x32xbf16>
    %cst_14 = arith.constant dense<0.000000e+00> : vector<32x3xf32>
    %40 = tpu.matmul %39, %9, %cst_14 {dimension_numbers = #tpu.dot_dimension_numbers<[1], [0], [0], [1], [0, 0, 1, 1], [], []>} : vector<32x32xbf16>, vector<32x3xbf16>, vector<32x3xf32> -> vector<32x3xf32>
    %41 = arith.truncf %40 : vector<32x3xf32> to vector<32x3xbf16>
    %c0_15 = arith.constant 0 : index
    %c0_16 = arith.constant 0 : index
    %42 = vector.load %arg3[%c0_15, %c0_16] : memref<3x128xbf16, #tpu.memory_space<vmem>>, vector<3x128xbf16>
    %cst_17 = arith.constant dense<0.000000e+00> : vector<32x128xf32>
    %43 = tpu.matmul %41, %42, %cst_17 {dimension_numbers = #tpu.dot_dimension_numbers<[1], [0], [0], [1], [0, 0, 1, 1], [], []>} : vector<32x3xbf16>, vector<3x128xbf16>, vector<32x128xf32> -> vector<32x128xf32>
    %44 = arith.maximumf %26, %43 : vector<32x128xf32>
    %cst_18 = arith.constant 0x7F800000 : f32
    %45 = vector.broadcast %cst_18 : f32 to vector<32x32xf32>
    %46 = arith.select %36, %45, %20 : vector<32x32xi1>, vector<32x32xf32>
    %c1_i32 = arith.constant 1 : i32
    %cst_19 = arith.constant dense<0x7F800000> : vector<32xf32>
    %47 = vector.multi_reduction <minimumf>, %46, %cst_19 [1] : vector<32x32xf32> to vector<32xf32>
    %48 = vector.shape_cast %47 : vector<32xf32> to vector<32x1xf32>
    %49 = vector.broadcast %48 : vector<32x1xf32> to vector<32x32xf32>
    %50 = arith.cmpf oeq, %46, %49 : vector<32x32xf32>
    %c32_i32_20 = arith.constant 32 : i32
    %51 = vector.broadcast %c32_i32_20 : i32 to vector<32x32xi32>
    %52 = arith.select %50, %1, %51 : vector<32x32xi1>, vector<32x32xi32>
    %cst_21 = arith.constant dense<2147483647> : vector<32xi32>
    %53 = vector.multi_reduction <minsi>, %52, %cst_21 [1] : vector<32x32xi32> to vector<32xi32>
    %54 = vector.shape_cast %53 : vector<32xi32> to vector<32x1xi32>
    %55 = vector.broadcast %54 : vector<32x1xi32> to vector<32x32xi32>
    %56 = arith.cmpi eq, %1, %55 : vector<32x32xi32>
    %57 = arith.extui %56 : vector<32x32xi1> to vector<32x32xi32>
    %58 = arith.sitofp %57 : vector<32x32xi32> to vector<32x32xf32>
    %59 = arith.truncf %58 : vector<32x32xf32> to vector<32x32xbf16>
    %cst_22 = arith.constant dense<0.000000e+00> : vector<32x3xf32>
    %60 = tpu.matmul %59, %9, %cst_22 {dimension_numbers = #tpu.dot_dimension_numbers<[1], [0], [0], [1], [0, 0, 1, 1], [], []>} : vector<32x32xbf16>, vector<32x3xbf16>, vector<32x3xf32> -> vector<32x3xf32>
    %61 = arith.truncf %60 : vector<32x3xf32> to vector<32x3xbf16>
    %c0_23 = arith.constant 0 : index
    %c0_24 = arith.constant 0 : index
    %62 = vector.load %arg3[%c0_23, %c0_24] : memref<3x128xbf16, #tpu.memory_space<vmem>>, vector<3x128xbf16>
    %cst_25 = arith.constant dense<0.000000e+00> : vector<32x128xf32>
    %63 = tpu.matmul %61, %62, %cst_25 {dimension_numbers = #tpu.dot_dimension_numbers<[1], [0], [0], [1], [0, 0, 1, 1], [], []>} : vector<32x3xbf16>, vector<3x128xbf16>, vector<32x128xf32> -> vector<32x128xf32>
    %64 = arith.maximumf %44, %63 : vector<32x128xf32>
    %cst_26 = arith.constant 0x7F800000 : f32
    %65 = vector.broadcast %cst_26 : f32 to vector<32x32xf32>
    %66 = arith.select %56, %65, %46 : vector<32x32xi1>, vector<32x32xf32>
    %c2_i32 = arith.constant 2 : i32
    %cst_27 = arith.constant dense<0x7F800000> : vector<32xf32>
    %67 = vector.multi_reduction <minimumf>, %66, %cst_27 [1] : vector<32x32xf32> to vector<32xf32>
    %68 = vector.shape_cast %67 : vector<32xf32> to vector<32x1xf32>
    %69 = vector.broadcast %68 : vector<32x1xf32> to vector<32x32xf32>
    %70 = arith.cmpf oeq, %66, %69 : vector<32x32xf32>
    %c32_i32_28 = arith.constant 32 : i32
    %71 = vector.broadcast %c32_i32_28 : i32 to vector<32x32xi32>
    %72 = arith.select %70, %1, %71 : vector<32x32xi1>, vector<32x32xi32>
    %cst_29 = arith.constant dense<2147483647> : vector<32xi32>
    %73 = vector.multi_reduction <minsi>, %72, %cst_29 [1] : vector<32x32xi32> to vector<32xi32>
    %74 = vector.shape_cast %73 : vector<32xi32> to vector<32x1xi32>
    %75 = vector.broadcast %74 : vector<32x1xi32> to vector<32x32xi32>
    %76 = arith.cmpi eq, %1, %75 : vector<32x32xi32>
    %77 = arith.extui %76 : vector<32x32xi1> to vector<32x32xi32>
    %78 = arith.sitofp %77 : vector<32x32xi32> to vector<32x32xf32>
    %79 = arith.truncf %78 : vector<32x32xf32> to vector<32x32xbf16>
    %cst_30 = arith.constant dense<0.000000e+00> : vector<32x3xf32>
    %80 = tpu.matmul %79, %9, %cst_30 {dimension_numbers = #tpu.dot_dimension_numbers<[1], [0], [0], [1], [0, 0, 1, 1], [], []>} : vector<32x32xbf16>, vector<32x3xbf16>, vector<32x3xf32> -> vector<32x3xf32>
    %81 = arith.truncf %80 : vector<32x3xf32> to vector<32x3xbf16>
    %c0_31 = arith.constant 0 : index
    %c0_32 = arith.constant 0 : index
    %82 = vector.load %arg3[%c0_31, %c0_32] : memref<3x128xbf16, #tpu.memory_space<vmem>>, vector<3x128xbf16>
    %cst_33 = arith.constant dense<0.000000e+00> : vector<32x128xf32>
    %83 = tpu.matmul %81, %82, %cst_33 {dimension_numbers = #tpu.dot_dimension_numbers<[1], [0], [0], [1], [0, 0, 1, 1], [], []>} : vector<32x3xbf16>, vector<3x128xbf16>, vector<32x128xf32> -> vector<32x128xf32>
    %84 = arith.maximumf %64, %83 : vector<32x128xf32>
    %cst_34 = arith.constant 0x7F800000 : f32
    %85 = vector.broadcast %cst_34 : f32 to vector<32x32xf32>
    %86 = arith.select %76, %85, %66 : vector<32x32xi1>, vector<32x32xf32>
    %c3_i32 = arith.constant 3 : i32
    %cst_35 = arith.constant dense<0x7F800000> : vector<32xf32>
    %87 = vector.multi_reduction <minimumf>, %86, %cst_35 [1] : vector<32x32xf32> to vector<32xf32>
    %88 = vector.shape_cast %87 : vector<32xf32> to vector<32x1xf32>
    %89 = vector.broadcast %88 : vector<32x1xf32> to vector<32x32xf32>
    %90 = arith.cmpf oeq, %86, %89 : vector<32x32xf32>
    %c32_i32_36 = arith.constant 32 : i32
    %91 = vector.broadcast %c32_i32_36 : i32 to vector<32x32xi32>
    %92 = arith.select %90, %1, %91 : vector<32x32xi1>, vector<32x32xi32>
    %cst_37 = arith.constant dense<2147483647> : vector<32xi32>
    %93 = vector.multi_reduction <minsi>, %92, %cst_37 [1] : vector<32x32xi32> to vector<32xi32>
    %94 = vector.shape_cast %93 : vector<32xi32> to vector<32x1xi32>
    %95 = vector.broadcast %94 : vector<32x1xi32> to vector<32x32xi32>
    %96 = arith.cmpi eq, %1, %95 : vector<32x32xi32>
    %97 = arith.extui %96 : vector<32x32xi1> to vector<32x32xi32>
    %98 = arith.sitofp %97 : vector<32x32xi32> to vector<32x32xf32>
    %99 = arith.truncf %98 : vector<32x32xf32> to vector<32x32xbf16>
    %cst_38 = arith.constant dense<0.000000e+00> : vector<32x3xf32>
    %100 = tpu.matmul %99, %9, %cst_38 {dimension_numbers = #tpu.dot_dimension_numbers<[1], [0], [0], [1], [0, 0, 1, 1], [], []>} : vector<32x32xbf16>, vector<32x3xbf16>, vector<32x3xf32> -> vector<32x3xf32>
    %101 = arith.truncf %100 : vector<32x3xf32> to vector<32x3xbf16>
    %c0_39 = arith.constant 0 : index
    %c0_40 = arith.constant 0 : index
    %102 = vector.load %arg3[%c0_39, %c0_40] : memref<3x128xbf16, #tpu.memory_space<vmem>>, vector<3x128xbf16>
    %cst_41 = arith.constant dense<0.000000e+00> : vector<32x128xf32>
    %103 = tpu.matmul %101, %102, %cst_41 {dimension_numbers = #tpu.dot_dimension_numbers<[1], [0], [0], [1], [0, 0, 1, 1], [], []>} : vector<32x3xbf16>, vector<3x128xbf16>, vector<32x128xf32> -> vector<32x128xf32>
    %104 = arith.maximumf %84, %103 : vector<32x128xf32>
    %cst_42 = arith.constant 0x7F800000 : f32
    %105 = vector.broadcast %cst_42 : f32 to vector<32x32xf32>
    %106 = arith.select %96, %105, %86 : vector<32x32xi1>, vector<32x32xf32>
    %c4_i32 = arith.constant 4 : i32
    %cst_43 = arith.constant dense<0x7F800000> : vector<32xf32>
    %107 = vector.multi_reduction <minimumf>, %106, %cst_43 [1] : vector<32x32xf32> to vector<32xf32>
    %108 = vector.shape_cast %107 : vector<32xf32> to vector<32x1xf32>
    %109 = vector.broadcast %108 : vector<32x1xf32> to vector<32x32xf32>
    %110 = arith.cmpf oeq, %106, %109 : vector<32x32xf32>
    %c32_i32_44 = arith.constant 32 : i32
    %111 = vector.broadcast %c32_i32_44 : i32 to vector<32x32xi32>
    %112 = arith.select %110, %1, %111 : vector<32x32xi1>, vector<32x32xi32>
    %cst_45 = arith.constant dense<2147483647> : vector<32xi32>
    %113 = vector.multi_reduction <minsi>, %112, %cst_45 [1] : vector<32x32xi32> to vector<32xi32>
    %114 = vector.shape_cast %113 : vector<32xi32> to vector<32x1xi32>
    %115 = vector.broadcast %114 : vector<32x1xi32> to vector<32x32xi32>
    %116 = arith.cmpi eq, %1, %115 : vector<32x32xi32>
    %117 = arith.extui %116 : vector<32x32xi1> to vector<32x32xi32>
    %118 = arith.sitofp %117 : vector<32x32xi32> to vector<32x32xf32>
    %119 = arith.truncf %118 : vector<32x32xf32> to vector<32x32xbf16>
    %cst_46 = arith.constant dense<0.000000e+00> : vector<32x3xf32>
    %120 = tpu.matmul %119, %9, %cst_46 {dimension_numbers = #tpu.dot_dimension_numbers<[1], [0], [0], [1], [0, 0, 1, 1], [], []>} : vector<32x32xbf16>, vector<32x3xbf16>, vector<32x3xf32> -> vector<32x3xf32>
    %121 = arith.truncf %120 : vector<32x3xf32> to vector<32x3xbf16>
    %c0_47 = arith.constant 0 : index
    %c0_48 = arith.constant 0 : index
    %122 = vector.load %arg3[%c0_47, %c0_48] : memref<3x128xbf16, #tpu.memory_space<vmem>>, vector<3x128xbf16>
    %cst_49 = arith.constant dense<0.000000e+00> : vector<32x128xf32>
    %123 = tpu.matmul %121, %122, %cst_49 {dimension_numbers = #tpu.dot_dimension_numbers<[1], [0], [0], [1], [0, 0, 1, 1], [], []>} : vector<32x3xbf16>, vector<3x128xbf16>, vector<32x128xf32> -> vector<32x128xf32>
    %124 = arith.maximumf %104, %123 : vector<32x128xf32>
    %cst_50 = arith.constant 0x7F800000 : f32
    %125 = vector.broadcast %cst_50 : f32 to vector<32x32xf32>
    %126 = arith.select %116, %125, %106 : vector<32x32xi1>, vector<32x32xf32>
    %127 = arith.addf %25, %124 : vector<32x128xf32>
    %cst_51 = arith.constant 0.000000e+00 : f32
    %128 = vector.broadcast %cst_51 : f32 to vector<32x128xf32>
    %129 = arith.maximumf %127, %128 : vector<32x128xf32>
    %130 = arith.truncf %129 : vector<32x128xf32> to vector<32x128xbf16>
    %cst_52 = arith.constant dense<0.000000e+00> : vector<32x32xf32>
    %131 = tpu.matmul %130, %130, %cst_52 {dimension_numbers = #tpu.dot_dimension_numbers<[1], [1], [0], [0], [0, 0, 1, 0], [], []>} : vector<32x128xbf16>, vector<32x128xbf16>, vector<32x32xf32> -> vector<32x32xf32>
    %132 = arith.mulf %129, %129 : vector<32x128xf32>
    %133 = arith.truncf %132 : vector<32x128xf32> to vector<32x128xbf16>
    %cst_53 = arith.constant 1.000000e+00 : bf16
    %134 = vector.broadcast %cst_53 : bf16 to vector<1x128xbf16>
    %cst_54 = arith.constant dense<0.000000e+00> : vector<1x32xf32>
    %135 = tpu.matmul %134, %133, %cst_54 {dimension_numbers = #tpu.dot_dimension_numbers<[1], [1], [0], [0], [0, 0, 1, 0], [], []>} : vector<1x128xbf16>, vector<32x128xbf16>, vector<1x32xf32> -> vector<1x32xf32>
    %cst_55 = arith.constant 2.000000e+00 : f32
    %136 = vector.broadcast %cst_55 : f32 to vector<32x32xf32>
    %137 = arith.mulf %136, %131 : vector<32x32xf32>
    %138 = vector.broadcast %135 : vector<1x32xf32> to vector<32x32xf32>
    %139 = arith.subf %138, %137 : vector<32x32xf32>
    %cst_56 = arith.constant 0x7F800000 : f32
    %140 = vector.broadcast %cst_56 : f32 to vector<32x32xf32>
    %141 = arith.select %7, %140, %139 : vector<32x32xi1>, vector<32x32xf32>
    %c0_57 = arith.constant 0 : index
    %c0_58 = arith.constant 0 : index
    %142 = vector.load %arg5[%c0_57, %c0_58] : memref<128x128xbf16, #tpu.memory_space<vmem>>, vector<128x128xbf16>
    %cst_59 = arith.constant dense<0.000000e+00> : vector<32x128xf32>
    %143 = tpu.matmul %130, %142, %cst_59 {dimension_numbers = #tpu.dot_dimension_numbers<[1], [0], [0], [1], [0, 0, 1, 1], [], []>} : vector<32x128xbf16>, vector<128x128xbf16>, vector<32x128xf32> -> vector<32x128xf32>
    %c0_60 = arith.constant 0 : index
    %c0_61 = arith.constant 0 : index
    %144 = vector.load %arg7[%c0_60, %c0_61] : memref<1x128xf32, #tpu.memory_space<vmem>>, vector<1x128xf32>
    %145 = vector.broadcast %144 : vector<1x128xf32> to vector<32x128xf32>
    %146 = arith.addf %143, %145 : vector<32x128xf32>
    %c0_62 = arith.constant 0 : index
    %c0_63 = arith.constant 0 : index
    %147 = vector.load %arg6[%c0_62, %c0_63] : memref<128x128xbf16, #tpu.memory_space<vmem>>, vector<128x128xbf16>
    %cst_64 = arith.constant dense<0.000000e+00> : vector<32x128xf32>
    %148 = tpu.matmul %130, %147, %cst_64 {dimension_numbers = #tpu.dot_dimension_numbers<[1], [0], [0], [1], [0, 0, 1, 1], [], []>} : vector<32x128xbf16>, vector<128x128xbf16>, vector<32x128xf32> -> vector<32x128xf32>
    %149 = arith.truncf %148 : vector<32x128xf32> to vector<32x128xbf16>
    %cst_65 = arith.constant 0xFF800000 : f32
    %150 = vector.broadcast %cst_65 : f32 to vector<32x128xf32>
    %c0_i32_66 = arith.constant 0 : i32
    %cst_67 = arith.constant dense<0x7F800000> : vector<32xf32>
    %151 = vector.multi_reduction <minimumf>, %141, %cst_67 [1] : vector<32x32xf32> to vector<32xf32>
    %152 = vector.shape_cast %151 : vector<32xf32> to vector<32x1xf32>
    %153 = vector.broadcast %152 : vector<32x1xf32> to vector<32x32xf32>
    %154 = arith.cmpf oeq, %141, %153 : vector<32x32xf32>
    %c32_i32_68 = arith.constant 32 : i32
    %155 = vector.broadcast %c32_i32_68 : i32 to vector<32x32xi32>
    %156 = arith.select %154, %1, %155 : vector<32x32xi1>, vector<32x32xi32>
    %cst_69 = arith.constant dense<2147483647> : vector<32xi32>
    %157 = vector.multi_reduction <minsi>, %156, %cst_69 [1] : vector<32x32xi32> to vector<32xi32>
    %158 = vector.shape_cast %157 : vector<32xi32> to vector<32x1xi32>
    %159 = vector.broadcast %158 : vector<32x1xi32> to vector<32x32xi32>
    %160 = arith.cmpi eq, %1, %159 : vector<32x32xi32>
    %161 = arith.extui %160 : vector<32x32xi1> to vector<32x32xi32>
    %162 = arith.sitofp %161 : vector<32x32xi32> to vector<32x32xf32>
    %163 = arith.truncf %162 : vector<32x32xf32> to vector<32x32xbf16>
    %cst_70 = arith.constant dense<0.000000e+00> : vector<32x128xf32>
    %164 = tpu.matmul %163, %149, %cst_70 {dimension_numbers = #tpu.dot_dimension_numbers<[1], [0], [0], [1], [0, 0, 1, 1], [], []>} : vector<32x32xbf16>, vector<32x128xbf16>, vector<32x128xf32> -> vector<32x128xf32>
    %165 = arith.maximumf %150, %164 : vector<32x128xf32>
    %cst_71 = arith.constant 0x7F800000 : f32
    %166 = vector.broadcast %cst_71 : f32 to vector<32x32xf32>
    %167 = arith.select %160, %166, %141 : vector<32x32xi1>, vector<32x32xf32>
    %c1_i32_72 = arith.constant 1 : i32
    %cst_73 = arith.constant dense<0x7F800000> : vector<32xf32>
    %168 = vector.multi_reduction <minimumf>, %167, %cst_73 [1] : vector<32x32xf32> to vector<32xf32>
    %169 = vector.shape_cast %168 : vector<32xf32> to vector<32x1xf32>
    %170 = vector.broadcast %169 : vector<32x1xf32> to vector<32x32xf32>
    %171 = arith.cmpf oeq, %167, %170 : vector<32x32xf32>
    %c32_i32_74 = arith.constant 32 : i32
    %172 = vector.broadcast %c32_i32_74 : i32 to vector<32x32xi32>
    %173 = arith.select %171, %1, %172 : vector<32x32xi1>, vector<32x32xi32>
    %cst_75 = arith.constant dense<2147483647> : vector<32xi32>
    %174 = vector.multi_reduction <minsi>, %173, %cst_75 [1] : vector<32x32xi32> to vector<32xi32>
    %175 = vector.shape_cast %174 : vector<32xi32> to vector<32x1xi32>
    %176 = vector.broadcast %175 : vector<32x1xi32> to vector<32x32xi32>
    %177 = arith.cmpi eq, %1, %176 : vector<32x32xi32>
    %178 = arith.extui %177 : vector<32x32xi1> to vector<32x32xi32>
    %179 = arith.sitofp %178 : vector<32x32xi32> to vector<32x32xf32>
    %180 = arith.truncf %179 : vector<32x32xf32> to vector<32x32xbf16>
    %cst_76 = arith.constant dense<0.000000e+00> : vector<32x128xf32>
    %181 = tpu.matmul %180, %149, %cst_76 {dimension_numbers = #tpu.dot_dimension_numbers<[1], [0], [0], [1], [0, 0, 1, 1], [], []>} : vector<32x32xbf16>, vector<32x128xbf16>, vector<32x128xf32> -> vector<32x128xf32>
    %182 = arith.maximumf %165, %181 : vector<32x128xf32>
    %cst_77 = arith.constant 0x7F800000 : f32
    %183 = vector.broadcast %cst_77 : f32 to vector<32x32xf32>
    %184 = arith.select %177, %183, %167 : vector<32x32xi1>, vector<32x32xf32>
    %c2_i32_78 = arith.constant 2 : i32
    %cst_79 = arith.constant dense<0x7F800000> : vector<32xf32>
    %185 = vector.multi_reduction <minimumf>, %184, %cst_79 [1] : vector<32x32xf32> to vector<32xf32>
    %186 = vector.shape_cast %185 : vector<32xf32> to vector<32x1xf32>
    %187 = vector.broadcast %186 : vector<32x1xf32> to vector<32x32xf32>
    %188 = arith.cmpf oeq, %184, %187 : vector<32x32xf32>
    %c32_i32_80 = arith.constant 32 : i32
    %189 = vector.broadcast %c32_i32_80 : i32 to vector<32x32xi32>
    %190 = arith.select %188, %1, %189 : vector<32x32xi1>, vector<32x32xi32>
    %cst_81 = arith.constant dense<2147483647> : vector<32xi32>
    %191 = vector.multi_reduction <minsi>, %190, %cst_81 [1] : vector<32x32xi32> to vector<32xi32>
    %192 = vector.shape_cast %191 : vector<32xi32> to vector<32x1xi32>
    %193 = vector.broadcast %192 : vector<32x1xi32> to vector<32x32xi32>
    %194 = arith.cmpi eq, %1, %193 : vector<32x32xi32>
    %195 = arith.extui %194 : vector<32x32xi1> to vector<32x32xi32>
    %196 = arith.sitofp %195 : vector<32x32xi32> to vector<32x32xf32>
    %197 = arith.truncf %196 : vector<32x32xf32> to vector<32x32xbf16>
    %cst_82 = arith.constant dense<0.000000e+00> : vector<32x128xf32>
    %198 = tpu.matmul %197, %149, %cst_82 {dimension_numbers = #tpu.dot_dimension_numbers<[1], [0], [0], [1], [0, 0, 1, 1], [], []>} : vector<32x32xbf16>, vector<32x128xbf16>, vector<32x128xf32> -> vector<32x128xf32>
    %199 = arith.maximumf %182, %198 : vector<32x128xf32>
    %cst_83 = arith.constant 0x7F800000 : f32
    %200 = vector.broadcast %cst_83 : f32 to vector<32x32xf32>
    %201 = arith.select %194, %200, %184 : vector<32x32xi1>, vector<32x32xf32>
    %c3_i32_84 = arith.constant 3 : i32
    %cst_85 = arith.constant dense<0x7F800000> : vector<32xf32>
    %202 = vector.multi_reduction <minimumf>, %201, %cst_85 [1] : vector<32x32xf32> to vector<32xf32>
    %203 = vector.shape_cast %202 : vector<32xf32> to vector<32x1xf32>
    %204 = vector.broadcast %203 : vector<32x1xf32> to vector<32x32xf32>
    %205 = arith.cmpf oeq, %201, %204 : vector<32x32xf32>
    %c32_i32_86 = arith.constant 32 : i32
    %206 = vector.broadcast %c32_i32_86 : i32 to vector<32x32xi32>
    %207 = arith.select %205, %1, %206 : vector<32x32xi1>, vector<32x32xi32>
    %cst_87 = arith.constant dense<2147483647> : vector<32xi32>
    %208 = vector.multi_reduction <minsi>, %207, %cst_87 [1] : vector<32x32xi32> to vector<32xi32>
    %209 = vector.shape_cast %208 : vector<32xi32> to vector<32x1xi32>
    %210 = vector.broadcast %209 : vector<32x1xi32> to vector<32x32xi32>
    %211 = arith.cmpi eq, %1, %210 : vector<32x32xi32>
    %212 = arith.extui %211 : vector<32x32xi1> to vector<32x32xi32>
    %213 = arith.sitofp %212 : vector<32x32xi32> to vector<32x32xf32>
    %214 = arith.truncf %213 : vector<32x32xf32> to vector<32x32xbf16>
    %cst_88 = arith.constant dense<0.000000e+00> : vector<32x128xf32>
    %215 = tpu.matmul %214, %149, %cst_88 {dimension_numbers = #tpu.dot_dimension_numbers<[1], [0], [0], [1], [0, 0, 1, 1], [], []>} : vector<32x32xbf16>, vector<32x128xbf16>, vector<32x128xf32> -> vector<32x128xf32>
    %216 = arith.maximumf %199, %215 : vector<32x128xf32>
    %cst_89 = arith.constant 0x7F800000 : f32
    %217 = vector.broadcast %cst_89 : f32 to vector<32x32xf32>
    %218 = arith.select %211, %217, %201 : vector<32x32xi1>, vector<32x32xf32>
    %c4_i32_90 = arith.constant 4 : i32
    %cst_91 = arith.constant dense<0x7F800000> : vector<32xf32>
    %219 = vector.multi_reduction <minimumf>, %218, %cst_91 [1] : vector<32x32xf32> to vector<32xf32>
    %220 = vector.shape_cast %219 : vector<32xf32> to vector<32x1xf32>
    %221 = vector.broadcast %220 : vector<32x1xf32> to vector<32x32xf32>
    %222 = arith.cmpf oeq, %218, %221 : vector<32x32xf32>
    %c32_i32_92 = arith.constant 32 : i32
    %223 = vector.broadcast %c32_i32_92 : i32 to vector<32x32xi32>
    %224 = arith.select %222, %1, %223 : vector<32x32xi1>, vector<32x32xi32>
    %cst_93 = arith.constant dense<2147483647> : vector<32xi32>
    %225 = vector.multi_reduction <minsi>, %224, %cst_93 [1] : vector<32x32xi32> to vector<32xi32>
    %226 = vector.shape_cast %225 : vector<32xi32> to vector<32x1xi32>
    %227 = vector.broadcast %226 : vector<32x1xi32> to vector<32x32xi32>
    %228 = arith.cmpi eq, %1, %227 : vector<32x32xi32>
    %229 = arith.extui %228 : vector<32x32xi1> to vector<32x32xi32>
    %230 = arith.sitofp %229 : vector<32x32xi32> to vector<32x32xf32>
    %231 = arith.truncf %230 : vector<32x32xf32> to vector<32x32xbf16>
    %cst_94 = arith.constant dense<0.000000e+00> : vector<32x128xf32>
    %232 = tpu.matmul %231, %149, %cst_94 {dimension_numbers = #tpu.dot_dimension_numbers<[1], [0], [0], [1], [0, 0, 1, 1], [], []>} : vector<32x32xbf16>, vector<32x128xbf16>, vector<32x128xf32> -> vector<32x128xf32>
    %233 = arith.maximumf %216, %232 : vector<32x128xf32>
    %cst_95 = arith.constant 0x7F800000 : f32
    %234 = vector.broadcast %cst_95 : f32 to vector<32x32xf32>
    %235 = arith.select %228, %234, %218 : vector<32x32xi1>, vector<32x32xf32>
    %236 = arith.addf %146, %233 : vector<32x128xf32>
    %cst_96 = arith.constant 0.000000e+00 : f32
    %237 = vector.broadcast %cst_96 : f32 to vector<32x128xf32>
    %238 = arith.maximumf %236, %237 : vector<32x128xf32>
    %239 = arith.truncf %238 : vector<32x128xf32> to vector<32x128xbf16>
    %cst_97 = arith.constant dense<0.000000e+00> : vector<32x32xf32>
    %240 = tpu.matmul %239, %239, %cst_97 {dimension_numbers = #tpu.dot_dimension_numbers<[1], [1], [0], [0], [0, 0, 1, 0], [], []>} : vector<32x128xbf16>, vector<32x128xbf16>, vector<32x32xf32> -> vector<32x32xf32>
    %241 = arith.mulf %238, %238 : vector<32x128xf32>
    %242 = arith.truncf %241 : vector<32x128xf32> to vector<32x128xbf16>
    %cst_98 = arith.constant 1.000000e+00 : bf16
    %243 = vector.broadcast %cst_98 : bf16 to vector<1x128xbf16>
    %cst_99 = arith.constant dense<0.000000e+00> : vector<1x32xf32>
    %244 = tpu.matmul %243, %242, %cst_99 {dimension_numbers = #tpu.dot_dimension_numbers<[1], [1], [0], [0], [0, 0, 1, 0], [], []>} : vector<1x128xbf16>, vector<32x128xbf16>, vector<1x32xf32> -> vector<1x32xf32>
    %cst_100 = arith.constant 2.000000e+00 : f32
    %245 = vector.broadcast %cst_100 : f32 to vector<32x32xf32>
    %246 = arith.mulf %245, %240 : vector<32x32xf32>
    %247 = vector.broadcast %244 : vector<1x32xf32> to vector<32x32xf32>
    %248 = arith.subf %247, %246 : vector<32x32xf32>
    %cst_101 = arith.constant 0x7F800000 : f32
    %249 = vector.broadcast %cst_101 : f32 to vector<32x32xf32>
    %250 = arith.select %7, %249, %248 : vector<32x32xi1>, vector<32x32xf32>
    %c0_102 = arith.constant 0 : index
    %c0_103 = arith.constant 0 : index
    %251 = vector.load %arg8[%c0_102, %c0_103] : memref<128x128xbf16, #tpu.memory_space<vmem>>, vector<128x128xbf16>
    %cst_104 = arith.constant dense<0.000000e+00> : vector<32x128xf32>
    %252 = tpu.matmul %239, %251, %cst_104 {dimension_numbers = #tpu.dot_dimension_numbers<[1], [0], [0], [1], [0, 0, 1, 1], [], []>} : vector<32x128xbf16>, vector<128x128xbf16>, vector<32x128xf32> -> vector<32x128xf32>
    %c0_105 = arith.constant 0 : index
    %c0_106 = arith.constant 0 : index
    %253 = vector.load %arg10[%c0_105, %c0_106] : memref<1x128xf32, #tpu.memory_space<vmem>>, vector<1x128xf32>
    %254 = vector.broadcast %253 : vector<1x128xf32> to vector<32x128xf32>
    %255 = arith.addf %252, %254 : vector<32x128xf32>
    %c0_107 = arith.constant 0 : index
    %c0_108 = arith.constant 0 : index
    %256 = vector.load %arg9[%c0_107, %c0_108] : memref<128x128xbf16, #tpu.memory_space<vmem>>, vector<128x128xbf16>
    %cst_109 = arith.constant dense<0.000000e+00> : vector<32x128xf32>
    %257 = tpu.matmul %239, %256, %cst_109 {dimension_numbers = #tpu.dot_dimension_numbers<[1], [0], [0], [1], [0, 0, 1, 1], [], []>} : vector<32x128xbf16>, vector<128x128xbf16>, vector<32x128xf32> -> vector<32x128xf32>
    %258 = arith.truncf %257 : vector<32x128xf32> to vector<32x128xbf16>
    %cst_110 = arith.constant 0xFF800000 : f32
    %259 = vector.broadcast %cst_110 : f32 to vector<32x128xf32>
    %c0_i32_111 = arith.constant 0 : i32
    %cst_112 = arith.constant dense<0x7F800000> : vector<32xf32>
    %260 = vector.multi_reduction <minimumf>, %250, %cst_112 [1] : vector<32x32xf32> to vector<32xf32>
    %261 = vector.shape_cast %260 : vector<32xf32> to vector<32x1xf32>
    %262 = vector.broadcast %261 : vector<32x1xf32> to vector<32x32xf32>
    %263 = arith.cmpf oeq, %250, %262 : vector<32x32xf32>
    %c32_i32_113 = arith.constant 32 : i32
    %264 = vector.broadcast %c32_i32_113 : i32 to vector<32x32xi32>
    %265 = arith.select %263, %1, %264 : vector<32x32xi1>, vector<32x32xi32>
    %cst_114 = arith.constant dense<2147483647> : vector<32xi32>
    %266 = vector.multi_reduction <minsi>, %265, %cst_114 [1] : vector<32x32xi32> to vector<32xi32>
    %267 = vector.shape_cast %266 : vector<32xi32> to vector<32x1xi32>
    %268 = vector.broadcast %267 : vector<32x1xi32> to vector<32x32xi32>
    %269 = arith.cmpi eq, %1, %268 : vector<32x32xi32>
    %270 = arith.extui %269 : vector<32x32xi1> to vector<32x32xi32>
    %271 = arith.sitofp %270 : vector<32x32xi32> to vector<32x32xf32>
    %272 = arith.truncf %271 : vector<32x32xf32> to vector<32x32xbf16>
    %cst_115 = arith.constant dense<0.000000e+00> : vector<32x128xf32>
    %273 = tpu.matmul %272, %258, %cst_115 {dimension_numbers = #tpu.dot_dimension_numbers<[1], [0], [0], [1], [0, 0, 1, 1], [], []>} : vector<32x32xbf16>, vector<32x128xbf16>, vector<32x128xf32> -> vector<32x128xf32>
    %274 = arith.maximumf %259, %273 : vector<32x128xf32>
    %cst_116 = arith.constant 0x7F800000 : f32
    %275 = vector.broadcast %cst_116 : f32 to vector<32x32xf32>
    %276 = arith.select %269, %275, %250 : vector<32x32xi1>, vector<32x32xf32>
    %c1_i32_117 = arith.constant 1 : i32
    %cst_118 = arith.constant dense<0x7F800000> : vector<32xf32>
    %277 = vector.multi_reduction <minimumf>, %276, %cst_118 [1] : vector<32x32xf32> to vector<32xf32>
    %278 = vector.shape_cast %277 : vector<32xf32> to vector<32x1xf32>
    %279 = vector.broadcast %278 : vector<32x1xf32> to vector<32x32xf32>
    %280 = arith.cmpf oeq, %276, %279 : vector<32x32xf32>
    %c32_i32_119 = arith.constant 32 : i32
    %281 = vector.broadcast %c32_i32_119 : i32 to vector<32x32xi32>
    %282 = arith.select %280, %1, %281 : vector<32x32xi1>, vector<32x32xi32>
    %cst_120 = arith.constant dense<2147483647> : vector<32xi32>
    %283 = vector.multi_reduction <minsi>, %282, %cst_120 [1] : vector<32x32xi32> to vector<32xi32>
    %284 = vector.shape_cast %283 : vector<32xi32> to vector<32x1xi32>
    %285 = vector.broadcast %284 : vector<32x1xi32> to vector<32x32xi32>
    %286 = arith.cmpi eq, %1, %285 : vector<32x32xi32>
    %287 = arith.extui %286 : vector<32x32xi1> to vector<32x32xi32>
    %288 = arith.sitofp %287 : vector<32x32xi32> to vector<32x32xf32>
    %289 = arith.truncf %288 : vector<32x32xf32> to vector<32x32xbf16>
    %cst_121 = arith.constant dense<0.000000e+00> : vector<32x128xf32>
    %290 = tpu.matmul %289, %258, %cst_121 {dimension_numbers = #tpu.dot_dimension_numbers<[1], [0], [0], [1], [0, 0, 1, 1], [], []>} : vector<32x32xbf16>, vector<32x128xbf16>, vector<32x128xf32> -> vector<32x128xf32>
    %291 = arith.maximumf %274, %290 : vector<32x128xf32>
    %cst_122 = arith.constant 0x7F800000 : f32
    %292 = vector.broadcast %cst_122 : f32 to vector<32x32xf32>
    %293 = arith.select %286, %292, %276 : vector<32x32xi1>, vector<32x32xf32>
    %c2_i32_123 = arith.constant 2 : i32
    %cst_124 = arith.constant dense<0x7F800000> : vector<32xf32>
    %294 = vector.multi_reduction <minimumf>, %293, %cst_124 [1] : vector<32x32xf32> to vector<32xf32>
    %295 = vector.shape_cast %294 : vector<32xf32> to vector<32x1xf32>
    %296 = vector.broadcast %295 : vector<32x1xf32> to vector<32x32xf32>
    %297 = arith.cmpf oeq, %293, %296 : vector<32x32xf32>
    %c32_i32_125 = arith.constant 32 : i32
    %298 = vector.broadcast %c32_i32_125 : i32 to vector<32x32xi32>
    %299 = arith.select %297, %1, %298 : vector<32x32xi1>, vector<32x32xi32>
    %cst_126 = arith.constant dense<2147483647> : vector<32xi32>
    %300 = vector.multi_reduction <minsi>, %299, %cst_126 [1] : vector<32x32xi32> to vector<32xi32>
    %301 = vector.shape_cast %300 : vector<32xi32> to vector<32x1xi32>
    %302 = vector.broadcast %301 : vector<32x1xi32> to vector<32x32xi32>
    %303 = arith.cmpi eq, %1, %302 : vector<32x32xi32>
    %304 = arith.extui %303 : vector<32x32xi1> to vector<32x32xi32>
    %305 = arith.sitofp %304 : vector<32x32xi32> to vector<32x32xf32>
    %306 = arith.truncf %305 : vector<32x32xf32> to vector<32x32xbf16>
    %cst_127 = arith.constant dense<0.000000e+00> : vector<32x128xf32>
    %307 = tpu.matmul %306, %258, %cst_127 {dimension_numbers = #tpu.dot_dimension_numbers<[1], [0], [0], [1], [0, 0, 1, 1], [], []>} : vector<32x32xbf16>, vector<32x128xbf16>, vector<32x128xf32> -> vector<32x128xf32>
    %308 = arith.maximumf %291, %307 : vector<32x128xf32>
    %cst_128 = arith.constant 0x7F800000 : f32
    %309 = vector.broadcast %cst_128 : f32 to vector<32x32xf32>
    %310 = arith.select %303, %309, %293 : vector<32x32xi1>, vector<32x32xf32>
    %c3_i32_129 = arith.constant 3 : i32
    %cst_130 = arith.constant dense<0x7F800000> : vector<32xf32>
    %311 = vector.multi_reduction <minimumf>, %310, %cst_130 [1] : vector<32x32xf32> to vector<32xf32>
    %312 = vector.shape_cast %311 : vector<32xf32> to vector<32x1xf32>
    %313 = vector.broadcast %312 : vector<32x1xf32> to vector<32x32xf32>
    %314 = arith.cmpf oeq, %310, %313 : vector<32x32xf32>
    %c32_i32_131 = arith.constant 32 : i32
    %315 = vector.broadcast %c32_i32_131 : i32 to vector<32x32xi32>
    %316 = arith.select %314, %1, %315 : vector<32x32xi1>, vector<32x32xi32>
    %cst_132 = arith.constant dense<2147483647> : vector<32xi32>
    %317 = vector.multi_reduction <minsi>, %316, %cst_132 [1] : vector<32x32xi32> to vector<32xi32>
    %318 = vector.shape_cast %317 : vector<32xi32> to vector<32x1xi32>
    %319 = vector.broadcast %318 : vector<32x1xi32> to vector<32x32xi32>
    %320 = arith.cmpi eq, %1, %319 : vector<32x32xi32>
    %321 = arith.extui %320 : vector<32x32xi1> to vector<32x32xi32>
    %322 = arith.sitofp %321 : vector<32x32xi32> to vector<32x32xf32>
    %323 = arith.truncf %322 : vector<32x32xf32> to vector<32x32xbf16>
    %cst_133 = arith.constant dense<0.000000e+00> : vector<32x128xf32>
    %324 = tpu.matmul %323, %258, %cst_133 {dimension_numbers = #tpu.dot_dimension_numbers<[1], [0], [0], [1], [0, 0, 1, 1], [], []>} : vector<32x32xbf16>, vector<32x128xbf16>, vector<32x128xf32> -> vector<32x128xf32>
    %325 = arith.maximumf %308, %324 : vector<32x128xf32>
    %cst_134 = arith.constant 0x7F800000 : f32
    %326 = vector.broadcast %cst_134 : f32 to vector<32x32xf32>
    %327 = arith.select %320, %326, %310 : vector<32x32xi1>, vector<32x32xf32>
    %c4_i32_135 = arith.constant 4 : i32
    %cst_136 = arith.constant dense<0x7F800000> : vector<32xf32>
    %328 = vector.multi_reduction <minimumf>, %327, %cst_136 [1] : vector<32x32xf32> to vector<32xf32>
    %329 = vector.shape_cast %328 : vector<32xf32> to vector<32x1xf32>
    %330 = vector.broadcast %329 : vector<32x1xf32> to vector<32x32xf32>
    %331 = arith.cmpf oeq, %327, %330 : vector<32x32xf32>
    %c32_i32_137 = arith.constant 32 : i32
    %332 = vector.broadcast %c32_i32_137 : i32 to vector<32x32xi32>
    %333 = arith.select %331, %1, %332 : vector<32x32xi1>, vector<32x32xi32>
    %cst_138 = arith.constant dense<2147483647> : vector<32xi32>
    %334 = vector.multi_reduction <minsi>, %333, %cst_138 [1] : vector<32x32xi32> to vector<32xi32>
    %335 = vector.shape_cast %334 : vector<32xi32> to vector<32x1xi32>
    %336 = vector.broadcast %335 : vector<32x1xi32> to vector<32x32xi32>
    %337 = arith.cmpi eq, %1, %336 : vector<32x32xi32>
    %338 = arith.extui %337 : vector<32x32xi1> to vector<32x32xi32>
    %339 = arith.sitofp %338 : vector<32x32xi32> to vector<32x32xf32>
    %340 = arith.truncf %339 : vector<32x32xf32> to vector<32x32xbf16>
    %cst_139 = arith.constant dense<0.000000e+00> : vector<32x128xf32>
    %341 = tpu.matmul %340, %258, %cst_139 {dimension_numbers = #tpu.dot_dimension_numbers<[1], [0], [0], [1], [0, 0, 1, 1], [], []>} : vector<32x32xbf16>, vector<32x128xbf16>, vector<32x128xf32> -> vector<32x128xf32>
    %342 = arith.maximumf %325, %341 : vector<32x128xf32>
    %cst_140 = arith.constant 0x7F800000 : f32
    %343 = vector.broadcast %cst_140 : f32 to vector<32x32xf32>
    %344 = arith.select %337, %343, %327 : vector<32x32xi1>, vector<32x32xf32>
    %345 = arith.addf %255, %342 : vector<32x128xf32>
    %cst_141 = arith.constant 0.000000e+00 : f32
    %346 = vector.broadcast %cst_141 : f32 to vector<32x128xf32>
    %347 = arith.maximumf %345, %346 : vector<32x128xf32>
    %348 = arith.truncf %347 : vector<32x128xf32> to vector<32x128xbf16>
    %cst_142 = arith.constant dense<0.000000e+00> : vector<32x32xf32>
    %349 = tpu.matmul %348, %348, %cst_142 {dimension_numbers = #tpu.dot_dimension_numbers<[1], [1], [0], [0], [0, 0, 1, 0], [], []>} : vector<32x128xbf16>, vector<32x128xbf16>, vector<32x32xf32> -> vector<32x32xf32>
    %350 = arith.mulf %347, %347 : vector<32x128xf32>
    %351 = arith.truncf %350 : vector<32x128xf32> to vector<32x128xbf16>
    %cst_143 = arith.constant 1.000000e+00 : bf16
    %352 = vector.broadcast %cst_143 : bf16 to vector<1x128xbf16>
    %cst_144 = arith.constant dense<0.000000e+00> : vector<1x32xf32>
    %353 = tpu.matmul %352, %351, %cst_144 {dimension_numbers = #tpu.dot_dimension_numbers<[1], [1], [0], [0], [0, 0, 1, 0], [], []>} : vector<1x128xbf16>, vector<32x128xbf16>, vector<1x32xf32> -> vector<1x32xf32>
    %cst_145 = arith.constant 2.000000e+00 : f32
    %354 = vector.broadcast %cst_145 : f32 to vector<32x32xf32>
    %355 = arith.mulf %354, %349 : vector<32x32xf32>
    %356 = vector.broadcast %353 : vector<1x32xf32> to vector<32x32xf32>
    %357 = arith.subf %356, %355 : vector<32x32xf32>
    %cst_146 = arith.constant 0x7F800000 : f32
    %358 = vector.broadcast %cst_146 : f32 to vector<32x32xf32>
    %359 = arith.select %7, %358, %357 : vector<32x32xi1>, vector<32x32xf32>
    %c0_147 = arith.constant 0 : index
    %c0_148 = arith.constant 0 : index
    %360 = vector.load %arg11[%c0_147, %c0_148] : memref<128x1024xbf16, #tpu.memory_space<vmem>>, vector<128x1024xbf16>
    %cst_149 = arith.constant dense<0.000000e+00> : vector<32x1024xf32>
    %361 = tpu.matmul %348, %360, %cst_149 {dimension_numbers = #tpu.dot_dimension_numbers<[1], [0], [0], [1], [0, 0, 1, 1], [], []>} : vector<32x128xbf16>, vector<128x1024xbf16>, vector<32x1024xf32> -> vector<32x1024xf32>
    %c0_150 = arith.constant 0 : index
    %c0_151 = arith.constant 0 : index
    %362 = vector.load %arg13[%c0_150, %c0_151] : memref<1x1024xf32, #tpu.memory_space<vmem>>, vector<1x1024xf32>
    %363 = vector.broadcast %362 : vector<1x1024xf32> to vector<32x1024xf32>
    %364 = arith.addf %361, %363 : vector<32x1024xf32>
    %cst_152 = arith.constant 0xFF800000 : f32
    %365 = vector.broadcast %cst_152 : f32 to vector<32x1024xf32>
    %c0_i32_153 = arith.constant 0 : i32
    %cst_154 = arith.constant dense<0x7F800000> : vector<32xf32>
    %366 = vector.multi_reduction <minimumf>, %359, %cst_154 [1] : vector<32x32xf32> to vector<32xf32>
    %367 = vector.shape_cast %366 : vector<32xf32> to vector<32x1xf32>
    %368 = vector.broadcast %367 : vector<32x1xf32> to vector<32x32xf32>
    %369 = arith.cmpf oeq, %359, %368 : vector<32x32xf32>
    %c32_i32_155 = arith.constant 32 : i32
    %370 = vector.broadcast %c32_i32_155 : i32 to vector<32x32xi32>
    %371 = arith.select %369, %1, %370 : vector<32x32xi1>, vector<32x32xi32>
    %cst_156 = arith.constant dense<2147483647> : vector<32xi32>
    %372 = vector.multi_reduction <minsi>, %371, %cst_156 [1] : vector<32x32xi32> to vector<32xi32>
    %373 = vector.shape_cast %372 : vector<32xi32> to vector<32x1xi32>
    %374 = vector.broadcast %373 : vector<32x1xi32> to vector<32x32xi32>
    %375 = arith.cmpi eq, %1, %374 : vector<32x32xi32>
    %376 = arith.extui %375 : vector<32x32xi1> to vector<32x32xi32>
    %377 = arith.sitofp %376 : vector<32x32xi32> to vector<32x32xf32>
    %378 = arith.truncf %377 : vector<32x32xf32> to vector<32x32xbf16>
    %cst_157 = arith.constant dense<0.000000e+00> : vector<32x128xf32>
    %379 = tpu.matmul %378, %348, %cst_157 {dimension_numbers = #tpu.dot_dimension_numbers<[1], [0], [0], [1], [0, 0, 1, 1], [], []>} : vector<32x32xbf16>, vector<32x128xbf16>, vector<32x128xf32> -> vector<32x128xf32>
    %380 = arith.truncf %379 : vector<32x128xf32> to vector<32x128xbf16>
    %c0_158 = arith.constant 0 : index
    %c0_159 = arith.constant 0 : index
    %381 = vector.load %arg12[%c0_158, %c0_159] : memref<128x1024xbf16, #tpu.memory_space<vmem>>, vector<128x1024xbf16>
    %cst_160 = arith.constant dense<0.000000e+00> : vector<32x1024xf32>
    %382 = tpu.matmul %380, %381, %cst_160 {dimension_numbers = #tpu.dot_dimension_numbers<[1], [0], [0], [1], [0, 0, 1, 1], [], []>} : vector<32x128xbf16>, vector<128x1024xbf16>, vector<32x1024xf32> -> vector<32x1024xf32>
    %383 = arith.maximumf %365, %382 : vector<32x1024xf32>
    %cst_161 = arith.constant 0x7F800000 : f32
    %384 = vector.broadcast %cst_161 : f32 to vector<32x32xf32>
    %385 = arith.select %375, %384, %359 : vector<32x32xi1>, vector<32x32xf32>
    %c1_i32_162 = arith.constant 1 : i32
    %cst_163 = arith.constant dense<0x7F800000> : vector<32xf32>
    %386 = vector.multi_reduction <minimumf>, %385, %cst_163 [1] : vector<32x32xf32> to vector<32xf32>
    %387 = vector.shape_cast %386 : vector<32xf32> to vector<32x1xf32>
    %388 = vector.broadcast %387 : vector<32x1xf32> to vector<32x32xf32>
    %389 = arith.cmpf oeq, %385, %388 : vector<32x32xf32>
    %c32_i32_164 = arith.constant 32 : i32
    %390 = vector.broadcast %c32_i32_164 : i32 to vector<32x32xi32>
    %391 = arith.select %389, %1, %390 : vector<32x32xi1>, vector<32x32xi32>
    %cst_165 = arith.constant dense<2147483647> : vector<32xi32>
    %392 = vector.multi_reduction <minsi>, %391, %cst_165 [1] : vector<32x32xi32> to vector<32xi32>
    %393 = vector.shape_cast %392 : vector<32xi32> to vector<32x1xi32>
    %394 = vector.broadcast %393 : vector<32x1xi32> to vector<32x32xi32>
    %395 = arith.cmpi eq, %1, %394 : vector<32x32xi32>
    %396 = arith.extui %395 : vector<32x32xi1> to vector<32x32xi32>
    %397 = arith.sitofp %396 : vector<32x32xi32> to vector<32x32xf32>
    %398 = arith.truncf %397 : vector<32x32xf32> to vector<32x32xbf16>
    %cst_166 = arith.constant dense<0.000000e+00> : vector<32x128xf32>
    %399 = tpu.matmul %398, %348, %cst_166 {dimension_numbers = #tpu.dot_dimension_numbers<[1], [0], [0], [1], [0, 0, 1, 1], [], []>} : vector<32x32xbf16>, vector<32x128xbf16>, vector<32x128xf32> -> vector<32x128xf32>
    %400 = arith.truncf %399 : vector<32x128xf32> to vector<32x128xbf16>
    %c0_167 = arith.constant 0 : index
    %c0_168 = arith.constant 0 : index
    %401 = vector.load %arg12[%c0_167, %c0_168] : memref<128x1024xbf16, #tpu.memory_space<vmem>>, vector<128x1024xbf16>
    %cst_169 = arith.constant dense<0.000000e+00> : vector<32x1024xf32>
    %402 = tpu.matmul %400, %401, %cst_169 {dimension_numbers = #tpu.dot_dimension_numbers<[1], [0], [0], [1], [0, 0, 1, 1], [], []>} : vector<32x128xbf16>, vector<128x1024xbf16>, vector<32x1024xf32> -> vector<32x1024xf32>
    %403 = arith.maximumf %383, %402 : vector<32x1024xf32>
    %cst_170 = arith.constant 0x7F800000 : f32
    %404 = vector.broadcast %cst_170 : f32 to vector<32x32xf32>
    %405 = arith.select %395, %404, %385 : vector<32x32xi1>, vector<32x32xf32>
    %c2_i32_171 = arith.constant 2 : i32
    %cst_172 = arith.constant dense<0x7F800000> : vector<32xf32>
    %406 = vector.multi_reduction <minimumf>, %405, %cst_172 [1] : vector<32x32xf32> to vector<32xf32>
    %407 = vector.shape_cast %406 : vector<32xf32> to vector<32x1xf32>
    %408 = vector.broadcast %407 : vector<32x1xf32> to vector<32x32xf32>
    %409 = arith.cmpf oeq, %405, %408 : vector<32x32xf32>
    %c32_i32_173 = arith.constant 32 : i32
    %410 = vector.broadcast %c32_i32_173 : i32 to vector<32x32xi32>
    %411 = arith.select %409, %1, %410 : vector<32x32xi1>, vector<32x32xi32>
    %cst_174 = arith.constant dense<2147483647> : vector<32xi32>
    %412 = vector.multi_reduction <minsi>, %411, %cst_174 [1] : vector<32x32xi32> to vector<32xi32>
    %413 = vector.shape_cast %412 : vector<32xi32> to vector<32x1xi32>
    %414 = vector.broadcast %413 : vector<32x1xi32> to vector<32x32xi32>
    %415 = arith.cmpi eq, %1, %414 : vector<32x32xi32>
    %416 = arith.extui %415 : vector<32x32xi1> to vector<32x32xi32>
    %417 = arith.sitofp %416 : vector<32x32xi32> to vector<32x32xf32>
    %418 = arith.truncf %417 : vector<32x32xf32> to vector<32x32xbf16>
    %cst_175 = arith.constant dense<0.000000e+00> : vector<32x128xf32>
    %419 = tpu.matmul %418, %348, %cst_175 {dimension_numbers = #tpu.dot_dimension_numbers<[1], [0], [0], [1], [0, 0, 1, 1], [], []>} : vector<32x32xbf16>, vector<32x128xbf16>, vector<32x128xf32> -> vector<32x128xf32>
    %420 = arith.truncf %419 : vector<32x128xf32> to vector<32x128xbf16>
    %c0_176 = arith.constant 0 : index
    %c0_177 = arith.constant 0 : index
    %421 = vector.load %arg12[%c0_176, %c0_177] : memref<128x1024xbf16, #tpu.memory_space<vmem>>, vector<128x1024xbf16>
    %cst_178 = arith.constant dense<0.000000e+00> : vector<32x1024xf32>
    %422 = tpu.matmul %420, %421, %cst_178 {dimension_numbers = #tpu.dot_dimension_numbers<[1], [0], [0], [1], [0, 0, 1, 1], [], []>} : vector<32x128xbf16>, vector<128x1024xbf16>, vector<32x1024xf32> -> vector<32x1024xf32>
    %423 = arith.maximumf %403, %422 : vector<32x1024xf32>
    %cst_179 = arith.constant 0x7F800000 : f32
    %424 = vector.broadcast %cst_179 : f32 to vector<32x32xf32>
    %425 = arith.select %415, %424, %405 : vector<32x32xi1>, vector<32x32xf32>
    %c3_i32_180 = arith.constant 3 : i32
    %cst_181 = arith.constant dense<0x7F800000> : vector<32xf32>
    %426 = vector.multi_reduction <minimumf>, %425, %cst_181 [1] : vector<32x32xf32> to vector<32xf32>
    %427 = vector.shape_cast %426 : vector<32xf32> to vector<32x1xf32>
    %428 = vector.broadcast %427 : vector<32x1xf32> to vector<32x32xf32>
    %429 = arith.cmpf oeq, %425, %428 : vector<32x32xf32>
    %c32_i32_182 = arith.constant 32 : i32
    %430 = vector.broadcast %c32_i32_182 : i32 to vector<32x32xi32>
    %431 = arith.select %429, %1, %430 : vector<32x32xi1>, vector<32x32xi32>
    %cst_183 = arith.constant dense<2147483647> : vector<32xi32>
    %432 = vector.multi_reduction <minsi>, %431, %cst_183 [1] : vector<32x32xi32> to vector<32xi32>
    %433 = vector.shape_cast %432 : vector<32xi32> to vector<32x1xi32>
    %434 = vector.broadcast %433 : vector<32x1xi32> to vector<32x32xi32>
    %435 = arith.cmpi eq, %1, %434 : vector<32x32xi32>
    %436 = arith.extui %435 : vector<32x32xi1> to vector<32x32xi32>
    %437 = arith.sitofp %436 : vector<32x32xi32> to vector<32x32xf32>
    %438 = arith.truncf %437 : vector<32x32xf32> to vector<32x32xbf16>
    %cst_184 = arith.constant dense<0.000000e+00> : vector<32x128xf32>
    %439 = tpu.matmul %438, %348, %cst_184 {dimension_numbers = #tpu.dot_dimension_numbers<[1], [0], [0], [1], [0, 0, 1, 1], [], []>} : vector<32x32xbf16>, vector<32x128xbf16>, vector<32x128xf32> -> vector<32x128xf32>
    %440 = arith.truncf %439 : vector<32x128xf32> to vector<32x128xbf16>
    %c0_185 = arith.constant 0 : index
    %c0_186 = arith.constant 0 : index
    %441 = vector.load %arg12[%c0_185, %c0_186] : memref<128x1024xbf16, #tpu.memory_space<vmem>>, vector<128x1024xbf16>
    %cst_187 = arith.constant dense<0.000000e+00> : vector<32x1024xf32>
    %442 = tpu.matmul %440, %441, %cst_187 {dimension_numbers = #tpu.dot_dimension_numbers<[1], [0], [0], [1], [0, 0, 1, 1], [], []>} : vector<32x128xbf16>, vector<128x1024xbf16>, vector<32x1024xf32> -> vector<32x1024xf32>
    %443 = arith.maximumf %423, %442 : vector<32x1024xf32>
    %cst_188 = arith.constant 0x7F800000 : f32
    %444 = vector.broadcast %cst_188 : f32 to vector<32x32xf32>
    %445 = arith.select %435, %444, %425 : vector<32x32xi1>, vector<32x32xf32>
    %c4_i32_189 = arith.constant 4 : i32
    %cst_190 = arith.constant dense<0x7F800000> : vector<32xf32>
    %446 = vector.multi_reduction <minimumf>, %445, %cst_190 [1] : vector<32x32xf32> to vector<32xf32>
    %447 = vector.shape_cast %446 : vector<32xf32> to vector<32x1xf32>
    %448 = vector.broadcast %447 : vector<32x1xf32> to vector<32x32xf32>
    %449 = arith.cmpf oeq, %445, %448 : vector<32x32xf32>
    %c32_i32_191 = arith.constant 32 : i32
    %450 = vector.broadcast %c32_i32_191 : i32 to vector<32x32xi32>
    %451 = arith.select %449, %1, %450 : vector<32x32xi1>, vector<32x32xi32>
    %cst_192 = arith.constant dense<2147483647> : vector<32xi32>
    %452 = vector.multi_reduction <minsi>, %451, %cst_192 [1] : vector<32x32xi32> to vector<32xi32>
    %453 = vector.shape_cast %452 : vector<32xi32> to vector<32x1xi32>
    %454 = vector.broadcast %453 : vector<32x1xi32> to vector<32x32xi32>
    %455 = arith.cmpi eq, %1, %454 : vector<32x32xi32>
    %456 = arith.extui %455 : vector<32x32xi1> to vector<32x32xi32>
    %457 = arith.sitofp %456 : vector<32x32xi32> to vector<32x32xf32>
    %458 = arith.truncf %457 : vector<32x32xf32> to vector<32x32xbf16>
    %cst_193 = arith.constant dense<0.000000e+00> : vector<32x128xf32>
    %459 = tpu.matmul %458, %348, %cst_193 {dimension_numbers = #tpu.dot_dimension_numbers<[1], [0], [0], [1], [0, 0, 1, 1], [], []>} : vector<32x32xbf16>, vector<32x128xbf16>, vector<32x128xf32> -> vector<32x128xf32>
    %460 = arith.truncf %459 : vector<32x128xf32> to vector<32x128xbf16>
    %c0_194 = arith.constant 0 : index
    %c0_195 = arith.constant 0 : index
    %461 = vector.load %arg12[%c0_194, %c0_195] : memref<128x1024xbf16, #tpu.memory_space<vmem>>, vector<128x1024xbf16>
    %cst_196 = arith.constant dense<0.000000e+00> : vector<32x1024xf32>
    %462 = tpu.matmul %460, %461, %cst_196 {dimension_numbers = #tpu.dot_dimension_numbers<[1], [0], [0], [1], [0, 0, 1, 1], [], []>} : vector<32x128xbf16>, vector<128x1024xbf16>, vector<32x1024xf32> -> vector<32x1024xf32>
    %463 = arith.maximumf %443, %462 : vector<32x1024xf32>
    %cst_197 = arith.constant 0x7F800000 : f32
    %464 = vector.broadcast %cst_197 : f32 to vector<32x32xf32>
    %465 = arith.select %455, %464, %445 : vector<32x32xi1>, vector<32x32xf32>
    %466 = arith.addf %364, %463 : vector<32x1024xf32>
    %cst_198 = arith.constant 0.000000e+00 : f32
    %467 = vector.broadcast %cst_198 : f32 to vector<32x1024xf32>
    %468 = arith.maximumf %466, %467 : vector<32x1024xf32>
    %469 = vector.extract_strided_slice %468 {offsets = [0, 0], sizes = [16, 1024], strides = [1, 1]} : vector<32x1024xf32> to vector<16x1024xf32>
    %cst_199 = arith.constant dense<0xFF800000> : vector<1024xf32>
    %470 = vector.multi_reduction <maximumf>, %469, %cst_199 [0] : vector<16x1024xf32> to vector<1024xf32>
    %471 = vector.shape_cast %470 : vector<1024xf32> to vector<1x1024xf32>
    %472 = vector.extract_strided_slice %468 {offsets = [16, 0], sizes = [16, 1024], strides = [1, 1]} : vector<32x1024xf32> to vector<16x1024xf32>
    %cst_200 = arith.constant dense<0xFF800000> : vector<1024xf32>
    %473 = vector.multi_reduction <maximumf>, %472, %cst_200 [0] : vector<16x1024xf32> to vector<1024xf32>
    %474 = vector.shape_cast %473 : vector<1024xf32> to vector<1x1024xf32>
    %475 = tpu.concatenate %471, %474 in 0 : vector<1x1024xf32>, vector<1x1024xf32> -> vector<2x1024xf32>
    %476 = arith.truncf %475 : vector<2x1024xf32> to vector<2x1024xbf16>
    %c0_201 = arith.constant 0 : index
    %c0_202 = arith.constant 0 : index
    %477 = vector.load %arg14[%c0_201, %c0_202] : memref<1024x512xbf16, #tpu.memory_space<vmem>>, vector<1024x512xbf16>
    %cst_203 = arith.constant dense<0.000000e+00> : vector<2x512xf32>
    %478 = tpu.matmul %476, %477, %cst_203 {dimension_numbers = #tpu.dot_dimension_numbers<[1], [0], [0], [1], [0, 0, 1, 1], [], []>} : vector<2x1024xbf16>, vector<1024x512xbf16>, vector<2x512xf32> -> vector<2x512xf32>
    %c0_204 = arith.constant 0 : index
    %c0_205 = arith.constant 0 : index
    %479 = vector.load %arg15[%c0_204, %c0_205] : memref<1x512xf32, #tpu.memory_space<vmem>>, vector<1x512xf32>
    %480 = vector.broadcast %479 : vector<1x512xf32> to vector<2x512xf32>
    %481 = arith.addf %478, %480 : vector<2x512xf32>
    %cst_206 = arith.constant 0.000000e+00 : f32
    %482 = vector.broadcast %cst_206 : f32 to vector<2x512xf32>
    %483 = arith.maximumf %481, %482 : vector<2x512xf32>
    %484 = arith.truncf %483 : vector<2x512xf32> to vector<2x512xbf16>
    %c0_207 = arith.constant 0 : index
    %c0_208 = arith.constant 0 : index
    %485 = vector.load %arg16[%c0_207, %c0_208] : memref<512x128xbf16, #tpu.memory_space<vmem>>, vector<512x128xbf16>
    %cst_209 = arith.constant dense<0.000000e+00> : vector<2x128xf32>
    %486 = tpu.matmul %484, %485, %cst_209 {dimension_numbers = #tpu.dot_dimension_numbers<[1], [0], [0], [1], [0, 0, 1, 1], [], []>} : vector<2x512xbf16>, vector<512x128xbf16>, vector<2x128xf32> -> vector<2x128xf32>
    %c0_210 = arith.constant 0 : index
    %c0_211 = arith.constant 0 : index
    %487 = vector.load %arg17[%c0_210, %c0_211] : memref<1x128xf32, #tpu.memory_space<vmem>>, vector<1x128xf32>
    %488 = vector.broadcast %487 : vector<1x128xf32> to vector<2x128xf32>
    %489 = arith.addf %486, %488 : vector<2x128xf32>
    %c0_212 = arith.constant 0 : index
    %c0_213 = arith.constant 0 : index
    %c0_214 = arith.constant 0 : index
    %490 = vector.load %arg18[%c0_212, %c0_213, %c0_214] : memref<1x2x128xf32, #tpu.memory_space<vmem>>, vector<1x2x128xf32>
    %491 = vector.shape_cast %490 : vector<1x2x128xf32> to vector<2x128xf32>
    %492 = vector.shape_cast %489 : vector<2x128xf32> to vector<1x2x128xf32>
    tpu.vector_store %arg18[%c0_212, %c0_213, %c0_214], %492 {strides = array<i32>} : memref<1x2x128xf32, #tpu.memory_space<vmem>>, vector<1x2x128xf32>,
    return
  }
  func.func @transform_0(%arg0: i32) -> (i32, i32) {
    %c0_i32 = arith.constant 0 : i32
    %c0_i32_0 = arith.constant 0 : i32
    return %arg0, %c0_i32 : i32, i32
  }
  func.func @transform_1(%arg0: i32) -> (i32, i32) {
    %c0_i32 = arith.constant 0 : i32
    %c0_i32_0 = arith.constant 0 : i32
    %c0_i32_1 = arith.constant 0 : i32
    return %c0_i32, %c0_i32_0 : i32, i32
  }
  func.func @transform_2(%arg0: i32) -> (i32, i32) {
    %c0_i32 = arith.constant 0 : i32
    %c0_i32_0 = arith.constant 0 : i32
    %c0_i32_1 = arith.constant 0 : i32
    return %c0_i32, %c0_i32_0 : i32, i32
  }
  func.func @transform_3(%arg0: i32) -> (i32, i32) {
    %c0_i32 = arith.constant 0 : i32
    %c0_i32_0 = arith.constant 0 : i32
    %c0_i32_1 = arith.constant 0 : i32
    return %c0_i32, %c0_i32_0 : i32, i32
  }
  func.func @transform_4(%arg0: i32) -> (i32, i32) {
    %c0_i32 = arith.constant 0 : i32
    %c0_i32_0 = arith.constant 0 : i32
    %c0_i32_1 = arith.constant 0 : i32
    return %c0_i32, %c0_i32_0 : i32, i32
  }
  func.func @transform_5(%arg0: i32) -> (i32, i32) {
    %c0_i32 = arith.constant 0 : i32
    %c0_i32_0 = arith.constant 0 : i32
    %c0_i32_1 = arith.constant 0 : i32
    return %c0_i32, %c0_i32_0 : i32, i32
  }
  func.func @transform_6(%arg0: i32) -> (i32, i32) {
    %c0_i32 = arith.constant 0 : i32
    %c0_i32_0 = arith.constant 0 : i32
    %c0_i32_1 = arith.constant 0 : i32
    return %c0_i32, %c0_i32_0 : i32, i32
  }
  func.func @transform_7(%arg0: i32) -> (i32, i32) {
    %c0_i32 = arith.constant 0 : i32
    %c0_i32_0 = arith.constant 0 : i32
    %c0_i32_1 = arith.constant 0 : i32
    return %c0_i32, %c0_i32_0 : i32, i32
  }
  func.func @transform_8(%arg0: i32) -> (i32, i32) {
    %c0_i32 = arith.constant 0 : i32
    %c0_i32_0 = arith.constant 0 : i32
    %c0_i32_1 = arith.constant 0 : i32
    return %c0_i32, %c0_i32_0 : i32, i32
  }
  func.func @transform_9(%arg0: i32) -> (i32, i32) {
    %c0_i32 = arith.constant 0 : i32
    %c0_i32_0 = arith.constant 0 : i32
    %c0_i32_1 = arith.constant 0 : i32
    return %c0_i32, %c0_i32_0 : i32, i32
  }
  func.func @transform_10(%arg0: i32) -> (i32, i32) {
    %c0_i32 = arith.constant 0 : i32
    %c0_i32_0 = arith.constant 0 : i32
    %c0_i32_1 = arith.constant 0 : i32
    return %c0_i32, %c0_i32_0 : i32, i32
  }
  func.func @transform_11(%arg0: i32) -> (i32, i32) {
    %c0_i32 = arith.constant 0 : i32
    %c0_i32_0 = arith.constant 0 : i32
    %c0_i32_1 = arith.constant 0 : i32
    return %c0_i32, %c0_i32_0 : i32, i32
  }
  func.func @transform_12(%arg0: i32) -> (i32, i32) {
    %c0_i32 = arith.constant 0 : i32
    %c0_i32_0 = arith.constant 0 : i32
    %c0_i32_1 = arith.constant 0 : i32
    return %c0_i32, %c0_i32_0 : i32, i32
  }
  func.func @transform_13(%arg0: i32) -> (i32, i32) {
    %c0_i32 = arith.constant 0 : i32
    %c0_i32_0 = arith.constant 0 : i32
    %c0_i32_1 = arith.constant 0 : i32
    return %c0_i32, %c0_i32_0 : i32, i32
  }
  func.func @transform_14(%arg0: i32) -> (i32, i32) {
    %c0_i32 = arith.constant 0 : i32
    %c0_i32_0 = arith.constant 0 : i32
    %c0_i32_1 = arith.constant 0 : i32
    return %c0_i32, %c0_i32_0 : i32, i32
  }
  func.func @transform_15(%arg0: i32) -> (i32, i32) {
    %c0_i32 = arith.constant 0 : i32
    %c0_i32_0 = arith.constant 0 : i32
    %c0_i32_1 = arith.constant 0 : i32
    return %c0_i32, %c0_i32_0 : i32, i32
  }
  func.func @transform_16(%arg0: i32) -> (i32, i32) {
    %c0_i32 = arith.constant 0 : i32
    %c0_i32_0 = arith.constant 0 : i32
    %c0_i32_1 = arith.constant 0 : i32
    return %c0_i32, %c0_i32_0 : i32, i32
  }
  func.func @transform_17(%arg0: i32) -> (i32, i32, i32) {
    %c0_i32 = arith.constant 0 : i32
    %c0_i32_0 = arith.constant 0 : i32
    %c0_i32_1 = arith.constant 0 : i32
    return %arg0, %c0_i32, %c0_i32_0 : i32, i32, i32
  }
}

</mosaic_0001>

<llo_original>
// kernel: tpu_custom_call.1
$region0: #{tpu_custom_call.1}
  #allocation0 [shape = 'u32[]', space=smem, size = 0x4, offset = 0x4, fixed_abs, tag = 'smem constant byte address 0x4 - core index']
  #allocation1 [shape = 'u32[72,128]{1,0:T(1,128)}', space=vmem, size = 0x9000, scoped, tag = 'internal scratch']
  %s0 = inlined_call_operand.vmem [shape: f32[32,3], index: 0, kind: input, shape index: {}]
  %s1 = inlined_call_operand.vmem [shape: bf16[3,128], index: 1, kind: input, shape index: {}]
  %s2 = inlined_call_operand.vmem [shape: bf16[3,128], index: 2, kind: input, shape index: {}]
  %s3 = inlined_call_operand.vmem [shape: f32[1,128], index: 3, kind: input, shape index: {}]
  %s4 = inlined_call_operand.hbm [shape: bf16[128,128], index: 4, kind: input, shape index: {}]
  %s5 = inlined_call_operand.hbm [shape: bf16[128,128], index: 5, kind: input, shape index: {}]
  %s6 = inlined_call_operand.vmem [shape: f32[1,128], index: 6, kind: input, shape index: {}]
  %s7 = inlined_call_operand.hbm [shape: bf16[128,128], index: 7, kind: input, shape index: {}]
  %s8 = inlined_call_operand.hbm [shape: bf16[128,128], index: 8, kind: input, shape index: {}]
  %s9 = inlined_call_operand.vmem [shape: f32[1,128], index: 9, kind: input, shape index: {}]
  %s10 = inlined_call_operand.hbm [shape: bf16[128,1024], index: 10, kind: input, shape index: {}]
  %s11 = inlined_call_operand.hbm [shape: bf16[128,1024], index: 11, kind: input, shape index: {}]
  %s12 = inlined_call_operand.vmem [shape: f32[1,1024], index: 12, kind: input, shape index: {}]
  %s13 = inlined_call_operand.hbm [shape: bf16[1024,512], index: 13, kind: input, shape index: {}]
  %s14 = inlined_call_operand.vmem [shape: f32[1,512], index: 14, kind: input, shape index: {}]
  %s15 = inlined_call_operand.hbm [shape: bf16[512,128], index: 15, kind: input, shape index: {}]
  %s16 = inlined_call_operand.vmem [shape: f32[1,128], index: 16, kind: input, shape index: {}]
  %s17 = inlined_call_operand.hbm [shape: f32[1,2,128], index: 17, kind: output, shape index: {}]
  %s18 = sld [smem:[#allocation0]]
  $region110: #{tpu_custom_call.1} parent=0
    _
  %s20 = ssub.s32 1, %s18
  %s21 = scalar_select 0, %s20, %s18
  $region1: #{tpu_custom_call.1} parent=0
    #allocation2 [shape = 'u8[32768]{0}', space=vmem, size = 0x8000, scoped, tag = 'input window, operand 4, single buffered']
    #allocation3 [shape = 's32[1]{0}', space=sflag, size = 0x4, scoped, tag = 'scoped memory for tpu_custom_call.1']
    #allocation4 [shape = 's32[1]{0}', space=sflag, size = 0x4, scoped, tag = 'scoped memory for tpu_custom_call.1']
    #allocation5 [shape = 'u8[32768]{0}', space=vmem, size = 0x8000, scoped, tag = 'input window, operand 5, single buffered']
    #allocation6 [shape = 's32[1]{0}', space=sflag, size = 0x4, scoped, tag = 'scoped memory for tpu_custom_call.1']
    #allocation7 [shape = 'u8[32768]{0}', space=vmem, size = 0x8000, scoped, tag = 'input window, operand 7, single buffered']
    #allocation8 [shape = 'u8[32768]{0}', space=vmem, size = 0x8000, scoped, tag = 'input window, operand 8, single buffered']
    #allocation9 [shape = 's32[1]{0}', space=sflag, size = 0x4, scoped, tag = 'scoped memory for tpu_custom_call.1']
    #allocation10 [shape = 'u8[262144]{0}', space=vmem, size = 0x40000, scoped, tag = 'input window, operand 10, single buffered']
    #allocation11 [shape = 'u8[262144]{0}', space=vmem, size = 0x40000, scoped, tag = 'input window, operand 11, single buffered']
    #allocation12 [shape = 's32[1]{0}', space=sflag, size = 0x4, scoped, tag = 'scoped memory for tpu_custom_call.1']
    #allocation13 [shape = 'u8[1048576]{0}', space=vmem, size = 0x100000, scoped, tag = 'input window, operand 13, single buffered']
    #allocation14 [shape = 'u8[131072]{0}', space=vmem, size = 0x20000, scoped, tag = 'input window, operand 15, single buffered']
    #allocation15 [shape = 's32[1]{0}', space=sflag, size = 0x4, scoped, tag = 'scoped memory for tpu_custom_call.1']
    #allocation16 [shape = 'u8[1024]{0}', space=vmem, size = 0x400, scoped, tag = 'output window, operand 0, single buffered']
    %22 = vsyncpa [#allocation3], 0
    %23 = vsyncpa [#allocation6], 0
    %24 = vsyncpa [#allocation9], 0
    %25 = vsyncpa [#allocation12], 0
    %26 = vsyncpa [#allocation15], 0
    %27 = vsyncpa [#allocation4], 0
    // Predicated region
    $region2: #{tpu_custom_call.1} parent=1 // pred_check
      _
    $region3: #{tpu_custom_call.1} parent=1 // pred_check_branch
      %29 = sbr.rel (0) target = $region5
    $region4: #{tpu_custom_call.1} parent=1 // pred_region
      _
    $region5: #{tpu_custom_call.1} parent=1 // pred_fallthru
      _
    // Predicated region
    $region6: #{tpu_custom_call.1} parent=1 // pred_check
      _
    $region7: #{tpu_custom_call.1} parent=1 // pred_check_branch
      %31 = sbr.rel (0) target = $region9
    $region8: #{tpu_custom_call.1} parent=1 // pred_region
      _
    $region9: #{tpu_custom_call.1} parent=1 // pred_fallthru
      _
    // Predicated region
    $region10: #{tpu_custom_call.1} parent=1 // pred_check
      _
    $region11: #{tpu_custom_call.1} parent=1 // pred_check_branch
      %33 = sbr.rel (0) target = $region13
    $region12: #{tpu_custom_call.1} parent=1 // pred_region
      _
    $region13: #{tpu_custom_call.1} parent=1 // pred_fallthru
      _
    // Predicated region
    $region14: #{tpu_custom_call.1} parent=1 // pred_check
      _
    $region15: #{tpu_custom_call.1} parent=1 // pred_check_branch
      %35 = sbr.rel (0) target = $region17
    $region16: #{tpu_custom_call.1} parent=1 // pred_region
      _
    $region17: #{tpu_custom_call.1} parent=1 // pred_fallthru
      _
    // Predicated region
    $region18: #{tpu_custom_call.1} parent=1 // pred_check
      _
    $region19: #{tpu_custom_call.1} parent=1 // pred_check_branch
      %37 = sbr.rel (0) target = $region21
    $region20: #{tpu_custom_call.1} parent=1 // pred_region
      %39 = vsyncadd [#allocation3], 0
      %s40 = sshll.u32 %s4, 4
      %s41 = int_to_ptr.hbm [resolvable:$true] %s40
      %s42 = sshll.u32 [#allocation2], 4
      %s43 = int_to_ptr.vmem [resolvable:$true] %s42
      %48 = dma.hbm_to_vmem [thread:$0]  %s41, 1024, %s43, [#allocation3], 64, 64, 4
    $region21: #{tpu_custom_call.1} parent=1 // pred_fallthru
      _
    // Predicated region
    $region22: #{tpu_custom_call.1} parent=1 // pred_check
      _
    $region23: #{tpu_custom_call.1} parent=1 // pred_check_branch
      %50 = sbr.rel (0) target = $region25
    $region24: #{tpu_custom_call.1} parent=1 // pred_region
      %52 = vsyncadd [#allocation6], 0
      %s53 = sshll.u32 %s5, 4
      %s54 = int_to_ptr.hbm [resolvable:$true] %s53
      %s55 = sshll.u32 [#allocation5], 4
      %s56 = int_to_ptr.vmem [resolvable:$true] %s55
      %61 = dma.hbm_to_vmem [thread:$0]  %s54, 1024, %s56, [#allocation6], 64, 64, 4
    $region25: #{tpu_custom_call.1} parent=1 // pred_fallthru
      _
    // Predicated region
    $region26: #{tpu_custom_call.1} parent=1 // pred_check
      _
    $region27: #{tpu_custom_call.1} parent=1 // pred_check_branch
      %63 = sbr.rel (0) target = $region29
    $region28: #{tpu_custom_call.1} parent=1 // pred_region
      _
    $region29: #{tpu_custom_call.1} parent=1 // pred_fallthru
      _
    // Predicated region
    $region30: #{tpu_custom_call.1} parent=1 // pred_check
      _
    $region31: #{tpu_custom_call.1} parent=1 // pred_check_branch
      %65 = sbr.rel (0) target = $region33
    $region32: #{tpu_custom_call.1} parent=1 // pred_region
      %67 = vsyncadd [#allocation6], 0
      %s68 = sshll.u32 %s7, 4
      %s69 = int_to_ptr.hbm [resolvable:$true] %s68
      %s70 = sshll.u32 [#allocation7], 4
      %s71 = int_to_ptr.vmem [resolvable:$true] %s70
      %76 = dma.hbm_to_vmem [thread:$0]  %s69, 1024, %s71, [#allocation6], 64, 64, 4
    $region33: #{tpu_custom_call.1} parent=1 // pred_fallthru
      _
    // Predicated region
    $region34: #{tpu_custom_call.1} parent=1 // pred_check
      _
    $region35: #{tpu_custom_call.1} parent=1 // pred_check_branch
      %78 = sbr.rel (0) target = $region37
    $region36: #{tpu_custom_call.1} parent=1 // pred_region
      %80 = vsyncadd [#allocation9], 0
      %s81 = sshll.u32 %s8, 4
      %s82 = int_to_ptr.hbm [resolvable:$true] %s81
      %s83 = sshll.u32 [#allocation8], 4
      %s84 = int_to_ptr.vmem [resolvable:$true] %s83
      %89 = dma.hbm_to_vmem [thread:$0]  %s82, 1024, %s84, [#allocation9], 64, 64, 4
    $region37: #{tpu_custom_call.1} parent=1 // pred_fallthru
      _
    // Predicated region
    $region38: #{tpu_custom_call.1} parent=1 // pred_check
      _
    $region39: #{tpu_custom_call.1} parent=1 // pred_check_branch
      %91 = sbr.rel (0) target = $region41
    $region40: #{tpu_custom_call.1} parent=1 // pred_region
      _
    $region41: #{tpu_custom_call.1} parent=1 // pred_fallthru
      _
    // Predicated region
    $region42: #{tpu_custom_call.1} parent=1 // pred_check
      _
    $region43: #{tpu_custom_call.1} parent=1 // pred_check_branch
      %93 = sbr.rel (0) target = $region45
    $region44: #{tpu_custom_call.1} parent=1 // pred_region
      %95 = vsyncadd [#allocation9], 0
      %s96 = sshll.u32 %s10, 4
      %s97 = int_to_ptr.hbm [resolvable:$true] %s96
      %s98 = sshll.u32 [#allocation10], 4
      %s99 = int_to_ptr.vmem [resolvable:$true] %s98
      %104 = dma.hbm_to_vmem [thread:$0]  %s97, 8192, %s99, [#allocation9], 512, 512, 32
    $region45: #{tpu_custom_call.1} parent=1 // pred_fallthru
      _
    // Predicated region
    $region46: #{tpu_custom_call.1} parent=1 // pred_check
      _
    $region47: #{tpu_custom_call.1} parent=1 // pred_check_branch
      %106 = sbr.rel (0) target = $region49
    $region48: #{tpu_custom_call.1} parent=1 // pred_region
      %108 = vsyncadd [#allocation12], 0
      %s109 = sshll.u32 %s11, 4
      %s110 = int_to_ptr.hbm [resolvable:$true] %s109
      %s111 = sshll.u32 [#allocation11], 4
      %s112 = int_to_ptr.vmem [resolvable:$true] %s111
      %117 = dma.hbm_to_vmem [thread:$0]  %s110, 8192, %s112, [#allocation12], 512, 512, 32
    $region49: #{tpu_custom_call.1} parent=1 // pred_fallthru
      _
    // Predicated region
    $region50: #{tpu_custom_call.1} parent=1 // pred_check
      _
    $region51: #{tpu_custom_call.1} parent=1 // pred_check_branch
      %119 = sbr.rel (0) target = $region53
    $region52: #{tpu_custom_call.1} parent=1 // pred_region
      _
    $region53: #{tpu_custom_call.1} parent=1 // pred_fallthru
      _
    // Predicated region
    $region54: #{tpu_custom_call.1} parent=1 // pred_check
      _
    $region55: #{tpu_custom_call.1} parent=1 // pred_check_branch
      %121 = sbr.rel (0) target = $region57
    $region56: #{tpu_custom_call.1} parent=1 // pred_region
      %123 = vsyncadd [#allocation12], 0
      %s124 = sshll.u32 %s13, 4
      %s125 = int_to_ptr.hbm [resolvable:$true] %s124
      %s126 = sshll.u32 [#allocation13], 4
      %s127 = int_to_ptr.vmem [resolvable:$true] %s126
      %132 = dma.hbm_to_vmem [thread:$0]  %s125, 32768, %s127, [#allocation12], 256, 256, 16
    $region57: #{tpu_custom_call.1} parent=1 // pred_fallthru
      _
    // Predicated region
    $region58: #{tpu_custom_call.1} parent=1 // pred_check
      _
    $region59: #{tpu_custom_call.1} parent=1 // pred_check_branch
      %134 = sbr.rel (0) target = $region61
    $region60: #{tpu_custom_call.1} parent=1 // pred_region
      _
    $region61: #{tpu_custom_call.1} parent=1 // pred_fallthru
      _
    // Predicated region
    $region62: #{tpu_custom_call.1} parent=1 // pred_check
      _
    $region63: #{tpu_custom_call.1} parent=1 // pred_check_branch
      %136 = sbr.rel (0) target = $region65
    $region64: #{tpu_custom_call.1} parent=1 // pred_region
      %138 = vsyncadd [#allocation15], 0
      %s139 = sshll.u32 %s15, 4
      %s140 = int_to_ptr.hbm [resolvable:$true] %s139
      %s141 = sshll.u32 [#allocation14], 4
      %s142 = int_to_ptr.vmem [resolvable:$true] %s141
      %147 = dma.hbm_to_vmem [thread:$0]  %s140, 4096, %s142, [#allocation15], 64, 64, 4
    $region65: #{tpu_custom_call.1} parent=1 // pred_fallthru
      _
    // Predicated region
    $region66: #{tpu_custom_call.1} parent=1 // pred_check
      _
    $region67: #{tpu_custom_call.1} parent=1 // pred_check_branch
      %149 = sbr.rel (0) target = $region69
    $region68: #{tpu_custom_call.1} parent=1 // pred_region
      _
    $region69: #{tpu_custom_call.1} parent=1 // pred_fallthru
      _
    // Predicated region
    $region70: #{tpu_custom_call.1} parent=1 // pred_check
      _
    $region71: #{tpu_custom_call.1} parent=1 // pred_check_branch
      %151 = sbr.rel (0) target = $region73
    $region72: #{tpu_custom_call.1} parent=1 // pred_region
      %153 = dma.done [#allocation3], 1024
    $region73: #{tpu_custom_call.1} parent=1 // pred_fallthru
      _
    // Predicated region
    $region74: #{tpu_custom_call.1} parent=1 // pred_check
      _
    $region75: #{tpu_custom_call.1} parent=1 // pred_check_branch
      %155 = sbr.rel (0) target = $region77
    $region76: #{tpu_custom_call.1} parent=1 // pred_region
      %157 = dma.done [#allocation6], 1024
    $region77: #{tpu_custom_call.1} parent=1 // pred_fallthru
      _
    // Predicated region
    $region78: #{tpu_custom_call.1} parent=1 // pred_check
      _
    $region79: #{tpu_custom_call.1} parent=1 // pred_check_branch
      %159 = sbr.rel (0) target = $region81
    $region80: #{tpu_custom_call.1} parent=1 // pred_region
      %161 = dma.done [#allocation6], 1024
    $region81: #{tpu_custom_call.1} parent=1 // pred_fallthru
      _
    // Predicated region
    $region82: #{tpu_custom_call.1} parent=1 // pred_check
      _
    $region83: #{tpu_custom_call.1} parent=1 // pred_check_branch
      %163 = sbr.rel (0) target = $region85
    $region84: #{tpu_custom_call.1} parent=1 // pred_region
      %165 = dma.done [#allocation9], 1024
    $region85: #{tpu_custom_call.1} parent=1 // pred_fallthru
      _
    // Predicated region
    $region86: #{tpu_custom_call.1} parent=1 // pred_check
      _
    $region87: #{tpu_custom_call.1} parent=1 // pred_check_branch
      %167 = sbr.rel (0) target = $region89
    $region88: #{tpu_custom_call.1} parent=1 // pred_region
      %169 = dma.done [#allocation9], 8192
    $region89: #{tpu_custom_call.1} parent=1 // pred_fallthru
      _
    // Predicated region
    $region90: #{tpu_custom_call.1} parent=1 // pred_check
      _
    $region91: #{tpu_custom_call.1} parent=1 // pred_check_branch
      %171 = sbr.rel (0) target = $region93
    $region92: #{tpu_custom_call.1} parent=1 // pred_region
      %173 = dma.done [#allocation12], 8192
    $region93: #{tpu_custom_call.1} parent=1 // pred_fallthru
      _
    // Predicated region
    $region94: #{tpu_custom_call.1} parent=1 // pred_check
      _
    $region95: #{tpu_custom_call.1} parent=1 // pred_check_branch
      %175 = sbr.rel (0) target = $region97
    $region96: #{tpu_custom_call.1} parent=1 // pred_region
      %177 = dma.done [#allocation12], 32768
    $region97: #{tpu_custom_call.1} parent=1 // pred_fallthru
      _
    // Predicated region
    $region98: #{tpu_custom_call.1} parent=1 // pred_check
      _
    $region99: #{tpu_custom_call.1} parent=1 // pred_check_branch
      %179 = sbr.rel (0) target = $region101
    $region100: #{tpu_custom_call.1} parent=1 // pred_region
      %181 = dma.done [#allocation15], 4096
    $region101: #{tpu_custom_call.1} parent=1 // pred_fallthru
      _
    %v184 = vlaneseq
    %v185 = vshrl.u32 %v184, 7
    %v186 = vadd.s32 %v185, 8
    %v187 = vadd.s32 %v185, 16
    %v188 = vadd.s32 %v185, 24
    %v189 = vlaneseq
    %v190 = vand.u32 %v189, 127
    %v191 = vxor.u32 %v185, %v190
    %v192 = vxor.u32 %v186, %v190
    %v193 = vxor.u32 %v187, %v190
    %v194 = vxor.u32 %v188, %v190
    %vm195 = vcmp.ge.s32.totalorder %v191, 16
    %vm196 = vcmp.ge.s32.totalorder %v192, 16
    %vm197 = vcmp.ge.s32.totalorder %v193, 16
    %vm198 = vcmp.ge.s32.totalorder %v194, 16
    %vm199 = vcmp.eq.s32.totalorder %v191, 0
    %vm200 = vcmp.eq.s32.totalorder %v192, 0
    %vm201 = vcmp.eq.s32.totalorder %v193, 0
    %vm202 = vcmp.eq.s32.totalorder %v194, 0
    %vm203 = vmor %vm195, %vm199
    %vm204 = vmor %vm196, %vm200
    %vm205 = vmor %vm197, %vm201
    %vm206 = vmor %vm198, %vm202
    %v207 = vld [vmem:[%s0] sm:$0xff]
    %v208 = vld [vmem:[%s0 + $0x8] sm:$0xff]
    %v209 = vld [vmem:[%s0 + $0x10] sm:$0xff]
    %v210 = vld [vmem:[%s0 + $0x18] sm:$0xff]
    %v211 = vpack.c.bf16 %v208, %v207
    %v212 = vpack.c.bf16 %v210, %v209
    %vm213 = vcmask 23552
    %v215 = vsel %vm213, %v211, 0
    %v218 = vsel %vm213, %v212, 0
    %220 = vmatpush.bf16.xpose.msra.mxu0 0
    %221 = vmatpush.bf16.xpose.msra.mxu0 0
    %222 = vmatpush.bf16.xpose.msra.mxu0 0
    %223 = vmatpush.bf16.xpose.msra.mxu0 0
    %224 = vmatpush.bf16.xpose.msra.mxu0 0
    %225 = vmatpush.bf16.xpose.msra.mxu0 0
    %226 = vmatpush.bf16.xpose.msra.mxu0 %v218
    %227 = vmatpush.bf16.xpose.msra.mxu0 %v215
    %228 = vmatmul.bf16.gmra.mxu0 %v215
    %v229 = vpop.f32.mrf.mxu0
    %v230 = vadd.f32 0.0, %v229
    %v231 = vpop.f32.mrf.mxu0
    %v232 = vadd.f32 0.0, %v231
    %233 = vmatmul.bf16.gmra.mxu0 %v218
    %v234 = vpop.f32.mrf.mxu0
    %v235 = vadd.f32 0.0, %v234
    %v236 = vpop.f32.mrf.mxu0
    %v237 = vadd.f32 0.0, %v236
    %238 = vdwg.mxu0
    %v239 = vmul.f32 %v207, %v207
    %v240 = vmul.f32 %v208, %v208
    %v241 = vmul.f32 %v209, %v209
    %v242 = vmul.f32 %v210, %v210
    %v243 = vpack.c.bf16 %v240, %v239
    %v244 = vpack.c.bf16 %v242, %v241
    %v246 = vsel %vm213, 1065369472, 0
    %v249 = vsel %vm213, %v243, 0
    %v252 = vsel %vm213, %v244, 0
    %254 = vmatpush.bf16.xpose.msra.mxu0 0
    %255 = vmatpush.bf16.xpose.msra.mxu0 0
    %256 = vmatpush.bf16.xpose.msra.mxu0 0
    %257 = vmatpush.bf16.xpose.msra.mxu0 0
    %258 = vmatpush.bf16.xpose.msra.mxu0 0
    %259 = vmatpush.bf16.xpose.msra.mxu0 0
    %260 = vmatpush.bf16.xpose.msra.mxu0 %v252
    %261 = vmatpush.bf16.xpose.msra.mxu0 %v249
    %262 = vmatmul.bf16.gmra.mxu0 %v246
    %v263 = vpop.f32.mrf.mxu0
    %v264 = vadd.f32 0.0, %v263
    %v265 = vpop.f32.mrf.mxu0
    %266 = vdwg.mxu0
    %v267 = vmul.f32 %v230, 2.0
    %v268 = vmul.f32 %v232, 2.0
    %v269 = vmul.f32 %v235, 2.0
    %v270 = vmul.f32 %v237, 2.0
    %v271 = vperm.slane %v264, 0
    %v272 = vsub.f32 %v271, %v267
    %v273 = vsub.f32 %v271, %v268
    %v274 = vsub.f32 %v271, %v269
    %v275 = vsub.f32 %v271, %v270
    %v276 = vsel %vm203, inf, %v272
    %v277 = vsel %vm204, inf, %v273
    %v278 = vsel %vm205, inf, %v274
    %v279 = vsel %vm206, inf, %v275
    %v280 = vld [vmem:[%s1] sm:$0x3]
    %v281 = vld [vmem:[%s3] sm:$0x1]
    %v283 = vperm.slane %v281, 0
    %vm285 = vcmask 1040384
    %vm286 = vcmask 1041408
    %v287 = vsel %vm285, 4294967295, 65535
    %v288 = vsel %vm286, %v287, 0
    %v290 = vand.u32 %v280, %v288
    %292 = vmatpush.bf16.msra.mxu0 0
    %293 = vmatpush.bf16.msra.mxu0 0
    %294 = vmatpush.bf16.msra.mxu0 0
    %295 = vmatpush.bf16.msra.mxu0 0
    %296 = vmatpush.bf16.msra.mxu0 0
    %297 = vmatpush.bf16.msra.mxu0 0
    %298 = vmatpush.bf16.msra.mxu0 0
    %299 = vmatpush.bf16.msra.mxu0 %v290
    %300 = vmatmul.bf16.gmra.mxu0 %v215
    %v301 = vpop.f32.mrf.mxu0
    %v302 = vadd.f32 %v283, %v301
    %v303 = vpop.f32.mrf.mxu0
    %v304 = vadd.f32 %v283, %v303
    %305 = vmatmul.bf16.gmra.mxu0 %v218
    %v306 = vpop.f32.mrf.mxu0
    %v307 = vadd.f32 %v283, %v306
    %v308 = vpop.f32.mrf.mxu0
    %v309 = vadd.f32 %v283, %v308
    %310 = vdwg.mxu0
    %vm311 = vcmask 261120
    %v312 = vsel %vm311, %v276, inf
    %313 = vmin.xlane.f32.xlu0 %v312
    %v314 = vpop.xlane.xlu0 %313
    %v315 = vsel %vm311, %v277, inf
    %316 = vmin.xlane.f32.xlu0 %v315
    %v317 = vpop.xlane.xlu0 %316
    %v318 = vsel %vm311, %v278, inf
    %319 = vmin.xlane.f32.xlu0 %v318
    %v320 = vpop.xlane.xlu0 %319
    %v321 = vsel %vm311, %v279, inf
    %322 = vmin.xlane.f32.xlu0 %v321
    %v323 = vpop.xlane.xlu0 %322
    %vm324 = vcmp.eq.f32.partialorder %v276, %v314
    %vm325 = vcmp.eq.f32.partialorder %v277, %v317
    %vm326 = vcmp.eq.f32.partialorder %v278, %v320
    %vm327 = vcmp.eq.f32.partialorder %v279, %v323
    %v328 = vsel %vm324, %v190, 32
    %v329 = vsel %vm325, %v190, 32
    %v330 = vsel %vm326, %v190, 32
    %v331 = vsel %vm327, %v190, 32
    %v332 = vsel %vm311, %v328, 2147483647
    %v333 = vand.u32 %v332, 65535
    %v334 = vshra.s32 %v332, 16
    %v335 = vcvt.s32.f32 %v333
    %v336 = vcvt.s32.f32 %v334
    %337 = vmin.xlane.f32.xlu0 %v336
    %v338 = vpop.xlane.xlu0 %337
    %vm339 = vcmp.eq.f32.partialorder %v336, %v338
    %v340 = vsel %vm339, %v335, inf
    %341 = vmin.xlane.f32.xlu0 %v340
    %v342 = vpop.xlane.xlu0 %341
    %v343 = vcvt.f32.s32 %v342
    %v344 = vcvt.f32.s32 %v338
    %v345 = vshll.u32 %v344, 16
    %v346 = vadd.s32 %v345, %v343
    %v347 = vsel %vm311, %v329, 2147483647
    %v348 = vand.u32 %v347, 65535
    %v349 = vshra.s32 %v347, 16
    %v350 = vcvt.s32.f32 %v348
    %v351 = vcvt.s32.f32 %v349
    %352 = vmin.xlane.f32.xlu0 %v351
    %v353 = vpop.xlane.xlu0 %352
    %vm354 = vcmp.eq.f32.partialorder %v351, %v353
    %v355 = vsel %vm354, %v350, inf
    %356 = vmin.xlane.f32.xlu0 %v355
    %v357 = vpop.xlane.xlu0 %356
    %v358 = vcvt.f32.s32 %v357
    %v359 = vcvt.f32.s32 %v353
    %v360 = vshll.u32 %v359, 16
    %v361 = vadd.s32 %v360, %v358
    %v362 = vsel %vm311, %v330, 2147483647
    %v363 = vand.u32 %v362, 65535
    %v364 = vshra.s32 %v362, 16
    %v365 = vcvt.s32.f32 %v363
    %v366 = vcvt.s32.f32 %v364
    %367 = vmin.xlane.f32.xlu0 %v366
    %v368 = vpop.xlane.xlu0 %367
    %vm369 = vcmp.eq.f32.partialorder %v366, %v368
    %v370 = vsel %vm369, %v365, inf
    %371 = vmin.xlane.f32.xlu0 %v370
    %v372 = vpop.xlane.xlu0 %371
    %v373 = vcvt.f32.s32 %v372
    %v374 = vcvt.f32.s32 %v368
    %v375 = vshll.u32 %v374, 16
    %v376 = vadd.s32 %v375, %v373
    %v377 = vsel %vm311, %v331, 2147483647
    %v378 = vand.u32 %v377, 65535
    %v379 = vshra.s32 %v377, 16
    %v380 = vcvt.s32.f32 %v378
    %v381 = vcvt.s32.f32 %v379
    %382 = vmin.xlane.f32.xlu0 %v381
    %v383 = vpop.xlane.xlu0 %382
    %vm384 = vcmp.eq.f32.partialorder %v381, %v383
    %v385 = vsel %vm384, %v380, inf
    %386 = vmin.xlane.f32.xlu0 %v385
    %v387 = vpop.xlane.xlu0 %386
    %v388 = vcvt.f32.s32 %v387
    %v389 = vcvt.f32.s32 %v383
    %v390 = vshll.u32 %v389, 16
    %v391 = vadd.s32 %v390, %v388
    %vm392 = vcmp.eq.s32.totalorder %v190, %v346
    %vm393 = vcmp.eq.s32.totalorder %v190, %v361
    %vm394 = vcmp.eq.s32.totalorder %v190, %v376
    %vm395 = vcmp.eq.s32.totalorder %v190, %v391
    %v396 = vsel %vm392, 1, 0
    %v397 = vsel %vm393, 1, 0
    %v398 = vsel %vm394, 1, 0
    %v399 = vsel %vm395, 1, 0
    %v400 = vcvt.s32.f32 %v396
    %v401 = vcvt.s32.f32 %v397
    %v402 = vcvt.s32.f32 %v398
    %v403 = vcvt.s32.f32 %v399
    %v404 = vpack.c.bf16 %v401, %v400
    %v405 = vpack.c.bf16 %v403, %v402
    %v407 = vsel %vm311, %v404, 0
    %v410 = vsel %vm311, %v405, 0
    %412 = vmatpush.bf16.msra.mxu0 0
    %413 = vmatpush.bf16.msra.mxu0 0
    %414 = vmatpush.bf16.msra.mxu0 0
    %415 = vmatpush.bf16.msra.mxu0 0
    %416 = vmatpush.bf16.msra.mxu0 0
    %417 = vmatpush.bf16.msra.mxu0 0
    %418 = vmatpush.bf16.msra.mxu0 %v212
    %419 = vmatpush.bf16.msra.mxu0 %v211
    %420 = vmatmul.bf16.gmra.mxu0 %v407
    %v421 = vpop.f32.mrf.mxu0
    %v422 = vadd.f32 0.0, %v421
    %v423 = vpop.f32.mrf.mxu0
    %v424 = vadd.f32 0.0, %v423
    %425 = vmatmul.bf16.gmra.mxu0 %v410
    %v426 = vpop.f32.mrf.mxu0
    %v427 = vadd.f32 0.0, %v426
    %v428 = vpop.f32.mrf.mxu0
    %v429 = vadd.f32 0.0, %v428
    %430 = vdwg.mxu0
    %v431 = vpack.c.bf16 %v424, %v422
    %v432 = vpack.c.bf16 %v429, %v427
    %v433 = vld [vmem:[%s2] sm:$0x3]
    %v435 = vsel %vm213, %v431, 0
    %v438 = vsel %vm213, %v432, 0
    %v441 = vand.u32 %v433, %v288
    %443 = vmatpush.bf16.msra.mxu0 0
    %444 = vmatpush.bf16.msra.mxu0 0
    %445 = vmatpush.bf16.msra.mxu0 0
    %446 = vmatpush.bf16.msra.mxu0 0
    %447 = vmatpush.bf16.msra.mxu0 0
    %448 = vmatpush.bf16.msra.mxu0 0
    %449 = vmatpush.bf16.msra.mxu0 0
    %450 = vmatpush.bf16.msra.mxu0 %v441
    %451 = vmatmul.bf16.gmra.mxu0 %v435
    %v452 = vpop.f32.mrf.mxu0
    %v453 = vadd.f32 0.0, %v452
    %v454 = vpop.f32.mrf.mxu0
    %v455 = vadd.f32 0.0, %v454
    %456 = vmatmul.bf16.gmra.mxu0 %v438
    %v457 = vpop.f32.mrf.mxu0
    %v458 = vadd.f32 0.0, %v457
    %v459 = vpop.f32.mrf.mxu0
    %v460 = vadd.f32 0.0, %v459
    %461 = vdwg.mxu0
    %v462 = vsel %vm392, inf, %v276
    %v463 = vsel %vm393, inf, %v277
    %v464 = vsel %vm394, inf, %v278
    %v465 = vsel %vm395, inf, %v279
    %v466 = vsel %vm311, %v462, inf
    %467 = vmin.xlane.f32.xlu0 %v466
    %v468 = vpop.xlane.xlu0 %467
    %v469 = vsel %vm311, %v463, inf
    %470 = vmin.xlane.f32.xlu0 %v469
    %v471 = vpop.xlane.xlu0 %470
    %v472 = vsel %vm311, %v464, inf
    %473 = vmin.xlane.f32.xlu0 %v472
    %v474 = vpop.xlane.xlu0 %473
    %v475 = vsel %vm311, %v465, inf
    %476 = vmin.xlane.f32.xlu0 %v475
    %v477 = vpop.xlane.xlu0 %476
    %vm478 = vcmp.eq.f32.partialorder %v462, %v468
    %vm479 = vcmp.eq.f32.partialorder %v463, %v471
    %vm480 = vcmp.eq.f32.partialorder %v464, %v474
    %vm481 = vcmp.eq.f32.partialorder %v465, %v477
    %v482 = vsel %vm478, %v190, 32
    %v483 = vsel %vm479, %v190, 32
    %v484 = vsel %vm480, %v190, 32
    %v485 = vsel %vm481, %v190, 32
    %v486 = vsel %vm311, %v482, 2147483647
    %v487 = vand.u32 %v486, 65535
    %v488 = vshra.s32 %v486, 16
    %v489 = vcvt.s32.f32 %v487
    %v490 = vcvt.s32.f32 %v488
    %491 = vmin.xlane.f32.xlu0 %v490
    %v492 = vpop.xlane.xlu0 %491
    %vm493 = vcmp.eq.f32.partialorder %v490, %v492
    %v494 = vsel %vm493, %v489, inf
    %495 = vmin.xlane.f32.xlu0 %v494
    %v496 = vpop.xlane.xlu0 %495
    %v497 = vcvt.f32.s32 %v496
    %v498 = vcvt.f32.s32 %v492
    %v499 = vshll.u32 %v498, 16
    %v500 = vadd.s32 %v499, %v497
    %v501 = vsel %vm311, %v483, 2147483647
    %v502 = vand.u32 %v501, 65535
    %v503 = vshra.s32 %v501, 16
    %v504 = vcvt.s32.f32 %v502
    %v505 = vcvt.s32.f32 %v503
    %506 = vmin.xlane.f32.xlu0 %v505
    %v507 = vpop.xlane.xlu0 %506
    %vm508 = vcmp.eq.f32.partialorder %v505, %v507
    %v509 = vsel %vm508, %v504, inf
    %510 = vmin.xlane.f32.xlu0 %v509
    %v511 = vpop.xlane.xlu0 %510
    %v512 = vcvt.f32.s32 %v511
    %v513 = vcvt.f32.s32 %v507
    %v514 = vshll.u32 %v513, 16
    %v515 = vadd.s32 %v514, %v512
    %v516 = vsel %vm311, %v484, 2147483647
    %v517 = vand.u32 %v516, 65535
    %v518 = vshra.s32 %v516, 16
    %v519 = vcvt.s32.f32 %v517
    %v520 = vcvt.s32.f32 %v518
    %521 = vmin.xlane.f32.xlu0 %v520
    %v522 = vpop.xlane.xlu0 %521
    %vm523 = vcmp.eq.f32.partialorder %v520, %v522
    %v524 = vsel %vm523, %v519, inf
    %525 = vmin.xlane.f32.xlu0 %v524
    %v526 = vpop.xlane.xlu0 %525
    %v527 = vcvt.f32.s32 %v526
    %v528 = vcvt.f32.s32 %v522
    %v529 = vshll.u32 %v528, 16
    %v530 = vadd.s32 %v529, %v527
    %v531 = vsel %vm311, %v485, 2147483647
    %v532 = vand.u32 %v531, 65535
    %v533 = vshra.s32 %v531, 16
    %v534 = vcvt.s32.f32 %v532
    %v535 = vcvt.s32.f32 %v533
    %536 = vmin.xlane.f32.xlu0 %v535
    %v537 = vpop.xlane.xlu0 %536
    %vm538 = vcmp.eq.f32.partialorder %v535, %v537
    %v539 = vsel %vm538, %v534, inf
    %540 = vmin.xlane.f32.xlu0 %v539
    %v541 = vpop.xlane.xlu0 %540
    %v542 = vcvt.f32.s32 %v541
    %v543 = vcvt.f32.s32 %v537
    %v544 = vshll.u32 %v543, 16
    %v545 = vadd.s32 %v544, %v542
    %vm546 = vcmp.eq.s32.totalorder %v190, %v500
    %vm547 = vcmp.eq.s32.totalorder %v190, %v515
    %vm548 = vcmp.eq.s32.totalorder %v190, %v530
    %vm549 = vcmp.eq.s32.totalorder %v190, %v545
    %v550 = vsel %vm546, 1, 0
    %v551 = vsel %vm547, 1, 0
    %v552 = vsel %vm548, 1, 0
    %v553 = vsel %vm549, 1, 0
    %v554 = vcvt.s32.f32 %v550
    %v555 = vcvt.s32.f32 %v551
    %v556 = vcvt.s32.f32 %v552
    %v557 = vcvt.s32.f32 %v553
    %v558 = vpack.c.bf16 %v555, %v554
    %v559 = vpack.c.bf16 %v557, %v556
    %v561 = vsel %vm311, %v558, 0
    %v564 = vsel %vm311, %v559, 0
    %566 = vmatpush.bf16.msra.mxu0 0
    %567 = vmatpush.bf16.msra.mxu0 0
    %568 = vmatpush.bf16.msra.mxu0 0
    %569 = vmatpush.bf16.msra.mxu0 0
    %570 = vmatpush.bf16.msra.mxu0 0
    %571 = vmatpush.bf16.msra.mxu0 0
    %572 = vmatpush.bf16.msra.mxu0 %v212
    %573 = vmatpush.bf16.msra.mxu0 %v211
    %574 = vmatmul.bf16.gmra.mxu0 %v561
    %v575 = vpop.f32.mrf.mxu0
    %v576 = vadd.f32 0.0, %v575
    %v577 = vpop.f32.mrf.mxu0
    %v578 = vadd.f32 0.0, %v577
    %579 = vmatmul.bf16.gmra.mxu0 %v564
    %v580 = vpop.f32.mrf.mxu0
    %v581 = vadd.f32 0.0, %v580
    %v582 = vpop.f32.mrf.mxu0
    %v583 = vadd.f32 0.0, %v582
    %584 = vdwg.mxu0
    %v585 = vpack.c.bf16 %v578, %v576
    %v586 = vpack.c.bf16 %v583, %v581
    %v588 = vsel %vm213, %v585, 0
    %v591 = vsel %vm213, %v586, 0
    %593 = vmatpush.bf16.msra.mxu0 0
    %594 = vmatpush.bf16.msra.mxu0 0
    %595 = vmatpush.bf16.msra.mxu0 0
    %596 = vmatpush.bf16.msra.mxu0 0
    %597 = vmatpush.bf16.msra.mxu0 0
    %598 = vmatpush.bf16.msra.mxu0 0
    %599 = vmatpush.bf16.msra.mxu0 0
    %600 = vmatpush.bf16.msra.mxu0 %v441
    %601 = vmatmul.bf16.gmra.mxu0 %v588
    %v602 = vpop.f32.mrf.mxu0
    %v603 = vadd.f32 0.0, %v602
    %v604 = vpop.f32.mrf.mxu0
    %v605 = vadd.f32 0.0, %v604
    %606 = vmatmul.bf16.gmra.mxu0 %v591
    %v607 = vpop.f32.mrf.mxu0
    %v608 = vadd.f32 0.0, %v607
    %v609 = vpop.f32.mrf.mxu0
    %v610 = vadd.f32 0.0, %v609
    %611 = vdwg.mxu0
    %v612 = vmax.f32 %v453, %v603
    %v613 = vmax.f32 %v455, %v605
    %v614 = vmax.f32 %v458, %v608
    %v615 = vmax.f32 %v460, %v610
    %v616 = vsel %vm546, inf, %v462
    %v617 = vsel %vm547, inf, %v463
    %v618 = vsel %vm548, inf, %v464
    %v619 = vsel %vm549, inf, %v465
    %v620 = vsel %vm311, %v616, inf
    %621 = vmin.xlane.f32.xlu0 %v620
    %v622 = vpop.xlane.xlu0 %621
    %v623 = vsel %vm311, %v617, inf
    %624 = vmin.xlane.f32.xlu0 %v623
    %v625 = vpop.xlane.xlu0 %624
    %v626 = vsel %vm311, %v618, inf
    %627 = vmin.xlane.f32.xlu0 %v626
    %v628 = vpop.xlane.xlu0 %627
    %v629 = vsel %vm311, %v619, inf
    %630 = vmin.xlane.f32.xlu0 %v629
    %v631 = vpop.xlane.xlu0 %630
    %vm632 = vcmp.eq.f32.partialorder %v616, %v622
    %vm633 = vcmp.eq.f32.partialorder %v617, %v625
    %vm634 = vcmp.eq.f32.partialorder %v618, %v628
    %vm635 = vcmp.eq.f32.partialorder %v619, %v631
    %v636 = vsel %vm632, %v190, 32
    %v637 = vsel %vm633, %v190, 32
    %v638 = vsel %vm634, %v190, 32
    %v639 = vsel %vm635, %v190, 32
    %v640 = vsel %vm311, %v636, 2147483647
    %v641 = vand.u32 %v640, 65535
    %v642 = vshra.s32 %v640, 16
    %v643 = vcvt.s32.f32 %v641
    %v644 = vcvt.s32.f32 %v642
    %645 = vmin.xlane.f32.xlu0 %v644
    %v646 = vpop.xlane.xlu0 %645
    %vm647 = vcmp.eq.f32.partialorder %v644, %v646
    %v648 = vsel %vm647, %v643, inf
    %649 = vmin.xlane.f32.xlu0 %v648
    %v650 = vpop.xlane.xlu0 %649
    %v651 = vcvt.f32.s32 %v650
    %v652 = vcvt.f32.s32 %v646
    %v653 = vshll.u32 %v652, 16
    %v654 = vadd.s32 %v653, %v651
    %v655 = vsel %vm311, %v637, 2147483647
    %v656 = vand.u32 %v655, 65535
    %v657 = vshra.s32 %v655, 16
    %v658 = vcvt.s32.f32 %v656
    %v659 = vcvt.s32.f32 %v657
    %660 = vmin.xlane.f32.xlu0 %v659
    %v661 = vpop.xlane.xlu0 %660
    %vm662 = vcmp.eq.f32.partialorder %v659, %v661
    %v663 = vsel %vm662, %v658, inf
    %664 = vmin.xlane.f32.xlu0 %v663
    %v665 = vpop.xlane.xlu0 %664
    %v666 = vcvt.f32.s32 %v665
    %v667 = vcvt.f32.s32 %v661
    %v668 = vshll.u32 %v667, 16
    %v669 = vadd.s32 %v668, %v666
    %v670 = vsel %vm311, %v638, 2147483647
    %v671 = vand.u32 %v670, 65535
    %v672 = vshra.s32 %v670, 16
    %v673 = vcvt.s32.f32 %v671
    %v674 = vcvt.s32.f32 %v672
    %675 = vmin.xlane.f32.xlu0 %v674
    %v676 = vpop.xlane.xlu0 %675
    %vm677 = vcmp.eq.f32.partialorder %v674, %v676
    %v678 = vsel %vm677, %v673, inf
    %679 = vmin.xlane.f32.xlu0 %v678
    %v680 = vpop.xlane.xlu0 %679
    %v681 = vcvt.f32.s32 %v680
    %v682 = vcvt.f32.s32 %v676
    %v683 = vshll.u32 %v682, 16
    %v684 = vadd.s32 %v683, %v681
    %v685 = vsel %vm311, %v639, 2147483647
    %v686 = vand.u32 %v685, 65535
    %v687 = vshra.s32 %v685, 16
    %v688 = vcvt.s32.f32 %v686
    %v689 = vcvt.s32.f32 %v687
    %690 = vmin.xlane.f32.xlu0 %v689
    %v691 = vpop.xlane.xlu0 %690
    %vm692 = vcmp.eq.f32.partialorder %v689, %v691
    %v693 = vsel %vm692, %v688, inf
    %694 = vmin.xlane.f32.xlu0 %v693
    %v695 = vpop.xlane.xlu0 %694
    %v696 = vcvt.f32.s32 %v695
    %v697 = vcvt.f32.s32 %v691
    %v698 = vshll.u32 %v697, 16
    %v699 = vadd.s32 %v698, %v696
    %vm700 = vcmp.eq.s32.totalorder %v190, %v654
    %vm701 = vcmp.eq.s32.totalorder %v190, %v669
    %vm702 = vcmp.eq.s32.totalorder %v190, %v684
    %vm703 = vcmp.eq.s32.totalorder %v190, %v699
    %v704 = vsel %vm700, 1, 0
    %v705 = vsel %vm701, 1, 0
    %v706 = vsel %vm702, 1, 0
    %v707 = vsel %vm703, 1, 0
    %v708 = vcvt.s32.f32 %v704
    %v709 = vcvt.s32.f32 %v705
    %v710 = vcvt.s32.f32 %v706
    %v711 = vcvt.s32.f32 %v707
    %v712 = vpack.c.bf16 %v709, %v708
    %v713 = vpack.c.bf16 %v711, %v710
    %v715 = vsel %vm311, %v712, 0
    %v718 = vsel %vm311, %v713, 0
    %720 = vmatpush.bf16.msra.mxu0 0
    %721 = vmatpush.bf16.msra.mxu0 0
    %722 = vmatpush.bf16.msra.mxu0 0
    %723 = vmatpush.bf16.msra.mxu0 0
    %724 = vmatpush.bf16.msra.mxu0 0
    %725 = vmatpush.bf16.msra.mxu0 0
    %726 = vmatpush.bf16.msra.mxu0 %v212
    %727 = vmatpush.bf16.msra.mxu0 %v211
    %728 = vmatmul.bf16.gmra.mxu0 %v715
    %v729 = vpop.f32.mrf.mxu0
    %v730 = vadd.f32 0.0, %v729
    %v731 = vpop.f32.mrf.mxu0
    %v732 = vadd.f32 0.0, %v731
    %733 = vmatmul.bf16.gmra.mxu0 %v718
    %v734 = vpop.f32.mrf.mxu0
    %v735 = vadd.f32 0.0, %v734
    %v736 = vpop.f32.mrf.mxu0
    %v737 = vadd.f32 0.0, %v736
    %738 = vdwg.mxu0
    %v739 = vpack.c.bf16 %v732, %v730
    %v740 = vpack.c.bf16 %v737, %v735
    %v742 = vsel %vm213, %v739, 0
    %v745 = vsel %vm213, %v740, 0
    %747 = vmatpush.bf16.msra.mxu0 0
    %748 = vmatpush.bf16.msra.mxu0 0
    %749 = vmatpush.bf16.msra.mxu0 0
    %750 = vmatpush.bf16.msra.mxu0 0
    %751 = vmatpush.bf16.msra.mxu0 0
    %752 = vmatpush.bf16.msra.mxu0 0
    %753 = vmatpush.bf16.msra.mxu0 0
    %754 = vmatpush.bf16.msra.mxu0 %v441
    %755 = vmatmul.bf16.gmra.mxu0 %v742
    %v756 = vpop.f32.mrf.mxu0
    %v757 = vadd.f32 0.0, %v756
    %v758 = vpop.f32.mrf.mxu0
    %v759 = vadd.f32 0.0, %v758
    %760 = vmatmul.bf16.gmra.mxu0 %v745
    %v761 = vpop.f32.mrf.mxu0
    %v762 = vadd.f32 0.0, %v761
    %v763 = vpop.f32.mrf.mxu0
    %v764 = vadd.f32 0.0, %v763
    %765 = vdwg.mxu0
    %v766 = vmax.f32 %v612, %v757
    %v767 = vmax.f32 %v613, %v759
    %v768 = vmax.f32 %v614, %v762
    %v769 = vmax.f32 %v615, %v764
    %v770 = vsel %vm700, inf, %v616
    %v771 = vsel %vm701, inf, %v617
    %v772 = vsel %vm702, inf, %v618
    %v773 = vsel %vm703, inf, %v619
    %v774 = vsel %vm311, %v770, inf
    %775 = vmin.xlane.f32.xlu0 %v774
    %v776 = vpop.xlane.xlu0 %775
    %v777 = vsel %vm311, %v771, inf
    %778 = vmin.xlane.f32.xlu0 %v777
    %v779 = vpop.xlane.xlu0 %778
    %v780 = vsel %vm311, %v772, inf
    %781 = vmin.xlane.f32.xlu0 %v780
    %v782 = vpop.xlane.xlu0 %781
    %v783 = vsel %vm311, %v773, inf
    %784 = vmin.xlane.f32.xlu0 %v783
    %v785 = vpop.xlane.xlu0 %784
    %vm786 = vcmp.eq.f32.partialorder %v770, %v776
    %vm787 = vcmp.eq.f32.partialorder %v771, %v779
    %vm788 = vcmp.eq.f32.partialorder %v772, %v782
    %vm789 = vcmp.eq.f32.partialorder %v773, %v785
    %v790 = vsel %vm786, %v190, 32
    %v791 = vsel %vm787, %v190, 32
    %v792 = vsel %vm788, %v190, 32
    %v793 = vsel %vm789, %v190, 32
    %v794 = vsel %vm311, %v790, 2147483647
    %v795 = vand.u32 %v794, 65535
    %v796 = vshra.s32 %v794, 16
    %v797 = vcvt.s32.f32 %v795
    %v798 = vcvt.s32.f32 %v796
    %799 = vmin.xlane.f32.xlu0 %v798
    %v800 = vpop.xlane.xlu0 %799
    %vm801 = vcmp.eq.f32.partialorder %v798, %v800
    %v802 = vsel %vm801, %v797, inf
    %803 = vmin.xlane.f32.xlu0 %v802
    %v804 = vpop.xlane.xlu0 %803
    %v805 = vcvt.f32.s32 %v804
    %v806 = vcvt.f32.s32 %v800
    %v807 = vshll.u32 %v806, 16
    %v808 = vadd.s32 %v807, %v805
    %v809 = vsel %vm311, %v791, 2147483647
    %v810 = vand.u32 %v809, 65535
    %v811 = vshra.s32 %v809, 16
    %v812 = vcvt.s32.f32 %v810
    %v813 = vcvt.s32.f32 %v811
    %814 = vmin.xlane.f32.xlu0 %v813
    %v815 = vpop.xlane.xlu0 %814
    %vm816 = vcmp.eq.f32.partialorder %v813, %v815
    %v817 = vsel %vm816, %v812, inf
    %818 = vmin.xlane.f32.xlu0 %v817
    %v819 = vpop.xlane.xlu0 %818
    %v820 = vcvt.f32.s32 %v819
    %v821 = vcvt.f32.s32 %v815
    %v822 = vshll.u32 %v821, 16
    %v823 = vadd.s32 %v822, %v820
    %v824 = vsel %vm311, %v792, 2147483647
    %v825 = vand.u32 %v824, 65535
    %v826 = vshra.s32 %v824, 16
    %v827 = vcvt.s32.f32 %v825
    %v828 = vcvt.s32.f32 %v826
    %829 = vmin.xlane.f32.xlu0 %v828
    %v830 = vpop.xlane.xlu0 %829
    %vm831 = vcmp.eq.f32.partialorder %v828, %v830
    %v832 = vsel %vm831, %v827, inf
    %833 = vmin.xlane.f32.xlu0 %v832
    %v834 = vpop.xlane.xlu0 %833
    %v835 = vcvt.f32.s32 %v834
    %v836 = vcvt.f32.s32 %v830
    %v837 = vshll.u32 %v836, 16
    %v838 = vadd.s32 %v837, %v835
    %v839 = vsel %vm311, %v793, 2147483647
    %v840 = vand.u32 %v839, 65535
    %v841 = vshra.s32 %v839, 16
    %v842 = vcvt.s32.f32 %v840
    %v843 = vcvt.s32.f32 %v841
    %844 = vmin.xlane.f32.xlu0 %v843
    %v845 = vpop.xlane.xlu0 %844
    %vm846 = vcmp.eq.f32.partialorder %v843, %v845
    %v847 = vsel %vm846, %v842, inf
    %848 = vmin.xlane.f32.xlu0 %v847
    %v849 = vpop.xlane.xlu0 %848
    %v850 = vcvt.f32.s32 %v849
    %v851 = vcvt.f32.s32 %v845
    %v852 = vshll.u32 %v851, 16
    %v853 = vadd.s32 %v852, %v850
    %vm854 = vcmp.eq.s32.totalorder %v190, %v808
    %vm855 = vcmp.eq.s32.totalorder %v190, %v823
    %vm856 = vcmp.eq.s32.totalorder %v190, %v838
    %vm857 = vcmp.eq.s32.totalorder %v190, %v853
    %v858 = vsel %vm854, 1, 0
    %v859 = vsel %vm855, 1, 0
    %v860 = vsel %vm856, 1, 0
    %v861 = vsel %vm857, 1, 0
    %v862 = vcvt.s32.f32 %v858
    %v863 = vcvt.s32.f32 %v859
    %v864 = vcvt.s32.f32 %v860
    %v865 = vcvt.s32.f32 %v861
    %v866 = vpack.c.bf16 %v863, %v862
    %v867 = vpack.c.bf16 %v865, %v864
    %v869 = vsel %vm311, %v866, 0
    %v872 = vsel %vm311, %v867, 0
    %874 = vmatpush.bf16.msra.mxu0 0
    %875 = vmatpush.bf16.msra.mxu0 0
    %876 = vmatpush.bf16.msra.mxu0 0
    %877 = vmatpush.bf16.msra.mxu0 0
    %878 = vmatpush.bf16.msra.mxu0 0
    %879 = vmatpush.bf16.msra.mxu0 0
    %880 = vmatpush.bf16.msra.mxu0 %v212
    %881 = vmatpush.bf16.msra.mxu0 %v211
    %882 = vmatmul.bf16.gmra.mxu0 %v869
    %v883 = vpop.f32.mrf.mxu0
    %v884 = vadd.f32 0.0, %v883
    %v885 = vpop.f32.mrf.mxu0
    %v886 = vadd.f32 0.0, %v885
    %887 = vmatmul.bf16.gmra.mxu0 %v872
    %v888 = vpop.f32.mrf.mxu0
    %v889 = vadd.f32 0.0, %v888
    %v890 = vpop.f32.mrf.mxu0
    %v891 = vadd.f32 0.0, %v890
    %892 = vdwg.mxu0
    %v893 = vpack.c.bf16 %v886, %v884
    %v894 = vpack.c.bf16 %v891, %v889
    %v896 = vsel %vm213, %v893, 0
    %v899 = vsel %vm213, %v894, 0
    %901 = vmatpush.bf16.msra.mxu0 0
    %902 = vmatpush.bf16.msra.mxu0 0
    %903 = vmatpush.bf16.msra.mxu0 0
    %904 = vmatpush.bf16.msra.mxu0 0
    %905 = vmatpush.bf16.msra.mxu0 0
    %906 = vmatpush.bf16.msra.mxu0 0
    %907 = vmatpush.bf16.msra.mxu0 0
    %908 = vmatpush.bf16.msra.mxu0 %v441
    %909 = vmatmul.bf16.gmra.mxu0 %v896
    %v910 = vpop.f32.mrf.mxu0
    %v911 = vadd.f32 0.0, %v910
    %v912 = vpop.f32.mrf.mxu0
    %v913 = vadd.f32 0.0, %v912
    %914 = vmatmul.bf16.gmra.mxu0 %v899
    %v915 = vpop.f32.mrf.mxu0
    %v916 = vadd.f32 0.0, %v915
    %v917 = vpop.f32.mrf.mxu0
    %v918 = vadd.f32 0.0, %v917
    %919 = vdwg.mxu0
    %v920 = vmax.f32 %v766, %v911
    %v921 = vmax.f32 %v767, %v913
    %v922 = vmax.f32 %v768, %v916
    %v923 = vmax.f32 %v769, %v918
    %v924 = vsel %vm854, inf, %v770
    %v925 = vsel %vm855, inf, %v771
    %v926 = vsel %vm856, inf, %v772
    %v927 = vsel %vm857, inf, %v773
    %v928 = vsel %vm311, %v924, inf
    %929 = vmin.xlane.f32.xlu0 %v928
    %v930 = vpop.xlane.xlu0 %929
    %v931 = vsel %vm311, %v925, inf
    %932 = vmin.xlane.f32.xlu0 %v931
    %v933 = vpop.xlane.xlu0 %932
    %v934 = vsel %vm311, %v926, inf
    %935 = vmin.xlane.f32.xlu0 %v934
    %v936 = vpop.xlane.xlu0 %935
    %v937 = vsel %vm311, %v927, inf
    %938 = vmin.xlane.f32.xlu0 %v937
    %v939 = vpop.xlane.xlu0 %938
    %vm940 = vcmp.eq.f32.partialorder %v924, %v930
    %vm941 = vcmp.eq.f32.partialorder %v925, %v933
    %vm942 = vcmp.eq.f32.partialorder %v926, %v936
    %vm943 = vcmp.eq.f32.partialorder %v927, %v939
    %v944 = vsel %vm940, %v190, 32
    %v945 = vsel %vm941, %v190, 32
    %v946 = vsel %vm942, %v190, 32
    %v947 = vsel %vm943, %v190, 32
    %v948 = vsel %vm311, %v944, 2147483647
    %v949 = vand.u32 %v948, 65535
    %v950 = vshra.s32 %v948, 16
    %v951 = vcvt.s32.f32 %v949
    %v952 = vcvt.s32.f32 %v950
    %953 = vmin.xlane.f32.xlu0 %v952
    %v954 = vpop.xlane.xlu0 %953
    %vm955 = vcmp.eq.f32.partialorder %v952, %v954
    %v956 = vsel %vm955, %v951, inf
    %957 = vmin.xlane.f32.xlu0 %v956
    %v958 = vpop.xlane.xlu0 %957
    %v959 = vcvt.f32.s32 %v958
    %v960 = vcvt.f32.s32 %v954
    %v961 = vshll.u32 %v960, 16
    %v962 = vadd.s32 %v961, %v959
    %v963 = vsel %vm311, %v945, 2147483647
    %v964 = vand.u32 %v963, 65535
    %v965 = vshra.s32 %v963, 16
    %v966 = vcvt.s32.f32 %v964
    %v967 = vcvt.s32.f32 %v965
    %968 = vmin.xlane.f32.xlu0 %v967
    %v969 = vpop.xlane.xlu0 %968
    %vm970 = vcmp.eq.f32.partialorder %v967, %v969
    %v971 = vsel %vm970, %v966, inf
    %972 = vmin.xlane.f32.xlu0 %v971
    %v973 = vpop.xlane.xlu0 %972
    %v974 = vcvt.f32.s32 %v973
    %v975 = vcvt.f32.s32 %v969
    %v976 = vshll.u32 %v975, 16
    %v977 = vadd.s32 %v976, %v974
    %v978 = vsel %vm311, %v946, 2147483647
    %v979 = vand.u32 %v978, 65535
    %v980 = vshra.s32 %v978, 16
    %v981 = vcvt.s32.f32 %v979
    %v982 = vcvt.s32.f32 %v980
    %983 = vmin.xlane.f32.xlu0 %v982
    %v984 = vpop.xlane.xlu0 %983
    %vm985 = vcmp.eq.f32.partialorder %v982, %v984
    %v986 = vsel %vm985, %v981, inf
    %987 = vmin.xlane.f32.xlu0 %v986
    %v988 = vpop.xlane.xlu0 %987
    %v989 = vcvt.f32.s32 %v988
    %v990 = vcvt.f32.s32 %v984
    %v991 = vshll.u32 %v990, 16
    %v992 = vadd.s32 %v991, %v989
    %v993 = vsel %vm311, %v947, 2147483647
    %v994 = vand.u32 %v993, 65535
    %v995 = vshra.s32 %v993, 16
    %v996 = vcvt.s32.f32 %v994
    %v997 = vcvt.s32.f32 %v995
    %998 = vmin.xlane.f32.xlu0 %v997
    %v999 = vpop.xlane.xlu0 %998
    %vm1000 = vcmp.eq.f32.partialorder %v997, %v999
    %v1001 = vsel %vm1000, %v996, inf
    %1002 = vmin.xlane.f32.xlu0 %v1001
    %v1003 = vpop.xlane.xlu0 %1002
    %v1004 = vcvt.f32.s32 %v1003
    %v1005 = vcvt.f32.s32 %v999
    %v1006 = vshll.u32 %v1005, 16
    %v1007 = vadd.s32 %v1006, %v1004
    %vm1008 = vcmp.eq.s32.totalorder %v190, %v962
    %vm1009 = vcmp.eq.s32.totalorder %v190, %v977
    %vm1010 = vcmp.eq.s32.totalorder %v190, %v992
    %vm1011 = vcmp.eq.s32.totalorder %v190, %v1007
    %v1012 = vsel %vm1008, 1, 0
    %v1013 = vsel %vm1009, 1, 0
    %v1014 = vsel %vm1010, 1, 0
    %v1015 = vsel %vm1011, 1, 0
    %v1016 = vcvt.s32.f32 %v1012
    %v1017 = vcvt.s32.f32 %v1013
    %v1018 = vcvt.s32.f32 %v1014
    %v1019 = vcvt.s32.f32 %v1015
    %v1020 = vpack.c.bf16 %v1017, %v1016
    %v1021 = vpack.c.bf16 %v1019, %v1018
    %v1023 = vsel %vm311, %v1020, 0
    %v1026 = vsel %vm311, %v1021, 0
    %1028 = vmatpush.bf16.msra.mxu0 0
    %1029 = vmatpush.bf16.msra.mxu0 0
    %1030 = vmatpush.bf16.msra.mxu0 0
    %1031 = vmatpush.bf16.msra.mxu0 0
    %1032 = vmatpush.bf16.msra.mxu0 0
    %1033 = vmatpush.bf16.msra.mxu0 0
    %1034 = vmatpush.bf16.msra.mxu0 %v212
    %1035 = vmatpush.bf16.msra.mxu0 %v211
    %1036 = vmatmul.bf16.gmra.mxu0 %v1023
    %v1037 = vpop.f32.mrf.mxu0
    %v1038 = vadd.f32 0.0, %v1037
    %v1039 = vpop.f32.mrf.mxu0
    %v1040 = vadd.f32 0.0, %v1039
    %1041 = vmatmul.bf16.gmra.mxu0 %v1026
    %v1042 = vpop.f32.mrf.mxu0
    %v1043 = vadd.f32 0.0, %v1042
    %v1044 = vpop.f32.mrf.mxu0
    %v1045 = vadd.f32 0.0, %v1044
    %1046 = vdwg.mxu0
    %v1047 = vpack.c.bf16 %v1040, %v1038
    %v1048 = vpack.c.bf16 %v1045, %v1043
    %v1050 = vsel %vm213, %v1047, 0
    %v1053 = vsel %vm213, %v1048, 0
    %1055 = vmatpush.bf16.msra.mxu0 0
    %1056 = vmatpush.bf16.msra.mxu0 0
    %1057 = vmatpush.bf16.msra.mxu0 0
    %1058 = vmatpush.bf16.msra.mxu0 0
    %1059 = vmatpush.bf16.msra.mxu0 0
    %1060 = vmatpush.bf16.msra.mxu0 0
    %1061 = vmatpush.bf16.msra.mxu0 0
    %1062 = vmatpush.bf16.msra.mxu0 %v441
    %1063 = vmatmul.bf16.gmra.mxu0 %v1050
    %v1064 = vpop.f32.mrf.mxu0
    %v1065 = vadd.f32 0.0, %v1064
    %v1066 = vpop.f32.mrf.mxu0
    %v1067 = vadd.f32 0.0, %v1066
    %1068 = vmatmul.bf16.gmra.mxu0 %v1053
    %v1069 = vpop.f32.mrf.mxu0
    %v1070 = vadd.f32 0.0, %v1069
    %v1071 = vpop.f32.mrf.mxu0
    %v1072 = vadd.f32 0.0, %v1071
    %1073 = vdwg.mxu0
    %v1074 = vmax.f32 %v920, %v1065
    %v1075 = vmax.f32 %v921, %v1067
    %v1076 = vmax.f32 %v922, %v1070
    %v1077 = vmax.f32 %v923, %v1072
    %v1078 = vadd.f32 %v302, %v1074
    %v1079 = vadd.f32 %v304, %v1075
    %v1080 = vadd.f32 %v307, %v1076
    %v1081 = vadd.f32 %v309, %v1077
    %v1082 = vmax.f32 %v1078, 0.0
    %v1083 = vmax.f32 %v1079, 0.0
    %v1084 = vmax.f32 %v1080, 0.0
    %v1085 = vmax.f32 %v1081, 0.0
    %v1086 = vpack.c.bf16 %v1083, %v1082
    %v1087 = vpack.c.bf16 %v1085, %v1084
    %1088 = vmatpush.bf16.xpose.msra.mxu0 0
    %1089 = vmatpush.bf16.xpose.msra.mxu0 0
    %1090 = vmatpush.bf16.xpose.msra.mxu0 0
    %1091 = vmatpush.bf16.xpose.msra.mxu0 0
    %1092 = vmatpush.bf16.xpose.msra.mxu0 0
    %1093 = vmatpush.bf16.xpose.msra.mxu0 0
    %1094 = vmatpush.bf16.xpose.msra.mxu0 %v1087
    %1095 = vmatpush.bf16.xpose.msra.mxu0 %v1086
    %1096 = vmatmul.bf16.gmra.mxu0 %v1086
    %v1097 = vpop.f32.mrf.mxu0
    %v1098 = vadd.f32 0.0, %v1097
    %v1099 = vpop.f32.mrf.mxu0
    %v1100 = vadd.f32 0.0, %v1099
    %1101 = vmatmul.bf16.gmra.mxu0 %v1087
    %v1102 = vpop.f32.mrf.mxu0
    %v1103 = vadd.f32 0.0, %v1102
    %v1104 = vpop.f32.mrf.mxu0
    %v1105 = vadd.f32 0.0, %v1104
    %1106 = vdwg.mxu0
    %v1107 = vmul.f32 %v1082, %v1082
    %v1108 = vmul.f32 %v1083, %v1083
    %v1109 = vmul.f32 %v1084, %v1084
    %v1110 = vmul.f32 %v1085, %v1085
    %v1111 = vpack.c.bf16 %v1108, %v1107
    %v1112 = vpack.c.bf16 %v1110, %v1109
    %1113 = vmatpush.bf16.xpose.msra.mxu0 0
    %1114 = vmatpush.bf16.xpose.msra.mxu0 0
    %1115 = vmatpush.bf16.xpose.msra.mxu0 0
    %1116 = vmatpush.bf16.xpose.msra.mxu0 0
    %1117 = vmatpush.bf16.xpose.msra.mxu0 0
    %1118 = vmatpush.bf16.xpose.msra.mxu0 0
    %1119 = vmatpush.bf16.xpose.msra.mxu0 %v1112
    %1120 = vmatpush.bf16.xpose.msra.mxu0 %v1111
    %1121 = vmatmul.bf16.gmra.mxu0 1065369472
    %v1122 = vpop.f32.mrf.mxu0
    %v1123 = vadd.f32 0.0, %v1122
    %v1124 = vpop.f32.mrf.mxu0
    %1125 = vdwg.mxu0
    %v1126 = vmul.f32 %v1098, 2.0
    %v1127 = vmul.f32 %v1100, 2.0
    %v1128 = vmul.f32 %v1103, 2.0
    %v1129 = vmul.f32 %v1105, 2.0
    %v1130 = vperm.slane %v1123, 0
    %v1131 = vsub.f32 %v1130, %v1126
    %v1132 = vsub.f32 %v1130, %v1127
    %v1133 = vsub.f32 %v1130, %v1128
    %v1134 = vsub.f32 %v1130, %v1129
    %v1135 = vsel %vm203, inf, %v1131
    %v1136 = vsel %vm204, inf, %v1132
    %v1137 = vsel %vm205, inf, %v1133
    %v1138 = vsel %vm206, inf, %v1134
    %v1139 = vld [vmem:[#allocation2] sm:$0xf]
    %v1140 = vld [vmem:[#allocation2 + $0x4] sm:$0xf]
    %v1141 = vld [vmem:[#allocation2 + $0x8] sm:$0xf]
    %v1142 = vld [vmem:[#allocation2 + $0xc] sm:$0xf]
    %v1143 = vld [vmem:[#allocation2 + $0x10] sm:$0xf]
    %v1144 = vld [vmem:[#allocation2 + $0x14] sm:$0xf]
    %v1145 = vld [vmem:[#allocation2 + $0x18] sm:$0xf]
    %v1146 = vld [vmem:[#allocation2 + $0x1c] sm:$0xf]
    %v1147 = vld [vmem:[#allocation2 + $0x20] sm:$0xf]
    %v1148 = vld [vmem:[#allocation2 + $0x24] sm:$0xf]
    %v1149 = vld [vmem:[#allocation2 + $0x28] sm:$0xf]
    %v1150 = vld [vmem:[#allocation2 + $0x2c] sm:$0xf]
    %v1151 = vld [vmem:[#allocation2 + $0x30] sm:$0xf]
    %v1152 = vld [vmem:[#allocation2 + $0x34] sm:$0xf]
    %v1153 = vld [vmem:[#allocation2 + $0x38] sm:$0xf]
    %v1154 = vld [vmem:[#allocation2 + $0x3c] sm:$0xf]
    %v1155 = vld [vmem:[%s6] sm:$0x1]
    %v1157 = vperm.slane %v1155, 0
    %v1175 = vunpack.c.l.b16 %v1139
    %v1176 = vunpack.c.l.b16 %v1140
    %v1177 = vunpack.c.l.b16 %v1141
    %v1178 = vunpack.c.l.b16 %v1142
    %v1179 = vunpack.c.l.b16 %v1143
    %v1180 = vunpack.c.l.b16 %v1144
    %v1181 = vunpack.c.l.b16 %v1145
    %v1182 = vunpack.c.l.b16 %v1146
    %v1183 = vunpack.c.l.b16 %v1147
    %v1184 = vunpack.c.l.b16 %v1148
    %v1185 = vunpack.c.l.b16 %v1149
    %v1186 = vunpack.c.l.b16 %v1150
    %v1187 = vunpack.c.l.b16 %v1151
    %v1188 = vunpack.c.l.b16 %v1152
    %v1189 = vunpack.c.l.b16 %v1153
    %v1190 = vunpack.c.l.b16 %v1154
    %v1191 = vpack.c.b16 %v1176, %v1175
    %v1192 = vpack.c.b16 %v1178, %v1177
    %v1193 = vpack.c.b16 %v1180, %v1179
    %v1194 = vpack.c.b16 %v1182, %v1181
    %v1195 = vpack.c.b16 %v1184, %v1183
    %v1196 = vpack.c.b16 %v1186, %v1185
    %v1197 = vpack.c.b16 %v1188, %v1187
    %v1198 = vpack.c.b16 %v1190, %v1189
    %1207 = vmatpush.bf16.msra.mxu0 %v1198
    %1208 = vmatpush.bf16.msra.mxu0 %v1197
    %1209 = vmatpush.bf16.msra.mxu0 %v1196
    %1210 = vmatpush.bf16.msra.mxu0 %v1195
    %1211 = vmatpush.bf16.msra.mxu0 %v1194
    %1212 = vmatpush.bf16.msra.mxu0 %v1193
    %1213 = vmatpush.bf16.msra.mxu0 %v1192
    %1214 = vmatpush.bf16.msra.mxu0 %v1191
    %1215 = vmatmul.bf16.gmra.mxu0 %v1086
    %v1216 = vpop.f32.mrf.mxu0
    %v1217 = vadd.f32 %v1157, %v1216
    %v1218 = vpop.f32.mrf.mxu0
    %v1219 = vadd.f32 %v1157, %v1218
    %1220 = vmatmul.bf16.gmra.mxu0 %v1087
    %v1221 = vpop.f32.mrf.mxu0
    %v1222 = vadd.f32 %v1157, %v1221
    %v1223 = vpop.f32.mrf.mxu0
    %v1224 = vadd.f32 %v1157, %v1223
    %1225 = vdwg.mxu0
    %v1226 = vld [vmem:[#allocation5] sm:$0xf]
    %v1227 = vld [vmem:[#allocation5 + $0x4] sm:$0xf]
    %v1228 = vld [vmem:[#allocation5 + $0x8] sm:$0xf]
    %v1229 = vld [vmem:[#allocation5 + $0xc] sm:$0xf]
    %v1230 = vld [vmem:[#allocation5 + $0x10] sm:$0xf]
    %v1231 = vld [vmem:[#allocation5 + $0x14] sm:$0xf]
    %v1232 = vld [vmem:[#allocation5 + $0x18] sm:$0xf]
    %v1233 = vld [vmem:[#allocation5 + $0x1c] sm:$0xf]
    %v1234 = vld [vmem:[#allocation5 + $0x20] sm:$0xf]
    %v1235 = vld [vmem:[#allocation5 + $0x24] sm:$0xf]
    %v1236 = vld [vmem:[#allocation5 + $0x28] sm:$0xf]
    %v1237 = vld [vmem:[#allocation5 + $0x2c] sm:$0xf]
    %v1238 = vld [vmem:[#allocation5 + $0x30] sm:$0xf]
    %v1239 = vld [vmem:[#allocation5 + $0x34] sm:$0xf]
    %v1240 = vld [vmem:[#allocation5 + $0x38] sm:$0xf]
    %v1241 = vld [vmem:[#allocation5 + $0x3c] sm:$0xf]
    %v1258 = vunpack.c.l.b16 %v1226
    %v1259 = vunpack.c.l.b16 %v1227
    %v1260 = vunpack.c.l.b16 %v1228
    %v1261 = vunpack.c.l.b16 %v1229
    %v1262 = vunpack.c.l.b16 %v1230
    %v1263 = vunpack.c.l.b16 %v1231
    %v1264 = vunpack.c.l.b16 %v1232
    %v1265 = vunpack.c.l.b16 %v1233
    %v1266 = vunpack.c.l.b16 %v1234
    %v1267 = vunpack.c.l.b16 %v1235
    %v1268 = vunpack.c.l.b16 %v1236
    %v1269 = vunpack.c.l.b16 %v1237
    %v1270 = vunpack.c.l.b16 %v1238
    %v1271 = vunpack.c.l.b16 %v1239
    %v1272 = vunpack.c.l.b16 %v1240
    %v1273 = vunpack.c.l.b16 %v1241
    %v1274 = vpack.c.b16 %v1259, %v1258
    %v1275 = vpack.c.b16 %v1261, %v1260
    %v1276 = vpack.c.b16 %v1263, %v1262
    %v1277 = vpack.c.b16 %v1265, %v1264
    %v1278 = vpack.c.b16 %v1267, %v1266
    %v1279 = vpack.c.b16 %v1269, %v1268
    %v1280 = vpack.c.b16 %v1271, %v1270
    %v1281 = vpack.c.b16 %v1273, %v1272
    %1290 = vmatpush.bf16.msra.mxu0 %v1281
    %1291 = vmatpush.bf16.msra.mxu0 %v1280
    %1292 = vmatpush.bf16.msra.mxu0 %v1279
    %1293 = vmatpush.bf16.msra.mxu0 %v1278
    %1294 = vmatpush.bf16.msra.mxu0 %v1277
    %1295 = vmatpush.bf16.msra.mxu0 %v1276
    %1296 = vmatpush.bf16.msra.mxu0 %v1275
    %1297 = vmatpush.bf16.msra.mxu0 %v1274
    %1298 = vmatmul.bf16.gmra.mxu0 %v1086
    %v1299 = vpop.f32.mrf.mxu0
    %v1300 = vadd.f32 0.0, %v1299
    %v1301 = vpop.f32.mrf.mxu0
    %v1302 = vadd.f32 0.0, %v1301
    %1303 = vmatmul.bf16.gmra.mxu0 %v1087
    %v1304 = vpop.f32.mrf.mxu0
    %v1305 = vadd.f32 0.0, %v1304
    %v1306 = vpop.f32.mrf.mxu0
    %v1307 = vadd.f32 0.0, %v1306
    %1308 = vdwg.mxu0
    %v1309 = vpack.c.bf16 %v1302, %v1300
    %v1310 = vpack.c.bf16 %v1307, %v1305
    %v1311 = vsel %vm311, %v1135, inf
    %1312 = vmin.xlane.f32.xlu0 %v1311
    %v1313 = vpop.xlane.xlu0 %1312
    %v1314 = vsel %vm311, %v1136, inf
    %1315 = vmin.xlane.f32.xlu0 %v1314
    %v1316 = vpop.xlane.xlu0 %1315
    %v1317 = vsel %vm311, %v1137, inf
    %1318 = vmin.xlane.f32.xlu0 %v1317
    %v1319 = vpop.xlane.xlu0 %1318
    %v1320 = vsel %vm311, %v1138, inf
    %1321 = vmin.xlane.f32.xlu0 %v1320
    %v1322 = vpop.xlane.xlu0 %1321
    %vm1323 = vcmp.eq.f32.partialorder %v1135, %v1313
    %vm1324 = vcmp.eq.f32.partialorder %v1136, %v1316
    %vm1325 = vcmp.eq.f32.partialorder %v1137, %v1319
    %vm1326 = vcmp.eq.f32.partialorder %v1138, %v1322
    %v1327 = vsel %vm1323, %v190, 32
    %v1328 = vsel %vm1324, %v190, 32
    %v1329 = vsel %vm1325, %v190, 32
    %v1330 = vsel %vm1326, %v190, 32
    %v1331 = vsel %vm311, %v1327, 2147483647
    %v1332 = vand.u32 %v1331, 65535
    %v1333 = vshra.s32 %v1331, 16
    %v1334 = vcvt.s32.f32 %v1332
    %v1335 = vcvt.s32.f32 %v1333
    %1336 = vmin.xlane.f32.xlu0 %v1335
    %v1337 = vpop.xlane.xlu0 %1336
    %vm1338 = vcmp.eq.f32.partialorder %v1335, %v1337
    %v1339 = vsel %vm1338, %v1334, inf
    %1340 = vmin.xlane.f32.xlu0 %v1339
    %v1341 = vpop.xlane.xlu0 %1340
    %v1342 = vcvt.f32.s32 %v1341
    %v1343 = vcvt.f32.s32 %v1337
    %v1344 = vshll.u32 %v1343, 16
    %v1345 = vadd.s32 %v1344, %v1342
    %v1346 = vsel %vm311, %v1328, 2147483647
    %v1347 = vand.u32 %v1346, 65535
    %v1348 = vshra.s32 %v1346, 16
    %v1349 = vcvt.s32.f32 %v1347
    %v1350 = vcvt.s32.f32 %v1348
    %1351 = vmin.xlane.f32.xlu0 %v1350
    %v1352 = vpop.xlane.xlu0 %1351
    %vm1353 = vcmp.eq.f32.partialorder %v1350, %v1352
    %v1354 = vsel %vm1353, %v1349, inf
    %1355 = vmin.xlane.f32.xlu0 %v1354
    %v1356 = vpop.xlane.xlu0 %1355
    %v1357 = vcvt.f32.s32 %v1356
    %v1358 = vcvt.f32.s32 %v1352
    %v1359 = vshll.u32 %v1358, 16
    %v1360 = vadd.s32 %v1359, %v1357
    %v1361 = vsel %vm311, %v1329, 2147483647
    %v1362 = vand.u32 %v1361, 65535
    %v1363 = vshra.s32 %v1361, 16
    %v1364 = vcvt.s32.f32 %v1362
    %v1365 = vcvt.s32.f32 %v1363
    %1366 = vmin.xlane.f32.xlu0 %v1365
    %v1367 = vpop.xlane.xlu0 %1366
    %vm1368 = vcmp.eq.f32.partialorder %v1365, %v1367
    %v1369 = vsel %vm1368, %v1364, inf
    %1370 = vmin.xlane.f32.xlu0 %v1369
    %v1371 = vpop.xlane.xlu0 %1370
    %v1372 = vcvt.f32.s32 %v1371
    %v1373 = vcvt.f32.s32 %v1367
    %v1374 = vshll.u32 %v1373, 16
    %v1375 = vadd.s32 %v1374, %v1372
    %v1376 = vsel %vm311, %v1330, 2147483647
    %v1377 = vand.u32 %v1376, 65535
    %v1378 = vshra.s32 %v1376, 16
    %v1379 = vcvt.s32.f32 %v1377
    %v1380 = vcvt.s32.f32 %v1378
    %1381 = vmin.xlane.f32.xlu0 %v1380
    %v1382 = vpop.xlane.xlu0 %1381
    %vm1383 = vcmp.eq.f32.partialorder %v1380, %v1382
    %v1384 = vsel %vm1383, %v1379, inf
    %1385 = vmin.xlane.f32.xlu0 %v1384
    %v1386 = vpop.xlane.xlu0 %1385
    %v1387 = vcvt.f32.s32 %v1386
    %v1388 = vcvt.f32.s32 %v1382
    %v1389 = vshll.u32 %v1388, 16
    %v1390 = vadd.s32 %v1389, %v1387
    %vm1391 = vcmp.eq.s32.totalorder %v190, %v1345
    %vm1392 = vcmp.eq.s32.totalorder %v190, %v1360
    %vm1393 = vcmp.eq.s32.totalorder %v190, %v1375
    %vm1394 = vcmp.eq.s32.totalorder %v190, %v1390
    %v1395 = vsel %vm1391, 1, 0
    %v1396 = vsel %vm1392, 1, 0
    %v1397 = vsel %vm1393, 1, 0
    %v1398 = vsel %vm1394, 1, 0
    %v1399 = vcvt.s32.f32 %v1395
    %v1400 = vcvt.s32.f32 %v1396
    %v1401 = vcvt.s32.f32 %v1397
    %v1402 = vcvt.s32.f32 %v1398
    %v1403 = vpack.c.bf16 %v1400, %v1399
    %v1404 = vpack.c.bf16 %v1402, %v1401
    %v1406 = vsel %vm311, %v1403, 0
    %v1409 = vsel %vm311, %v1404, 0
    %1411 = vmatpush.bf16.msra.mxu0 0
    %1412 = vmatpush.bf16.msra.mxu0 0
    %1413 = vmatpush.bf16.msra.mxu0 0
    %1414 = vmatpush.bf16.msra.mxu0 0
    %1415 = vmatpush.bf16.msra.mxu0 0
    %1416 = vmatpush.bf16.msra.mxu0 0
    %1417 = vmatpush.bf16.msra.mxu0 %v1310
    %1418 = vmatpush.bf16.msra.mxu0 %v1309
    %1419 = vmatmul.bf16.gmra.mxu0 %v1406
    %v1420 = vpop.f32.mrf.mxu0
    %v1421 = vadd.f32 0.0, %v1420
    %v1422 = vpop.f32.mrf.mxu0
    %v1423 = vadd.f32 0.0, %v1422
    %1424 = vmatmul.bf16.gmra.mxu0 %v1409
    %v1425 = vpop.f32.mrf.mxu0
    %v1426 = vadd.f32 0.0, %v1425
    %v1427 = vpop.f32.mrf.mxu0
    %v1428 = vadd.f32 0.0, %v1427
    %1429 = vdwg.mxu0
    %v1430 = vsel %vm1391, inf, %v1135
    %v1431 = vsel %vm1392, inf, %v1136
    %v1432 = vsel %vm1393, inf, %v1137
    %v1433 = vsel %vm1394, inf, %v1138
    %v1434 = vsel %vm311, %v1430, inf
    %1435 = vmin.xlane.f32.xlu0 %v1434
    %v1436 = vpop.xlane.xlu0 %1435
    %v1437 = vsel %vm311, %v1431, inf
    %1438 = vmin.xlane.f32.xlu0 %v1437
    %v1439 = vpop.xlane.xlu0 %1438
    %v1440 = vsel %vm311, %v1432, inf
    %1441 = vmin.xlane.f32.xlu0 %v1440
    %v1442 = vpop.xlane.xlu0 %1441
    %v1443 = vsel %vm311, %v1433, inf
    %1444 = vmin.xlane.f32.xlu0 %v1443
    %v1445 = vpop.xlane.xlu0 %1444
    %vm1446 = vcmp.eq.f32.partialorder %v1430, %v1436
    %vm1447 = vcmp.eq.f32.partialorder %v1431, %v1439
    %vm1448 = vcmp.eq.f32.partialorder %v1432, %v1442
    %vm1449 = vcmp.eq.f32.partialorder %v1433, %v1445
    %v1450 = vsel %vm1446, %v190, 32
    %v1451 = vsel %vm1447, %v190, 32
    %v1452 = vsel %vm1448, %v190, 32
    %v1453 = vsel %vm1449, %v190, 32
    %v1454 = vsel %vm311, %v1450, 2147483647
    %v1455 = vand.u32 %v1454, 65535
    %v1456 = vshra.s32 %v1454, 16
    %v1457 = vcvt.s32.f32 %v1455
    %v1458 = vcvt.s32.f32 %v1456
    %1459 = vmin.xlane.f32.xlu0 %v1458
    %v1460 = vpop.xlane.xlu0 %1459
    %vm1461 = vcmp.eq.f32.partialorder %v1458, %v1460
    %v1462 = vsel %vm1461, %v1457, inf
    %1463 = vmin.xlane.f32.xlu0 %v1462
    %v1464 = vpop.xlane.xlu0 %1463
    %v1465 = vcvt.f32.s32 %v1464
    %v1466 = vcvt.f32.s32 %v1460
    %v1467 = vshll.u32 %v1466, 16
    %v1468 = vadd.s32 %v1467, %v1465
    %v1469 = vsel %vm311, %v1451, 2147483647
    %v1470 = vand.u32 %v1469, 65535
    %v1471 = vshra.s32 %v1469, 16
    %v1472 = vcvt.s32.f32 %v1470
    %v1473 = vcvt.s32.f32 %v1471
    %1474 = vmin.xlane.f32.xlu0 %v1473
    %v1475 = vpop.xlane.xlu0 %1474
    %vm1476 = vcmp.eq.f32.partialorder %v1473, %v1475
    %v1477 = vsel %vm1476, %v1472, inf
    %1478 = vmin.xlane.f32.xlu0 %v1477
    %v1479 = vpop.xlane.xlu0 %1478
    %v1480 = vcvt.f32.s32 %v1479
    %v1481 = vcvt.f32.s32 %v1475
    %v1482 = vshll.u32 %v1481, 16
    %v1483 = vadd.s32 %v1482, %v1480
    %v1484 = vsel %vm311, %v1452, 2147483647
    %v1485 = vand.u32 %v1484, 65535
    %v1486 = vshra.s32 %v1484, 16
    %v1487 = vcvt.s32.f32 %v1485
    %v1488 = vcvt.s32.f32 %v1486
    %1489 = vmin.xlane.f32.xlu0 %v1488
    %v1490 = vpop.xlane.xlu0 %1489
    %vm1491 = vcmp.eq.f32.partialorder %v1488, %v1490
    %v1492 = vsel %vm1491, %v1487, inf
    %1493 = vmin.xlane.f32.xlu0 %v1492
    %v1494 = vpop.xlane.xlu0 %1493
    %v1495 = vcvt.f32.s32 %v1494
    %v1496 = vcvt.f32.s32 %v1490
    %v1497 = vshll.u32 %v1496, 16
    %v1498 = vadd.s32 %v1497, %v1495
    %v1499 = vsel %vm311, %v1453, 2147483647
    %v1500 = vand.u32 %v1499, 65535
    %v1501 = vshra.s32 %v1499, 16
    %v1502 = vcvt.s32.f32 %v1500
    %v1503 = vcvt.s32.f32 %v1501
    %1504 = vmin.xlane.f32.xlu0 %v1503
    %v1505 = vpop.xlane.xlu0 %1504
    %vm1506 = vcmp.eq.f32.partialorder %v1503, %v1505
    %v1507 = vsel %vm1506, %v1502, inf
    %1508 = vmin.xlane.f32.xlu0 %v1507
    %v1509 = vpop.xlane.xlu0 %1508
    %v1510 = vcvt.f32.s32 %v1509
    %v1511 = vcvt.f32.s32 %v1505
    %v1512 = vshll.u32 %v1511, 16
    %v1513 = vadd.s32 %v1512, %v1510
    %vm1514 = vcmp.eq.s32.totalorder %v190, %v1468
    %vm1515 = vcmp.eq.s32.totalorder %v190, %v1483
    %vm1516 = vcmp.eq.s32.totalorder %v190, %v1498
    %vm1517 = vcmp.eq.s32.totalorder %v190, %v1513
    %v1518 = vsel %vm1514, 1, 0
    %v1519 = vsel %vm1515, 1, 0
    %v1520 = vsel %vm1516, 1, 0
    %v1521 = vsel %vm1517, 1, 0
    %v1522 = vcvt.s32.f32 %v1518
    %v1523 = vcvt.s32.f32 %v1519
    %v1524 = vcvt.s32.f32 %v1520
    %v1525 = vcvt.s32.f32 %v1521
    %v1526 = vpack.c.bf16 %v1523, %v1522
    %v1527 = vpack.c.bf16 %v1525, %v1524
    %v1529 = vsel %vm311, %v1526, 0
    %v1532 = vsel %vm311, %v1527, 0
    %1534 = vmatpush.bf16.msra.mxu0 0
    %1535 = vmatpush.bf16.msra.mxu0 0
    %1536 = vmatpush.bf16.msra.mxu0 0
    %1537 = vmatpush.bf16.msra.mxu0 0
    %1538 = vmatpush.bf16.msra.mxu0 0
    %1539 = vmatpush.bf16.msra.mxu0 0
    %1540 = vmatpush.bf16.msra.mxu0 %v1310
    %1541 = vmatpush.bf16.msra.mxu0 %v1309
    %1542 = vmatmul.bf16.gmra.mxu0 %v1529
    %v1543 = vpop.f32.mrf.mxu0
    %v1544 = vadd.f32 0.0, %v1543
    %v1545 = vpop.f32.mrf.mxu0
    %v1546 = vadd.f32 0.0, %v1545
    %1547 = vmatmul.bf16.gmra.mxu0 %v1532
    %v1548 = vpop.f32.mrf.mxu0
    %v1549 = vadd.f32 0.0, %v1548
    %v1550 = vpop.f32.mrf.mxu0
    %v1551 = vadd.f32 0.0, %v1550
    %1552 = vdwg.mxu0
    %v1553 = vmax.f32 %v1421, %v1544
    %v1554 = vmax.f32 %v1423, %v1546
    %v1555 = vmax.f32 %v1426, %v1549
    %v1556 = vmax.f32 %v1428, %v1551
    %v1557 = vsel %vm1514, inf, %v1430
    %v1558 = vsel %vm1515, inf, %v1431
    %v1559 = vsel %vm1516, inf, %v1432
    %v1560 = vsel %vm1517, inf, %v1433
    %v1561 = vsel %vm311, %v1557, inf
    %1562 = vmin.xlane.f32.xlu0 %v1561
    %v1563 = vpop.xlane.xlu0 %1562
    %v1564 = vsel %vm311, %v1558, inf
    %1565 = vmin.xlane.f32.xlu0 %v1564
    %v1566 = vpop.xlane.xlu0 %1565
    %v1567 = vsel %vm311, %v1559, inf
    %1568 = vmin.xlane.f32.xlu0 %v1567
    %v1569 = vpop.xlane.xlu0 %1568
    %v1570 = vsel %vm311, %v1560, inf
    %1571 = vmin.xlane.f32.xlu0 %v1570
    %v1572 = vpop.xlane.xlu0 %1571
    %vm1573 = vcmp.eq.f32.partialorder %v1557, %v1563
    %vm1574 = vcmp.eq.f32.partialorder %v1558, %v1566
    %vm1575 = vcmp.eq.f32.partialorder %v1559, %v1569
    %vm1576 = vcmp.eq.f32.partialorder %v1560, %v1572
    %v1577 = vsel %vm1573, %v190, 32
    %v1578 = vsel %vm1574, %v190, 32
    %v1579 = vsel %vm1575, %v190, 32
    %v1580 = vsel %vm1576, %v190, 32
    %v1581 = vsel %vm311, %v1577, 2147483647
    %v1582 = vand.u32 %v1581, 65535
    %v1583 = vshra.s32 %v1581, 16
    %v1584 = vcvt.s32.f32 %v1582
    %v1585 = vcvt.s32.f32 %v1583
    %1586 = vmin.xlane.f32.xlu0 %v1585
    %v1587 = vpop.xlane.xlu0 %1586
    %vm1588 = vcmp.eq.f32.partialorder %v1585, %v1587
    %v1589 = vsel %vm1588, %v1584, inf
    %1590 = vmin.xlane.f32.xlu0 %v1589
    %v1591 = vpop.xlane.xlu0 %1590
    %v1592 = vcvt.f32.s32 %v1591
    %v1593 = vcvt.f32.s32 %v1587
    %v1594 = vshll.u32 %v1593, 16
    %v1595 = vadd.s32 %v1594, %v1592
    %v1596 = vsel %vm311, %v1578, 2147483647
    %v1597 = vand.u32 %v1596, 65535
    %v1598 = vshra.s32 %v1596, 16
    %v1599 = vcvt.s32.f32 %v1597
    %v1600 = vcvt.s32.f32 %v1598
    %1601 = vmin.xlane.f32.xlu0 %v1600
    %v1602 = vpop.xlane.xlu0 %1601
    %vm1603 = vcmp.eq.f32.partialorder %v1600, %v1602
    %v1604 = vsel %vm1603, %v1599, inf
    %1605 = vmin.xlane.f32.xlu0 %v1604
    %v1606 = vpop.xlane.xlu0 %1605
    %v1607 = vcvt.f32.s32 %v1606
    %v1608 = vcvt.f32.s32 %v1602
    %v1609 = vshll.u32 %v1608, 16
    %v1610 = vadd.s32 %v1609, %v1607
    %v1611 = vsel %vm311, %v1579, 2147483647
    %v1612 = vand.u32 %v1611, 65535
    %v1613 = vshra.s32 %v1611, 16
    %v1614 = vcvt.s32.f32 %v1612
    %v1615 = vcvt.s32.f32 %v1613
    %1616 = vmin.xlane.f32.xlu0 %v1615
    %v1617 = vpop.xlane.xlu0 %1616
    %vm1618 = vcmp.eq.f32.partialorder %v1615, %v1617
    %v1619 = vsel %vm1618, %v1614, inf
    %1620 = vmin.xlane.f32.xlu0 %v1619
    %v1621 = vpop.xlane.xlu0 %1620
    %v1622 = vcvt.f32.s32 %v1621
    %v1623 = vcvt.f32.s32 %v1617
    %v1624 = vshll.u32 %v1623, 16
    %v1625 = vadd.s32 %v1624, %v1622
    %v1626 = vsel %vm311, %v1580, 2147483647
    %v1627 = vand.u32 %v1626, 65535
    %v1628 = vshra.s32 %v1626, 16
    %v1629 = vcvt.s32.f32 %v1627
    %v1630 = vcvt.s32.f32 %v1628
    %1631 = vmin.xlane.f32.xlu0 %v1630
    %v1632 = vpop.xlane.xlu0 %1631
    %vm1633 = vcmp.eq.f32.partialorder %v1630, %v1632
    %v1634 = vsel %vm1633, %v1629, inf
    %1635 = vmin.xlane.f32.xlu0 %v1634
    %v1636 = vpop.xlane.xlu0 %1635
    %v1637 = vcvt.f32.s32 %v1636
    %v1638 = vcvt.f32.s32 %v1632
    %v1639 = vshll.u32 %v1638, 16
    %v1640 = vadd.s32 %v1639, %v1637
    %vm1641 = vcmp.eq.s32.totalorder %v190, %v1595
    %vm1642 = vcmp.eq.s32.totalorder %v190, %v1610
    %vm1643 = vcmp.eq.s32.totalorder %v190, %v1625
    %vm1644 = vcmp.eq.s32.totalorder %v190, %v1640
    %v1645 = vsel %vm1641, 1, 0
    %v1646 = vsel %vm1642, 1, 0
    %v1647 = vsel %vm1643, 1, 0
    %v1648 = vsel %vm1644, 1, 0
    %v1649 = vcvt.s32.f32 %v1645
    %v1650 = vcvt.s32.f32 %v1646
    %v1651 = vcvt.s32.f32 %v1647
    %v1652 = vcvt.s32.f32 %v1648
    %v1653 = vpack.c.bf16 %v1650, %v1649
    %v1654 = vpack.c.bf16 %v1652, %v1651
    %v1656 = vsel %vm311, %v1653, 0
    %v1659 = vsel %vm311, %v1654, 0
    %1661 = vmatpush.bf16.msra.mxu0 0
    %1662 = vmatpush.bf16.msra.mxu0 0
    %1663 = vmatpush.bf16.msra.mxu0 0
    %1664 = vmatpush.bf16.msra.mxu0 0
    %1665 = vmatpush.bf16.msra.mxu0 0
    %1666 = vmatpush.bf16.msra.mxu0 0
    %1667 = vmatpush.bf16.msra.mxu0 %v1310
    %1668 = vmatpush.bf16.msra.mxu0 %v1309
    %1669 = vmatmul.bf16.gmra.mxu0 %v1656
    %v1670 = vpop.f32.mrf.mxu0
    %v1671 = vadd.f32 0.0, %v1670
    %v1672 = vpop.f32.mrf.mxu0
    %v1673 = vadd.f32 0.0, %v1672
    %1674 = vmatmul.bf16.gmra.mxu0 %v1659
    %v1675 = vpop.f32.mrf.mxu0
    %v1676 = vadd.f32 0.0, %v1675
    %v1677 = vpop.f32.mrf.mxu0
    %v1678 = vadd.f32 0.0, %v1677
    %1679 = vdwg.mxu0
    %v1680 = vmax.f32 %v1553, %v1671
    %v1681 = vmax.f32 %v1554, %v1673
    %v1682 = vmax.f32 %v1555, %v1676
    %v1683 = vmax.f32 %v1556, %v1678
    %v1684 = vsel %vm1641, inf, %v1557
    %v1685 = vsel %vm1642, inf, %v1558
    %v1686 = vsel %vm1643, inf, %v1559
    %v1687 = vsel %vm1644, inf, %v1560
    %v1688 = vsel %vm311, %v1684, inf
    %1689 = vmin.xlane.f32.xlu0 %v1688
    %v1690 = vpop.xlane.xlu0 %1689
    %v1691 = vsel %vm311, %v1685, inf
    %1692 = vmin.xlane.f32.xlu0 %v1691
    %v1693 = vpop.xlane.xlu0 %1692
    %v1694 = vsel %vm311, %v1686, inf
    %1695 = vmin.xlane.f32.xlu0 %v1694
    %v1696 = vpop.xlane.xlu0 %1695
    %v1697 = vsel %vm311, %v1687, inf
    %1698 = vmin.xlane.f32.xlu0 %v1697
    %v1699 = vpop.xlane.xlu0 %1698
    %vm1700 = vcmp.eq.f32.partialorder %v1684, %v1690
    %vm1701 = vcmp.eq.f32.partialorder %v1685, %v1693
    %vm1702 = vcmp.eq.f32.partialorder %v1686, %v1696
    %vm1703 = vcmp.eq.f32.partialorder %v1687, %v1699
    %v1704 = vsel %vm1700, %v190, 32
    %v1705 = vsel %vm1701, %v190, 32
    %v1706 = vsel %vm1702, %v190, 32
    %v1707 = vsel %vm1703, %v190, 32
    %v1708 = vsel %vm311, %v1704, 2147483647
    %v1709 = vand.u32 %v1708, 65535
    %v1710 = vshra.s32 %v1708, 16
    %v1711 = vcvt.s32.f32 %v1709
    %v1712 = vcvt.s32.f32 %v1710
    %1713 = vmin.xlane.f32.xlu0 %v1712
    %v1714 = vpop.xlane.xlu0 %1713
    %vm1715 = vcmp.eq.f32.partialorder %v1712, %v1714
    %v1716 = vsel %vm1715, %v1711, inf
    %1717 = vmin.xlane.f32.xlu0 %v1716
    %v1718 = vpop.xlane.xlu0 %1717
    %v1719 = vcvt.f32.s32 %v1718
    %v1720 = vcvt.f32.s32 %v1714
    %v1721 = vshll.u32 %v1720, 16
    %v1722 = vadd.s32 %v1721, %v1719
    %v1723 = vsel %vm311, %v1705, 2147483647
    %v1724 = vand.u32 %v1723, 65535
    %v1725 = vshra.s32 %v1723, 16
    %v1726 = vcvt.s32.f32 %v1724
    %v1727 = vcvt.s32.f32 %v1725
    %1728 = vmin.xlane.f32.xlu0 %v1727
    %v1729 = vpop.xlane.xlu0 %1728
    %vm1730 = vcmp.eq.f32.partialorder %v1727, %v1729
    %v1731 = vsel %vm1730, %v1726, inf
    %1732 = vmin.xlane.f32.xlu0 %v1731
    %v1733 = vpop.xlane.xlu0 %1732
    %v1734 = vcvt.f32.s32 %v1733
    %v1735 = vcvt.f32.s32 %v1729
    %v1736 = vshll.u32 %v1735, 16
    %v1737 = vadd.s32 %v1736, %v1734
    %v1738 = vsel %vm311, %v1706, 2147483647
    %v1739 = vand.u32 %v1738, 65535
    %v1740 = vshra.s32 %v1738, 16
    %v1741 = vcvt.s32.f32 %v1739
    %v1742 = vcvt.s32.f32 %v1740
    %1743 = vmin.xlane.f32.xlu0 %v1742
    %v1744 = vpop.xlane.xlu0 %1743
    %vm1745 = vcmp.eq.f32.partialorder %v1742, %v1744
    %v1746 = vsel %vm1745, %v1741, inf
    %1747 = vmin.xlane.f32.xlu0 %v1746
    %v1748 = vpop.xlane.xlu0 %1747
    %v1749 = vcvt.f32.s32 %v1748
    %v1750 = vcvt.f32.s32 %v1744
    %v1751 = vshll.u32 %v1750, 16
    %v1752 = vadd.s32 %v1751, %v1749
    %v1753 = vsel %vm311, %v1707, 2147483647
    %v1754 = vand.u32 %v1753, 65535
    %v1755 = vshra.s32 %v1753, 16
    %v1756 = vcvt.s32.f32 %v1754
    %v1757 = vcvt.s32.f32 %v1755
    %1758 = vmin.xlane.f32.xlu0 %v1757
    %v1759 = vpop.xlane.xlu0 %1758
    %vm1760 = vcmp.eq.f32.partialorder %v1757, %v1759
    %v1761 = vsel %vm1760, %v1756, inf
    %1762 = vmin.xlane.f32.xlu0 %v1761
    %v1763 = vpop.xlane.xlu0 %1762
    %v1764 = vcvt.f32.s32 %v1763
    %v1765 = vcvt.f32.s32 %v1759
    %v1766 = vshll.u32 %v1765, 16
    %v1767 = vadd.s32 %v1766, %v1764
    %vm1768 = vcmp.eq.s32.totalorder %v190, %v1722
    %vm1769 = vcmp.eq.s32.totalorder %v190, %v1737
    %vm1770 = vcmp.eq.s32.totalorder %v190, %v1752
    %vm1771 = vcmp.eq.s32.totalorder %v190, %v1767
    %v1772 = vsel %vm1768, 1, 0
    %v1773 = vsel %vm1769, 1, 0
    %v1774 = vsel %vm1770, 1, 0
    %v1775 = vsel %vm1771, 1, 0
    %v1776 = vcvt.s32.f32 %v1772
    %v1777 = vcvt.s32.f32 %v1773
    %v1778 = vcvt.s32.f32 %v1774
    %v1779 = vcvt.s32.f32 %v1775
    %v1780 = vpack.c.bf16 %v1777, %v1776
    %v1781 = vpack.c.bf16 %v1779, %v1778
    %v1783 = vsel %vm311, %v1780, 0
    %v1786 = vsel %vm311, %v1781, 0
    %1788 = vmatpush.bf16.msra.mxu0 0
    %1789 = vmatpush.bf16.msra.mxu0 0
    %1790 = vmatpush.bf16.msra.mxu0 0
    %1791 = vmatpush.bf16.msra.mxu0 0
    %1792 = vmatpush.bf16.msra.mxu0 0
    %1793 = vmatpush.bf16.msra.mxu0 0
    %1794 = vmatpush.bf16.msra.mxu0 %v1310
    %1795 = vmatpush.bf16.msra.mxu0 %v1309
    %1796 = vmatmul.bf16.gmra.mxu0 %v1783
    %v1797 = vpop.f32.mrf.mxu0
    %v1798 = vadd.f32 0.0, %v1797
    %v1799 = vpop.f32.mrf.mxu0
    %v1800 = vadd.f32 0.0, %v1799
    %1801 = vmatmul.bf16.gmra.mxu0 %v1786
    %v1802 = vpop.f32.mrf.mxu0
    %v1803 = vadd.f32 0.0, %v1802
    %v1804 = vpop.f32.mrf.mxu0
    %v1805 = vadd.f32 0.0, %v1804
    %1806 = vdwg.mxu0
    %v1807 = vmax.f32 %v1680, %v1798
    %v1808 = vmax.f32 %v1681, %v1800
    %v1809 = vmax.f32 %v1682, %v1803
    %v1810 = vmax.f32 %v1683, %v1805
    %v1811 = vsel %vm1768, inf, %v1684
    %v1812 = vsel %vm1769, inf, %v1685
    %v1813 = vsel %vm1770, inf, %v1686
    %v1814 = vsel %vm1771, inf, %v1687
    %v1815 = vsel %vm311, %v1811, inf
    %1816 = vmin.xlane.f32.xlu0 %v1815
    %v1817 = vpop.xlane.xlu0 %1816
    %v1818 = vsel %vm311, %v1812, inf
    %1819 = vmin.xlane.f32.xlu0 %v1818
    %v1820 = vpop.xlane.xlu0 %1819
    %v1821 = vsel %vm311, %v1813, inf
    %1822 = vmin.xlane.f32.xlu0 %v1821
    %v1823 = vpop.xlane.xlu0 %1822
    %v1824 = vsel %vm311, %v1814, inf
    %1825 = vmin.xlane.f32.xlu0 %v1824
    %v1826 = vpop.xlane.xlu0 %1825
    %vm1827 = vcmp.eq.f32.partialorder %v1811, %v1817
    %vm1828 = vcmp.eq.f32.partialorder %v1812, %v1820
    %vm1829 = vcmp.eq.f32.partialorder %v1813, %v1823
    %vm1830 = vcmp.eq.f32.partialorder %v1814, %v1826
    %v1831 = vsel %vm1827, %v190, 32
    %v1832 = vsel %vm1828, %v190, 32
    %v1833 = vsel %vm1829, %v190, 32
    %v1834 = vsel %vm1830, %v190, 32
    %v1835 = vsel %vm311, %v1831, 2147483647
    %v1836 = vand.u32 %v1835, 65535
    %v1837 = vshra.s32 %v1835, 16
    %v1838 = vcvt.s32.f32 %v1836
    %v1839 = vcvt.s32.f32 %v1837
    %1840 = vmin.xlane.f32.xlu0 %v1839
    %v1841 = vpop.xlane.xlu0 %1840
    %vm1842 = vcmp.eq.f32.partialorder %v1839, %v1841
    %v1843 = vsel %vm1842, %v1838, inf
    %1844 = vmin.xlane.f32.xlu0 %v1843
    %v1845 = vpop.xlane.xlu0 %1844
    %v1846 = vcvt.f32.s32 %v1845
    %v1847 = vcvt.f32.s32 %v1841
    %v1848 = vshll.u32 %v1847, 16
    %v1849 = vadd.s32 %v1848, %v1846
    %v1850 = vsel %vm311, %v1832, 2147483647
    %v1851 = vand.u32 %v1850, 65535
    %v1852 = vshra.s32 %v1850, 16
    %v1853 = vcvt.s32.f32 %v1851
    %v1854 = vcvt.s32.f32 %v1852
    %1855 = vmin.xlane.f32.xlu0 %v1854
    %v1856 = vpop.xlane.xlu0 %1855
    %vm1857 = vcmp.eq.f32.partialorder %v1854, %v1856
    %v1858 = vsel %vm1857, %v1853, inf
    %1859 = vmin.xlane.f32.xlu0 %v1858
    %v1860 = vpop.xlane.xlu0 %1859
    %v1861 = vcvt.f32.s32 %v1860
    %v1862 = vcvt.f32.s32 %v1856
    %v1863 = vshll.u32 %v1862, 16
    %v1864 = vadd.s32 %v1863, %v1861
    %v1865 = vsel %vm311, %v1833, 2147483647
    %v1866 = vand.u32 %v1865, 65535
    %v1867 = vshra.s32 %v1865, 16
    %v1868 = vcvt.s32.f32 %v1866
    %v1869 = vcvt.s32.f32 %v1867
    %1870 = vmin.xlane.f32.xlu0 %v1869
    %v1871 = vpop.xlane.xlu0 %1870
    %vm1872 = vcmp.eq.f32.partialorder %v1869, %v1871
    %v1873 = vsel %vm1872, %v1868, inf
    %1874 = vmin.xlane.f32.xlu0 %v1873
    %v1875 = vpop.xlane.xlu0 %1874
    %v1876 = vcvt.f32.s32 %v1875
    %v1877 = vcvt.f32.s32 %v1871
    %v1878 = vshll.u32 %v1877, 16
    %v1879 = vadd.s32 %v1878, %v1876
    %v1880 = vsel %vm311, %v1834, 2147483647
    %v1881 = vand.u32 %v1880, 65535
    %v1882 = vshra.s32 %v1880, 16
    %v1883 = vcvt.s32.f32 %v1881
    %v1884 = vcvt.s32.f32 %v1882
    %1885 = vmin.xlane.f32.xlu0 %v1884
    %v1886 = vpop.xlane.xlu0 %1885
    %vm1887 = vcmp.eq.f32.partialorder %v1884, %v1886
    %v1888 = vsel %vm1887, %v1883, inf
    %1889 = vmin.xlane.f32.xlu0 %v1888
    %v1890 = vpop.xlane.xlu0 %1889
    %v1891 = vcvt.f32.s32 %v1890
    %v1892 = vcvt.f32.s32 %v1886
    %v1893 = vshll.u32 %v1892, 16
    %v1894 = vadd.s32 %v1893, %v1891
    %vm1895 = vcmp.eq.s32.totalorder %v190, %v1849
    %vm1896 = vcmp.eq.s32.totalorder %v190, %v1864
    %vm1897 = vcmp.eq.s32.totalorder %v190, %v1879
    %vm1898 = vcmp.eq.s32.totalorder %v190, %v1894
    %v1899 = vsel %vm1895, 1, 0
    %v1900 = vsel %vm1896, 1, 0
    %v1901 = vsel %vm1897, 1, 0
    %v1902 = vsel %vm1898, 1, 0
    %v1903 = vcvt.s32.f32 %v1899
    %v1904 = vcvt.s32.f32 %v1900
    %v1905 = vcvt.s32.f32 %v1901
    %v1906 = vcvt.s32.f32 %v1902
    %v1907 = vpack.c.bf16 %v1904, %v1903
    %v1908 = vpack.c.bf16 %v1906, %v1905
    %v1910 = vsel %vm311, %v1907, 0
    %v1913 = vsel %vm311, %v1908, 0
    %1915 = vmatpush.bf16.msra.mxu0 0
    %1916 = vmatpush.bf16.msra.mxu0 0
    %1917 = vmatpush.bf16.msra.mxu0 0
    %1918 = vmatpush.bf16.msra.mxu0 0
    %1919 = vmatpush.bf16.msra.mxu0 0
    %1920 = vmatpush.bf16.msra.mxu0 0
    %1921 = vmatpush.bf16.msra.mxu0 %v1310
    %1922 = vmatpush.bf16.msra.mxu0 %v1309
    %1923 = vmatmul.bf16.gmra.mxu0 %v1910
    %v1924 = vpop.f32.mrf.mxu0
    %v1925 = vadd.f32 0.0, %v1924
    %v1926 = vpop.f32.mrf.mxu0
    %v1927 = vadd.f32 0.0, %v1926
    %1928 = vmatmul.bf16.gmra.mxu0 %v1913
    %v1929 = vpop.f32.mrf.mxu0
    %v1930 = vadd.f32 0.0, %v1929
    %v1931 = vpop.f32.mrf.mxu0
    %v1932 = vadd.f32 0.0, %v1931
    %1933 = vdwg.mxu0
    %v1934 = vmax.f32 %v1807, %v1925
    %v1935 = vmax.f32 %v1808, %v1927
    %v1936 = vmax.f32 %v1809, %v1930
    %v1937 = vmax.f32 %v1810, %v1932
    %v1938 = vadd.f32 %v1217, %v1934
    %v1939 = vadd.f32 %v1219, %v1935
    %v1940 = vadd.f32 %v1222, %v1936
    %v1941 = vadd.f32 %v1224, %v1937
    %v1942 = vmax.f32 %v1938, 0.0
    %v1943 = vmax.f32 %v1939, 0.0
    %v1944 = vmax.f32 %v1940, 0.0
    %v1945 = vmax.f32 %v1941, 0.0
    %v1946 = vpack.c.bf16 %v1943, %v1942
    %v1947 = vpack.c.bf16 %v1945, %v1944
    %1948 = vmatpush.bf16.xpose.msra.mxu0 0
    %1949 = vmatpush.bf16.xpose.msra.mxu0 0
    %1950 = vmatpush.bf16.xpose.msra.mxu0 0
    %1951 = vmatpush.bf16.xpose.msra.mxu0 0
    %1952 = vmatpush.bf16.xpose.msra.mxu0 0
    %1953 = vmatpush.bf16.xpose.msra.mxu0 0
    %1954 = vmatpush.bf16.xpose.msra.mxu0 %v1947
    %1955 = vmatpush.bf16.xpose.msra.mxu0 %v1946
    %1956 = vmatmul.bf16.gmra.mxu0 %v1946
    %v1957 = vpop.f32.mrf.mxu0
    %v1958 = vadd.f32 0.0, %v1957
    %v1959 = vpop.f32.mrf.mxu0
    %v1960 = vadd.f32 0.0, %v1959
    %1961 = vmatmul.bf16.gmra.mxu0 %v1947
    %v1962 = vpop.f32.mrf.mxu0
    %v1963 = vadd.f32 0.0, %v1962
    %v1964 = vpop.f32.mrf.mxu0
    %v1965 = vadd.f32 0.0, %v1964
    %1966 = vdwg.mxu0
    %v1967 = vmul.f32 %v1942, %v1942
    %v1968 = vmul.f32 %v1943, %v1943
    %v1969 = vmul.f32 %v1944, %v1944
    %v1970 = vmul.f32 %v1945, %v1945
    %v1971 = vpack.c.bf16 %v1968, %v1967
    %v1972 = vpack.c.bf16 %v1970, %v1969
    %1973 = vmatpush.bf16.xpose.msra.mxu0 0
    %1974 = vmatpush.bf16.xpose.msra.mxu0 0
    %1975 = vmatpush.bf16.xpose.msra.mxu0 0
    %1976 = vmatpush.bf16.xpose.msra.mxu0 0
    %1977 = vmatpush.bf16.xpose.msra.mxu0 0
    %1978 = vmatpush.bf16.xpose.msra.mxu0 0
    %1979 = vmatpush.bf16.xpose.msra.mxu0 %v1972
    %1980 = vmatpush.bf16.xpose.msra.mxu0 %v1971
    %1981 = vmatmul.bf16.gmra.mxu0 1065369472
    %v1982 = vpop.f32.mrf.mxu0
    %v1983 = vadd.f32 0.0, %v1982
    %v1984 = vpop.f32.mrf.mxu0
    %1985 = vdwg.mxu0
    %v1986 = vmul.f32 %v1958, 2.0
    %v1987 = vmul.f32 %v1960, 2.0
    %v1988 = vmul.f32 %v1963, 2.0
    %v1989 = vmul.f32 %v1965, 2.0
    %v1990 = vperm.slane %v1983, 0
    %v1991 = vsub.f32 %v1990, %v1986
    %v1992 = vsub.f32 %v1990, %v1987
    %v1993 = vsub.f32 %v1990, %v1988
    %v1994 = vsub.f32 %v1990, %v1989
    %v1995 = vsel %vm203, inf, %v1991
    %v1996 = vsel %vm204, inf, %v1992
    %v1997 = vsel %vm205, inf, %v1993
    %v1998 = vsel %vm206, inf, %v1994
    %v1999 = vld [vmem:[#allocation7] sm:$0xf]
    %v2000 = vld [vmem:[#allocation7 + $0x4] sm:$0xf]
    %v2001 = vld [vmem:[#allocation7 + $0x8] sm:$0xf]
    %v2002 = vld [vmem:[#allocation7 + $0xc] sm:$0xf]
    %v2003 = vld [vmem:[#allocation7 + $0x10] sm:$0xf]
    %v2004 = vld [vmem:[#allocation7 + $0x14] sm:$0xf]
    %v2005 = vld [vmem:[#allocation7 + $0x18] sm:$0xf]
    %v2006 = vld [vmem:[#allocation7 + $0x1c] sm:$0xf]
    %v2007 = vld [vmem:[#allocation7 + $0x20] sm:$0xf]
    %v2008 = vld [vmem:[#allocation7 + $0x24] sm:$0xf]
    %v2009 = vld [vmem:[#allocation7 + $0x28] sm:$0xf]
    %v2010 = vld [vmem:[#allocation7 + $0x2c] sm:$0xf]
    %v2011 = vld [vmem:[#allocation7 + $0x30] sm:$0xf]
    %v2012 = vld [vmem:[#allocation7 + $0x34] sm:$0xf]
    %v2013 = vld [vmem:[#allocation7 + $0x38] sm:$0xf]
    %v2014 = vld [vmem:[#allocation7 + $0x3c] sm:$0xf]
    %v2015 = vld [vmem:[%s9] sm:$0x1]
    %v2017 = vperm.slane %v2015, 0
    %v2035 = vunpack.c.l.b16 %v1999
    %v2036 = vunpack.c.l.b16 %v2000
    %v2037 = vunpack.c.l.b16 %v2001
    %v2038 = vunpack.c.l.b16 %v2002
    %v2039 = vunpack.c.l.b16 %v2003
    %v2040 = vunpack.c.l.b16 %v2004
    %v2041 = vunpack.c.l.b16 %v2005
    %v2042 = vunpack.c.l.b16 %v2006
    %v2043 = vunpack.c.l.b16 %v2007
    %v2044 = vunpack.c.l.b16 %v2008
    %v2045 = vunpack.c.l.b16 %v2009
    %v2046 = vunpack.c.l.b16 %v2010
    %v2047 = vunpack.c.l.b16 %v2011
    %v2048 = vunpack.c.l.b16 %v2012
    %v2049 = vunpack.c.l.b16 %v2013
    %v2050 = vunpack.c.l.b16 %v2014
    %v2051 = vpack.c.b16 %v2036, %v2035
    %v2052 = vpack.c.b16 %v2038, %v2037
    %v2053 = vpack.c.b16 %v2040, %v2039
    %v2054 = vpack.c.b16 %v2042, %v2041
    %v2055 = vpack.c.b16 %v2044, %v2043
    %v2056 = vpack.c.b16 %v2046, %v2045
    %v2057 = vpack.c.b16 %v2048, %v2047
    %v2058 = vpack.c.b16 %v2050, %v2049
    %2067 = vmatpush.bf16.msra.mxu0 %v2058
    %2068 = vmatpush.bf16.msra.mxu0 %v2057
    %2069 = vmatpush.bf16.msra.mxu0 %v2056
    %2070 = vmatpush.bf16.msra.mxu0 %v2055
    %2071 = vmatpush.bf16.msra.mxu0 %v2054
    %2072 = vmatpush.bf16.msra.mxu0 %v2053
    %2073 = vmatpush.bf16.msra.mxu0 %v2052
    %2074 = vmatpush.bf16.msra.mxu0 %v2051
    %2075 = vmatmul.bf16.gmra.mxu0 %v1946
    %v2076 = vpop.f32.mrf.mxu0
    %v2077 = vadd.f32 %v2017, %v2076
    %v2078 = vpop.f32.mrf.mxu0
    %v2079 = vadd.f32 %v2017, %v2078
    %2080 = vmatmul.bf16.gmra.mxu0 %v1947
    %v2081 = vpop.f32.mrf.mxu0
    %v2082 = vadd.f32 %v2017, %v2081
    %v2083 = vpop.f32.mrf.mxu0
    %v2084 = vadd.f32 %v2017, %v2083
    %2085 = vdwg.mxu0
    %v2086 = vld [vmem:[#allocation8] sm:$0xf]
    %v2087 = vld [vmem:[#allocation8 + $0x4] sm:$0xf]
    %v2088 = vld [vmem:[#allocation8 + $0x8] sm:$0xf]
    %v2089 = vld [vmem:[#allocation8 + $0xc] sm:$0xf]
    %v2090 = vld [vmem:[#allocation8 + $0x10] sm:$0xf]
    %v2091 = vld [vmem:[#allocation8 + $0x14] sm:$0xf]
    %v2092 = vld [vmem:[#allocation8 + $0x18] sm:$0xf]
    %v2093 = vld [vmem:[#allocation8 + $0x1c] sm:$0xf]
    %v2094 = vld [vmem:[#allocation8 + $0x20] sm:$0xf]
    %v2095 = vld [vmem:[#allocation8 + $0x24] sm:$0xf]
    %v2096 = vld [vmem:[#allocation8 + $0x28] sm:$0xf]
    %v2097 = vld [vmem:[#allocation8 + $0x2c] sm:$0xf]
    %v2098 = vld [vmem:[#allocation8 + $0x30] sm:$0xf]
    %v2099 = vld [vmem:[#allocation8 + $0x34] sm:$0xf]
    %v2100 = vld [vmem:[#allocation8 + $0x38] sm:$0xf]
    %v2101 = vld [vmem:[#allocation8 + $0x3c] sm:$0xf]
    %v2118 = vunpack.c.l.b16 %v2086
    %v2119 = vunpack.c.l.b16 %v2087
    %v2120 = vunpack.c.l.b16 %v2088
    %v2121 = vunpack.c.l.b16 %v2089
    %v2122 = vunpack.c.l.b16 %v2090
    %v2123 = vunpack.c.l.b16 %v2091
    %v2124 = vunpack.c.l.b16 %v2092
    %v2125 = vunpack.c.l.b16 %v2093
    %v2126 = vunpack.c.l.b16 %v2094
    %v2127 = vunpack.c.l.b16 %v2095
    %v2128 = vunpack.c.l.b16 %v2096
    %v2129 = vunpack.c.l.b16 %v2097
    %v2130 = vunpack.c.l.b16 %v2098
    %v2131 = vunpack.c.l.b16 %v2099
    %v2132 = vunpack.c.l.b16 %v2100
    %v2133 = vunpack.c.l.b16 %v2101
    %v2134 = vpack.c.b16 %v2119, %v2118
    %v2135 = vpack.c.b16 %v2121, %v2120
    %v2136 = vpack.c.b16 %v2123, %v2122
    %v2137 = vpack.c.b16 %v2125, %v2124
    %v2138 = vpack.c.b16 %v2127, %v2126
    %v2139 = vpack.c.b16 %v2129, %v2128
    %v2140 = vpack.c.b16 %v2131, %v2130
    %v2141 = vpack.c.b16 %v2133, %v2132
    %2150 = vmatpush.bf16.msra.mxu0 %v2141
    %2151 = vmatpush.bf16.msra.mxu0 %v2140
    %2152 = vmatpush.bf16.msra.mxu0 %v2139
    %2153 = vmatpush.bf16.msra.mxu0 %v2138
    %2154 = vmatpush.bf16.msra.mxu0 %v2137
    %2155 = vmatpush.bf16.msra.mxu0 %v2136
    %2156 = vmatpush.bf16.msra.mxu0 %v2135
    %2157 = vmatpush.bf16.msra.mxu0 %v2134
    %2158 = vmatmul.bf16.gmra.mxu0 %v1946
    %v2159 = vpop.f32.mrf.mxu0
    %v2160 = vadd.f32 0.0, %v2159
    %v2161 = vpop.f32.mrf.mxu0
    %v2162 = vadd.f32 0.0, %v2161
    %2163 = vmatmul.bf16.gmra.mxu0 %v1947
    %v2164 = vpop.f32.mrf.mxu0
    %v2165 = vadd.f32 0.0, %v2164
    %v2166 = vpop.f32.mrf.mxu0
    %v2167 = vadd.f32 0.0, %v2166
    %2168 = vdwg.mxu0
    %v2169 = vpack.c.bf16 %v2162, %v2160
    %v2170 = vpack.c.bf16 %v2167, %v2165
    %v2171 = vsel %vm311, %v1995, inf
    %2172 = vmin.xlane.f32.xlu0 %v2171
    %v2173 = vpop.xlane.xlu0 %2172
    %v2174 = vsel %vm311, %v1996, inf
    %2175 = vmin.xlane.f32.xlu0 %v2174
    %v2176 = vpop.xlane.xlu0 %2175
    %v2177 = vsel %vm311, %v1997, inf
    %2178 = vmin.xlane.f32.xlu0 %v2177
    %v2179 = vpop.xlane.xlu0 %2178
    %v2180 = vsel %vm311, %v1998, inf
    %2181 = vmin.xlane.f32.xlu0 %v2180
    %v2182 = vpop.xlane.xlu0 %2181
    %vm2183 = vcmp.eq.f32.partialorder %v1995, %v2173
    %vm2184 = vcmp.eq.f32.partialorder %v1996, %v2176
    %vm2185 = vcmp.eq.f32.partialorder %v1997, %v2179
    %vm2186 = vcmp.eq.f32.partialorder %v1998, %v2182
    %v2187 = vsel %vm2183, %v190, 32
    %v2188 = vsel %vm2184, %v190, 32
    %v2189 = vsel %vm2185, %v190, 32
    %v2190 = vsel %vm2186, %v190, 32
    %v2191 = vsel %vm311, %v2187, 2147483647
    %v2192 = vand.u32 %v2191, 65535
    %v2193 = vshra.s32 %v2191, 16
    %v2194 = vcvt.s32.f32 %v2192
    %v2195 = vcvt.s32.f32 %v2193
    %2196 = vmin.xlane.f32.xlu0 %v2195
    %v2197 = vpop.xlane.xlu0 %2196
    %vm2198 = vcmp.eq.f32.partialorder %v2195, %v2197
    %v2199 = vsel %vm2198, %v2194, inf
    %2200 = vmin.xlane.f32.xlu0 %v2199
    %v2201 = vpop.xlane.xlu0 %2200
    %v2202 = vcvt.f32.s32 %v2201
    %v2203 = vcvt.f32.s32 %v2197
    %v2204 = vshll.u32 %v2203, 16
    %v2205 = vadd.s32 %v2204, %v2202
    %v2206 = vsel %vm311, %v2188, 2147483647
    %v2207 = vand.u32 %v2206, 65535
    %v2208 = vshra.s32 %v2206, 16
    %v2209 = vcvt.s32.f32 %v2207
    %v2210 = vcvt.s32.f32 %v2208
    %2211 = vmin.xlane.f32.xlu0 %v2210
    %v2212 = vpop.xlane.xlu0 %2211
    %vm2213 = vcmp.eq.f32.partialorder %v2210, %v2212
    %v2214 = vsel %vm2213, %v2209, inf
    %2215 = vmin.xlane.f32.xlu0 %v2214
    %v2216 = vpop.xlane.xlu0 %2215
    %v2217 = vcvt.f32.s32 %v2216
    %v2218 = vcvt.f32.s32 %v2212
    %v2219 = vshll.u32 %v2218, 16
    %v2220 = vadd.s32 %v2219, %v2217
    %v2221 = vsel %vm311, %v2189, 2147483647
    %v2222 = vand.u32 %v2221, 65535
    %v2223 = vshra.s32 %v2221, 16
    %v2224 = vcvt.s32.f32 %v2222
    %v2225 = vcvt.s32.f32 %v2223
    %2226 = vmin.xlane.f32.xlu0 %v2225
    %v2227 = vpop.xlane.xlu0 %2226
    %vm2228 = vcmp.eq.f32.partialorder %v2225, %v2227
    %v2229 = vsel %vm2228, %v2224, inf
    %2230 = vmin.xlane.f32.xlu0 %v2229
    %v2231 = vpop.xlane.xlu0 %2230
    %v2232 = vcvt.f32.s32 %v2231
    %v2233 = vcvt.f32.s32 %v2227
    %v2234 = vshll.u32 %v2233, 16
    %v2235 = vadd.s32 %v2234, %v2232
    %v2236 = vsel %vm311, %v2190, 2147483647
    %v2237 = vand.u32 %v2236, 65535
    %v2238 = vshra.s32 %v2236, 16
    %v2239 = vcvt.s32.f32 %v2237
    %v2240 = vcvt.s32.f32 %v2238
    %2241 = vmin.xlane.f32.xlu0 %v2240
    %v2242 = vpop.xlane.xlu0 %2241
    %vm2243 = vcmp.eq.f32.partialorder %v2240, %v2242
    %v2244 = vsel %vm2243, %v2239, inf
    %2245 = vmin.xlane.f32.xlu0 %v2244
    %v2246 = vpop.xlane.xlu0 %2245
    %v2247 = vcvt.f32.s32 %v2246
    %v2248 = vcvt.f32.s32 %v2242
    %v2249 = vshll.u32 %v2248, 16
    %v2250 = vadd.s32 %v2249, %v2247
    %vm2251 = vcmp.eq.s32.totalorder %v190, %v2205
    %vm2252 = vcmp.eq.s32.totalorder %v190, %v2220
    %vm2253 = vcmp.eq.s32.totalorder %v190, %v2235
    %vm2254 = vcmp.eq.s32.totalorder %v190, %v2250
    %v2255 = vsel %vm2251, 1, 0
    %v2256 = vsel %vm2252, 1, 0
    %v2257 = vsel %vm2253, 1, 0
    %v2258 = vsel %vm2254, 1, 0
    %v2259 = vcvt.s32.f32 %v2255
    %v2260 = vcvt.s32.f32 %v2256
    %v2261 = vcvt.s32.f32 %v2257
    %v2262 = vcvt.s32.f32 %v2258
    %v2263 = vpack.c.bf16 %v2260, %v2259
    %v2264 = vpack.c.bf16 %v2262, %v2261
    %v2266 = vsel %vm311, %v2263, 0
    %v2269 = vsel %vm311, %v2264, 0
    %2271 = vmatpush.bf16.msra.mxu0 0
    %2272 = vmatpush.bf16.msra.mxu0 0
    %2273 = vmatpush.bf16.msra.mxu0 0
    %2274 = vmatpush.bf16.msra.mxu0 0
    %2275 = vmatpush.bf16.msra.mxu0 0
    %2276 = vmatpush.bf16.msra.mxu0 0
    %2277 = vmatpush.bf16.msra.mxu0 %v2170
    %2278 = vmatpush.bf16.msra.mxu0 %v2169
    %2279 = vmatmul.bf16.gmra.mxu0 %v2266
    %v2280 = vpop.f32.mrf.mxu0
    %v2281 = vadd.f32 0.0, %v2280
    %v2282 = vpop.f32.mrf.mxu0
    %v2283 = vadd.f32 0.0, %v2282
    %2284 = vmatmul.bf16.gmra.mxu0 %v2269
    %v2285 = vpop.f32.mrf.mxu0
    %v2286 = vadd.f32 0.0, %v2285
    %v2287 = vpop.f32.mrf.mxu0
    %v2288 = vadd.f32 0.0, %v2287
    %2289 = vdwg.mxu0
    %v2290 = vsel %vm2251, inf, %v1995
    %v2291 = vsel %vm2252, inf, %v1996
    %v2292 = vsel %vm2253, inf, %v1997
    %v2293 = vsel %vm2254, inf, %v1998
    %v2294 = vsel %vm311, %v2290, inf
    %2295 = vmin.xlane.f32.xlu0 %v2294
    %v2296 = vpop.xlane.xlu0 %2295
    %v2297 = vsel %vm311, %v2291, inf
    %2298 = vmin.xlane.f32.xlu0 %v2297
    %v2299 = vpop.xlane.xlu0 %2298
    %v2300 = vsel %vm311, %v2292, inf
    %2301 = vmin.xlane.f32.xlu0 %v2300
    %v2302 = vpop.xlane.xlu0 %2301
    %v2303 = vsel %vm311, %v2293, inf
    %2304 = vmin.xlane.f32.xlu0 %v2303
    %v2305 = vpop.xlane.xlu0 %2304
    %vm2306 = vcmp.eq.f32.partialorder %v2290, %v2296
    %vm2307 = vcmp.eq.f32.partialorder %v2291, %v2299
    %vm2308 = vcmp.eq.f32.partialorder %v2292, %v2302
    %vm2309 = vcmp.eq.f32.partialorder %v2293, %v2305
    %v2310 = vsel %vm2306, %v190, 32
    %v2311 = vsel %vm2307, %v190, 32
    %v2312 = vsel %vm2308, %v190, 32
    %v2313 = vsel %vm2309, %v190, 32
    %v2314 = vsel %vm311, %v2310, 2147483647
    %v2315 = vand.u32 %v2314, 65535
    %v2316 = vshra.s32 %v2314, 16
    %v2317 = vcvt.s32.f32 %v2315
    %v2318 = vcvt.s32.f32 %v2316
    %2319 = vmin.xlane.f32.xlu0 %v2318
    %v2320 = vpop.xlane.xlu0 %2319
    %vm2321 = vcmp.eq.f32.partialorder %v2318, %v2320
    %v2322 = vsel %vm2321, %v2317, inf
    %2323 = vmin.xlane.f32.xlu0 %v2322
    %v2324 = vpop.xlane.xlu0 %2323
    %v2325 = vcvt.f32.s32 %v2324
    %v2326 = vcvt.f32.s32 %v2320
    %v2327 = vshll.u32 %v2326, 16
    %v2328 = vadd.s32 %v2327, %v2325
    %v2329 = vsel %vm311, %v2311, 2147483647
    %v2330 = vand.u32 %v2329, 65535
    %v2331 = vshra.s32 %v2329, 16
    %v2332 = vcvt.s32.f32 %v2330
    %v2333 = vcvt.s32.f32 %v2331
    %2334 = vmin.xlane.f32.xlu0 %v2333
    %v2335 = vpop.xlane.xlu0 %2334
    %vm2336 = vcmp.eq.f32.partialorder %v2333, %v2335
    %v2337 = vsel %vm2336, %v2332, inf
    %2338 = vmin.xlane.f32.xlu0 %v2337
    %v2339 = vpop.xlane.xlu0 %2338
    %v2340 = vcvt.f32.s32 %v2339
    %v2341 = vcvt.f32.s32 %v2335
    %v2342 = vshll.u32 %v2341, 16
    %v2343 = vadd.s32 %v2342, %v2340
    %v2344 = vsel %vm311, %v2312, 2147483647
    %v2345 = vand.u32 %v2344, 65535
    %v2346 = vshra.s32 %v2344, 16
    %v2347 = vcvt.s32.f32 %v2345
    %v2348 = vcvt.s32.f32 %v2346
    %2349 = vmin.xlane.f32.xlu0 %v2348
    %v2350 = vpop.xlane.xlu0 %2349
    %vm2351 = vcmp.eq.f32.partialorder %v2348, %v2350
    %v2352 = vsel %vm2351, %v2347, inf
    %2353 = vmin.xlane.f32.xlu0 %v2352
    %v2354 = vpop.xlane.xlu0 %2353
    %v2355 = vcvt.f32.s32 %v2354
    %v2356 = vcvt.f32.s32 %v2350
    %v2357 = vshll.u32 %v2356, 16
    %v2358 = vadd.s32 %v2357, %v2355
    %v2359 = vsel %vm311, %v2313, 2147483647
    %v2360 = vand.u32 %v2359, 65535
    %v2361 = vshra.s32 %v2359, 16
    %v2362 = vcvt.s32.f32 %v2360
    %v2363 = vcvt.s32.f32 %v2361
    %2364 = vmin.xlane.f32.xlu0 %v2363
    %v2365 = vpop.xlane.xlu0 %2364
    %vm2366 = vcmp.eq.f32.partialorder %v2363, %v2365
    %v2367 = vsel %vm2366, %v2362, inf
    %2368 = vmin.xlane.f32.xlu0 %v2367
    %v2369 = vpop.xlane.xlu0 %2368
    %v2370 = vcvt.f32.s32 %v2369
    %v2371 = vcvt.f32.s32 %v2365
    %v2372 = vshll.u32 %v2371, 16
    %v2373 = vadd.s32 %v2372, %v2370
    %vm2374 = vcmp.eq.s32.totalorder %v190, %v2328
    %vm2375 = vcmp.eq.s32.totalorder %v190, %v2343
    %vm2376 = vcmp.eq.s32.totalorder %v190, %v2358
    %vm2377 = vcmp.eq.s32.totalorder %v190, %v2373
    %v2378 = vsel %vm2374, 1, 0
    %v2379 = vsel %vm2375, 1, 0
    %v2380 = vsel %vm2376, 1, 0
    %v2381 = vsel %vm2377, 1, 0
    %v2382 = vcvt.s32.f32 %v2378
    %v2383 = vcvt.s32.f32 %v2379
    %v2384 = vcvt.s32.f32 %v2380
    %v2385 = vcvt.s32.f32 %v2381
    %v2386 = vpack.c.bf16 %v2383, %v2382
    %v2387 = vpack.c.bf16 %v2385, %v2384
    %v2389 = vsel %vm311, %v2386, 0
    %v2392 = vsel %vm311, %v2387, 0
    %2394 = vmatpush.bf16.msra.mxu0 0
    %2395 = vmatpush.bf16.msra.mxu0 0
    %2396 = vmatpush.bf16.msra.mxu0 0
    %2397 = vmatpush.bf16.msra.mxu0 0
    %2398 = vmatpush.bf16.msra.mxu0 0
    %2399 = vmatpush.bf16.msra.mxu0 0
    %2400 = vmatpush.bf16.msra.mxu0 %v2170
    %2401 = vmatpush.bf16.msra.mxu0 %v2169
    %2402 = vmatmul.bf16.gmra.mxu0 %v2389
    %v2403 = vpop.f32.mrf.mxu0
    %v2404 = vadd.f32 0.0, %v2403
    %v2405 = vpop.f32.mrf.mxu0
    %v2406 = vadd.f32 0.0, %v2405
    %2407 = vmatmul.bf16.gmra.mxu0 %v2392
    %v2408 = vpop.f32.mrf.mxu0
    %v2409 = vadd.f32 0.0, %v2408
    %v2410 = vpop.f32.mrf.mxu0
    %v2411 = vadd.f32 0.0, %v2410
    %2412 = vdwg.mxu0
    %v2413 = vmax.f32 %v2281, %v2404
    %v2414 = vmax.f32 %v2283, %v2406
    %v2415 = vmax.f32 %v2286, %v2409
    %v2416 = vmax.f32 %v2288, %v2411
    %v2417 = vsel %vm2374, inf, %v2290
    %v2418 = vsel %vm2375, inf, %v2291
    %v2419 = vsel %vm2376, inf, %v2292
    %v2420 = vsel %vm2377, inf, %v2293
    %v2421 = vsel %vm311, %v2417, inf
    %2422 = vmin.xlane.f32.xlu0 %v2421
    %v2423 = vpop.xlane.xlu0 %2422
    %v2424 = vsel %vm311, %v2418, inf
    %2425 = vmin.xlane.f32.xlu0 %v2424
    %v2426 = vpop.xlane.xlu0 %2425
    %v2427 = vsel %vm311, %v2419, inf
    %2428 = vmin.xlane.f32.xlu0 %v2427
    %v2429 = vpop.xlane.xlu0 %2428
    %v2430 = vsel %vm311, %v2420, inf
    %2431 = vmin.xlane.f32.xlu0 %v2430
    %v2432 = vpop.xlane.xlu0 %2431
    %vm2433 = vcmp.eq.f32.partialorder %v2417, %v2423
    %vm2434 = vcmp.eq.f32.partialorder %v2418, %v2426
    %vm2435 = vcmp.eq.f32.partialorder %v2419, %v2429
    %vm2436 = vcmp.eq.f32.partialorder %v2420, %v2432
    %v2437 = vsel %vm2433, %v190, 32
    %v2438 = vsel %vm2434, %v190, 32
    %v2439 = vsel %vm2435, %v190, 32
    %v2440 = vsel %vm2436, %v190, 32
    %v2441 = vsel %vm311, %v2437, 2147483647
    %v2442 = vand.u32 %v2441, 65535
    %v2443 = vshra.s32 %v2441, 16
    %v2444 = vcvt.s32.f32 %v2442
    %v2445 = vcvt.s32.f32 %v2443
    %2446 = vmin.xlane.f32.xlu0 %v2445
    %v2447 = vpop.xlane.xlu0 %2446
    %vm2448 = vcmp.eq.f32.partialorder %v2445, %v2447
    %v2449 = vsel %vm2448, %v2444, inf
    %2450 = vmin.xlane.f32.xlu0 %v2449
    %v2451 = vpop.xlane.xlu0 %2450
    %v2452 = vcvt.f32.s32 %v2451
    %v2453 = vcvt.f32.s32 %v2447
    %v2454 = vshll.u32 %v2453, 16
    %v2455 = vadd.s32 %v2454, %v2452
    %v2456 = vsel %vm311, %v2438, 2147483647
    %v2457 = vand.u32 %v2456, 65535
    %v2458 = vshra.s32 %v2456, 16
    %v2459 = vcvt.s32.f32 %v2457
    %v2460 = vcvt.s32.f32 %v2458
    %2461 = vmin.xlane.f32.xlu0 %v2460
    %v2462 = vpop.xlane.xlu0 %2461
    %vm2463 = vcmp.eq.f32.partialorder %v2460, %v2462
    %v2464 = vsel %vm2463, %v2459, inf
    %2465 = vmin.xlane.f32.xlu0 %v2464
    %v2466 = vpop.xlane.xlu0 %2465
    %v2467 = vcvt.f32.s32 %v2466
    %v2468 = vcvt.f32.s32 %v2462
    %v2469 = vshll.u32 %v2468, 16
    %v2470 = vadd.s32 %v2469, %v2467
    %v2471 = vsel %vm311, %v2439, 2147483647
    %v2472 = vand.u32 %v2471, 65535
    %v2473 = vshra.s32 %v2471, 16
    %v2474 = vcvt.s32.f32 %v2472
    %v2475 = vcvt.s32.f32 %v2473
    %2476 = vmin.xlane.f32.xlu0 %v2475
    %v2477 = vpop.xlane.xlu0 %2476
    %vm2478 = vcmp.eq.f32.partialorder %v2475, %v2477
    %v2479 = vsel %vm2478, %v2474, inf
    %2480 = vmin.xlane.f32.xlu0 %v2479
    %v2481 = vpop.xlane.xlu0 %2480
    %v2482 = vcvt.f32.s32 %v2481
    %v2483 = vcvt.f32.s32 %v2477
    %v2484 = vshll.u32 %v2483, 16
    %v2485 = vadd.s32 %v2484, %v2482
    %v2486 = vsel %vm311, %v2440, 2147483647
    %v2487 = vand.u32 %v2486, 65535
    %v2488 = vshra.s32 %v2486, 16
    %v2489 = vcvt.s32.f32 %v2487
    %v2490 = vcvt.s32.f32 %v2488
    %2491 = vmin.xlane.f32.xlu0 %v2490
    %v2492 = vpop.xlane.xlu0 %2491
    %vm2493 = vcmp.eq.f32.partialorder %v2490, %v2492
    %v2494 = vsel %vm2493, %v2489, inf
    %2495 = vmin.xlane.f32.xlu0 %v2494
    %v2496 = vpop.xlane.xlu0 %2495
    %v2497 = vcvt.f32.s32 %v2496
    %v2498 = vcvt.f32.s32 %v2492
    %v2499 = vshll.u32 %v2498, 16
    %v2500 = vadd.s32 %v2499, %v2497
    %vm2501 = vcmp.eq.s32.totalorder %v190, %v2455
    %vm2502 = vcmp.eq.s32.totalorder %v190, %v2470
    %vm2503 = vcmp.eq.s32.totalorder %v190, %v2485
    %vm2504 = vcmp.eq.s32.totalorder %v190, %v2500
    %v2505 = vsel %vm2501, 1, 0
    %v2506 = vsel %vm2502, 1, 0
    %v2507 = vsel %vm2503, 1, 0
    %v2508 = vsel %vm2504, 1, 0
    %v2509 = vcvt.s32.f32 %v2505
    %v2510 = vcvt.s32.f32 %v2506
    %v2511 = vcvt.s32.f32 %v2507
    %v2512 = vcvt.s32.f32 %v2508
    %v2513 = vpack.c.bf16 %v2510, %v2509
    %v2514 = vpack.c.bf16 %v2512, %v2511
    %v2516 = vsel %vm311, %v2513, 0
    %v2519 = vsel %vm311, %v2514, 0
    %2521 = vmatpush.bf16.msra.mxu0 0
    %2522 = vmatpush.bf16.msra.mxu0 0
    %2523 = vmatpush.bf16.msra.mxu0 0
    %2524 = vmatpush.bf16.msra.mxu0 0
    %2525 = vmatpush.bf16.msra.mxu0 0
    %2526 = vmatpush.bf16.msra.mxu0 0
    %2527 = vmatpush.bf16.msra.mxu0 %v2170
    %2528 = vmatpush.bf16.msra.mxu0 %v2169
    %2529 = vmatmul.bf16.gmra.mxu0 %v2516
    %v2530 = vpop.f32.mrf.mxu0
    %v2531 = vadd.f32 0.0, %v2530
    %v2532 = vpop.f32.mrf.mxu0
    %v2533 = vadd.f32 0.0, %v2532
    %2534 = vmatmul.bf16.gmra.mxu0 %v2519
    %v2535 = vpop.f32.mrf.mxu0
    %v2536 = vadd.f32 0.0, %v2535
    %v2537 = vpop.f32.mrf.mxu0
    %v2538 = vadd.f32 0.0, %v2537
    %2539 = vdwg.mxu0
    %v2540 = vmax.f32 %v2413, %v2531
    %v2541 = vmax.f32 %v2414, %v2533
    %v2542 = vmax.f32 %v2415, %v2536
    %v2543 = vmax.f32 %v2416, %v2538
    %v2544 = vsel %vm2501, inf, %v2417
    %v2545 = vsel %vm2502, inf, %v2418
    %v2546 = vsel %vm2503, inf, %v2419
    %v2547 = vsel %vm2504, inf, %v2420
    %v2548 = vsel %vm311, %v2544, inf
    %2549 = vmin.xlane.f32.xlu0 %v2548
    %v2550 = vpop.xlane.xlu0 %2549
    %v2551 = vsel %vm311, %v2545, inf
    %2552 = vmin.xlane.f32.xlu0 %v2551
    %v2553 = vpop.xlane.xlu0 %2552
    %v2554 = vsel %vm311, %v2546, inf
    %2555 = vmin.xlane.f32.xlu0 %v2554
    %v2556 = vpop.xlane.xlu0 %2555
    %v2557 = vsel %vm311, %v2547, inf
    %2558 = vmin.xlane.f32.xlu0 %v2557
    %v2559 = vpop.xlane.xlu0 %2558
    %vm2560 = vcmp.eq.f32.partialorder %v2544, %v2550
    %vm2561 = vcmp.eq.f32.partialorder %v2545, %v2553
    %vm2562 = vcmp.eq.f32.partialorder %v2546, %v2556
    %vm2563 = vcmp.eq.f32.partialorder %v2547, %v2559
    %v2564 = vsel %vm2560, %v190, 32
    %v2565 = vsel %vm2561, %v190, 32
    %v2566 = vsel %vm2562, %v190, 32
    %v2567 = vsel %vm2563, %v190, 32
    %v2568 = vsel %vm311, %v2564, 2147483647
    %v2569 = vand.u32 %v2568, 65535
    %v2570 = vshra.s32 %v2568, 16
    %v2571 = vcvt.s32.f32 %v2569
    %v2572 = vcvt.s32.f32 %v2570
    %2573 = vmin.xlane.f32.xlu0 %v2572
    %v2574 = vpop.xlane.xlu0 %2573
    %vm2575 = vcmp.eq.f32.partialorder %v2572, %v2574
    %v2576 = vsel %vm2575, %v2571, inf
    %2577 = vmin.xlane.f32.xlu0 %v2576
    %v2578 = vpop.xlane.xlu0 %2577
    %v2579 = vcvt.f32.s32 %v2578
    %v2580 = vcvt.f32.s32 %v2574
    %v2581 = vshll.u32 %v2580, 16
    %v2582 = vadd.s32 %v2581, %v2579
    %v2583 = vsel %vm311, %v2565, 2147483647
    %v2584 = vand.u32 %v2583, 65535
    %v2585 = vshra.s32 %v2583, 16
    %v2586 = vcvt.s32.f32 %v2584
    %v2587 = vcvt.s32.f32 %v2585
    %2588 = vmin.xlane.f32.xlu0 %v2587
    %v2589 = vpop.xlane.xlu0 %2588
    %vm2590 = vcmp.eq.f32.partialorder %v2587, %v2589
    %v2591 = vsel %vm2590, %v2586, inf
    %2592 = vmin.xlane.f32.xlu0 %v2591
    %v2593 = vpop.xlane.xlu0 %2592
    %v2594 = vcvt.f32.s32 %v2593
    %v2595 = vcvt.f32.s32 %v2589
    %v2596 = vshll.u32 %v2595, 16
    %v2597 = vadd.s32 %v2596, %v2594
    %v2598 = vsel %vm311, %v2566, 2147483647
    %v2599 = vand.u32 %v2598, 65535
    %v2600 = vshra.s32 %v2598, 16
    %v2601 = vcvt.s32.f32 %v2599
    %v2602 = vcvt.s32.f32 %v2600
    %2603 = vmin.xlane.f32.xlu0 %v2602
    %v2604 = vpop.xlane.xlu0 %2603
    %vm2605 = vcmp.eq.f32.partialorder %v2602, %v2604
    %v2606 = vsel %vm2605, %v2601, inf
    %2607 = vmin.xlane.f32.xlu0 %v2606
    %v2608 = vpop.xlane.xlu0 %2607
    %v2609 = vcvt.f32.s32 %v2608
    %v2610 = vcvt.f32.s32 %v2604
    %v2611 = vshll.u32 %v2610, 16
    %v2612 = vadd.s32 %v2611, %v2609
    %v2613 = vsel %vm311, %v2567, 2147483647
    %v2614 = vand.u32 %v2613, 65535
    %v2615 = vshra.s32 %v2613, 16
    %v2616 = vcvt.s32.f32 %v2614
    %v2617 = vcvt.s32.f32 %v2615
    %2618 = vmin.xlane.f32.xlu0 %v2617
    %v2619 = vpop.xlane.xlu0 %2618
    %vm2620 = vcmp.eq.f32.partialorder %v2617, %v2619
    %v2621 = vsel %vm2620, %v2616, inf
    %2622 = vmin.xlane.f32.xlu0 %v2621
    %v2623 = vpop.xlane.xlu0 %2622
    %v2624 = vcvt.f32.s32 %v2623
    %v2625 = vcvt.f32.s32 %v2619
    %v2626 = vshll.u32 %v2625, 16
    %v2627 = vadd.s32 %v2626, %v2624
    %vm2628 = vcmp.eq.s32.totalorder %v190, %v2582
    %vm2629 = vcmp.eq.s32.totalorder %v190, %v2597
    %vm2630 = vcmp.eq.s32.totalorder %v190, %v2612
    %vm2631 = vcmp.eq.s32.totalorder %v190, %v2627
    %v2632 = vsel %vm2628, 1, 0
    %v2633 = vsel %vm2629, 1, 0
    %v2634 = vsel %vm2630, 1, 0
    %v2635 = vsel %vm2631, 1, 0
    %v2636 = vcvt.s32.f32 %v2632
    %v2637 = vcvt.s32.f32 %v2633
    %v2638 = vcvt.s32.f32 %v2634
    %v2639 = vcvt.s32.f32 %v2635
    %v2640 = vpack.c.bf16 %v2637, %v2636
    %v2641 = vpack.c.bf16 %v2639, %v2638
    %v2643 = vsel %vm311, %v2640, 0
    %v2646 = vsel %vm311, %v2641, 0
    %2648 = vmatpush.bf16.msra.mxu0 0
    %2649 = vmatpush.bf16.msra.mxu0 0
    %2650 = vmatpush.bf16.msra.mxu0 0
    %2651 = vmatpush.bf16.msra.mxu0 0
    %2652 = vmatpush.bf16.msra.mxu0 0
    %2653 = vmatpush.bf16.msra.mxu0 0
    %2654 = vmatpush.bf16.msra.mxu0 %v2170
    %2655 = vmatpush.bf16.msra.mxu0 %v2169
    %2656 = vmatmul.bf16.gmra.mxu0 %v2643
    %v2657 = vpop.f32.mrf.mxu0
    %v2658 = vadd.f32 0.0, %v2657
    %v2659 = vpop.f32.mrf.mxu0
    %v2660 = vadd.f32 0.0, %v2659
    %2661 = vmatmul.bf16.gmra.mxu0 %v2646
    %v2662 = vpop.f32.mrf.mxu0
    %v2663 = vadd.f32 0.0, %v2662
    %v2664 = vpop.f32.mrf.mxu0
    %v2665 = vadd.f32 0.0, %v2664
    %2666 = vdwg.mxu0
    %v2667 = vmax.f32 %v2540, %v2658
    %v2668 = vmax.f32 %v2541, %v2660
    %v2669 = vmax.f32 %v2542, %v2663
    %v2670 = vmax.f32 %v2543, %v2665
    %v2671 = vsel %vm2628, inf, %v2544
    %v2672 = vsel %vm2629, inf, %v2545
    %v2673 = vsel %vm2630, inf, %v2546
    %v2674 = vsel %vm2631, inf, %v2547
    %v2675 = vsel %vm311, %v2671, inf
    %2676 = vmin.xlane.f32.xlu0 %v2675
    %v2677 = vpop.xlane.xlu0 %2676
    %v2678 = vsel %vm311, %v2672, inf
    %2679 = vmin.xlane.f32.xlu0 %v2678
    %v2680 = vpop.xlane.xlu0 %2679
    %v2681 = vsel %vm311, %v2673, inf
    %2682 = vmin.xlane.f32.xlu0 %v2681
    %v2683 = vpop.xlane.xlu0 %2682
    %v2684 = vsel %vm311, %v2674, inf
    %2685 = vmin.xlane.f32.xlu0 %v2684
    %v2686 = vpop.xlane.xlu0 %2685
    %vm2687 = vcmp.eq.f32.partialorder %v2671, %v2677
    %vm2688 = vcmp.eq.f32.partialorder %v2672, %v2680
    %vm2689 = vcmp.eq.f32.partialorder %v2673, %v2683
    %vm2690 = vcmp.eq.f32.partialorder %v2674, %v2686
    %v2691 = vsel %vm2687, %v190, 32
    %v2692 = vsel %vm2688, %v190, 32
    %v2693 = vsel %vm2689, %v190, 32
    %v2694 = vsel %vm2690, %v190, 32
    %v2695 = vsel %vm311, %v2691, 2147483647
    %v2696 = vand.u32 %v2695, 65535
    %v2697 = vshra.s32 %v2695, 16
    %v2698 = vcvt.s32.f32 %v2696
    %v2699 = vcvt.s32.f32 %v2697
    %2700 = vmin.xlane.f32.xlu0 %v2699
    %v2701 = vpop.xlane.xlu0 %2700
    %vm2702 = vcmp.eq.f32.partialorder %v2699, %v2701
    %v2703 = vsel %vm2702, %v2698, inf
    %2704 = vmin.xlane.f32.xlu0 %v2703
    %v2705 = vpop.xlane.xlu0 %2704
    %v2706 = vcvt.f32.s32 %v2705
    %v2707 = vcvt.f32.s32 %v2701
    %v2708 = vshll.u32 %v2707, 16
    %v2709 = vadd.s32 %v2708, %v2706
    %v2710 = vsel %vm311, %v2692, 2147483647
    %v2711 = vand.u32 %v2710, 65535
    %v2712 = vshra.s32 %v2710, 16
    %v2713 = vcvt.s32.f32 %v2711
    %v2714 = vcvt.s32.f32 %v2712
    %2715 = vmin.xlane.f32.xlu0 %v2714
    %v2716 = vpop.xlane.xlu0 %2715
    %vm2717 = vcmp.eq.f32.partialorder %v2714, %v2716
    %v2718 = vsel %vm2717, %v2713, inf
    %2719 = vmin.xlane.f32.xlu0 %v2718
    %v2720 = vpop.xlane.xlu0 %2719
    %v2721 = vcvt.f32.s32 %v2720
    %v2722 = vcvt.f32.s32 %v2716
    %v2723 = vshll.u32 %v2722, 16
    %v2724 = vadd.s32 %v2723, %v2721
    %v2725 = vsel %vm311, %v2693, 2147483647
    %v2726 = vand.u32 %v2725, 65535
    %v2727 = vshra.s32 %v2725, 16
    %v2728 = vcvt.s32.f32 %v2726
    %v2729 = vcvt.s32.f32 %v2727
    %2730 = vmin.xlane.f32.xlu0 %v2729
    %v2731 = vpop.xlane.xlu0 %2730
    %vm2732 = vcmp.eq.f32.partialorder %v2729, %v2731
    %v2733 = vsel %vm2732, %v2728, inf
    %2734 = vmin.xlane.f32.xlu0 %v2733
    %v2735 = vpop.xlane.xlu0 %2734
    %v2736 = vcvt.f32.s32 %v2735
    %v2737 = vcvt.f32.s32 %v2731
    %v2738 = vshll.u32 %v2737, 16
    %v2739 = vadd.s32 %v2738, %v2736
    %v2740 = vsel %vm311, %v2694, 2147483647
    %v2741 = vand.u32 %v2740, 65535
    %v2742 = vshra.s32 %v2740, 16
    %v2743 = vcvt.s32.f32 %v2741
    %v2744 = vcvt.s32.f32 %v2742
    %2745 = vmin.xlane.f32.xlu0 %v2744
    %v2746 = vpop.xlane.xlu0 %2745
    %vm2747 = vcmp.eq.f32.partialorder %v2744, %v2746
    %v2748 = vsel %vm2747, %v2743, inf
    %2749 = vmin.xlane.f32.xlu0 %v2748
    %v2750 = vpop.xlane.xlu0 %2749
    %v2751 = vcvt.f32.s32 %v2750
    %v2752 = vcvt.f32.s32 %v2746
    %v2753 = vshll.u32 %v2752, 16
    %v2754 = vadd.s32 %v2753, %v2751
    %vm2755 = vcmp.eq.s32.totalorder %v190, %v2709
    %vm2756 = vcmp.eq.s32.totalorder %v190, %v2724
    %vm2757 = vcmp.eq.s32.totalorder %v190, %v2739
    %vm2758 = vcmp.eq.s32.totalorder %v190, %v2754
    %v2759 = vsel %vm2755, 1, 0
    %v2760 = vsel %vm2756, 1, 0
    %v2761 = vsel %vm2757, 1, 0
    %v2762 = vsel %vm2758, 1, 0
    %v2763 = vcvt.s32.f32 %v2759
    %v2764 = vcvt.s32.f32 %v2760
    %v2765 = vcvt.s32.f32 %v2761
    %v2766 = vcvt.s32.f32 %v2762
    %v2767 = vpack.c.bf16 %v2764, %v2763
    %v2768 = vpack.c.bf16 %v2766, %v2765
    %v2770 = vsel %vm311, %v2767, 0
    %v2773 = vsel %vm311, %v2768, 0
    %2775 = vmatpush.bf16.msra.mxu0 0
    %2776 = vmatpush.bf16.msra.mxu0 0
    %2777 = vmatpush.bf16.msra.mxu0 0
    %2778 = vmatpush.bf16.msra.mxu0 0
    %2779 = vmatpush.bf16.msra.mxu0 0
    %2780 = vmatpush.bf16.msra.mxu0 0
    %2781 = vmatpush.bf16.msra.mxu0 %v2170
    %2782 = vmatpush.bf16.msra.mxu0 %v2169
    %2783 = vmatmul.bf16.gmra.mxu0 %v2770
    %v2784 = vpop.f32.mrf.mxu0
    %v2785 = vadd.f32 0.0, %v2784
    %v2786 = vpop.f32.mrf.mxu0
    %v2787 = vadd.f32 0.0, %v2786
    %2788 = vmatmul.bf16.gmra.mxu0 %v2773
    %v2789 = vpop.f32.mrf.mxu0
    %v2790 = vadd.f32 0.0, %v2789
    %v2791 = vpop.f32.mrf.mxu0
    %v2792 = vadd.f32 0.0, %v2791
    %2793 = vdwg.mxu0
    %v2794 = vmax.f32 %v2667, %v2785
    %v2795 = vmax.f32 %v2668, %v2787
    %v2796 = vmax.f32 %v2669, %v2790
    %v2797 = vmax.f32 %v2670, %v2792
    %v2798 = vadd.f32 %v2077, %v2794
    %v2799 = vadd.f32 %v2079, %v2795
    %v2800 = vadd.f32 %v2082, %v2796
    %v2801 = vadd.f32 %v2084, %v2797
    %v2802 = vmax.f32 %v2798, 0.0
    %v2803 = vmax.f32 %v2799, 0.0
    %v2804 = vmax.f32 %v2800, 0.0
    %v2805 = vmax.f32 %v2801, 0.0
    %v2806 = vpack.c.bf16 %v2803, %v2802
    %v2807 = vpack.c.bf16 %v2805, %v2804
    %2808 = vmatpush.bf16.xpose.msra.mxu0 0
    %2809 = vmatpush.bf16.xpose.msra.mxu0 0
    %2810 = vmatpush.bf16.xpose.msra.mxu0 0
    %2811 = vmatpush.bf16.xpose.msra.mxu0 0
    %2812 = vmatpush.bf16.xpose.msra.mxu0 0
    %2813 = vmatpush.bf16.xpose.msra.mxu0 0
    %2814 = vmatpush.bf16.xpose.msra.mxu0 %v2807
    %2815 = vmatpush.bf16.xpose.msra.mxu0 %v2806
    %2816 = vmatmul.bf16.gmra.mxu0 %v2806
    %v2817 = vpop.f32.mrf.mxu0
    %v2818 = vadd.f32 0.0, %v2817
    %v2819 = vpop.f32.mrf.mxu0
    %v2820 = vadd.f32 0.0, %v2819
    %2821 = vmatmul.bf16.gmra.mxu0 %v2807
    %v2822 = vpop.f32.mrf.mxu0
    %v2823 = vadd.f32 0.0, %v2822
    %v2824 = vpop.f32.mrf.mxu0
    %v2825 = vadd.f32 0.0, %v2824
    %2826 = vdwg.mxu0
    %v2827 = vmul.f32 %v2802, %v2802
    %v2828 = vmul.f32 %v2803, %v2803
    %v2829 = vmul.f32 %v2804, %v2804
    %v2830 = vmul.f32 %v2805, %v2805
    %v2831 = vpack.c.bf16 %v2828, %v2827
    %v2832 = vpack.c.bf16 %v2830, %v2829
    %2833 = vmatpush.bf16.xpose.msra.mxu0 0
    %2834 = vmatpush.bf16.xpose.msra.mxu0 0
    %2835 = vmatpush.bf16.xpose.msra.mxu0 0
    %2836 = vmatpush.bf16.xpose.msra.mxu0 0
    %2837 = vmatpush.bf16.xpose.msra.mxu0 0
    %2838 = vmatpush.bf16.xpose.msra.mxu0 0
    %2839 = vmatpush.bf16.xpose.msra.mxu0 %v2832
    %2840 = vmatpush.bf16.xpose.msra.mxu0 %v2831
    %2841 = vmatmul.bf16.gmra.mxu0 1065369472
    %v2842 = vpop.f32.mrf.mxu0
    %v2843 = vadd.f32 0.0, %v2842
    %v2844 = vpop.f32.mrf.mxu0
    %2845 = vdwg.mxu0
    %v2846 = vmul.f32 %v2818, 2.0
    %v2847 = vmul.f32 %v2820, 2.0
    %v2848 = vmul.f32 %v2823, 2.0
    %v2849 = vmul.f32 %v2825, 2.0
    %v2850 = vperm.slane %v2843, 0
    %v2851 = vsub.f32 %v2850, %v2846
    %v2852 = vsub.f32 %v2850, %v2847
    %v2853 = vsub.f32 %v2850, %v2848
    %v2854 = vsub.f32 %v2850, %v2849
    %v2855 = vsel %vm203, inf, %v2851
    %v2856 = vsel %vm204, inf, %v2852
    %v2857 = vsel %vm205, inf, %v2853
    %v2858 = vsel %vm206, inf, %v2854
    %v2859 = vld [vmem:[#allocation10] sm:$0xff]
    %v2860 = vld [vmem:[#allocation10 + $0x8] sm:$0xff]
    %v2861 = vld [vmem:[#allocation10 + $0x10] sm:$0xff]
    %v2862 = vld [vmem:[#allocation10 + $0x18] sm:$0xff]
    %v2863 = vld [vmem:[#allocation10 + $0x20] sm:$0xff]
    %v2864 = vld [vmem:[#allocation10 + $0x28] sm:$0xff]
    %v2865 = vld [vmem:[#allocation10 + $0x30] sm:$0xff]
    %v2866 = vld [vmem:[#allocation10 + $0x38] sm:$0xff]
    %v2867 = vld [vmem:[#allocation10 + $0x40] sm:$0xff]
    %v2868 = vld [vmem:[#allocation10 + $0x48] sm:$0xff]
    %v2869 = vld [vmem:[#allocation10 + $0x50] sm:$0xff]
    %v2870 = vld [vmem:[#allocation10 + $0x58] sm:$0xff]
    %v2871 = vld [vmem:[#allocation10 + $0x60] sm:$0xff]
    %v2872 = vld [vmem:[#allocation10 + $0x68] sm:$0xff]
    %v2873 = vld [vmem:[#allocation10 + $0x70] sm:$0xff]
    %v2874 = vld [vmem:[#allocation10 + $0x78] sm:$0xff]
    %v2875 = vld [vmem:[#allocation10 + $0x80] sm:$0xff]
    %v2876 = vld [vmem:[#allocation10 + $0x88] sm:$0xff]
    %v2877 = vld [vmem:[#allocation10 + $0x90] sm:$0xff]
    %v2878 = vld [vmem:[#allocation10 + $0x98] sm:$0xff]
    %v2879 = vld [vmem:[#allocation10 + $0xa0] sm:$0xff]
    %v2880 = vld [vmem:[#allocation10 + $0xa8] sm:$0xff]
    %v2881 = vld [vmem:[#allocation10 + $0xb0] sm:$0xff]
    %v2882 = vld [vmem:[#allocation10 + $0xb8] sm:$0xff]
    %v2883 = vld [vmem:[#allocation10 + $0xc0] sm:$0xff]
    %v2884 = vld [vmem:[#allocation10 + $0xc8] sm:$0xff]
    %v2885 = vld [vmem:[#allocation10 + $0xd0] sm:$0xff]
    %v2886 = vld [vmem:[#allocation10 + $0xd8] sm:$0xff]
    %v2887 = vld [vmem:[#allocation10 + $0xe0] sm:$0xff]
    %v2888 = vld [vmem:[#allocation10 + $0xe8] sm:$0xff]
    %v2889 = vld [vmem:[#allocation10 + $0xf0] sm:$0xff]
    %v2890 = vld [vmem:[#allocation10 + $0xf8] sm:$0xff]
    %v2891 = vld [vmem:[#allocation10 + $0x100] sm:$0xff]
    %v2892 = vld [vmem:[#allocation10 + $0x108] sm:$0xff]
    %v2893 = vld [vmem:[#allocation10 + $0x110] sm:$0xff]
    %v2894 = vld [vmem:[#allocation10 + $0x118] sm:$0xff]
    %v2895 = vld [vmem:[#allocation10 + $0x120] sm:$0xff]
    %v2896 = vld [vmem:[#allocation10 + $0x128] sm:$0xff]
    %v2897 = vld [vmem:[#allocation10 + $0x130] sm:$0xff]
    %v2898 = vld [vmem:[#allocation10 + $0x138] sm:$0xff]
    %v2899 = vld [vmem:[#allocation10 + $0x140] sm:$0xff]
    %v2900 = vld [vmem:[#allocation10 + $0x148] sm:$0xff]
    %v2901 = vld [vmem:[#allocation10 + $0x150] sm:$0xff]
    %v2902 = vld [vmem:[#allocation10 + $0x158] sm:$0xff]
    %v2903 = vld [vmem:[#allocation10 + $0x160] sm:$0xff]
    %v2904 = vld [vmem:[#allocation10 + $0x168] sm:$0xff]
    %v2905 = vld [vmem:[#allocation10 + $0x170] sm:$0xff]
    %v2906 = vld [vmem:[#allocation10 + $0x178] sm:$0xff]
    %v2907 = vld [vmem:[#allocation10 + $0x180] sm:$0xff]
    %v2908 = vld [vmem:[#allocation10 + $0x188] sm:$0xff]
    %v2909 = vld [vmem:[#allocation10 + $0x190] sm:$0xff]
    %v2910 = vld [vmem:[#allocation10 + $0x198] sm:$0xff]
    %v2911 = vld [vmem:[#allocation10 + $0x1a0] sm:$0xff]
    %v2912 = vld [vmem:[#allocation10 + $0x1a8] sm:$0xff]
    %v2913 = vld [vmem:[#allocation10 + $0x1b0] sm:$0xff]
    %v2914 = vld [vmem:[#allocation10 + $0x1b8] sm:$0xff]
    %v2915 = vld [vmem:[#allocation10 + $0x1c0] sm:$0xff]
    %v2916 = vld [vmem:[#allocation10 + $0x1c8] sm:$0xff]
    %v2917 = vld [vmem:[#allocation10 + $0x1d0] sm:$0xff]
    %v2918 = vld [vmem:[#allocation10 + $0x1d8] sm:$0xff]
    %v2919 = vld [vmem:[#allocation10 + $0x1e0] sm:$0xff]
    %v2920 = vld [vmem:[#allocation10 + $0x1e8] sm:$0xff]
    %v2921 = vld [vmem:[#allocation10 + $0x1f0] sm:$0xff]
    %v2922 = vld [vmem:[#allocation10 + $0x1f8] sm:$0xff]
    %v2923 = vld [vmem:[%s12] sm:$0xff]
    %v2925 = vperm.slane %v2923, 0
    %v2926 = vperm.slane %v2923, 1
    %v2927 = vperm.slane %v2923, 2
    %v2928 = vperm.slane %v2923, 3
    %v2929 = vperm.slane %v2923, 4
    %v2930 = vperm.slane %v2923, 5
    %v2931 = vperm.slane %v2923, 6
    %v2932 = vperm.slane %v2923, 7
    %v3005 = vunpack.c.l.b16 %v2859
    %v3006 = vunpack.c.h.b16 %v2859
    %v3007 = vunpack.c.l.b16 %v2860
    %v3008 = vunpack.c.h.b16 %v2860
    %v3009 = vunpack.c.l.b16 %v2861
    %v3010 = vunpack.c.h.b16 %v2861
    %v3011 = vunpack.c.l.b16 %v2862
    %v3012 = vunpack.c.h.b16 %v2862
    %v3013 = vunpack.c.l.b16 %v2863
    %v3014 = vunpack.c.h.b16 %v2863
    %v3015 = vunpack.c.l.b16 %v2864
    %v3016 = vunpack.c.h.b16 %v2864
    %v3017 = vunpack.c.l.b16 %v2865
    %v3018 = vunpack.c.h.b16 %v2865
    %v3019 = vunpack.c.l.b16 %v2866
    %v3020 = vunpack.c.h.b16 %v2866
    %v3021 = vunpack.c.l.b16 %v2867
    %v3022 = vunpack.c.h.b16 %v2867
    %v3023 = vunpack.c.l.b16 %v2868
    %v3024 = vunpack.c.h.b16 %v2868
    %v3025 = vunpack.c.l.b16 %v2869
    %v3026 = vunpack.c.h.b16 %v2869
    %v3027 = vunpack.c.l.b16 %v2870
    %v3028 = vunpack.c.h.b16 %v2870
    %v3029 = vunpack.c.l.b16 %v2871
    %v3030 = vunpack.c.h.b16 %v2871
    %v3031 = vunpack.c.l.b16 %v2872
    %v3032 = vunpack.c.h.b16 %v2872
    %v3033 = vunpack.c.l.b16 %v2873
    %v3034 = vunpack.c.h.b16 %v2873
    %v3035 = vunpack.c.l.b16 %v2874
    %v3036 = vunpack.c.h.b16 %v2874
    %v3037 = vunpack.c.l.b16 %v2875
    %v3038 = vunpack.c.h.b16 %v2875
    %v3039 = vunpack.c.l.b16 %v2876
    %v3040 = vunpack.c.h.b16 %v2876
    %v3041 = vunpack.c.l.b16 %v2877
    %v3042 = vunpack.c.h.b16 %v2877
    %v3043 = vunpack.c.l.b16 %v2878
    %v3044 = vunpack.c.h.b16 %v2878
    %v3045 = vunpack.c.l.b16 %v2879
    %v3046 = vunpack.c.h.b16 %v2879
    %v3047 = vunpack.c.l.b16 %v2880
    %v3048 = vunpack.c.h.b16 %v2880
    %v3049 = vunpack.c.l.b16 %v2881
    %v3050 = vunpack.c.h.b16 %v2881
    %v3051 = vunpack.c.l.b16 %v2882
    %v3052 = vunpack.c.h.b16 %v2882
    %v3053 = vunpack.c.l.b16 %v2883
    %v3054 = vunpack.c.h.b16 %v2883
    %v3055 = vunpack.c.l.b16 %v2884
    %v3056 = vunpack.c.h.b16 %v2884
    %v3057 = vunpack.c.l.b16 %v2885
    %v3058 = vunpack.c.h.b16 %v2885
    %v3059 = vunpack.c.l.b16 %v2886
    %v3060 = vunpack.c.h.b16 %v2886
    %v3061 = vunpack.c.l.b16 %v2887
    %v3062 = vunpack.c.h.b16 %v2887
    %v3063 = vunpack.c.l.b16 %v2888
    %v3064 = vunpack.c.h.b16 %v2888
    %v3065 = vunpack.c.l.b16 %v2889
    %v3066 = vunpack.c.h.b16 %v2889
    %v3067 = vunpack.c.l.b16 %v2890
    %v3068 = vunpack.c.h.b16 %v2890
    %v3069 = vunpack.c.l.b16 %v2891
    %v3070 = vunpack.c.h.b16 %v2891
    %v3071 = vunpack.c.l.b16 %v2892
    %v3072 = vunpack.c.h.b16 %v2892
    %v3073 = vunpack.c.l.b16 %v2893
    %v3074 = vunpack.c.h.b16 %v2893
    %v3075 = vunpack.c.l.b16 %v2894
    %v3076 = vunpack.c.h.b16 %v2894
    %v3077 = vunpack.c.l.b16 %v2895
    %v3078 = vunpack.c.h.b16 %v2895
    %v3079 = vunpack.c.l.b16 %v2896
    %v3080 = vunpack.c.h.b16 %v2896
    %v3081 = vunpack.c.l.b16 %v2897
    %v3082 = vunpack.c.h.b16 %v2897
    %v3083 = vunpack.c.l.b16 %v2898
    %v3084 = vunpack.c.h.b16 %v2898
    %v3085 = vunpack.c.l.b16 %v2899
    %v3086 = vunpack.c.h.b16 %v2899
    %v3087 = vunpack.c.l.b16 %v2900
    %v3088 = vunpack.c.h.b16 %v2900
    %v3089 = vunpack.c.l.b16 %v2901
    %v3090 = vunpack.c.h.b16 %v2901
    %v3091 = vunpack.c.l.b16 %v2902
    %v3092 = vunpack.c.h.b16 %v2902
    %v3093 = vunpack.c.l.b16 %v2903
    %v3094 = vunpack.c.h.b16 %v2903
    %v3095 = vunpack.c.l.b16 %v2904
    %v3096 = vunpack.c.h.b16 %v2904
    %v3097 = vunpack.c.l.b16 %v2905
    %v3098 = vunpack.c.h.b16 %v2905
    %v3099 = vunpack.c.l.b16 %v2906
    %v3100 = vunpack.c.h.b16 %v2906
    %v3101 = vunpack.c.l.b16 %v2907
    %v3102 = vunpack.c.h.b16 %v2907
    %v3103 = vunpack.c.l.b16 %v2908
    %v3104 = vunpack.c.h.b16 %v2908
    %v3105 = vunpack.c.l.b16 %v2909
    %v3106 = vunpack.c.h.b16 %v2909
    %v3107 = vunpack.c.l.b16 %v2910
    %v3108 = vunpack.c.h.b16 %v2910
    %v3109 = vunpack.c.l.b16 %v2911
    %v3110 = vunpack.c.h.b16 %v2911
    %v3111 = vunpack.c.l.b16 %v2912
    %v3112 = vunpack.c.h.b16 %v2912
    %v3113 = vunpack.c.l.b16 %v2913
    %v3114 = vunpack.c.h.b16 %v2913
    %v3115 = vunpack.c.l.b16 %v2914
    %v3116 = vunpack.c.h.b16 %v2914
    %v3117 = vunpack.c.l.b16 %v2915
    %v3118 = vunpack.c.h.b16 %v2915
    %v3119 = vunpack.c.l.b16 %v2916
    %v3120 = vunpack.c.h.b16 %v2916
    %v3121 = vunpack.c.l.b16 %v2917
    %v3122 = vunpack.c.h.b16 %v2917
    %v3123 = vunpack.c.l.b16 %v2918
    %v3124 = vunpack.c.h.b16 %v2918
    %v3125 = vunpack.c.l.b16 %v2919
    %v3126 = vunpack.c.h.b16 %v2919
    %v3127 = vunpack.c.l.b16 %v2920
    %v3128 = vunpack.c.h.b16 %v2920
    %v3129 = vunpack.c.l.b16 %v2921
    %v3130 = vunpack.c.h.b16 %v2921
    %v3131 = vunpack.c.l.b16 %v2922
    %v3132 = vunpack.c.h.b16 %v2922
    %v3133 = vpack.c.b16 %v3013, %v3005
    %v3134 = vpack.c.b16 %v3014, %v3006
    %v3135 = vpack.c.b16 %v3015, %v3007
    %v3136 = vpack.c.b16 %v3016, %v3008
    %v3137 = vpack.c.b16 %v3017, %v3009
    %v3138 = vpack.c.b16 %v3018, %v3010
    %v3139 = vpack.c.b16 %v3019, %v3011
    %v3140 = vpack.c.b16 %v3020, %v3012
    %v3141 = vpack.c.b16 %v3029, %v3021
    %v3142 = vpack.c.b16 %v3030, %v3022
    %v3143 = vpack.c.b16 %v3031, %v3023
    %v3144 = vpack.c.b16 %v3032, %v3024
    %v3145 = vpack.c.b16 %v3033, %v3025
    %v3146 = vpack.c.b16 %v3034, %v3026
    %v3147 = vpack.c.b16 %v3035, %v3027
    %v3148 = vpack.c.b16 %v3036, %v3028
    %v3149 = vpack.c.b16 %v3045, %v3037
    %v3150 = vpack.c.b16 %v3046, %v3038
    %v3151 = vpack.c.b16 %v3047, %v3039
    %v3152 = vpack.c.b16 %v3048, %v3040
    %v3153 = vpack.c.b16 %v3049, %v3041
    %v3154 = vpack.c.b16 %v3050, %v3042
    %v3155 = vpack.c.b16 %v3051, %v3043
    %v3156 = vpack.c.b16 %v3052, %v3044
    %v3157 = vpack.c.b16 %v3061, %v3053
    %v3158 = vpack.c.b16 %v3062, %v3054
    %v3159 = vpack.c.b16 %v3063, %v3055
    %v3160 = vpack.c.b16 %v3064, %v3056
    %v3161 = vpack.c.b16 %v3065, %v3057
    %v3162 = vpack.c.b16 %v3066, %v3058
    %v3163 = vpack.c.b16 %v3067, %v3059
    %v3164 = vpack.c.b16 %v3068, %v3060
    %v3165 = vpack.c.b16 %v3077, %v3069
    %v3166 = vpack.c.b16 %v3078, %v3070
    %v3167 = vpack.c.b16 %v3079, %v3071
    %v3168 = vpack.c.b16 %v3080, %v3072
    %v3169 = vpack.c.b16 %v3081, %v3073
    %v3170 = vpack.c.b16 %v3082, %v3074
    %v3171 = vpack.c.b16 %v3083, %v3075
    %v3172 = vpack.c.b16 %v3084, %v3076
    %v3173 = vpack.c.b16 %v3093, %v3085
    %v3174 = vpack.c.b16 %v3094, %v3086
    %v3175 = vpack.c.b16 %v3095, %v3087
    %v3176 = vpack.c.b16 %v3096, %v3088
    %v3177 = vpack.c.b16 %v3097, %v3089
    %v3178 = vpack.c.b16 %v3098, %v3090
    %v3179 = vpack.c.b16 %v3099, %v3091
    %v3180 = vpack.c.b16 %v3100, %v3092
    %v3181 = vpack.c.b16 %v3109, %v3101
    %v3182 = vpack.c.b16 %v3110, %v3102
    %v3183 = vpack.c.b16 %v3111, %v3103
    %v3184 = vpack.c.b16 %v3112, %v3104
    %v3185 = vpack.c.b16 %v3113, %v3105
    %v3186 = vpack.c.b16 %v3114, %v3106
    %v3187 = vpack.c.b16 %v3115, %v3107
    %v3188 = vpack.c.b16 %v3116, %v3108
    %v3189 = vpack.c.b16 %v3125, %v3117
    %v3190 = vpack.c.b16 %v3126, %v3118
    %v3191 = vpack.c.b16 %v3127, %v3119
    %v3192 = vpack.c.b16 %v3128, %v3120
    %v3193 = vpack.c.b16 %v3129, %v3121
    %v3194 = vpack.c.b16 %v3130, %v3122
    %v3195 = vpack.c.b16 %v3131, %v3123
    %v3196 = vpack.c.b16 %v3132, %v3124
    %3261 = vmatpush.bf16.msra.mxu0 %v3189
    %3262 = vmatpush.bf16.msra.mxu0 %v3181
    %3263 = vmatpush.bf16.msra.mxu0 %v3173
    %3264 = vmatpush.bf16.msra.mxu0 %v3165
    %3265 = vmatpush.bf16.msra.mxu0 %v3157
    %3266 = vmatpush.bf16.msra.mxu0 %v3149
    %3267 = vmatpush.bf16.msra.mxu0 %v3141
    %3268 = vmatpush.bf16.msra.mxu0 %v3133
    %3269 = vmatmul.bf16.gmra.mxu0 %v2806
    %v3270 = vpop.f32.mrf.mxu0
    %v3271 = vadd.f32 %v2925, %v3270
    %v3272 = vpop.f32.mrf.mxu0
    %v3273 = vadd.f32 %v2925, %v3272
    %3274 = vmatmul.bf16.gmra.mxu0 %v2807
    %v3275 = vpop.f32.mrf.mxu0
    %v3276 = vadd.f32 %v2925, %v3275
    %v3277 = vpop.f32.mrf.mxu0
    %v3278 = vadd.f32 %v2925, %v3277
    %3279 = vdwg.mxu0
    %3280 = vmatpush.bf16.msra.mxu0 %v3190
    %3281 = vmatpush.bf16.msra.mxu0 %v3182
    %3282 = vmatpush.bf16.msra.mxu0 %v3174
    %3283 = vmatpush.bf16.msra.mxu0 %v3166
    %3284 = vmatpush.bf16.msra.mxu0 %v3158
    %3285 = vmatpush.bf16.msra.mxu0 %v3150
    %3286 = vmatpush.bf16.msra.mxu0 %v3142
    %3287 = vmatpush.bf16.msra.mxu0 %v3134
    %3288 = vmatmul.bf16.gmra.mxu0 %v2806
    %v3289 = vpop.f32.mrf.mxu0
    %v3290 = vadd.f32 %v2926, %v3289
    %v3291 = vpop.f32.mrf.mxu0
    %v3292 = vadd.f32 %v2926, %v3291
    %3293 = vmatmul.bf16.gmra.mxu0 %v2807
    %v3294 = vpop.f32.mrf.mxu0
    %v3295 = vadd.f32 %v2926, %v3294
    %v3296 = vpop.f32.mrf.mxu0
    %v3297 = vadd.f32 %v2926, %v3296
    %3298 = vdwg.mxu0
    %3299 = vmatpush.bf16.msra.mxu0 %v3191
    %3300 = vmatpush.bf16.msra.mxu0 %v3183
    %3301 = vmatpush.bf16.msra.mxu0 %v3175
    %3302 = vmatpush.bf16.msra.mxu0 %v3167
    %3303 = vmatpush.bf16.msra.mxu0 %v3159
    %3304 = vmatpush.bf16.msra.mxu0 %v3151
    %3305 = vmatpush.bf16.msra.mxu0 %v3143
    %3306 = vmatpush.bf16.msra.mxu0 %v3135
    %3307 = vmatmul.bf16.gmra.mxu0 %v2806
    %v3308 = vpop.f32.mrf.mxu0
    %v3309 = vadd.f32 %v2927, %v3308
    %v3310 = vpop.f32.mrf.mxu0
    %v3311 = vadd.f32 %v2927, %v3310
    %3312 = vmatmul.bf16.gmra.mxu0 %v2807
    %v3313 = vpop.f32.mrf.mxu0
    %v3314 = vadd.f32 %v2927, %v3313
    %v3315 = vpop.f32.mrf.mxu0
    %v3316 = vadd.f32 %v2927, %v3315
    %3317 = vdwg.mxu0
    %3318 = vmatpush.bf16.msra.mxu0 %v3192
    %3319 = vmatpush.bf16.msra.mxu0 %v3184
    %3320 = vmatpush.bf16.msra.mxu0 %v3176
    %3321 = vmatpush.bf16.msra.mxu0 %v3168
    %3322 = vmatpush.bf16.msra.mxu0 %v3160
    %3323 = vmatpush.bf16.msra.mxu0 %v3152
    %3324 = vmatpush.bf16.msra.mxu0 %v3144
    %3325 = vmatpush.bf16.msra.mxu0 %v3136
    %3326 = vmatmul.bf16.gmra.mxu0 %v2806
    %v3327 = vpop.f32.mrf.mxu0
    %v3328 = vadd.f32 %v2928, %v3327
    %v3329 = vpop.f32.mrf.mxu0
    %v3330 = vadd.f32 %v2928, %v3329
    %3331 = vmatmul.bf16.gmra.mxu0 %v2807
    %v3332 = vpop.f32.mrf.mxu0
    %v3333 = vadd.f32 %v2928, %v3332
    %v3334 = vpop.f32.mrf.mxu0
    %v3335 = vadd.f32 %v2928, %v3334
    %3336 = vdwg.mxu0
    %3337 = vmatpush.bf16.msra.mxu0 %v3193
    %3338 = vmatpush.bf16.msra.mxu0 %v3185
    %3339 = vmatpush.bf16.msra.mxu0 %v3177
    %3340 = vmatpush.bf16.msra.mxu0 %v3169
    %3341 = vmatpush.bf16.msra.mxu0 %v3161
    %3342 = vmatpush.bf16.msra.mxu0 %v3153
    %3343 = vmatpush.bf16.msra.mxu0 %v3145
    %3344 = vmatpush.bf16.msra.mxu0 %v3137
    %3345 = vmatmul.bf16.gmra.mxu0 %v2806
    %v3346 = vpop.f32.mrf.mxu0
    %v3347 = vadd.f32 %v2929, %v3346
    %v3348 = vpop.f32.mrf.mxu0
    %v3349 = vadd.f32 %v2929, %v3348
    %3350 = vmatmul.bf16.gmra.mxu0 %v2807
    %v3351 = vpop.f32.mrf.mxu0
    %v3352 = vadd.f32 %v2929, %v3351
    %v3353 = vpop.f32.mrf.mxu0
    %v3354 = vadd.f32 %v2929, %v3353
    %3355 = vdwg.mxu0
    %3356 = vmatpush.bf16.msra.mxu0 %v3194
    %3357 = vmatpush.bf16.msra.mxu0 %v3186
    %3358 = vmatpush.bf16.msra.mxu0 %v3178
    %3359 = vmatpush.bf16.msra.mxu0 %v3170
    %3360 = vmatpush.bf16.msra.mxu0 %v3162
    %3361 = vmatpush.bf16.msra.mxu0 %v3154
    %3362 = vmatpush.bf16.msra.mxu0 %v3146
    %3363 = vmatpush.bf16.msra.mxu0 %v3138
    %3364 = vmatmul.bf16.gmra.mxu0 %v2806
    %v3365 = vpop.f32.mrf.mxu0
    %v3366 = vadd.f32 %v2930, %v3365
    %v3367 = vpop.f32.mrf.mxu0
    %v3368 = vadd.f32 %v2930, %v3367
    %3369 = vmatmul.bf16.gmra.mxu0 %v2807
    %v3370 = vpop.f32.mrf.mxu0
    %v3371 = vadd.f32 %v2930, %v3370
    %v3372 = vpop.f32.mrf.mxu0
    %v3373 = vadd.f32 %v2930, %v3372
    %3374 = vdwg.mxu0
    %3375 = vmatpush.bf16.msra.mxu0 %v3195
    %3376 = vmatpush.bf16.msra.mxu0 %v3187
    %3377 = vmatpush.bf16.msra.mxu0 %v3179
    %3378 = vmatpush.bf16.msra.mxu0 %v3171
    %3379 = vmatpush.bf16.msra.mxu0 %v3163
    %3380 = vmatpush.bf16.msra.mxu0 %v3155
    %3381 = vmatpush.bf16.msra.mxu0 %v3147
    %3382 = vmatpush.bf16.msra.mxu0 %v3139
    %3383 = vmatmul.bf16.gmra.mxu0 %v2806
    %v3384 = vpop.f32.mrf.mxu0
    %v3385 = vadd.f32 %v2931, %v3384
    %v3386 = vpop.f32.mrf.mxu0
    %v3387 = vadd.f32 %v2931, %v3386
    %3388 = vmatmul.bf16.gmra.mxu0 %v2807
    %v3389 = vpop.f32.mrf.mxu0
    %v3390 = vadd.f32 %v2931, %v3389
    %v3391 = vpop.f32.mrf.mxu0
    %v3392 = vadd.f32 %v2931, %v3391
    %3393 = vdwg.mxu0
    %3394 = vmatpush.bf16.msra.mxu0 %v3196
    %3395 = vmatpush.bf16.msra.mxu0 %v3188
    %3396 = vmatpush.bf16.msra.mxu0 %v3180
    %3397 = vmatpush.bf16.msra.mxu0 %v3172
    %3398 = vmatpush.bf16.msra.mxu0 %v3164
    %3399 = vmatpush.bf16.msra.mxu0 %v3156
    %3400 = vmatpush.bf16.msra.mxu0 %v3148
    %3401 = vmatpush.bf16.msra.mxu0 %v3140
    %3402 = vmatmul.bf16.gmra.mxu0 %v2806
    %v3403 = vpop.f32.mrf.mxu0
    %v3404 = vadd.f32 %v2932, %v3403
    %v3405 = vpop.f32.mrf.mxu0
    %v3406 = vadd.f32 %v2932, %v3405
    %3407 = vmatmul.bf16.gmra.mxu0 %v2807
    %v3408 = vpop.f32.mrf.mxu0
    %v3409 = vadd.f32 %v2932, %v3408
    %v3410 = vpop.f32.mrf.mxu0
    %v3411 = vadd.f32 %v2932, %v3410
    %3412 = vdwg.mxu0
    %v3413 = vsel %vm311, %v2855, inf
    %3414 = vmin.xlane.f32.xlu0 %v3413
    %v3415 = vpop.xlane.xlu0 %3414
    %v3416 = vsel %vm311, %v2856, inf
    %3417 = vmin.xlane.f32.xlu0 %v3416
    %v3418 = vpop.xlane.xlu0 %3417
    %v3419 = vsel %vm311, %v2857, inf
    %3420 = vmin.xlane.f32.xlu0 %v3419
    %v3421 = vpop.xlane.xlu0 %3420
    %v3422 = vsel %vm311, %v2858, inf
    %3423 = vmin.xlane.f32.xlu0 %v3422
    %v3424 = vpop.xlane.xlu0 %3423
    %vm3425 = vcmp.eq.f32.partialorder %v2855, %v3415
    %vm3426 = vcmp.eq.f32.partialorder %v2856, %v3418
    %vm3427 = vcmp.eq.f32.partialorder %v2857, %v3421
    %vm3428 = vcmp.eq.f32.partialorder %v2858, %v3424
    %v3429 = vsel %vm3425, %v190, 32
    %v3430 = vsel %vm3426, %v190, 32
    %v3431 = vsel %vm3427, %v190, 32
    %v3432 = vsel %vm3428, %v190, 32
    %v3433 = vsel %vm311, %v3429, 2147483647
    %v3434 = vand.u32 %v3433, 65535
    %v3435 = vshra.s32 %v3433, 16
    %v3436 = vcvt.s32.f32 %v3434
    %v3437 = vcvt.s32.f32 %v3435
    %3438 = vmin.xlane.f32.xlu0 %v3437
    %v3439 = vpop.xlane.xlu0 %3438
    %vm3440 = vcmp.eq.f32.partialorder %v3437, %v3439
    %v3441 = vsel %vm3440, %v3436, inf
    %3442 = vmin.xlane.f32.xlu0 %v3441
    %v3443 = vpop.xlane.xlu0 %3442
    %v3444 = vcvt.f32.s32 %v3443
    %v3445 = vcvt.f32.s32 %v3439
    %v3446 = vshll.u32 %v3445, 16
    %v3447 = vadd.s32 %v3446, %v3444
    %v3448 = vsel %vm311, %v3430, 2147483647
    %v3449 = vand.u32 %v3448, 65535
    %v3450 = vshra.s32 %v3448, 16
    %v3451 = vcvt.s32.f32 %v3449
    %v3452 = vcvt.s32.f32 %v3450
    %3453 = vmin.xlane.f32.xlu0 %v3452
    %v3454 = vpop.xlane.xlu0 %3453
    %vm3455 = vcmp.eq.f32.partialorder %v3452, %v3454
    %v3456 = vsel %vm3455, %v3451, inf
    %3457 = vmin.xlane.f32.xlu0 %v3456
    %v3458 = vpop.xlane.xlu0 %3457
    %v3459 = vcvt.f32.s32 %v3458
    %v3460 = vcvt.f32.s32 %v3454
    %v3461 = vshll.u32 %v3460, 16
    %v3462 = vadd.s32 %v3461, %v3459
    %v3463 = vsel %vm311, %v3431, 2147483647
    %v3464 = vand.u32 %v3463, 65535
    %v3465 = vshra.s32 %v3463, 16
    %v3466 = vcvt.s32.f32 %v3464
    %v3467 = vcvt.s32.f32 %v3465
    %3468 = vmin.xlane.f32.xlu0 %v3467
    %v3469 = vpop.xlane.xlu0 %3468
    %vm3470 = vcmp.eq.f32.partialorder %v3467, %v3469
    %v3471 = vsel %vm3470, %v3466, inf
    %3472 = vmin.xlane.f32.xlu0 %v3471
    %v3473 = vpop.xlane.xlu0 %3472
    %v3474 = vcvt.f32.s32 %v3473
    %v3475 = vcvt.f32.s32 %v3469
    %v3476 = vshll.u32 %v3475, 16
    %v3477 = vadd.s32 %v3476, %v3474
    %v3478 = vsel %vm311, %v3432, 2147483647
    %v3479 = vand.u32 %v3478, 65535
    %v3480 = vshra.s32 %v3478, 16
    %v3481 = vcvt.s32.f32 %v3479
    %v3482 = vcvt.s32.f32 %v3480
    %3483 = vmin.xlane.f32.xlu0 %v3482
    %v3484 = vpop.xlane.xlu0 %3483
    %vm3485 = vcmp.eq.f32.partialorder %v3482, %v3484
    %v3486 = vsel %vm3485, %v3481, inf
    %3487 = vmin.xlane.f32.xlu0 %v3486
    %v3488 = vpop.xlane.xlu0 %3487
    %v3489 = vcvt.f32.s32 %v3488
    %v3490 = vcvt.f32.s32 %v3484
    %v3491 = vshll.u32 %v3490, 16
    %v3492 = vadd.s32 %v3491, %v3489
    %vm3493 = vcmp.eq.s32.totalorder %v190, %v3447
    %vm3494 = vcmp.eq.s32.totalorder %v190, %v3462
    %vm3495 = vcmp.eq.s32.totalorder %v190, %v3477
    %vm3496 = vcmp.eq.s32.totalorder %v190, %v3492
    %v3497 = vsel %vm3493, 1, 0
    %v3498 = vsel %vm3494, 1, 0
    %v3499 = vsel %vm3495, 1, 0
    %v3500 = vsel %vm3496, 1, 0
    %v3501 = vcvt.s32.f32 %v3497
    %v3502 = vcvt.s32.f32 %v3498
    %v3503 = vcvt.s32.f32 %v3499
    %v3504 = vcvt.s32.f32 %v3500
    %v3505 = vpack.c.bf16 %v3502, %v3501
    %v3506 = vpack.c.bf16 %v3504, %v3503
    %v3508 = vsel %vm311, %v3505, 0
    %v3511 = vsel %vm311, %v3506, 0
    %3513 = vmatpush.bf16.msra.mxu0 0
    %3514 = vmatpush.bf16.msra.mxu0 0
    %3515 = vmatpush.bf16.msra.mxu0 0
    %3516 = vmatpush.bf16.msra.mxu0 0
    %3517 = vmatpush.bf16.msra.mxu0 0
    %3518 = vmatpush.bf16.msra.mxu0 0
    %3519 = vmatpush.bf16.msra.mxu0 %v2807
    %3520 = vmatpush.bf16.msra.mxu0 %v2806
    %3521 = vmatmul.bf16.gmra.mxu0 %v3508
    %v3522 = vpop.f32.mrf.mxu0
    %v3523 = vadd.f32 0.0, %v3522
    %v3524 = vpop.f32.mrf.mxu0
    %v3525 = vadd.f32 0.0, %v3524
    %3526 = vmatmul.bf16.gmra.mxu0 %v3511
    %v3527 = vpop.f32.mrf.mxu0
    %v3528 = vadd.f32 0.0, %v3527
    %v3529 = vpop.f32.mrf.mxu0
    %v3530 = vadd.f32 0.0, %v3529
    %3531 = vdwg.mxu0
    %v3532 = vpack.c.bf16 %v3525, %v3523
    %v3533 = vpack.c.bf16 %v3530, %v3528
    %v3534 = vld [vmem:[#allocation11] sm:$0xff]
    %v3535 = vld [vmem:[#allocation11 + $0x8] sm:$0xff]
    %v3536 = vld [vmem:[#allocation11 + $0x10] sm:$0xff]
    %v3537 = vld [vmem:[#allocation11 + $0x18] sm:$0xff]
    %v3538 = vld [vmem:[#allocation11 + $0x20] sm:$0xff]
    %v3539 = vld [vmem:[#allocation11 + $0x28] sm:$0xff]
    %v3540 = vld [vmem:[#allocation11 + $0x30] sm:$0xff]
    %v3541 = vld [vmem:[#allocation11 + $0x38] sm:$0xff]
    %v3542 = vld [vmem:[#allocation11 + $0x40] sm:$0xff]
    %v3543 = vld [vmem:[#allocation11 + $0x48] sm:$0xff]
    %v3544 = vld [vmem:[#allocation11 + $0x50] sm:$0xff]
    %v3545 = vld [vmem:[#allocation11 + $0x58] sm:$0xff]
    %v3546 = vld [vmem:[#allocation11 + $0x60] sm:$0xff]
    %v3547 = vld [vmem:[#allocation11 + $0x68] sm:$0xff]
    %v3548 = vld [vmem:[#allocation11 + $0x70] sm:$0xff]
    %v3549 = vld [vmem:[#allocation11 + $0x78] sm:$0xff]
    %v3550 = vld [vmem:[#allocation11 + $0x80] sm:$0xff]
    %v3551 = vld [vmem:[#allocation11 + $0x88] sm:$0xff]
    %v3552 = vld [vmem:[#allocation11 + $0x90] sm:$0xff]
    %v3553 = vld [vmem:[#allocation11 + $0x98] sm:$0xff]
    %v3554 = vld [vmem:[#allocation11 + $0xa0] sm:$0xff]
    %v3555 = vld [vmem:[#allocation11 + $0xa8] sm:$0xff]
    %v3556 = vld [vmem:[#allocation11 + $0xb0] sm:$0xff]
    %v3557 = vld [vmem:[#allocation11 + $0xb8] sm:$0xff]
    %v3558 = vld [vmem:[#allocation11 + $0xc0] sm:$0xff]
    %v3559 = vld [vmem:[#allocation11 + $0xc8] sm:$0xff]
    %v3560 = vld [vmem:[#allocation11 + $0xd0] sm:$0xff]
    %v3561 = vld [vmem:[#allocation11 + $0xd8] sm:$0xff]
    %v3562 = vld [vmem:[#allocation11 + $0xe0] sm:$0xff]
    %v3563 = vld [vmem:[#allocation11 + $0xe8] sm:$0xff]
    %v3564 = vld [vmem:[#allocation11 + $0xf0] sm:$0xff]
    %v3565 = vld [vmem:[#allocation11 + $0xf8] sm:$0xff]
    %v3566 = vld [vmem:[#allocation11 + $0x100] sm:$0xff]
    %v3567 = vld [vmem:[#allocation11 + $0x108] sm:$0xff]
    %v3568 = vld [vmem:[#allocation11 + $0x110] sm:$0xff]
    %v3569 = vld [vmem:[#allocation11 + $0x118] sm:$0xff]
    %v3570 = vld [vmem:[#allocation11 + $0x120] sm:$0xff]
    %v3571 = vld [vmem:[#allocation11 + $0x128] sm:$0xff]
    %v3572 = vld [vmem:[#allocation11 + $0x130] sm:$0xff]
    %v3573 = vld [vmem:[#allocation11 + $0x138] sm:$0xff]
    %v3574 = vld [vmem:[#allocation11 + $0x140] sm:$0xff]
    %v3575 = vld [vmem:[#allocation11 + $0x148] sm:$0xff]
    %v3576 = vld [vmem:[#allocation11 + $0x150] sm:$0xff]
    %v3577 = vld [vmem:[#allocation11 + $0x158] sm:$0xff]
    %v3578 = vld [vmem:[#allocation11 + $0x160] sm:$0xff]
    %v3579 = vld [vmem:[#allocation11 + $0x168] sm:$0xff]
    %v3580 = vld [vmem:[#allocation11 + $0x170] sm:$0xff]
    %v3581 = vld [vmem:[#allocation11 + $0x178] sm:$0xff]
    %v3582 = vld [vmem:[#allocation11 + $0x180] sm:$0xff]
    %v3583 = vld [vmem:[#allocation11 + $0x188] sm:$0xff]
    %v3584 = vld [vmem:[#allocation11 + $0x190] sm:$0xff]
    %v3585 = vld [vmem:[#allocation11 + $0x198] sm:$0xff]
    %v3586 = vld [vmem:[#allocation11 + $0x1a0] sm:$0xff]
    %v3587 = vld [vmem:[#allocation11 + $0x1a8] sm:$0xff]
    %v3588 = vld [vmem:[#allocation11 + $0x1b0] sm:$0xff]
    %v3589 = vld [vmem:[#allocation11 + $0x1b8] sm:$0xff]
    %v3590 = vld [vmem:[#allocation11 + $0x1c0] sm:$0xff]
    %v3591 = vld [vmem:[#allocation11 + $0x1c8] sm:$0xff]
    %v3592 = vld [vmem:[#allocation11 + $0x1d0] sm:$0xff]
    %v3593 = vld [vmem:[#allocation11 + $0x1d8] sm:$0xff]
    %v3594 = vld [vmem:[#allocation11 + $0x1e0] sm:$0xff]
    %v3595 = vld [vmem:[#allocation11 + $0x1e8] sm:$0xff]
    %v3596 = vld [vmem:[#allocation11 + $0x1f0] sm:$0xff]
    %v3597 = vld [vmem:[#allocation11 + $0x1f8] sm:$0xff]
    %v3662 = vunpack.c.l.b16 %v3534
    %v3663 = vunpack.c.h.b16 %v3534
    %v3664 = vunpack.c.l.b16 %v3535
    %v3665 = vunpack.c.h.b16 %v3535
    %v3666 = vunpack.c.l.b16 %v3536
    %v3667 = vunpack.c.h.b16 %v3536
    %v3668 = vunpack.c.l.b16 %v3537
    %v3669 = vunpack.c.h.b16 %v3537
    %v3670 = vunpack.c.l.b16 %v3538
    %v3671 = vunpack.c.h.b16 %v3538
    %v3672 = vunpack.c.l.b16 %v3539
    %v3673 = vunpack.c.h.b16 %v3539
    %v3674 = vunpack.c.l.b16 %v3540
    %v3675 = vunpack.c.h.b16 %v3540
    %v3676 = vunpack.c.l.b16 %v3541
    %v3677 = vunpack.c.h.b16 %v3541
    %v3678 = vunpack.c.l.b16 %v3542
    %v3679 = vunpack.c.h.b16 %v3542
    %v3680 = vunpack.c.l.b16 %v3543
    %v3681 = vunpack.c.h.b16 %v3543
    %v3682 = vunpack.c.l.b16 %v3544
    %v3683 = vunpack.c.h.b16 %v3544
    %v3684 = vunpack.c.l.b16 %v3545
    %v3685 = vunpack.c.h.b16 %v3545
    %v3686 = vunpack.c.l.b16 %v3546
    %v3687 = vunpack.c.h.b16 %v3546
    %v3688 = vunpack.c.l.b16 %v3547
    %v3689 = vunpack.c.h.b16 %v3547
    %v3690 = vunpack.c.l.b16 %v3548
    %v3691 = vunpack.c.h.b16 %v3548
    %v3692 = vunpack.c.l.b16 %v3549
    %v3693 = vunpack.c.h.b16 %v3549
    %v3694 = vunpack.c.l.b16 %v3550
    %v3695 = vunpack.c.h.b16 %v3550
    %v3696 = vunpack.c.l.b16 %v3551
    %v3697 = vunpack.c.h.b16 %v3551
    %v3698 = vunpack.c.l.b16 %v3552
    %v3699 = vunpack.c.h.b16 %v3552
    %v3700 = vunpack.c.l.b16 %v3553
    %v3701 = vunpack.c.h.b16 %v3553
    %v3702 = vunpack.c.l.b16 %v3554
    %v3703 = vunpack.c.h.b16 %v3554
    %v3704 = vunpack.c.l.b16 %v3555
    %v3705 = vunpack.c.h.b16 %v3555
    %v3706 = vunpack.c.l.b16 %v3556
    %v3707 = vunpack.c.h.b16 %v3556
    %v3708 = vunpack.c.l.b16 %v3557
    %v3709 = vunpack.c.h.b16 %v3557
    %v3710 = vunpack.c.l.b16 %v3558
    %v3711 = vunpack.c.h.b16 %v3558
    %v3712 = vunpack.c.l.b16 %v3559
    %v3713 = vunpack.c.h.b16 %v3559
    %v3714 = vunpack.c.l.b16 %v3560
    %v3715 = vunpack.c.h.b16 %v3560
    %v3716 = vunpack.c.l.b16 %v3561
    %v3717 = vunpack.c.h.b16 %v3561
    %v3718 = vunpack.c.l.b16 %v3562
    %v3719 = vunpack.c.h.b16 %v3562
    %v3720 = vunpack.c.l.b16 %v3563
    %v3721 = vunpack.c.h.b16 %v3563
    %v3722 = vunpack.c.l.b16 %v3564
    %v3723 = vunpack.c.h.b16 %v3564
    %v3724 = vunpack.c.l.b16 %v3565
    %v3725 = vunpack.c.h.b16 %v3565
    %v3726 = vunpack.c.l.b16 %v3566
    %v3727 = vunpack.c.h.b16 %v3566
    %v3728 = vunpack.c.l.b16 %v3567
    %v3729 = vunpack.c.h.b16 %v3567
    %v3730 = vunpack.c.l.b16 %v3568
    %v3731 = vunpack.c.h.b16 %v3568
    %v3732 = vunpack.c.l.b16 %v3569
    %v3733 = vunpack.c.h.b16 %v3569
    %v3734 = vunpack.c.l.b16 %v3570
    %v3735 = vunpack.c.h.b16 %v3570
    %v3736 = vunpack.c.l.b16 %v3571
    %v3737 = vunpack.c.h.b16 %v3571
    %v3738 = vunpack.c.l.b16 %v3572
    %v3739 = vunpack.c.h.b16 %v3572
    %v3740 = vunpack.c.l.b16 %v3573
    %v3741 = vunpack.c.h.b16 %v3573
    %v3742 = vunpack.c.l.b16 %v3574
    %v3743 = vunpack.c.h.b16 %v3574
    %v3744 = vunpack.c.l.b16 %v3575
    %v3745 = vunpack.c.h.b16 %v3575
    %v3746 = vunpack.c.l.b16 %v3576
    %v3747 = vunpack.c.h.b16 %v3576
    %v3748 = vunpack.c.l.b16 %v3577
    %v3749 = vunpack.c.h.b16 %v3577
    %v3750 = vunpack.c.l.b16 %v3578
    %v3751 = vunpack.c.h.b16 %v3578
    %v3752 = vunpack.c.l.b16 %v3579
    %v3753 = vunpack.c.h.b16 %v3579
    %v3754 = vunpack.c.l.b16 %v3580
    %v3755 = vunpack.c.h.b16 %v3580
    %v3756 = vunpack.c.l.b16 %v3581
    %v3757 = vunpack.c.h.b16 %v3581
    %v3758 = vunpack.c.l.b16 %v3582
    %v3759 = vunpack.c.h.b16 %v3582
    %v3760 = vunpack.c.l.b16 %v3583
    %v3761 = vunpack.c.h.b16 %v3583
    %v3762 = vunpack.c.l.b16 %v3584
    %v3763 = vunpack.c.h.b16 %v3584
    %v3764 = vunpack.c.l.b16 %v3585
    %v3765 = vunpack.c.h.b16 %v3585
    %v3766 = vunpack.c.l.b16 %v3586
    %v3767 = vunpack.c.h.b16 %v3586
    %v3768 = vunpack.c.l.b16 %v3587
    %v3769 = vunpack.c.h.b16 %v3587
    %v3770 = vunpack.c.l.b16 %v3588
    %v3771 = vunpack.c.h.b16 %v3588
    %v3772 = vunpack.c.l.b16 %v3589
    %v3773 = vunpack.c.h.b16 %v3589
    %v3774 = vunpack.c.l.b16 %v3590
    %v3775 = vunpack.c.h.b16 %v3590
    %v3776 = vunpack.c.l.b16 %v3591
    %v3777 = vunpack.c.h.b16 %v3591
    %v3778 = vunpack.c.l.b16 %v3592
    %v3779 = vunpack.c.h.b16 %v3592
    %v3780 = vunpack.c.l.b16 %v3593
    %v3781 = vunpack.c.h.b16 %v3593
    %v3782 = vunpack.c.l.b16 %v3594
    %v3783 = vunpack.c.h.b16 %v3594
    %v3784 = vunpack.c.l.b16 %v3595
    %v3785 = vunpack.c.h.b16 %v3595
    %v3786 = vunpack.c.l.b16 %v3596
    %v3787 = vunpack.c.h.b16 %v3596
    %v3788 = vunpack.c.l.b16 %v3597
    %v3789 = vunpack.c.h.b16 %v3597
    %v3790 = vpack.c.b16 %v3670, %v3662
    %v3791 = vpack.c.b16 %v3671, %v3663
    %v3792 = vpack.c.b16 %v3672, %v3664
    %v3793 = vpack.c.b16 %v3673, %v3665
    %v3794 = vpack.c.b16 %v3674, %v3666
    %v3795 = vpack.c.b16 %v3675, %v3667
    %v3796 = vpack.c.b16 %v3676, %v3668
    %v3797 = vpack.c.b16 %v3677, %v3669
    %v3798 = vpack.c.b16 %v3686, %v3678
    %v3799 = vpack.c.b16 %v3687, %v3679
    %v3800 = vpack.c.b16 %v3688, %v3680
    %v3801 = vpack.c.b16 %v3689, %v3681
    %v3802 = vpack.c.b16 %v3690, %v3682
    %v3803 = vpack.c.b16 %v3691, %v3683
    %v3804 = vpack.c.b16 %v3692, %v3684
    %v3805 = vpack.c.b16 %v3693, %v3685
    %v3806 = vpack.c.b16 %v3702, %v3694
    %v3807 = vpack.c.b16 %v3703, %v3695
    %v3808 = vpack.c.b16 %v3704, %v3696
    %v3809 = vpack.c.b16 %v3705, %v3697
    %v3810 = vpack.c.b16 %v3706, %v3698
    %v3811 = vpack.c.b16 %v3707, %v3699
    %v3812 = vpack.c.b16 %v3708, %v3700
    %v3813 = vpack.c.b16 %v3709, %v3701
    %v3814 = vpack.c.b16 %v3718, %v3710
    %v3815 = vpack.c.b16 %v3719, %v3711
    %v3816 = vpack.c.b16 %v3720, %v3712
    %v3817 = vpack.c.b16 %v3721, %v3713
    %v3818 = vpack.c.b16 %v3722, %v3714
    %v3819 = vpack.c.b16 %v3723, %v3715
    %v3820 = vpack.c.b16 %v3724, %v3716
    %v3821 = vpack.c.b16 %v3725, %v3717
    %v3822 = vpack.c.b16 %v3734, %v3726
    %v3823 = vpack.c.b16 %v3735, %v3727
    %v3824 = vpack.c.b16 %v3736, %v3728
    %v3825 = vpack.c.b16 %v3737, %v3729
    %v3826 = vpack.c.b16 %v3738, %v3730
    %v3827 = vpack.c.b16 %v3739, %v3731
    %v3828 = vpack.c.b16 %v3740, %v3732
    %v3829 = vpack.c.b16 %v3741, %v3733
    %v3830 = vpack.c.b16 %v3750, %v3742
    %v3831 = vpack.c.b16 %v3751, %v3743
    %v3832 = vpack.c.b16 %v3752, %v3744
    %v3833 = vpack.c.b16 %v3753, %v3745
    %v3834 = vpack.c.b16 %v3754, %v3746
    %v3835 = vpack.c.b16 %v3755, %v3747
    %v3836 = vpack.c.b16 %v3756, %v3748
    %v3837 = vpack.c.b16 %v3757, %v3749
    %v3838 = vpack.c.b16 %v3766, %v3758
    %v3839 = vpack.c.b16 %v3767, %v3759
    %v3840 = vpack.c.b16 %v3768, %v3760
    %v3841 = vpack.c.b16 %v3769, %v3761
    %v3842 = vpack.c.b16 %v3770, %v3762
    %v3843 = vpack.c.b16 %v3771, %v3763
    %v3844 = vpack.c.b16 %v3772, %v3764
    %v3845 = vpack.c.b16 %v3773, %v3765
    %v3846 = vpack.c.b16 %v3782, %v3774
    %v3847 = vpack.c.b16 %v3783, %v3775
    %v3848 = vpack.c.b16 %v3784, %v3776
    %v3849 = vpack.c.b16 %v3785, %v3777
    %v3850 = vpack.c.b16 %v3786, %v3778
    %v3851 = vpack.c.b16 %v3787, %v3779
    %v3852 = vpack.c.b16 %v3788, %v3780
    %v3853 = vpack.c.b16 %v3789, %v3781
    %3918 = vmatpush.bf16.msra.mxu0 %v3846
    %3919 = vmatpush.bf16.msra.mxu0 %v3838
    %3920 = vmatpush.bf16.msra.mxu0 %v3830
    %3921 = vmatpush.bf16.msra.mxu0 %v3822
    %3922 = vmatpush.bf16.msra.mxu0 %v3814
    %3923 = vmatpush.bf16.msra.mxu0 %v3806
    %3924 = vmatpush.bf16.msra.mxu0 %v3798
    %3925 = vmatpush.bf16.msra.mxu0 %v3790
    %3926 = vmatmul.bf16.gmra.mxu0 %v3532
    %v3927 = vpop.f32.mrf.mxu0
    %v3928 = vadd.f32 0.0, %v3927
    %v3929 = vpop.f32.mrf.mxu0
    %v3930 = vadd.f32 0.0, %v3929
    %3931 = vmatmul.bf16.gmra.mxu0 %v3533
    %v3932 = vpop.f32.mrf.mxu0
    %v3933 = vadd.f32 0.0, %v3932
    %v3934 = vpop.f32.mrf.mxu0
    %v3935 = vadd.f32 0.0, %v3934
    %3936 = vdwg.mxu0
    %3937 = vmatpush.bf16.msra.mxu0 %v3847
    %3938 = vmatpush.bf16.msra.mxu0 %v3839
    %3939 = vmatpush.bf16.msra.mxu0 %v3831
    %3940 = vmatpush.bf16.msra.mxu0 %v3823
    %3941 = vmatpush.bf16.msra.mxu0 %v3815
    %3942 = vmatpush.bf16.msra.mxu0 %v3807
    %3943 = vmatpush.bf16.msra.mxu0 %v3799
    %3944 = vmatpush.bf16.msra.mxu0 %v3791
    %3945 = vmatmul.bf16.gmra.mxu0 %v3532
    %v3946 = vpop.f32.mrf.mxu0
    %v3947 = vadd.f32 0.0, %v3946
    %v3948 = vpop.f32.mrf.mxu0
    %v3949 = vadd.f32 0.0, %v3948
    %3950 = vmatmul.bf16.gmra.mxu0 %v3533
    %v3951 = vpop.f32.mrf.mxu0
    %v3952 = vadd.f32 0.0, %v3951
    %v3953 = vpop.f32.mrf.mxu0
    %v3954 = vadd.f32 0.0, %v3953
    %3955 = vdwg.mxu0
    %3956 = vmatpush.bf16.msra.mxu0 %v3848
    %3957 = vmatpush.bf16.msra.mxu0 %v3840
    %3958 = vmatpush.bf16.msra.mxu0 %v3832
    %3959 = vmatpush.bf16.msra.mxu0 %v3824
    %3960 = vmatpush.bf16.msra.mxu0 %v3816
    %3961 = vmatpush.bf16.msra.mxu0 %v3808
    %3962 = vmatpush.bf16.msra.mxu0 %v3800
    %3963 = vmatpush.bf16.msra.mxu0 %v3792
    %3964 = vmatmul.bf16.gmra.mxu0 %v3532
    %v3965 = vpop.f32.mrf.mxu0
    %v3966 = vadd.f32 0.0, %v3965
    %v3967 = vpop.f32.mrf.mxu0
    %v3968 = vadd.f32 0.0, %v3967
    %3969 = vmatmul.bf16.gmra.mxu0 %v3533
    %v3970 = vpop.f32.mrf.mxu0
    %v3971 = vadd.f32 0.0, %v3970
    %v3972 = vpop.f32.mrf.mxu0
    %v3973 = vadd.f32 0.0, %v3972
    %3974 = vdwg.mxu0
    %3975 = vmatpush.bf16.msra.mxu0 %v3849
    %3976 = vmatpush.bf16.msra.mxu0 %v3841
    %3977 = vmatpush.bf16.msra.mxu0 %v3833
    %3978 = vmatpush.bf16.msra.mxu0 %v3825
    %3979 = vmatpush.bf16.msra.mxu0 %v3817
    %3980 = vmatpush.bf16.msra.mxu0 %v3809
    %3981 = vmatpush.bf16.msra.mxu0 %v3801
    %3982 = vmatpush.bf16.msra.mxu0 %v3793
    %3983 = vmatmul.bf16.gmra.mxu0 %v3532
    %v3984 = vpop.f32.mrf.mxu0
    %v3985 = vadd.f32 0.0, %v3984
    %v3986 = vpop.f32.mrf.mxu0
    %v3987 = vadd.f32 0.0, %v3986
    %3988 = vmatmul.bf16.gmra.mxu0 %v3533
    %v3989 = vpop.f32.mrf.mxu0
    %v3990 = vadd.f32 0.0, %v3989
    %v3991 = vpop.f32.mrf.mxu0
    %v3992 = vadd.f32 0.0, %v3991
    %3993 = vdwg.mxu0
    %3994 = vmatpush.bf16.msra.mxu0 %v3850
    %3995 = vmatpush.bf16.msra.mxu0 %v3842
    %3996 = vmatpush.bf16.msra.mxu0 %v3834
    %3997 = vmatpush.bf16.msra.mxu0 %v3826
    %3998 = vmatpush.bf16.msra.mxu0 %v3818
    %3999 = vmatpush.bf16.msra.mxu0 %v3810
    %4000 = vmatpush.bf16.msra.mxu0 %v3802
    %4001 = vmatpush.bf16.msra.mxu0 %v3794
    %4002 = vmatmul.bf16.gmra.mxu0 %v3532
    %v4003 = vpop.f32.mrf.mxu0
    %v4004 = vadd.f32 0.0, %v4003
    %v4005 = vpop.f32.mrf.mxu0
    %v4006 = vadd.f32 0.0, %v4005
    %4007 = vmatmul.bf16.gmra.mxu0 %v3533
    %v4008 = vpop.f32.mrf.mxu0
    %v4009 = vadd.f32 0.0, %v4008
    %v4010 = vpop.f32.mrf.mxu0
    %v4011 = vadd.f32 0.0, %v4010
    %4012 = vdwg.mxu0
    %4013 = vmatpush.bf16.msra.mxu0 %v3851
    %4014 = vmatpush.bf16.msra.mxu0 %v3843
    %4015 = vmatpush.bf16.msra.mxu0 %v3835
    %4016 = vmatpush.bf16.msra.mxu0 %v3827
    %4017 = vmatpush.bf16.msra.mxu0 %v3819
    %4018 = vmatpush.bf16.msra.mxu0 %v3811
    %4019 = vmatpush.bf16.msra.mxu0 %v3803
    %4020 = vmatpush.bf16.msra.mxu0 %v3795
    %4021 = vmatmul.bf16.gmra.mxu0 %v3532
    %v4022 = vpop.f32.mrf.mxu0
    %v4023 = vadd.f32 0.0, %v4022
    %v4024 = vpop.f32.mrf.mxu0
    %v4025 = vadd.f32 0.0, %v4024
    %4026 = vmatmul.bf16.gmra.mxu0 %v3533
    %v4027 = vpop.f32.mrf.mxu0
    %v4028 = vadd.f32 0.0, %v4027
    %v4029 = vpop.f32.mrf.mxu0
    %v4030 = vadd.f32 0.0, %v4029
    %4031 = vdwg.mxu0
    %4032 = vmatpush.bf16.msra.mxu0 %v3852
    %4033 = vmatpush.bf16.msra.mxu0 %v3844
    %4034 = vmatpush.bf16.msra.mxu0 %v3836
    %4035 = vmatpush.bf16.msra.mxu0 %v3828
    %4036 = vmatpush.bf16.msra.mxu0 %v3820
    %4037 = vmatpush.bf16.msra.mxu0 %v3812
    %4038 = vmatpush.bf16.msra.mxu0 %v3804
    %4039 = vmatpush.bf16.msra.mxu0 %v3796
    %4040 = vmatmul.bf16.gmra.mxu0 %v3532
    %v4041 = vpop.f32.mrf.mxu0
    %v4042 = vadd.f32 0.0, %v4041
    %v4043 = vpop.f32.mrf.mxu0
    %v4044 = vadd.f32 0.0, %v4043
    %4045 = vmatmul.bf16.gmra.mxu0 %v3533
    %v4046 = vpop.f32.mrf.mxu0
    %v4047 = vadd.f32 0.0, %v4046
    %v4048 = vpop.f32.mrf.mxu0
    %v4049 = vadd.f32 0.0, %v4048
    %4050 = vdwg.mxu0
    %4051 = vmatpush.bf16.msra.mxu0 %v3853
    %4052 = vmatpush.bf16.msra.mxu0 %v3845
    %4053 = vmatpush.bf16.msra.mxu0 %v3837
    %4054 = vmatpush.bf16.msra.mxu0 %v3829
    %4055 = vmatpush.bf16.msra.mxu0 %v3821
    %4056 = vmatpush.bf16.msra.mxu0 %v3813
    %4057 = vmatpush.bf16.msra.mxu0 %v3805
    %4058 = vmatpush.bf16.msra.mxu0 %v3797
    %4059 = vmatmul.bf16.gmra.mxu0 %v3532
    %v4060 = vpop.f32.mrf.mxu0
    %v4061 = vadd.f32 0.0, %v4060
    %v4062 = vpop.f32.mrf.mxu0
    %v4063 = vadd.f32 0.0, %v4062
    %4064 = vmatmul.bf16.gmra.mxu0 %v3533
    %v4065 = vpop.f32.mrf.mxu0
    %v4066 = vadd.f32 0.0, %v4065
    %v4067 = vpop.f32.mrf.mxu0
    %v4068 = vadd.f32 0.0, %v4067
    %4069 = vdwg.mxu0
    %v4070 = vsel %vm3493, inf, %v2855
    %v4071 = vsel %vm3494, inf, %v2856
    %v4072 = vsel %vm3495, inf, %v2857
    %v4073 = vsel %vm3496, inf, %v2858
    %v4074 = vsel %vm311, %v4070, inf
    %4075 = vmin.xlane.f32.xlu0 %v4074
    %v4076 = vpop.xlane.xlu0 %4075
    %v4077 = vsel %vm311, %v4071, inf
    %4078 = vmin.xlane.f32.xlu0 %v4077
    %v4079 = vpop.xlane.xlu0 %4078
    %v4080 = vsel %vm311, %v4072, inf
    %4081 = vmin.xlane.f32.xlu0 %v4080
    %v4082 = vpop.xlane.xlu0 %4081
    %v4083 = vsel %vm311, %v4073, inf
    %4084 = vmin.xlane.f32.xlu0 %v4083
    %v4085 = vpop.xlane.xlu0 %4084
    %vm4086 = vcmp.eq.f32.partialorder %v4070, %v4076
    %vm4087 = vcmp.eq.f32.partialorder %v4071, %v4079
    %vm4088 = vcmp.eq.f32.partialorder %v4072, %v4082
    %vm4089 = vcmp.eq.f32.partialorder %v4073, %v4085
    %v4090 = vsel %vm4086, %v190, 32
    %v4091 = vsel %vm4087, %v190, 32
    %v4092 = vsel %vm4088, %v190, 32
    %v4093 = vsel %vm4089, %v190, 32
    %v4094 = vsel %vm311, %v4090, 2147483647
    %v4095 = vand.u32 %v4094, 65535
    %v4096 = vshra.s32 %v4094, 16
    %v4097 = vcvt.s32.f32 %v4095
    %v4098 = vcvt.s32.f32 %v4096
    %4099 = vmin.xlane.f32.xlu0 %v4098
    %v4100 = vpop.xlane.xlu0 %4099
    %vm4101 = vcmp.eq.f32.partialorder %v4098, %v4100
    %v4102 = vsel %vm4101, %v4097, inf
    %4103 = vmin.xlane.f32.xlu0 %v4102
    %v4104 = vpop.xlane.xlu0 %4103
    %v4105 = vcvt.f32.s32 %v4104
    %v4106 = vcvt.f32.s32 %v4100
    %v4107 = vshll.u32 %v4106, 16
    %v4108 = vadd.s32 %v4107, %v4105
    %v4109 = vsel %vm311, %v4091, 2147483647
    %v4110 = vand.u32 %v4109, 65535
    %v4111 = vshra.s32 %v4109, 16
    %v4112 = vcvt.s32.f32 %v4110
    %v4113 = vcvt.s32.f32 %v4111
    %4114 = vmin.xlane.f32.xlu0 %v4113
    %v4115 = vpop.xlane.xlu0 %4114
    %vm4116 = vcmp.eq.f32.partialorder %v4113, %v4115
    %v4117 = vsel %vm4116, %v4112, inf
    %4118 = vmin.xlane.f32.xlu0 %v4117
    %v4119 = vpop.xlane.xlu0 %4118
    %v4120 = vcvt.f32.s32 %v4119
    %v4121 = vcvt.f32.s32 %v4115
    %v4122 = vshll.u32 %v4121, 16
    %v4123 = vadd.s32 %v4122, %v4120
    %v4124 = vsel %vm311, %v4092, 2147483647
    %v4125 = vand.u32 %v4124, 65535
    %v4126 = vshra.s32 %v4124, 16
    %v4127 = vcvt.s32.f32 %v4125
    %v4128 = vcvt.s32.f32 %v4126
    %4129 = vmin.xlane.f32.xlu0 %v4128
    %v4130 = vpop.xlane.xlu0 %4129
    %vm4131 = vcmp.eq.f32.partialorder %v4128, %v4130
    %v4132 = vsel %vm4131, %v4127, inf
    %4133 = vmin.xlane.f32.xlu0 %v4132
    %v4134 = vpop.xlane.xlu0 %4133
    %v4135 = vcvt.f32.s32 %v4134
    %v4136 = vcvt.f32.s32 %v4130
    %v4137 = vshll.u32 %v4136, 16
    %v4138 = vadd.s32 %v4137, %v4135
    %v4139 = vsel %vm311, %v4093, 2147483647
    %v4140 = vand.u32 %v4139, 65535
    %v4141 = vshra.s32 %v4139, 16
    %v4142 = vcvt.s32.f32 %v4140
    %v4143 = vcvt.s32.f32 %v4141
    %4144 = vmin.xlane.f32.xlu0 %v4143
    %v4145 = vpop.xlane.xlu0 %4144
    %vm4146 = vcmp.eq.f32.partialorder %v4143, %v4145
    %v4147 = vsel %vm4146, %v4142, inf
    %4148 = vmin.xlane.f32.xlu0 %v4147
    %v4149 = vpop.xlane.xlu0 %4148
    %v4150 = vcvt.f32.s32 %v4149
    %v4151 = vcvt.f32.s32 %v4145
    %v4152 = vshll.u32 %v4151, 16
    %v4153 = vadd.s32 %v4152, %v4150
    %vm4154 = vcmp.eq.s32.totalorder %v190, %v4108
    %vm4155 = vcmp.eq.s32.totalorder %v190, %v4123
    %vm4156 = vcmp.eq.s32.totalorder %v190, %v4138
    %vm4157 = vcmp.eq.s32.totalorder %v190, %v4153
    %v4158 = vsel %vm4154, 1, 0
    %v4159 = vsel %vm4155, 1, 0
    %v4160 = vsel %vm4156, 1, 0
    %v4161 = vsel %vm4157, 1, 0
    %v4162 = vcvt.s32.f32 %v4158
    %v4163 = vcvt.s32.f32 %v4159
    %v4164 = vcvt.s32.f32 %v4160
    %v4165 = vcvt.s32.f32 %v4161
    %v4166 = vpack.c.bf16 %v4163, %v4162
    %v4167 = vpack.c.bf16 %v4165, %v4164
    %v4169 = vsel %vm311, %v4166, 0
    %v4172 = vsel %vm311, %v4167, 0
    %4174 = vmatpush.bf16.msra.mxu0 0
    %4175 = vmatpush.bf16.msra.mxu0 0
    %4176 = vmatpush.bf16.msra.mxu0 0
    %4177 = vmatpush.bf16.msra.mxu0 0
    %4178 = vmatpush.bf16.msra.mxu0 0
    %4179 = vmatpush.bf16.msra.mxu0 0
    %4180 = vmatpush.bf16.msra.mxu0 %v2807
    %4181 = vmatpush.bf16.msra.mxu0 %v2806
    %4182 = vmatmul.bf16.gmra.mxu0 %v4169
    %v4183 = vpop.f32.mrf.mxu0
    %v4184 = vadd.f32 0.0, %v4183
    %v4185 = vpop.f32.mrf.mxu0
    %v4186 = vadd.f32 0.0, %v4185
    %4187 = vmatmul.bf16.gmra.mxu0 %v4172
    %v4188 = vpop.f32.mrf.mxu0
    %v4189 = vadd.f32 0.0, %v4188
    %v4190 = vpop.f32.mrf.mxu0
    %v4191 = vadd.f32 0.0, %v4190
    %4192 = vdwg.mxu0
    %v4193 = vpack.c.bf16 %v4186, %v4184
    %v4194 = vpack.c.bf16 %v4191, %v4189
    %4195 = vmatpush.bf16.msra.mxu0 %v3846
    %4196 = vmatpush.bf16.msra.mxu0 %v3838
    %4197 = vmatpush.bf16.msra.mxu0 %v3830
    %4198 = vmatpush.bf16.msra.mxu0 %v3822
    %4199 = vmatpush.bf16.msra.mxu0 %v3814
    %4200 = vmatpush.bf16.msra.mxu0 %v3806
    %4201 = vmatpush.bf16.msra.mxu0 %v3798
    %4202 = vmatpush.bf16.msra.mxu0 %v3790
    %4203 = vmatmul.bf16.gmra.mxu0 %v4193
    %v4204 = vpop.f32.mrf.mxu0
    %v4205 = vadd.f32 0.0, %v4204
    %v4206 = vpop.f32.mrf.mxu0
    %v4207 = vadd.f32 0.0, %v4206
    %4208 = vmatmul.bf16.gmra.mxu0 %v4194
    %v4209 = vpop.f32.mrf.mxu0
    %v4210 = vadd.f32 0.0, %v4209
    %v4211 = vpop.f32.mrf.mxu0
    %v4212 = vadd.f32 0.0, %v4211
    %4213 = vdwg.mxu0
    %4214 = vmatpush.bf16.msra.mxu0 %v3847
    %4215 = vmatpush.bf16.msra.mxu0 %v3839
    %4216 = vmatpush.bf16.msra.mxu0 %v3831
    %4217 = vmatpush.bf16.msra.mxu0 %v3823
    %4218 = vmatpush.bf16.msra.mxu0 %v3815
    %4219 = vmatpush.bf16.msra.mxu0 %v3807
    %4220 = vmatpush.bf16.msra.mxu0 %v3799
    %4221 = vmatpush.bf16.msra.mxu0 %v3791
    %4222 = vmatmul.bf16.gmra.mxu0 %v4193
    %v4223 = vpop.f32.mrf.mxu0
    %v4224 = vadd.f32 0.0, %v4223
    %v4225 = vpop.f32.mrf.mxu0
    %v4226 = vadd.f32 0.0, %v4225
    %4227 = vmatmul.bf16.gmra.mxu0 %v4194
    %v4228 = vpop.f32.mrf.mxu0
    %v4229 = vadd.f32 0.0, %v4228
    %v4230 = vpop.f32.mrf.mxu0
    %v4231 = vadd.f32 0.0, %v4230
    %4232 = vdwg.mxu0
    %4233 = vmatpush.bf16.msra.mxu0 %v3848
    %4234 = vmatpush.bf16.msra.mxu0 %v3840
    %4235 = vmatpush.bf16.msra.mxu0 %v3832
    %4236 = vmatpush.bf16.msra.mxu0 %v3824
    %4237 = vmatpush.bf16.msra.mxu0 %v3816
    %4238 = vmatpush.bf16.msra.mxu0 %v3808
    %4239 = vmatpush.bf16.msra.mxu0 %v3800
    %4240 = vmatpush.bf16.msra.mxu0 %v3792
    %4241 = vmatmul.bf16.gmra.mxu0 %v4193
    %v4242 = vpop.f32.mrf.mxu0
    %v4243 = vadd.f32 0.0, %v4242
    %v4244 = vpop.f32.mrf.mxu0
    %v4245 = vadd.f32 0.0, %v4244
    %4246 = vmatmul.bf16.gmra.mxu0 %v4194
    %v4247 = vpop.f32.mrf.mxu0
    %v4248 = vadd.f32 0.0, %v4247
    %v4249 = vpop.f32.mrf.mxu0
    %v4250 = vadd.f32 0.0, %v4249
    %4251 = vdwg.mxu0
    %4252 = vmatpush.bf16.msra.mxu0 %v3849
    %4253 = vmatpush.bf16.msra.mxu0 %v3841
    %4254 = vmatpush.bf16.msra.mxu0 %v3833
    %4255 = vmatpush.bf16.msra.mxu0 %v3825
    %4256 = vmatpush.bf16.msra.mxu0 %v3817
    %4257 = vmatpush.bf16.msra.mxu0 %v3809
    %4258 = vmatpush.bf16.msra.mxu0 %v3801
    %4259 = vmatpush.bf16.msra.mxu0 %v3793
    %4260 = vmatmul.bf16.gmra.mxu0 %v4193
    %v4261 = vpop.f32.mrf.mxu0
    %v4262 = vadd.f32 0.0, %v4261
    %v4263 = vpop.f32.mrf.mxu0
    %v4264 = vadd.f32 0.0, %v4263
    %4265 = vmatmul.bf16.gmra.mxu0 %v4194
    %v4266 = vpop.f32.mrf.mxu0
    %v4267 = vadd.f32 0.0, %v4266
    %v4268 = vpop.f32.mrf.mxu0
    %v4269 = vadd.f32 0.0, %v4268
    %4270 = vdwg.mxu0
    %4271 = vmatpush.bf16.msra.mxu0 %v3850
    %4272 = vmatpush.bf16.msra.mxu0 %v3842
    %4273 = vmatpush.bf16.msra.mxu0 %v3834
    %4274 = vmatpush.bf16.msra.mxu0 %v3826
    %4275 = vmatpush.bf16.msra.mxu0 %v3818
    %4276 = vmatpush.bf16.msra.mxu0 %v3810
    %4277 = vmatpush.bf16.msra.mxu0 %v3802
    %4278 = vmatpush.bf16.msra.mxu0 %v3794
    %4279 = vmatmul.bf16.gmra.mxu0 %v4193
    %v4280 = vpop.f32.mrf.mxu0
    %v4281 = vadd.f32 0.0, %v4280
    %v4282 = vpop.f32.mrf.mxu0
    %v4283 = vadd.f32 0.0, %v4282
    %4284 = vmatmul.bf16.gmra.mxu0 %v4194
    %v4285 = vpop.f32.mrf.mxu0
    %v4286 = vadd.f32 0.0, %v4285
    %v4287 = vpop.f32.mrf.mxu0
    %v4288 = vadd.f32 0.0, %v4287
    %4289 = vdwg.mxu0
    %4290 = vmatpush.bf16.msra.mxu0 %v3851
    %4291 = vmatpush.bf16.msra.mxu0 %v3843
    %4292 = vmatpush.bf16.msra.mxu0 %v3835
    %4293 = vmatpush.bf16.msra.mxu0 %v3827
    %4294 = vmatpush.bf16.msra.mxu0 %v3819
    %4295 = vmatpush.bf16.msra.mxu0 %v3811
    %4296 = vmatpush.bf16.msra.mxu0 %v3803
    %4297 = vmatpush.bf16.msra.mxu0 %v3795
    %4298 = vmatmul.bf16.gmra.mxu0 %v4193
    %v4299 = vpop.f32.mrf.mxu0
    %v4300 = vadd.f32 0.0, %v4299
    %v4301 = vpop.f32.mrf.mxu0
    %v4302 = vadd.f32 0.0, %v4301
    %4303 = vmatmul.bf16.gmra.mxu0 %v4194
    %v4304 = vpop.f32.mrf.mxu0
    %v4305 = vadd.f32 0.0, %v4304
    %v4306 = vpop.f32.mrf.mxu0
    %v4307 = vadd.f32 0.0, %v4306
    %4308 = vdwg.mxu0
    %4309 = vmatpush.bf16.msra.mxu0 %v3852
    %4310 = vmatpush.bf16.msra.mxu0 %v3844
    %4311 = vmatpush.bf16.msra.mxu0 %v3836
    %4312 = vmatpush.bf16.msra.mxu0 %v3828
    %4313 = vmatpush.bf16.msra.mxu0 %v3820
    %4314 = vmatpush.bf16.msra.mxu0 %v3812
    %4315 = vmatpush.bf16.msra.mxu0 %v3804
    %4316 = vmatpush.bf16.msra.mxu0 %v3796
    %4317 = vmatmul.bf16.gmra.mxu0 %v4193
    %v4318 = vpop.f32.mrf.mxu0
    %v4319 = vadd.f32 0.0, %v4318
    %v4320 = vpop.f32.mrf.mxu0
    %v4321 = vadd.f32 0.0, %v4320
    %4322 = vmatmul.bf16.gmra.mxu0 %v4194
    %v4323 = vpop.f32.mrf.mxu0
    %v4324 = vadd.f32 0.0, %v4323
    %v4325 = vpop.f32.mrf.mxu0
    %v4326 = vadd.f32 0.0, %v4325
    %4327 = vdwg.mxu0
    %4328 = vmatpush.bf16.msra.mxu0 %v3853
    %4329 = vmatpush.bf16.msra.mxu0 %v3845
    %4330 = vmatpush.bf16.msra.mxu0 %v3837
    %4331 = vmatpush.bf16.msra.mxu0 %v3829
    %4332 = vmatpush.bf16.msra.mxu0 %v3821
    %4333 = vmatpush.bf16.msra.mxu0 %v3813
    %4334 = vmatpush.bf16.msra.mxu0 %v3805
    %4335 = vmatpush.bf16.msra.mxu0 %v3797
    %4336 = vmatmul.bf16.gmra.mxu0 %v4193
    %v4337 = vpop.f32.mrf.mxu0
    %v4338 = vadd.f32 0.0, %v4337
    %v4339 = vpop.f32.mrf.mxu0
    %v4340 = vadd.f32 0.0, %v4339
    %4341 = vmatmul.bf16.gmra.mxu0 %v4194
    %v4342 = vpop.f32.mrf.mxu0
    %v4343 = vadd.f32 0.0, %v4342
    %v4344 = vpop.f32.mrf.mxu0
    %v4345 = vadd.f32 0.0, %v4344
    %4346 = vdwg.mxu0
    %v4347 = vmax.f32 %v3928, %v4205
    %v4348 = vmax.f32 %v3947, %v4224
    %v4349 = vmax.f32 %v3966, %v4243
    %v4350 = vmax.f32 %v3985, %v4262
    %v4351 = vmax.f32 %v4004, %v4281
    %v4352 = vmax.f32 %v4023, %v4300
    %v4353 = vmax.f32 %v4042, %v4319
    %v4354 = vmax.f32 %v4061, %v4338
    %v4355 = vmax.f32 %v3930, %v4207
    %v4356 = vmax.f32 %v3949, %v4226
    %v4357 = vmax.f32 %v3968, %v4245
    %v4358 = vmax.f32 %v3987, %v4264
    %v4359 = vmax.f32 %v4006, %v4283
    %v4360 = vmax.f32 %v4025, %v4302
    %v4361 = vmax.f32 %v4044, %v4321
    %v4362 = vmax.f32 %v4063, %v4340
    %v4363 = vmax.f32 %v3933, %v4210
    %v4364 = vmax.f32 %v3952, %v4229
    %v4365 = vmax.f32 %v3971, %v4248
    %v4366 = vmax.f32 %v3990, %v4267
    %v4367 = vmax.f32 %v4009, %v4286
    %v4368 = vmax.f32 %v4028, %v4305
    %v4369 = vmax.f32 %v4047, %v4324
    %v4370 = vmax.f32 %v4066, %v4343
    %v4371 = vmax.f32 %v3935, %v4212
    %v4372 = vmax.f32 %v3954, %v4231
    %v4373 = vmax.f32 %v3973, %v4250
    %v4374 = vmax.f32 %v3992, %v4269
    %v4375 = vmax.f32 %v4011, %v4288
    %v4376 = vmax.f32 %v4030, %v4307
    %v4377 = vmax.f32 %v4049, %v4326
    %v4378 = vmax.f32 %v4068, %v4345
    %v4379 = vsel %vm4154, inf, %v4070
    %v4380 = vsel %vm4155, inf, %v4071
    %v4381 = vsel %vm4156, inf, %v4072
    %v4382 = vsel %vm4157, inf, %v4073
    %v4383 = vsel %vm311, %v4379, inf
    %4384 = vmin.xlane.f32.xlu0 %v4383
    %v4385 = vpop.xlane.xlu0 %4384
    %v4386 = vsel %vm311, %v4380, inf
    %4387 = vmin.xlane.f32.xlu0 %v4386
    %v4388 = vpop.xlane.xlu0 %4387
    %v4389 = vsel %vm311, %v4381, inf
    %4390 = vmin.xlane.f32.xlu0 %v4389
    %v4391 = vpop.xlane.xlu0 %4390
    %v4392 = vsel %vm311, %v4382, inf
    %4393 = vmin.xlane.f32.xlu0 %v4392
    %v4394 = vpop.xlane.xlu0 %4393
    %vm4395 = vcmp.eq.f32.partialorder %v4379, %v4385
    %vm4396 = vcmp.eq.f32.partialorder %v4380, %v4388
    %vm4397 = vcmp.eq.f32.partialorder %v4381, %v4391
    %vm4398 = vcmp.eq.f32.partialorder %v4382, %v4394
    %v4399 = vsel %vm4395, %v190, 32
    %v4400 = vsel %vm4396, %v190, 32
    %v4401 = vsel %vm4397, %v190, 32
    %v4402 = vsel %vm4398, %v190, 32
    %v4403 = vsel %vm311, %v4399, 2147483647
    %v4404 = vand.u32 %v4403, 65535
    %v4405 = vshra.s32 %v4403, 16
    %v4406 = vcvt.s32.f32 %v4404
    %v4407 = vcvt.s32.f32 %v4405
    %4408 = vmin.xlane.f32.xlu0 %v4407
    %v4409 = vpop.xlane.xlu0 %4408
    %vm4410 = vcmp.eq.f32.partialorder %v4407, %v4409
    %v4411 = vsel %vm4410, %v4406, inf
    %4412 = vmin.xlane.f32.xlu0 %v4411
    %v4413 = vpop.xlane.xlu0 %4412
    %v4414 = vcvt.f32.s32 %v4413
    %v4415 = vcvt.f32.s32 %v4409
    %v4416 = vshll.u32 %v4415, 16
    %v4417 = vadd.s32 %v4416, %v4414
    %v4418 = vsel %vm311, %v4400, 2147483647
    %v4419 = vand.u32 %v4418, 65535
    %v4420 = vshra.s32 %v4418, 16
    %v4421 = vcvt.s32.f32 %v4419
    %v4422 = vcvt.s32.f32 %v4420
    %4423 = vmin.xlane.f32.xlu0 %v4422
    %v4424 = vpop.xlane.xlu0 %4423
    %vm4425 = vcmp.eq.f32.partialorder %v4422, %v4424
    %v4426 = vsel %vm4425, %v4421, inf
    %4427 = vmin.xlane.f32.xlu0 %v4426
    %v4428 = vpop.xlane.xlu0 %4427
    %v4429 = vcvt.f32.s32 %v4428
    %v4430 = vcvt.f32.s32 %v4424
    %v4431 = vshll.u32 %v4430, 16
    %v4432 = vadd.s32 %v4431, %v4429
    %v4433 = vsel %vm311, %v4401, 2147483647
    %v4434 = vand.u32 %v4433, 65535
    %v4435 = vshra.s32 %v4433, 16
    %v4436 = vcvt.s32.f32 %v4434
    %v4437 = vcvt.s32.f32 %v4435
    %4438 = vmin.xlane.f32.xlu0 %v4437
    %v4439 = vpop.xlane.xlu0 %4438
    %vm4440 = vcmp.eq.f32.partialorder %v4437, %v4439
    %v4441 = vsel %vm4440, %v4436, inf
    %4442 = vmin.xlane.f32.xlu0 %v4441
    %v4443 = vpop.xlane.xlu0 %4442
    %v4444 = vcvt.f32.s32 %v4443
    %v4445 = vcvt.f32.s32 %v4439
    %v4446 = vshll.u32 %v4445, 16
    %v4447 = vadd.s32 %v4446, %v4444
    %v4448 = vsel %vm311, %v4402, 2147483647
    %v4449 = vand.u32 %v4448, 65535
    %v4450 = vshra.s32 %v4448, 16
    %v4451 = vcvt.s32.f32 %v4449
    %v4452 = vcvt.s32.f32 %v4450
    %4453 = vmin.xlane.f32.xlu0 %v4452
    %v4454 = vpop.xlane.xlu0 %4453
    %vm4455 = vcmp.eq.f32.partialorder %v4452, %v4454
    %v4456 = vsel %vm4455, %v4451, inf
    %4457 = vmin.xlane.f32.xlu0 %v4456
    %v4458 = vpop.xlane.xlu0 %4457
    %v4459 = vcvt.f32.s32 %v4458
    %v4460 = vcvt.f32.s32 %v4454
    %v4461 = vshll.u32 %v4460, 16
    %v4462 = vadd.s32 %v4461, %v4459
    %vm4463 = vcmp.eq.s32.totalorder %v190, %v4417
    %vm4464 = vcmp.eq.s32.totalorder %v190, %v4432
    %vm4465 = vcmp.eq.s32.totalorder %v190, %v4447
    %vm4466 = vcmp.eq.s32.totalorder %v190, %v4462
    %v4467 = vsel %vm4463, 1, 0
    %v4468 = vsel %vm4464, 1, 0
    %v4469 = vsel %vm4465, 1, 0
    %v4470 = vsel %vm4466, 1, 0
    %v4471 = vcvt.s32.f32 %v4467
    %v4472 = vcvt.s32.f32 %v4468
    %v4473 = vcvt.s32.f32 %v4469
    %v4474 = vcvt.s32.f32 %v4470
    %v4475 = vpack.c.bf16 %v4472, %v4471
    %v4476 = vpack.c.bf16 %v4474, %v4473
    %v4478 = vsel %vm311, %v4475, 0
    %v4481 = vsel %vm311, %v4476, 0
    %4483 = vmatpush.bf16.msra.mxu0 0
    %4484 = vmatpush.bf16.msra.mxu0 0
    %4485 = vmatpush.bf16.msra.mxu0 0
    %4486 = vmatpush.bf16.msra.mxu0 0
    %4487 = vmatpush.bf16.msra.mxu0 0
    %4488 = vmatpush.bf16.msra.mxu0 0
    %4489 = vmatpush.bf16.msra.mxu0 %v2807
    %4490 = vmatpush.bf16.msra.mxu0 %v2806
    %4491 = vmatmul.bf16.gmra.mxu0 %v4478
    %v4492 = vpop.f32.mrf.mxu0
    %v4493 = vadd.f32 0.0, %v4492
    %v4494 = vpop.f32.mrf.mxu0
    %v4495 = vadd.f32 0.0, %v4494
    %4496 = vmatmul.bf16.gmra.mxu0 %v4481
    %v4497 = vpop.f32.mrf.mxu0
    %v4498 = vadd.f32 0.0, %v4497
    %v4499 = vpop.f32.mrf.mxu0
    %v4500 = vadd.f32 0.0, %v4499
    %4501 = vdwg.mxu0
    %v4502 = vpack.c.bf16 %v4495, %v4493
    %v4503 = vpack.c.bf16 %v4500, %v4498
    %4504 = vmatpush.bf16.msra.mxu0 %v3846
    %4505 = vmatpush.bf16.msra.mxu0 %v3838
    %4506 = vmatpush.bf16.msra.mxu0 %v3830
    %4507 = vmatpush.bf16.msra.mxu0 %v3822
    %4508 = vmatpush.bf16.msra.mxu0 %v3814
    %4509 = vmatpush.bf16.msra.mxu0 %v3806
    %4510 = vmatpush.bf16.msra.mxu0 %v3798
    %4511 = vmatpush.bf16.msra.mxu0 %v3790
    %4512 = vmatmul.bf16.gmra.mxu0 %v4502
    %v4513 = vpop.f32.mrf.mxu0
    %v4514 = vadd.f32 0.0, %v4513
    %v4515 = vpop.f32.mrf.mxu0
    %v4516 = vadd.f32 0.0, %v4515
    %4517 = vmatmul.bf16.gmra.mxu0 %v4503
    %v4518 = vpop.f32.mrf.mxu0
    %v4519 = vadd.f32 0.0, %v4518
    %v4520 = vpop.f32.mrf.mxu0
    %v4521 = vadd.f32 0.0, %v4520
    %4522 = vdwg.mxu0
    %4523 = vmatpush.bf16.msra.mxu0 %v3847
    %4524 = vmatpush.bf16.msra.mxu0 %v3839
    %4525 = vmatpush.bf16.msra.mxu0 %v3831
    %4526 = vmatpush.bf16.msra.mxu0 %v3823
    %4527 = vmatpush.bf16.msra.mxu0 %v3815
    %4528 = vmatpush.bf16.msra.mxu0 %v3807
    %4529 = vmatpush.bf16.msra.mxu0 %v3799
    %4530 = vmatpush.bf16.msra.mxu0 %v3791
    %4531 = vmatmul.bf16.gmra.mxu0 %v4502
    %v4532 = vpop.f32.mrf.mxu0
    %v4533 = vadd.f32 0.0, %v4532
    %v4534 = vpop.f32.mrf.mxu0
    %v4535 = vadd.f32 0.0, %v4534
    %4536 = vmatmul.bf16.gmra.mxu0 %v4503
    %v4537 = vpop.f32.mrf.mxu0
    %v4538 = vadd.f32 0.0, %v4537
    %v4539 = vpop.f32.mrf.mxu0
    %v4540 = vadd.f32 0.0, %v4539
    %4541 = vdwg.mxu0
    %4542 = vmatpush.bf16.msra.mxu0 %v3848
    %4543 = vmatpush.bf16.msra.mxu0 %v3840
    %4544 = vmatpush.bf16.msra.mxu0 %v3832
    %4545 = vmatpush.bf16.msra.mxu0 %v3824
    %4546 = vmatpush.bf16.msra.mxu0 %v3816
    %4547 = vmatpush.bf16.msra.mxu0 %v3808
    %4548 = vmatpush.bf16.msra.mxu0 %v3800
    %4549 = vmatpush.bf16.msra.mxu0 %v3792
    %4550 = vmatmul.bf16.gmra.mxu0 %v4502
    %v4551 = vpop.f32.mrf.mxu0
    %v4552 = vadd.f32 0.0, %v4551
    %v4553 = vpop.f32.mrf.mxu0
    %v4554 = vadd.f32 0.0, %v4553
    %4555 = vmatmul.bf16.gmra.mxu0 %v4503
    %v4556 = vpop.f32.mrf.mxu0
    %v4557 = vadd.f32 0.0, %v4556
    %v4558 = vpop.f32.mrf.mxu0
    %v4559 = vadd.f32 0.0, %v4558
    %4560 = vdwg.mxu0
    %4561 = vmatpush.bf16.msra.mxu0 %v3849
    %4562 = vmatpush.bf16.msra.mxu0 %v3841
    %4563 = vmatpush.bf16.msra.mxu0 %v3833
    %4564 = vmatpush.bf16.msra.mxu0 %v3825
    %4565 = vmatpush.bf16.msra.mxu0 %v3817
    %4566 = vmatpush.bf16.msra.mxu0 %v3809
    %4567 = vmatpush.bf16.msra.mxu0 %v3801
    %4568 = vmatpush.bf16.msra.mxu0 %v3793
    %4569 = vmatmul.bf16.gmra.mxu0 %v4502
    %v4570 = vpop.f32.mrf.mxu0
    %v4571 = vadd.f32 0.0, %v4570
    %v4572 = vpop.f32.mrf.mxu0
    %v4573 = vadd.f32 0.0, %v4572
    %4574 = vmatmul.bf16.gmra.mxu0 %v4503
    %v4575 = vpop.f32.mrf.mxu0
    %v4576 = vadd.f32 0.0, %v4575
    %v4577 = vpop.f32.mrf.mxu0
    %v4578 = vadd.f32 0.0, %v4577
    %4579 = vdwg.mxu0
    %4580 = vmatpush.bf16.msra.mxu0 %v3850
    %4581 = vmatpush.bf16.msra.mxu0 %v3842
    %4582 = vmatpush.bf16.msra.mxu0 %v3834
    %4583 = vmatpush.bf16.msra.mxu0 %v3826
    %4584 = vmatpush.bf16.msra.mxu0 %v3818
    %4585 = vmatpush.bf16.msra.mxu0 %v3810
    %4586 = vmatpush.bf16.msra.mxu0 %v3802
    %4587 = vmatpush.bf16.msra.mxu0 %v3794
    %4588 = vmatmul.bf16.gmra.mxu0 %v4502
    %v4589 = vpop.f32.mrf.mxu0
    %v4590 = vadd.f32 0.0, %v4589
    %v4591 = vpop.f32.mrf.mxu0
    %v4592 = vadd.f32 0.0, %v4591
    %4593 = vmatmul.bf16.gmra.mxu0 %v4503
    %v4594 = vpop.f32.mrf.mxu0
    %v4595 = vadd.f32 0.0, %v4594
    %v4596 = vpop.f32.mrf.mxu0
    %v4597 = vadd.f32 0.0, %v4596
    %4598 = vdwg.mxu0
    %4599 = vmatpush.bf16.msra.mxu0 %v3851
    %4600 = vmatpush.bf16.msra.mxu0 %v3843
    %4601 = vmatpush.bf16.msra.mxu0 %v3835
    %4602 = vmatpush.bf16.msra.mxu0 %v3827
    %4603 = vmatpush.bf16.msra.mxu0 %v3819
    %4604 = vmatpush.bf16.msra.mxu0 %v3811
    %4605 = vmatpush.bf16.msra.mxu0 %v3803
    %4606 = vmatpush.bf16.msra.mxu0 %v3795
    %4607 = vmatmul.bf16.gmra.mxu0 %v4502
    %v4608 = vpop.f32.mrf.mxu0
    %v4609 = vadd.f32 0.0, %v4608
    %v4610 = vpop.f32.mrf.mxu0
    %v4611 = vadd.f32 0.0, %v4610
    %4612 = vmatmul.bf16.gmra.mxu0 %v4503
    %v4613 = vpop.f32.mrf.mxu0
    %v4614 = vadd.f32 0.0, %v4613
    %v4615 = vpop.f32.mrf.mxu0
    %v4616 = vadd.f32 0.0, %v4615
    %4617 = vdwg.mxu0
    %4618 = vmatpush.bf16.msra.mxu0 %v3852
    %4619 = vmatpush.bf16.msra.mxu0 %v3844
    %4620 = vmatpush.bf16.msra.mxu0 %v3836
    %4621 = vmatpush.bf16.msra.mxu0 %v3828
    %4622 = vmatpush.bf16.msra.mxu0 %v3820
    %4623 = vmatpush.bf16.msra.mxu0 %v3812
    %4624 = vmatpush.bf16.msra.mxu0 %v3804
    %4625 = vmatpush.bf16.msra.mxu0 %v3796
    %4626 = vmatmul.bf16.gmra.mxu0 %v4502
    %v4627 = vpop.f32.mrf.mxu0
    %v4628 = vadd.f32 0.0, %v4627
    %v4629 = vpop.f32.mrf.mxu0
    %v4630 = vadd.f32 0.0, %v4629
    %4631 = vmatmul.bf16.gmra.mxu0 %v4503
    %v4632 = vpop.f32.mrf.mxu0
    %v4633 = vadd.f32 0.0, %v4632
    %v4634 = vpop.f32.mrf.mxu0
    %v4635 = vadd.f32 0.0, %v4634
    %4636 = vdwg.mxu0
    %4637 = vmatpush.bf16.msra.mxu0 %v3853
    %4638 = vmatpush.bf16.msra.mxu0 %v3845
    %4639 = vmatpush.bf16.msra.mxu0 %v3837
    %4640 = vmatpush.bf16.msra.mxu0 %v3829
    %4641 = vmatpush.bf16.msra.mxu0 %v3821
    %4642 = vmatpush.bf16.msra.mxu0 %v3813
    %4643 = vmatpush.bf16.msra.mxu0 %v3805
    %4644 = vmatpush.bf16.msra.mxu0 %v3797
    %4645 = vmatmul.bf16.gmra.mxu0 %v4502
    %v4646 = vpop.f32.mrf.mxu0
    %v4647 = vadd.f32 0.0, %v4646
    %v4648 = vpop.f32.mrf.mxu0
    %v4649 = vadd.f32 0.0, %v4648
    %4650 = vmatmul.bf16.gmra.mxu0 %v4503
    %v4651 = vpop.f32.mrf.mxu0
    %v4652 = vadd.f32 0.0, %v4651
    %v4653 = vpop.f32.mrf.mxu0
    %v4654 = vadd.f32 0.0, %v4653
    %4655 = vdwg.mxu0
    %v4656 = vmax.f32 %v4347, %v4514
    %v4657 = vmax.f32 %v4348, %v4533
    %v4658 = vmax.f32 %v4349, %v4552
    %v4659 = vmax.f32 %v4350, %v4571
    %v4660 = vmax.f32 %v4351, %v4590
    %v4661 = vmax.f32 %v4352, %v4609
    %v4662 = vmax.f32 %v4353, %v4628
    %v4663 = vmax.f32 %v4354, %v4647
    %v4664 = vmax.f32 %v4355, %v4516
    %v4665 = vmax.f32 %v4356, %v4535
    %v4666 = vmax.f32 %v4357, %v4554
    %v4667 = vmax.f32 %v4358, %v4573
    %v4668 = vmax.f32 %v4359, %v4592
    %v4669 = vmax.f32 %v4360, %v4611
    %v4670 = vmax.f32 %v4361, %v4630
    %v4671 = vmax.f32 %v4362, %v4649
    %v4672 = vmax.f32 %v4363, %v4519
    %v4673 = vmax.f32 %v4364, %v4538
    %v4674 = vmax.f32 %v4365, %v4557
    %v4675 = vmax.f32 %v4366, %v4576
    %v4676 = vmax.f32 %v4367, %v4595
    %v4677 = vmax.f32 %v4368, %v4614
    %v4678 = vmax.f32 %v4369, %v4633
    %v4679 = vmax.f32 %v4370, %v4652
    %v4680 = vmax.f32 %v4371, %v4521
    %v4681 = vmax.f32 %v4372, %v4540
    %v4682 = vmax.f32 %v4373, %v4559
    %v4683 = vmax.f32 %v4374, %v4578
    %v4684 = vmax.f32 %v4375, %v4597
    %v4685 = vmax.f32 %v4376, %v4616
    %v4686 = vmax.f32 %v4377, %v4635
    %v4687 = vmax.f32 %v4378, %v4654
    %v4688 = vsel %vm4463, inf, %v4379
    %v4689 = vsel %vm4464, inf, %v4380
    %v4690 = vsel %vm4465, inf, %v4381
    %v4691 = vsel %vm4466, inf, %v4382
    %v4692 = vsel %vm311, %v4688, inf
    %4693 = vmin.xlane.f32.xlu0 %v4692
    %v4694 = vpop.xlane.xlu0 %4693
    %v4695 = vsel %vm311, %v4689, inf
    %4696 = vmin.xlane.f32.xlu0 %v4695
    %v4697 = vpop.xlane.xlu0 %4696
    %v4698 = vsel %vm311, %v4690, inf
    %4699 = vmin.xlane.f32.xlu0 %v4698
    %v4700 = vpop.xlane.xlu0 %4699
    %v4701 = vsel %vm311, %v4691, inf
    %4702 = vmin.xlane.f32.xlu0 %v4701
    %v4703 = vpop.xlane.xlu0 %4702
    %vm4704 = vcmp.eq.f32.partialorder %v4688, %v4694
    %vm4705 = vcmp.eq.f32.partialorder %v4689, %v4697
    %vm4706 = vcmp.eq.f32.partialorder %v4690, %v4700
    %vm4707 = vcmp.eq.f32.partialorder %v4691, %v4703
    %v4708 = vsel %vm4704, %v190, 32
    %v4709 = vsel %vm4705, %v190, 32
    %v4710 = vsel %vm4706, %v190, 32
    %v4711 = vsel %vm4707, %v190, 32
    %v4712 = vsel %vm311, %v4708, 2147483647
    %v4713 = vand.u32 %v4712, 65535
    %v4714 = vshra.s32 %v4712, 16
    %v4715 = vcvt.s32.f32 %v4713
    %v4716 = vcvt.s32.f32 %v4714
    %4717 = vmin.xlane.f32.xlu0 %v4716
    %v4718 = vpop.xlane.xlu0 %4717
    %vm4719 = vcmp.eq.f32.partialorder %v4716, %v4718
    %v4720 = vsel %vm4719, %v4715, inf
    %4721 = vmin.xlane.f32.xlu0 %v4720
    %v4722 = vpop.xlane.xlu0 %4721
    %v4723 = vcvt.f32.s32 %v4722
    %v4724 = vcvt.f32.s32 %v4718
    %v4725 = vshll.u32 %v4724, 16
    %v4726 = vadd.s32 %v4725, %v4723
    %v4727 = vsel %vm311, %v4709, 2147483647
    %v4728 = vand.u32 %v4727, 65535
    %v4729 = vshra.s32 %v4727, 16
    %v4730 = vcvt.s32.f32 %v4728
    %v4731 = vcvt.s32.f32 %v4729
    %4732 = vmin.xlane.f32.xlu0 %v4731
    %v4733 = vpop.xlane.xlu0 %4732
    %vm4734 = vcmp.eq.f32.partialorder %v4731, %v4733
    %v4735 = vsel %vm4734, %v4730, inf
    %4736 = vmin.xlane.f32.xlu0 %v4735
    %v4737 = vpop.xlane.xlu0 %4736
    %v4738 = vcvt.f32.s32 %v4737
    %v4739 = vcvt.f32.s32 %v4733
    %v4740 = vshll.u32 %v4739, 16
    %v4741 = vadd.s32 %v4740, %v4738
    %v4742 = vsel %vm311, %v4710, 2147483647
    %v4743 = vand.u32 %v4742, 65535
    %v4744 = vshra.s32 %v4742, 16
    %v4745 = vcvt.s32.f32 %v4743
    %v4746 = vcvt.s32.f32 %v4744
    %4747 = vmin.xlane.f32.xlu0 %v4746
    %v4748 = vpop.xlane.xlu0 %4747
    %vm4749 = vcmp.eq.f32.partialorder %v4746, %v4748
    %v4750 = vsel %vm4749, %v4745, inf
    %4751 = vmin.xlane.f32.xlu0 %v4750
    %v4752 = vpop.xlane.xlu0 %4751
    %v4753 = vcvt.f32.s32 %v4752
    %v4754 = vcvt.f32.s32 %v4748
    %v4755 = vshll.u32 %v4754, 16
    %v4756 = vadd.s32 %v4755, %v4753
    %v4757 = vsel %vm311, %v4711, 2147483647
    %v4758 = vand.u32 %v4757, 65535
    %v4759 = vshra.s32 %v4757, 16
    %v4760 = vcvt.s32.f32 %v4758
    %v4761 = vcvt.s32.f32 %v4759
    %4762 = vmin.xlane.f32.xlu0 %v4761
    %v4763 = vpop.xlane.xlu0 %4762
    %vm4764 = vcmp.eq.f32.partialorder %v4761, %v4763
    %v4765 = vsel %vm4764, %v4760, inf
    %4766 = vmin.xlane.f32.xlu0 %v4765
    %v4767 = vpop.xlane.xlu0 %4766
    %v4768 = vcvt.f32.s32 %v4767
    %v4769 = vcvt.f32.s32 %v4763
    %v4770 = vshll.u32 %v4769, 16
    %v4771 = vadd.s32 %v4770, %v4768
    %vm4772 = vcmp.eq.s32.totalorder %v190, %v4726
    %vm4773 = vcmp.eq.s32.totalorder %v190, %v4741
    %vm4774 = vcmp.eq.s32.totalorder %v190, %v4756
    %vm4775 = vcmp.eq.s32.totalorder %v190, %v4771
    %v4776 = vsel %vm4772, 1, 0
    %v4777 = vsel %vm4773, 1, 0
    %v4778 = vsel %vm4774, 1, 0
    %v4779 = vsel %vm4775, 1, 0
    %v4780 = vcvt.s32.f32 %v4776
    %v4781 = vcvt.s32.f32 %v4777
    %v4782 = vcvt.s32.f32 %v4778
    %v4783 = vcvt.s32.f32 %v4779
    %v4784 = vpack.c.bf16 %v4781, %v4780
    %v4785 = vpack.c.bf16 %v4783, %v4782
    %v4787 = vsel %vm311, %v4784, 0
    %v4790 = vsel %vm311, %v4785, 0
    %4792 = vmatpush.bf16.msra.mxu0 0
    %4793 = vmatpush.bf16.msra.mxu0 0
    %4794 = vmatpush.bf16.msra.mxu0 0
    %4795 = vmatpush.bf16.msra.mxu0 0
    %4796 = vmatpush.bf16.msra.mxu0 0
    %4797 = vmatpush.bf16.msra.mxu0 0
    %4798 = vmatpush.bf16.msra.mxu0 %v2807
    %4799 = vmatpush.bf16.msra.mxu0 %v2806
    %4800 = vmatmul.bf16.gmra.mxu0 %v4787
    %v4801 = vpop.f32.mrf.mxu0
    %v4802 = vadd.f32 0.0, %v4801
    %v4803 = vpop.f32.mrf.mxu0
    %v4804 = vadd.f32 0.0, %v4803
    %4805 = vmatmul.bf16.gmra.mxu0 %v4790
    %v4806 = vpop.f32.mrf.mxu0
    %v4807 = vadd.f32 0.0, %v4806
    %v4808 = vpop.f32.mrf.mxu0
    %v4809 = vadd.f32 0.0, %v4808
    %4810 = vdwg.mxu0
    %v4811 = vpack.c.bf16 %v4804, %v4802
    %v4812 = vpack.c.bf16 %v4809, %v4807
    %4813 = vmatpush.bf16.msra.mxu0 %v3846
    %4814 = vmatpush.bf16.msra.mxu0 %v3838
    %4815 = vmatpush.bf16.msra.mxu0 %v3830
    %4816 = vmatpush.bf16.msra.mxu0 %v3822
    %4817 = vmatpush.bf16.msra.mxu0 %v3814
    %4818 = vmatpush.bf16.msra.mxu0 %v3806
    %4819 = vmatpush.bf16.msra.mxu0 %v3798
    %4820 = vmatpush.bf16.msra.mxu0 %v3790
    %4821 = vmatmul.bf16.gmra.mxu0 %v4811
    %v4822 = vpop.f32.mrf.mxu0
    %v4823 = vadd.f32 0.0, %v4822
    %v4824 = vpop.f32.mrf.mxu0
    %v4825 = vadd.f32 0.0, %v4824
    %4826 = vmatmul.bf16.gmra.mxu0 %v4812
    %v4827 = vpop.f32.mrf.mxu0
    %v4828 = vadd.f32 0.0, %v4827
    %v4829 = vpop.f32.mrf.mxu0
    %v4830 = vadd.f32 0.0, %v4829
    %4831 = vdwg.mxu0
    %4832 = vmatpush.bf16.msra.mxu0 %v3847
    %4833 = vmatpush.bf16.msra.mxu0 %v3839
    %4834 = vmatpush.bf16.msra.mxu0 %v3831
    %4835 = vmatpush.bf16.msra.mxu0 %v3823
    %4836 = vmatpush.bf16.msra.mxu0 %v3815
    %4837 = vmatpush.bf16.msra.mxu0 %v3807
    %4838 = vmatpush.bf16.msra.mxu0 %v3799
    %4839 = vmatpush.bf16.msra.mxu0 %v3791
    %4840 = vmatmul.bf16.gmra.mxu0 %v4811
    %v4841 = vpop.f32.mrf.mxu0
    %v4842 = vadd.f32 0.0, %v4841
    %v4843 = vpop.f32.mrf.mxu0
    %v4844 = vadd.f32 0.0, %v4843
    %4845 = vmatmul.bf16.gmra.mxu0 %v4812
    %v4846 = vpop.f32.mrf.mxu0
    %v4847 = vadd.f32 0.0, %v4846
    %v4848 = vpop.f32.mrf.mxu0
    %v4849 = vadd.f32 0.0, %v4848
    %4850 = vdwg.mxu0
    %4851 = vmatpush.bf16.msra.mxu0 %v3848
    %4852 = vmatpush.bf16.msra.mxu0 %v3840
    %4853 = vmatpush.bf16.msra.mxu0 %v3832
    %4854 = vmatpush.bf16.msra.mxu0 %v3824
    %4855 = vmatpush.bf16.msra.mxu0 %v3816
    %4856 = vmatpush.bf16.msra.mxu0 %v3808
    %4857 = vmatpush.bf16.msra.mxu0 %v3800
    %4858 = vmatpush.bf16.msra.mxu0 %v3792
    %4859 = vmatmul.bf16.gmra.mxu0 %v4811
    %v4860 = vpop.f32.mrf.mxu0
    %v4861 = vadd.f32 0.0, %v4860
    %v4862 = vpop.f32.mrf.mxu0
    %v4863 = vadd.f32 0.0, %v4862
    %4864 = vmatmul.bf16.gmra.mxu0 %v4812
    %v4865 = vpop.f32.mrf.mxu0
    %v4866 = vadd.f32 0.0, %v4865
    %v4867 = vpop.f32.mrf.mxu0
    %v4868 = vadd.f32 0.0, %v4867
    %4869 = vdwg.mxu0
    %4870 = vmatpush.bf16.msra.mxu0 %v3849
    %4871 = vmatpush.bf16.msra.mxu0 %v3841
    %4872 = vmatpush.bf16.msra.mxu0 %v3833
    %4873 = vmatpush.bf16.msra.mxu0 %v3825
    %4874 = vmatpush.bf16.msra.mxu0 %v3817
    %4875 = vmatpush.bf16.msra.mxu0 %v3809
    %4876 = vmatpush.bf16.msra.mxu0 %v3801
    %4877 = vmatpush.bf16.msra.mxu0 %v3793
    %4878 = vmatmul.bf16.gmra.mxu0 %v4811
    %v4879 = vpop.f32.mrf.mxu0
    %v4880 = vadd.f32 0.0, %v4879
    %v4881 = vpop.f32.mrf.mxu0
    %v4882 = vadd.f32 0.0, %v4881
    %4883 = vmatmul.bf16.gmra.mxu0 %v4812
    %v4884 = vpop.f32.mrf.mxu0
    %v4885 = vadd.f32 0.0, %v4884
    %v4886 = vpop.f32.mrf.mxu0
    %v4887 = vadd.f32 0.0, %v4886
    %4888 = vdwg.mxu0
    %4889 = vmatpush.bf16.msra.mxu0 %v3850
    %4890 = vmatpush.bf16.msra.mxu0 %v3842
    %4891 = vmatpush.bf16.msra.mxu0 %v3834
    %4892 = vmatpush.bf16.msra.mxu0 %v3826
    %4893 = vmatpush.bf16.msra.mxu0 %v3818
    %4894 = vmatpush.bf16.msra.mxu0 %v3810
    %4895 = vmatpush.bf16.msra.mxu0 %v3802
    %4896 = vmatpush.bf16.msra.mxu0 %v3794
    %4897 = vmatmul.bf16.gmra.mxu0 %v4811
    %v4898 = vpop.f32.mrf.mxu0
    %v4899 = vadd.f32 0.0, %v4898
    %v4900 = vpop.f32.mrf.mxu0
    %v4901 = vadd.f32 0.0, %v4900
    %4902 = vmatmul.bf16.gmra.mxu0 %v4812
    %v4903 = vpop.f32.mrf.mxu0
    %v4904 = vadd.f32 0.0, %v4903
    %v4905 = vpop.f32.mrf.mxu0
    %v4906 = vadd.f32 0.0, %v4905
    %4907 = vdwg.mxu0
    %4908 = vmatpush.bf16.msra.mxu0 %v3851
    %4909 = vmatpush.bf16.msra.mxu0 %v3843
    %4910 = vmatpush.bf16.msra.mxu0 %v3835
    %4911 = vmatpush.bf16.msra.mxu0 %v3827
    %4912 = vmatpush.bf16.msra.mxu0 %v3819
    %4913 = vmatpush.bf16.msra.mxu0 %v3811
    %4914 = vmatpush.bf16.msra.mxu0 %v3803
    %4915 = vmatpush.bf16.msra.mxu0 %v3795
    %4916 = vmatmul.bf16.gmra.mxu0 %v4811
    %v4917 = vpop.f32.mrf.mxu0
    %v4918 = vadd.f32 0.0, %v4917
    %v4919 = vpop.f32.mrf.mxu0
    %v4920 = vadd.f32 0.0, %v4919
    %4921 = vmatmul.bf16.gmra.mxu0 %v4812
    %v4922 = vpop.f32.mrf.mxu0
    %v4923 = vadd.f32 0.0, %v4922
    %v4924 = vpop.f32.mrf.mxu0
    %v4925 = vadd.f32 0.0, %v4924
    %4926 = vdwg.mxu0
    %4927 = vmatpush.bf16.msra.mxu0 %v3852
    %4928 = vmatpush.bf16.msra.mxu0 %v3844
    %4929 = vmatpush.bf16.msra.mxu0 %v3836
    %4930 = vmatpush.bf16.msra.mxu0 %v3828
    %4931 = vmatpush.bf16.msra.mxu0 %v3820
    %4932 = vmatpush.bf16.msra.mxu0 %v3812
    %4933 = vmatpush.bf16.msra.mxu0 %v3804
    %4934 = vmatpush.bf16.msra.mxu0 %v3796
    %4935 = vmatmul.bf16.gmra.mxu0 %v4811
    %v4936 = vpop.f32.mrf.mxu0
    %v4937 = vadd.f32 0.0, %v4936
    %v4938 = vpop.f32.mrf.mxu0
    %v4939 = vadd.f32 0.0, %v4938
    %4940 = vmatmul.bf16.gmra.mxu0 %v4812
    %v4941 = vpop.f32.mrf.mxu0
    %v4942 = vadd.f32 0.0, %v4941
    %v4943 = vpop.f32.mrf.mxu0
    %v4944 = vadd.f32 0.0, %v4943
    %4945 = vdwg.mxu0
    %4946 = vmatpush.bf16.msra.mxu0 %v3853
    %4947 = vmatpush.bf16.msra.mxu0 %v3845
    %4948 = vmatpush.bf16.msra.mxu0 %v3837
    %4949 = vmatpush.bf16.msra.mxu0 %v3829
    %4950 = vmatpush.bf16.msra.mxu0 %v3821
    %4951 = vmatpush.bf16.msra.mxu0 %v3813
    %4952 = vmatpush.bf16.msra.mxu0 %v3805
    %4953 = vmatpush.bf16.msra.mxu0 %v3797
    %4954 = vmatmul.bf16.gmra.mxu0 %v4811
    %v4955 = vpop.f32.mrf.mxu0
    %v4956 = vadd.f32 0.0, %v4955
    %v4957 = vpop.f32.mrf.mxu0
    %v4958 = vadd.f32 0.0, %v4957
    %4959 = vmatmul.bf16.gmra.mxu0 %v4812
    %v4960 = vpop.f32.mrf.mxu0
    %v4961 = vadd.f32 0.0, %v4960
    %v4962 = vpop.f32.mrf.mxu0
    %v4963 = vadd.f32 0.0, %v4962
    %4964 = vdwg.mxu0
    %v4965 = vmax.f32 %v4656, %v4823
    %v4966 = vmax.f32 %v4657, %v4842
    %v4967 = vmax.f32 %v4658, %v4861
    %v4968 = vmax.f32 %v4659, %v4880
    %v4969 = vmax.f32 %v4660, %v4899
    %v4970 = vmax.f32 %v4661, %v4918
    %v4971 = vmax.f32 %v4662, %v4937
    %v4972 = vmax.f32 %v4663, %v4956
    %v4973 = vmax.f32 %v4664, %v4825
    %v4974 = vmax.f32 %v4665, %v4844
    %v4975 = vmax.f32 %v4666, %v4863
    %v4976 = vmax.f32 %v4667, %v4882
    %v4977 = vmax.f32 %v4668, %v4901
    %v4978 = vmax.f32 %v4669, %v4920
    %v4979 = vmax.f32 %v4670, %v4939
    %v4980 = vmax.f32 %v4671, %v4958
    %v4981 = vmax.f32 %v4672, %v4828
    %v4982 = vmax.f32 %v4673, %v4847
    %v4983 = vmax.f32 %v4674, %v4866
    %v4984 = vmax.f32 %v4675, %v4885
    %v4985 = vmax.f32 %v4676, %v4904
    %v4986 = vmax.f32 %v4677, %v4923
    %v4987 = vmax.f32 %v4678, %v4942
    %v4988 = vmax.f32 %v4679, %v4961
    %v4989 = vmax.f32 %v4680, %v4830
    %v4990 = vmax.f32 %v4681, %v4849
    %v4991 = vmax.f32 %v4682, %v4868
    %v4992 = vmax.f32 %v4683, %v4887
    %v4993 = vmax.f32 %v4684, %v4906
    %v4994 = vmax.f32 %v4685, %v4925
    %v4995 = vmax.f32 %v4686, %v4944
    %v4996 = vmax.f32 %v4687, %v4963
    %v4997 = vsel %vm4772, inf, %v4688
    %v4998 = vsel %vm4773, inf, %v4689
    %v4999 = vsel %vm4774, inf, %v4690
    %v5000 = vsel %vm4775, inf, %v4691
    %v5001 = vsel %vm311, %v4997, inf
    %5002 = vmin.xlane.f32.xlu0 %v5001
    %v5003 = vpop.xlane.xlu0 %5002
    %v5004 = vsel %vm311, %v4998, inf
    %5005 = vmin.xlane.f32.xlu0 %v5004
    %v5006 = vpop.xlane.xlu0 %5005
    %v5007 = vsel %vm311, %v4999, inf
    %5008 = vmin.xlane.f32.xlu0 %v5007
    %v5009 = vpop.xlane.xlu0 %5008
    %v5010 = vsel %vm311, %v5000, inf
    %5011 = vmin.xlane.f32.xlu0 %v5010
    %v5012 = vpop.xlane.xlu0 %5011
    %vm5013 = vcmp.eq.f32.partialorder %v4997, %v5003
    %vm5014 = vcmp.eq.f32.partialorder %v4998, %v5006
    %vm5015 = vcmp.eq.f32.partialorder %v4999, %v5009
    %vm5016 = vcmp.eq.f32.partialorder %v5000, %v5012
    %v5017 = vsel %vm5013, %v190, 32
    %v5018 = vsel %vm5014, %v190, 32
    %v5019 = vsel %vm5015, %v190, 32
    %v5020 = vsel %vm5016, %v190, 32
    %v5021 = vsel %vm311, %v5017, 2147483647
    %v5022 = vand.u32 %v5021, 65535
    %v5023 = vshra.s32 %v5021, 16
    %v5024 = vcvt.s32.f32 %v5022
    %v5025 = vcvt.s32.f32 %v5023
    %5026 = vmin.xlane.f32.xlu0 %v5025
    %v5027 = vpop.xlane.xlu0 %5026
    %vm5028 = vcmp.eq.f32.partialorder %v5025, %v5027
    %v5029 = vsel %vm5028, %v5024, inf
    %5030 = vmin.xlane.f32.xlu0 %v5029
    %v5031 = vpop.xlane.xlu0 %5030
    %v5032 = vcvt.f32.s32 %v5031
    %v5033 = vcvt.f32.s32 %v5027
    %v5034 = vshll.u32 %v5033, 16
    %v5035 = vadd.s32 %v5034, %v5032
    %v5036 = vsel %vm311, %v5018, 2147483647
    %v5037 = vand.u32 %v5036, 65535
    %v5038 = vshra.s32 %v5036, 16
    %v5039 = vcvt.s32.f32 %v5037
    %v5040 = vcvt.s32.f32 %v5038
    %5041 = vmin.xlane.f32.xlu0 %v5040
    %v5042 = vpop.xlane.xlu0 %5041
    %vm5043 = vcmp.eq.f32.partialorder %v5040, %v5042
    %v5044 = vsel %vm5043, %v5039, inf
    %5045 = vmin.xlane.f32.xlu0 %v5044
    %v5046 = vpop.xlane.xlu0 %5045
    %v5047 = vcvt.f32.s32 %v5046
    %v5048 = vcvt.f32.s32 %v5042
    %v5049 = vshll.u32 %v5048, 16
    %v5050 = vadd.s32 %v5049, %v5047
    %v5051 = vsel %vm311, %v5019, 2147483647
    %v5052 = vand.u32 %v5051, 65535
    %v5053 = vshra.s32 %v5051, 16
    %v5054 = vcvt.s32.f32 %v5052
    %v5055 = vcvt.s32.f32 %v5053
    %5056 = vmin.xlane.f32.xlu0 %v5055
    %v5057 = vpop.xlane.xlu0 %5056
    %vm5058 = vcmp.eq.f32.partialorder %v5055, %v5057
    %v5059 = vsel %vm5058, %v5054, inf
    %5060 = vmin.xlane.f32.xlu0 %v5059
    %v5061 = vpop.xlane.xlu0 %5060
    %v5062 = vcvt.f32.s32 %v5061
    %v5063 = vcvt.f32.s32 %v5057
    %v5064 = vshll.u32 %v5063, 16
    %v5065 = vadd.s32 %v5064, %v5062
    %v5066 = vsel %vm311, %v5020, 2147483647
    %v5067 = vand.u32 %v5066, 65535
    %v5068 = vshra.s32 %v5066, 16
    %v5069 = vcvt.s32.f32 %v5067
    %v5070 = vcvt.s32.f32 %v5068
    %5071 = vmin.xlane.f32.xlu0 %v5070
    %v5072 = vpop.xlane.xlu0 %5071
    %vm5073 = vcmp.eq.f32.partialorder %v5070, %v5072
    %v5074 = vsel %vm5073, %v5069, inf
    %5075 = vmin.xlane.f32.xlu0 %v5074
    %v5076 = vpop.xlane.xlu0 %5075
    %v5077 = vcvt.f32.s32 %v5076
    %v5078 = vcvt.f32.s32 %v5072
    %v5079 = vshll.u32 %v5078, 16
    %v5080 = vadd.s32 %v5079, %v5077
    %vm5081 = vcmp.eq.s32.totalorder %v190, %v5035
    %vm5082 = vcmp.eq.s32.totalorder %v190, %v5050
    %vm5083 = vcmp.eq.s32.totalorder %v190, %v5065
    %vm5084 = vcmp.eq.s32.totalorder %v190, %v5080
    %v5085 = vsel %vm5081, 1, 0
    %v5086 = vsel %vm5082, 1, 0
    %v5087 = vsel %vm5083, 1, 0
    %v5088 = vsel %vm5084, 1, 0
    %v5089 = vcvt.s32.f32 %v5085
    %v5090 = vcvt.s32.f32 %v5086
    %v5091 = vcvt.s32.f32 %v5087
    %v5092 = vcvt.s32.f32 %v5088
    %v5093 = vpack.c.bf16 %v5090, %v5089
    %v5094 = vpack.c.bf16 %v5092, %v5091
    %v5096 = vsel %vm311, %v5093, 0
    %v5099 = vsel %vm311, %v5094, 0
    %5101 = vmatpush.bf16.msra.mxu0 0
    %5102 = vmatpush.bf16.msra.mxu0 0
    %5103 = vmatpush.bf16.msra.mxu0 0
    %5104 = vmatpush.bf16.msra.mxu0 0
    %5105 = vmatpush.bf16.msra.mxu0 0
    %5106 = vmatpush.bf16.msra.mxu0 0
    %5107 = vmatpush.bf16.msra.mxu0 %v2807
    %5108 = vmatpush.bf16.msra.mxu0 %v2806
    %5109 = vmatmul.bf16.gmra.mxu0 %v5096
    %v5110 = vpop.f32.mrf.mxu0
    %v5111 = vadd.f32 0.0, %v5110
    %v5112 = vpop.f32.mrf.mxu0
    %v5113 = vadd.f32 0.0, %v5112
    %5114 = vmatmul.bf16.gmra.mxu0 %v5099
    %v5115 = vpop.f32.mrf.mxu0
    %v5116 = vadd.f32 0.0, %v5115
    %v5117 = vpop.f32.mrf.mxu0
    %v5118 = vadd.f32 0.0, %v5117
    %5119 = vdwg.mxu0
    %v5120 = vpack.c.bf16 %v5113, %v5111
    %v5121 = vpack.c.bf16 %v5118, %v5116
    %5122 = vmatpush.bf16.msra.mxu0 %v3846
    %5123 = vmatpush.bf16.msra.mxu0 %v3838
    %5124 = vmatpush.bf16.msra.mxu0 %v3830
    %5125 = vmatpush.bf16.msra.mxu0 %v3822
    %5126 = vmatpush.bf16.msra.mxu0 %v3814
    %5127 = vmatpush.bf16.msra.mxu0 %v3806
    %5128 = vmatpush.bf16.msra.mxu0 %v3798
    %5129 = vmatpush.bf16.msra.mxu0 %v3790
    %5130 = vmatmul.bf16.gmra.mxu0 %v5120
    %v5131 = vpop.f32.mrf.mxu0
    %v5132 = vadd.f32 0.0, %v5131
    %v5133 = vpop.f32.mrf.mxu0
    %v5134 = vadd.f32 0.0, %v5133
    %5135 = vmatmul.bf16.gmra.mxu0 %v5121
    %v5136 = vpop.f32.mrf.mxu0
    %v5137 = vadd.f32 0.0, %v5136
    %v5138 = vpop.f32.mrf.mxu0
    %v5139 = vadd.f32 0.0, %v5138
    %5140 = vdwg.mxu0
    %5141 = vmatpush.bf16.msra.mxu0 %v3847
    %5142 = vmatpush.bf16.msra.mxu0 %v3839
    %5143 = vmatpush.bf16.msra.mxu0 %v3831
    %5144 = vmatpush.bf16.msra.mxu0 %v3823
    %5145 = vmatpush.bf16.msra.mxu0 %v3815
    %5146 = vmatpush.bf16.msra.mxu0 %v3807
    %5147 = vmatpush.bf16.msra.mxu0 %v3799
    %5148 = vmatpush.bf16.msra.mxu0 %v3791
    %5149 = vmatmul.bf16.gmra.mxu0 %v5120
    %v5150 = vpop.f32.mrf.mxu0
    %v5151 = vadd.f32 0.0, %v5150
    %v5152 = vpop.f32.mrf.mxu0
    %v5153 = vadd.f32 0.0, %v5152
    %5154 = vmatmul.bf16.gmra.mxu0 %v5121
    %v5155 = vpop.f32.mrf.mxu0
    %v5156 = vadd.f32 0.0, %v5155
    %v5157 = vpop.f32.mrf.mxu0
    %v5158 = vadd.f32 0.0, %v5157
    %5159 = vdwg.mxu0
    %5160 = vmatpush.bf16.msra.mxu0 %v3848
    %5161 = vmatpush.bf16.msra.mxu0 %v3840
    %5162 = vmatpush.bf16.msra.mxu0 %v3832
    %5163 = vmatpush.bf16.msra.mxu0 %v3824
    %5164 = vmatpush.bf16.msra.mxu0 %v3816
    %5165 = vmatpush.bf16.msra.mxu0 %v3808
    %5166 = vmatpush.bf16.msra.mxu0 %v3800
    %5167 = vmatpush.bf16.msra.mxu0 %v3792
    %5168 = vmatmul.bf16.gmra.mxu0 %v5120
    %v5169 = vpop.f32.mrf.mxu0
    %v5170 = vadd.f32 0.0, %v5169
    %v5171 = vpop.f32.mrf.mxu0
    %v5172 = vadd.f32 0.0, %v5171
    %5173 = vmatmul.bf16.gmra.mxu0 %v5121
    %v5174 = vpop.f32.mrf.mxu0
    %v5175 = vadd.f32 0.0, %v5174
    %v5176 = vpop.f32.mrf.mxu0
    %v5177 = vadd.f32 0.0, %v5176
    %5178 = vdwg.mxu0
    %5179 = vmatpush.bf16.msra.mxu0 %v3849
    %5180 = vmatpush.bf16.msra.mxu0 %v3841
    %5181 = vmatpush.bf16.msra.mxu0 %v3833
    %5182 = vmatpush.bf16.msra.mxu0 %v3825
    %5183 = vmatpush.bf16.msra.mxu0 %v3817
    %5184 = vmatpush.bf16.msra.mxu0 %v3809
    %5185 = vmatpush.bf16.msra.mxu0 %v3801
    %5186 = vmatpush.bf16.msra.mxu0 %v3793
    %5187 = vmatmul.bf16.gmra.mxu0 %v5120
    %v5188 = vpop.f32.mrf.mxu0
    %v5189 = vadd.f32 0.0, %v5188
    %v5190 = vpop.f32.mrf.mxu0
    %v5191 = vadd.f32 0.0, %v5190
    %5192 = vmatmul.bf16.gmra.mxu0 %v5121
    %v5193 = vpop.f32.mrf.mxu0
    %v5194 = vadd.f32 0.0, %v5193
    %v5195 = vpop.f32.mrf.mxu0
    %v5196 = vadd.f32 0.0, %v5195
    %5197 = vdwg.mxu0
    %5198 = vmatpush.bf16.msra.mxu0 %v3850
    %5199 = vmatpush.bf16.msra.mxu0 %v3842
    %5200 = vmatpush.bf16.msra.mxu0 %v3834
    %5201 = vmatpush.bf16.msra.mxu0 %v3826
    %5202 = vmatpush.bf16.msra.mxu0 %v3818
    %5203 = vmatpush.bf16.msra.mxu0 %v3810
    %5204 = vmatpush.bf16.msra.mxu0 %v3802
    %5205 = vmatpush.bf16.msra.mxu0 %v3794
    %5206 = vmatmul.bf16.gmra.mxu0 %v5120
    %v5207 = vpop.f32.mrf.mxu0
    %v5208 = vadd.f32 0.0, %v5207
    %v5209 = vpop.f32.mrf.mxu0
    %v5210 = vadd.f32 0.0, %v5209
    %5211 = vmatmul.bf16.gmra.mxu0 %v5121
    %v5212 = vpop.f32.mrf.mxu0
    %v5213 = vadd.f32 0.0, %v5212
    %v5214 = vpop.f32.mrf.mxu0
    %v5215 = vadd.f32 0.0, %v5214
    %5216 = vdwg.mxu0
    %5217 = vmatpush.bf16.msra.mxu0 %v3851
    %5218 = vmatpush.bf16.msra.mxu0 %v3843
    %5219 = vmatpush.bf16.msra.mxu0 %v3835
    %5220 = vmatpush.bf16.msra.mxu0 %v3827
    %5221 = vmatpush.bf16.msra.mxu0 %v3819
    %5222 = vmatpush.bf16.msra.mxu0 %v3811
    %5223 = vmatpush.bf16.msra.mxu0 %v3803
    %5224 = vmatpush.bf16.msra.mxu0 %v3795
    %5225 = vmatmul.bf16.gmra.mxu0 %v5120
    %v5226 = vpop.f32.mrf.mxu0
    %v5227 = vadd.f32 0.0, %v5226
    %v5228 = vpop.f32.mrf.mxu0
    %v5229 = vadd.f32 0.0, %v5228
    %5230 = vmatmul.bf16.gmra.mxu0 %v5121
    %v5231 = vpop.f32.mrf.mxu0
    %v5232 = vadd.f32 0.0, %v5231
    %v5233 = vpop.f32.mrf.mxu0
    %v5234 = vadd.f32 0.0, %v5233
    %5235 = vdwg.mxu0
    %5236 = vmatpush.bf16.msra.mxu0 %v3852
    %5237 = vmatpush.bf16.msra.mxu0 %v3844
    %5238 = vmatpush.bf16.msra.mxu0 %v3836
    %5239 = vmatpush.bf16.msra.mxu0 %v3828
    %5240 = vmatpush.bf16.msra.mxu0 %v3820
    %5241 = vmatpush.bf16.msra.mxu0 %v3812
    %5242 = vmatpush.bf16.msra.mxu0 %v3804
    %5243 = vmatpush.bf16.msra.mxu0 %v3796
    %5244 = vmatmul.bf16.gmra.mxu0 %v5120
    %v5245 = vpop.f32.mrf.mxu0
    %v5246 = vadd.f32 0.0, %v5245
    %v5247 = vpop.f32.mrf.mxu0
    %v5248 = vadd.f32 0.0, %v5247
    %5249 = vmatmul.bf16.gmra.mxu0 %v5121
    %v5250 = vpop.f32.mrf.mxu0
    %v5251 = vadd.f32 0.0, %v5250
    %v5252 = vpop.f32.mrf.mxu0
    %v5253 = vadd.f32 0.0, %v5252
    %5254 = vdwg.mxu0
    %5255 = vmatpush.bf16.msra.mxu0 %v3853
    %5256 = vmatpush.bf16.msra.mxu0 %v3845
    %5257 = vmatpush.bf16.msra.mxu0 %v3837
    %5258 = vmatpush.bf16.msra.mxu0 %v3829
    %5259 = vmatpush.bf16.msra.mxu0 %v3821
    %5260 = vmatpush.bf16.msra.mxu0 %v3813
    %5261 = vmatpush.bf16.msra.mxu0 %v3805
    %5262 = vmatpush.bf16.msra.mxu0 %v3797
    %5263 = vmatmul.bf16.gmra.mxu0 %v5120
    %v5264 = vpop.f32.mrf.mxu0
    %v5265 = vadd.f32 0.0, %v5264
    %v5266 = vpop.f32.mrf.mxu0
    %v5267 = vadd.f32 0.0, %v5266
    %5268 = vmatmul.bf16.gmra.mxu0 %v5121
    %v5269 = vpop.f32.mrf.mxu0
    %v5270 = vadd.f32 0.0, %v5269
    %v5271 = vpop.f32.mrf.mxu0
    %v5272 = vadd.f32 0.0, %v5271
    %5273 = vdwg.mxu0
    %v5274 = vmax.f32 %v4965, %v5132
    %v5275 = vmax.f32 %v4966, %v5151
    %v5276 = vmax.f32 %v4967, %v5170
    %v5277 = vmax.f32 %v4968, %v5189
    %v5278 = vmax.f32 %v4969, %v5208
    %v5279 = vmax.f32 %v4970, %v5227
    %v5280 = vmax.f32 %v4971, %v5246
    %v5281 = vmax.f32 %v4972, %v5265
    %v5282 = vmax.f32 %v4973, %v5134
    %v5283 = vmax.f32 %v4974, %v5153
    %v5284 = vmax.f32 %v4975, %v5172
    %v5285 = vmax.f32 %v4976, %v5191
    %v5286 = vmax.f32 %v4977, %v5210
    %v5287 = vmax.f32 %v4978, %v5229
    %v5288 = vmax.f32 %v4979, %v5248
    %v5289 = vmax.f32 %v4980, %v5267
    %v5290 = vmax.f32 %v4981, %v5137
    %v5291 = vmax.f32 %v4982, %v5156
    %v5292 = vmax.f32 %v4983, %v5175
    %v5293 = vmax.f32 %v4984, %v5194
    %v5294 = vmax.f32 %v4985, %v5213
    %v5295 = vmax.f32 %v4986, %v5232
    %v5296 = vmax.f32 %v4987, %v5251
    %v5297 = vmax.f32 %v4988, %v5270
    %v5298 = vmax.f32 %v4989, %v5139
    %v5299 = vmax.f32 %v4990, %v5158
    %v5300 = vmax.f32 %v4991, %v5177
    %v5301 = vmax.f32 %v4992, %v5196
    %v5302 = vmax.f32 %v4993, %v5215
    %v5303 = vmax.f32 %v4994, %v5234
    %v5304 = vmax.f32 %v4995, %v5253
    %v5305 = vmax.f32 %v4996, %v5272
    %v5306 = vadd.f32 %v3271, %v5274
    %v5307 = vadd.f32 %v3290, %v5275
    %v5308 = vadd.f32 %v3309, %v5276
    %v5309 = vadd.f32 %v3328, %v5277
    %v5310 = vadd.f32 %v3347, %v5278
    %v5311 = vadd.f32 %v3366, %v5279
    %v5312 = vadd.f32 %v3385, %v5280
    %v5313 = vadd.f32 %v3404, %v5281
    %v5314 = vadd.f32 %v3273, %v5282
    %v5315 = vadd.f32 %v3292, %v5283
    %v5316 = vadd.f32 %v3311, %v5284
    %v5317 = vadd.f32 %v3330, %v5285
    %v5318 = vadd.f32 %v3349, %v5286
    %v5319 = vadd.f32 %v3368, %v5287
    %v5320 = vadd.f32 %v3387, %v5288
    %v5321 = vadd.f32 %v3406, %v5289
    %v5322 = vadd.f32 %v3276, %v5290
    %v5323 = vadd.f32 %v3295, %v5291
    %v5324 = vadd.f32 %v3314, %v5292
    %v5325 = vadd.f32 %v3333, %v5293
    %v5326 = vadd.f32 %v3352, %v5294
    %v5327 = vadd.f32 %v3371, %v5295
    %v5328 = vadd.f32 %v3390, %v5296
    %v5329 = vadd.f32 %v3409, %v5297
    %v5330 = vadd.f32 %v3278, %v5298
    %v5331 = vadd.f32 %v3297, %v5299
    %v5332 = vadd.f32 %v3316, %v5300
    %v5333 = vadd.f32 %v3335, %v5301
    %v5334 = vadd.f32 %v3354, %v5302
    %v5335 = vadd.f32 %v3373, %v5303
    %v5336 = vadd.f32 %v3392, %v5304
    %v5337 = vadd.f32 %v3411, %v5305
    %v5338 = vmax.f32 %v5306, 0.0
    %v5339 = vmax.f32 %v5307, 0.0
    %v5340 = vmax.f32 %v5308, 0.0
    %v5341 = vmax.f32 %v5309, 0.0
    %v5342 = vmax.f32 %v5310, 0.0
    %v5343 = vmax.f32 %v5311, 0.0
    %v5344 = vmax.f32 %v5312, 0.0
    %v5345 = vmax.f32 %v5313, 0.0
    %v5346 = vmax.f32 %v5314, 0.0
    %v5347 = vmax.f32 %v5315, 0.0
    %v5348 = vmax.f32 %v5316, 0.0
    %v5349 = vmax.f32 %v5317, 0.0
    %v5350 = vmax.f32 %v5318, 0.0
    %v5351 = vmax.f32 %v5319, 0.0
    %v5352 = vmax.f32 %v5320, 0.0
    %v5353 = vmax.f32 %v5321, 0.0
    %v5354 = vmax.f32 %v5322, 0.0
    %v5355 = vmax.f32 %v5323, 0.0
    %v5356 = vmax.f32 %v5324, 0.0
    %v5357 = vmax.f32 %v5325, 0.0
    %v5358 = vmax.f32 %v5326, 0.0
    %v5359 = vmax.f32 %v5327, 0.0
    %v5360 = vmax.f32 %v5328, 0.0
    %v5361 = vmax.f32 %v5329, 0.0
    %v5362 = vmax.f32 %v5330, 0.0
    %v5363 = vmax.f32 %v5331, 0.0
    %v5364 = vmax.f32 %v5332, 0.0
    %v5365 = vmax.f32 %v5333, 0.0
    %v5366 = vmax.f32 %v5334, 0.0
    %v5367 = vmax.f32 %v5335, 0.0
    %v5368 = vmax.f32 %v5336, 0.0
    %v5369 = vmax.f32 %v5337, 0.0
    %v5370 = vmax.f32 %v5338, %v5346
    %v5371 = vrot.slane %v5370, 4
    %v5372 = vmax.f32 %v5370, %v5371
    %v5373 = vrot.slane %v5372, 2
    %v5374 = vmax.f32 %v5372, %v5373
    %v5375 = vrot.slane %v5374, 1
    %v5376 = vmax.f32 %v5374, %v5375
    %v5377 = vmax.f32 %v5339, %v5347
    %v5378 = vrot.slane %v5377, 4
    %v5379 = vmax.f32 %v5377, %v5378
    %v5380 = vrot.slane %v5379, 2
    %v5381 = vmax.f32 %v5379, %v5380
    %v5382 = vrot.slane %v5381, 1
    %v5383 = vmax.f32 %v5381, %v5382
    %v5384 = vmax.f32 %v5340, %v5348
    %v5385 = vrot.slane %v5384, 4
    %v5386 = vmax.f32 %v5384, %v5385
    %v5387 = vrot.slane %v5386, 2
    %v5388 = vmax.f32 %v5386, %v5387
    %v5389 = vrot.slane %v5388, 1
    %v5390 = vmax.f32 %v5388, %v5389
    %v5391 = vmax.f32 %v5341, %v5349
    %v5392 = vrot.slane %v5391, 4
    %v5393 = vmax.f32 %v5391, %v5392
    %v5394 = vrot.slane %v5393, 2
    %v5395 = vmax.f32 %v5393, %v5394
    %v5396 = vrot.slane %v5395, 1
    %v5397 = vmax.f32 %v5395, %v5396
    %v5398 = vmax.f32 %v5342, %v5350
    %v5399 = vrot.slane %v5398, 4
    %v5400 = vmax.f32 %v5398, %v5399
    %v5401 = vrot.slane %v5400, 2
    %v5402 = vmax.f32 %v5400, %v5401
    %v5403 = vrot.slane %v5402, 1
    %v5404 = vmax.f32 %v5402, %v5403
    %v5405 = vmax.f32 %v5343, %v5351
    %v5406 = vrot.slane %v5405, 4
    %v5407 = vmax.f32 %v5405, %v5406
    %v5408 = vrot.slane %v5407, 2
    %v5409 = vmax.f32 %v5407, %v5408
    %v5410 = vrot.slane %v5409, 1
    %v5411 = vmax.f32 %v5409, %v5410
    %v5412 = vmax.f32 %v5344, %v5352
    %v5413 = vrot.slane %v5412, 4
    %v5414 = vmax.f32 %v5412, %v5413
    %v5415 = vrot.slane %v5414, 2
    %v5416 = vmax.f32 %v5414, %v5415
    %v5417 = vrot.slane %v5416, 1
    %v5418 = vmax.f32 %v5416, %v5417
    %v5419 = vmax.f32 %v5345, %v5353
    %v5420 = vrot.slane %v5419, 4
    %v5421 = vmax.f32 %v5419, %v5420
    %v5422 = vrot.slane %v5421, 2
    %v5423 = vmax.f32 %v5421, %v5422
    %v5424 = vrot.slane %v5423, 1
    %v5425 = vmax.f32 %v5423, %v5424
    %v5426 = vmax.f32 %v5354, %v5362
    %v5427 = vrot.slane %v5426, 4
    %v5428 = vmax.f32 %v5426, %v5427
    %v5429 = vrot.slane %v5428, 2
    %v5430 = vmax.f32 %v5428, %v5429
    %v5431 = vrot.slane %v5430, 1
    %v5432 = vmax.f32 %v5430, %v5431
    %v5433 = vmax.f32 %v5355, %v5363
    %v5434 = vrot.slane %v5433, 4
    %v5435 = vmax.f32 %v5433, %v5434
    %v5436 = vrot.slane %v5435, 2
    %v5437 = vmax.f32 %v5435, %v5436
    %v5438 = vrot.slane %v5437, 1
    %v5439 = vmax.f32 %v5437, %v5438
    %v5440 = vmax.f32 %v5356, %v5364
    %v5441 = vrot.slane %v5440, 4
    %v5442 = vmax.f32 %v5440, %v5441
    %v5443 = vrot.slane %v5442, 2
    %v5444 = vmax.f32 %v5442, %v5443
    %v5445 = vrot.slane %v5444, 1
    %v5446 = vmax.f32 %v5444, %v5445
    %v5447 = vmax.f32 %v5357, %v5365
    %v5448 = vrot.slane %v5447, 4
    %v5449 = vmax.f32 %v5447, %v5448
    %v5450 = vrot.slane %v5449, 2
    %v5451 = vmax.f32 %v5449, %v5450
    %v5452 = vrot.slane %v5451, 1
    %v5453 = vmax.f32 %v5451, %v5452
    %v5454 = vmax.f32 %v5358, %v5366
    %v5455 = vrot.slane %v5454, 4
    %v5456 = vmax.f32 %v5454, %v5455
    %v5457 = vrot.slane %v5456, 2
    %v5458 = vmax.f32 %v5456, %v5457
    %v5459 = vrot.slane %v5458, 1
    %v5460 = vmax.f32 %v5458, %v5459
    %v5461 = vmax.f32 %v5359, %v5367
    %v5462 = vrot.slane %v5461, 4
    %v5463 = vmax.f32 %v5461, %v5462
    %v5464 = vrot.slane %v5463, 2
    %v5465 = vmax.f32 %v5463, %v5464
    %v5466 = vrot.slane %v5465, 1
    %v5467 = vmax.f32 %v5465, %v5466
    %v5468 = vmax.f32 %v5360, %v5368
    %v5469 = vrot.slane %v5468, 4
    %v5470 = vmax.f32 %v5468, %v5469
    %v5471 = vrot.slane %v5470, 2
    %v5472 = vmax.f32 %v5470, %v5471
    %v5473 = vrot.slane %v5472, 1
    %v5474 = vmax.f32 %v5472, %v5473
    %v5475 = vmax.f32 %v5361, %v5369
    %v5476 = vrot.slane %v5475, 4
    %v5477 = vmax.f32 %v5475, %v5476
    %v5478 = vrot.slane %v5477, 2
    %v5479 = vmax.f32 %v5477, %v5478
    %v5480 = vrot.slane %v5479, 1
    %v5481 = vmax.f32 %v5479, %v5480
    %v5482 = vsel %vm285, %v5376, %v5432
    %v5483 = vsel %vm285, %v5383, %v5439
    %v5484 = vsel %vm285, %v5390, %v5446
    %v5485 = vsel %vm285, %v5397, %v5453
    %v5486 = vsel %vm285, %v5404, %v5460
    %v5487 = vsel %vm285, %v5411, %v5467
    %v5488 = vsel %vm285, %v5418, %v5474
    %v5489 = vsel %vm285, %v5425, %v5481
    %v5490 = vpack.c.bf16 %v5482, %v5482
    %v5491 = vpack.c.bf16 %v5483, %v5483
    %v5492 = vpack.c.bf16 %v5484, %v5484
    %v5493 = vpack.c.bf16 %v5485, %v5485
    %v5494 = vpack.c.bf16 %v5486, %v5486
    %v5495 = vpack.c.bf16 %v5487, %v5487
    %v5496 = vpack.c.bf16 %v5488, %v5488
    %v5497 = vpack.c.bf16 %v5489, %v5489
    %v5498 = vld [vmem:[#allocation13] sm:$0xff]
    %v5499 = vld [vmem:[#allocation13 + $0x8] sm:$0xff]
    %v5500 = vld [vmem:[#allocation13 + $0x10] sm:$0xff]
    %v5501 = vld [vmem:[#allocation13 + $0x18] sm:$0xff]
    %v5502 = vld [vmem:[#allocation13 + $0x20] sm:$0xff]
    %v5503 = vld [vmem:[#allocation13 + $0x28] sm:$0xff]
    %v5504 = vld [vmem:[#allocation13 + $0x30] sm:$0xff]
    %v5505 = vld [vmem:[#allocation13 + $0x38] sm:$0xff]
    %v5506 = vld [vmem:[#allocation13 + $0x40] sm:$0xff]
    %v5507 = vld [vmem:[#allocation13 + $0x48] sm:$0xff]
    %v5508 = vld [vmem:[#allocation13 + $0x50] sm:$0xff]
    %v5509 = vld [vmem:[#allocation13 + $0x58] sm:$0xff]
    %v5510 = vld [vmem:[#allocation13 + $0x60] sm:$0xff]
    %v5511 = vld [vmem:[#allocation13 + $0x68] sm:$0xff]
    %v5512 = vld [vmem:[#allocation13 + $0x70] sm:$0xff]
    %v5513 = vld [vmem:[#allocation13 + $0x78] sm:$0xff]
    %v5514 = vld [vmem:[#allocation13 + $0x80] sm:$0xff]
    %v5515 = vld [vmem:[#allocation13 + $0x88] sm:$0xff]
    %v5516 = vld [vmem:[#allocation13 + $0x90] sm:$0xff]
    %v5517 = vld [vmem:[#allocation13 + $0x98] sm:$0xff]
    %v5518 = vld [vmem:[#allocation13 + $0xa0] sm:$0xff]
    %v5519 = vld [vmem:[#allocation13 + $0xa8] sm:$0xff]
    %v5520 = vld [vmem:[#allocation13 + $0xb0] sm:$0xff]
    %v5521 = vld [vmem:[#allocation13 + $0xb8] sm:$0xff]
    %v5522 = vld [vmem:[#allocation13 + $0xc0] sm:$0xff]
    %v5523 = vld [vmem:[#allocation13 + $0xc8] sm:$0xff]
    %v5524 = vld [vmem:[#allocation13 + $0xd0] sm:$0xff]
    %v5525 = vld [vmem:[#allocation13 + $0xd8] sm:$0xff]
    %v5526 = vld [vmem:[#allocation13 + $0xe0] sm:$0xff]
    %v5527 = vld [vmem:[#allocation13 + $0xe8] sm:$0xff]
    %v5528 = vld [vmem:[#allocation13 + $0xf0] sm:$0xff]
    %v5529 = vld [vmem:[#allocation13 + $0xf8] sm:$0xff]
    %v5530 = vld [vmem:[#allocation13 + $0x100] sm:$0xff]
    %v5531 = vld [vmem:[#allocation13 + $0x108] sm:$0xff]
    %v5532 = vld [vmem:[#allocation13 + $0x110] sm:$0xff]
    %v5533 = vld [vmem:[#allocation13 + $0x118] sm:$0xff]
    %v5534 = vld [vmem:[#allocation13 + $0x120] sm:$0xff]
    %v5535 = vld [vmem:[#allocation13 + $0x128] sm:$0xff]
    %v5536 = vld [vmem:[#allocation13 + $0x130] sm:$0xff]
    %v5537 = vld [vmem:[#allocation13 + $0x138] sm:$0xff]
    %v5538 = vld [vmem:[#allocation13 + $0x140] sm:$0xff]
    %v5539 = vld [vmem:[#allocation13 + $0x148] sm:$0xff]
    %v5540 = vld [vmem:[#allocation13 + $0x150] sm:$0xff]
    %v5541 = vld [vmem:[#allocation13 + $0x158] sm:$0xff]
    %v5542 = vld [vmem:[#allocation13 + $0x160] sm:$0xff]
    %v5543 = vld [vmem:[#allocation13 + $0x168] sm:$0xff]
    %v5544 = vld [vmem:[#allocation13 + $0x170] sm:$0xff]
    %v5545 = vld [vmem:[#allocation13 + $0x178] sm:$0xff]
    %v5546 = vld [vmem:[#allocation13 + $0x180] sm:$0xff]
    %v5547 = vld [vmem:[#allocation13 + $0x188] sm:$0xff]
    %v5548 = vld [vmem:[#allocation13 + $0x190] sm:$0xff]
    %v5549 = vld [vmem:[#allocation13 + $0x198] sm:$0xff]
    %v5550 = vld [vmem:[#allocation13 + $0x1a0] sm:$0xff]
    %v5551 = vld [vmem:[#allocation13 + $0x1a8] sm:$0xff]
    %v5552 = vld [vmem:[#allocation13 + $0x1b0] sm:$0xff]
    %v5553 = vld [vmem:[#allocation13 + $0x1b8] sm:$0xff]
    %v5554 = vld [vmem:[#allocation13 + $0x1c0] sm:$0xff]
    %v5555 = vld [vmem:[#allocation13 + $0x1c8] sm:$0xff]
    %v5556 = vld [vmem:[#allocation13 + $0x1d0] sm:$0xff]
    %v5557 = vld [vmem:[#allocation13 + $0x1d8] sm:$0xff]
    %v5558 = vld [vmem:[#allocation13 + $0x1e0] sm:$0xff]
    %v5559 = vld [vmem:[#allocation13 + $0x1e8] sm:$0xff]
    %v5560 = vld [vmem:[#allocation13 + $0x1f0] sm:$0xff]
    %v5561 = vld [vmem:[#allocation13 + $0x1f8] sm:$0xff]
    %v5562 = vld [vmem:[#allocation13 + $0x200] sm:$0xff]
    %v5563 = vld [vmem:[#allocation13 + $0x208] sm:$0xff]
    %v5564 = vld [vmem:[#allocation13 + $0x210] sm:$0xff]
    %v5565 = vld [vmem:[#allocation13 + $0x218] sm:$0xff]
    %v5566 = vld [vmem:[#allocation13 + $0x220] sm:$0xff]
    %v5567 = vld [vmem:[#allocation13 + $0x228] sm:$0xff]
    %v5568 = vld [vmem:[#allocation13 + $0x230] sm:$0xff]
    %v5569 = vld [vmem:[#allocation13 + $0x238] sm:$0xff]
    %v5570 = vld [vmem:[#allocation13 + $0x240] sm:$0xff]
    %v5571 = vld [vmem:[#allocation13 + $0x248] sm:$0xff]
    %v5572 = vld [vmem:[#allocation13 + $0x250] sm:$0xff]
    %v5573 = vld [vmem:[#allocation13 + $0x258] sm:$0xff]
    %v5574 = vld [vmem:[#allocation13 + $0x260] sm:$0xff]
    %v5575 = vld [vmem:[#allocation13 + $0x268] sm:$0xff]
    %v5576 = vld [vmem:[#allocation13 + $0x270] sm:$0xff]
    %v5577 = vld [vmem:[#allocation13 + $0x278] sm:$0xff]
    %v5578 = vld [vmem:[#allocation13 + $0x280] sm:$0xff]
    %v5579 = vld [vmem:[#allocation13 + $0x288] sm:$0xff]
    %v5580 = vld [vmem:[#allocation13 + $0x290] sm:$0xff]
    %v5581 = vld [vmem:[#allocation13 + $0x298] sm:$0xff]
    %v5582 = vld [vmem:[#allocation13 + $0x2a0] sm:$0xff]
    %v5583 = vld [vmem:[#allocation13 + $0x2a8] sm:$0xff]
    %v5584 = vld [vmem:[#allocation13 + $0x2b0] sm:$0xff]
    %v5585 = vld [vmem:[#allocation13 + $0x2b8] sm:$0xff]
    %v5586 = vld [vmem:[#allocation13 + $0x2c0] sm:$0xff]
    %v5587 = vld [vmem:[#allocation13 + $0x2c8] sm:$0xff]
    %v5588 = vld [vmem:[#allocation13 + $0x2d0] sm:$0xff]
    %v5589 = vld [vmem:[#allocation13 + $0x2d8] sm:$0xff]
    %v5590 = vld [vmem:[#allocation13 + $0x2e0] sm:$0xff]
    %v5591 = vld [vmem:[#allocation13 + $0x2e8] sm:$0xff]
    %v5592 = vld [vmem:[#allocation13 + $0x2f0] sm:$0xff]
    %v5593 = vld [vmem:[#allocation13 + $0x2f8] sm:$0xff]
    %v5594 = vld [vmem:[#allocation13 + $0x300] sm:$0xff]
    %v5595 = vld [vmem:[#allocation13 + $0x308] sm:$0xff]
    %v5596 = vld [vmem:[#allocation13 + $0x310] sm:$0xff]
    %v5597 = vld [vmem:[#allocation13 + $0x318] sm:$0xff]
    %v5598 = vld [vmem:[#allocation13 + $0x320] sm:$0xff]
    %v5599 = vld [vmem:[#allocation13 + $0x328] sm:$0xff]
    %v5600 = vld [vmem:[#allocation13 + $0x330] sm:$0xff]
    %v5601 = vld [vmem:[#allocation13 + $0x338] sm:$0xff]
    %v5602 = vld [vmem:[#allocation13 + $0x340] sm:$0xff]
    %v5603 = vld [vmem:[#allocation13 + $0x348] sm:$0xff]
    %v5604 = vld [vmem:[#allocation13 + $0x350] sm:$0xff]
    %v5605 = vld [vmem:[#allocation13 + $0x358] sm:$0xff]
    %v5606 = vld [vmem:[#allocation13 + $0x360] sm:$0xff]
    %v5607 = vld [vmem:[#allocation13 + $0x368] sm:$0xff]
    %v5608 = vld [vmem:[#allocation13 + $0x370] sm:$0xff]
    %v5609 = vld [vmem:[#allocation13 + $0x378] sm:$0xff]
    %v5610 = vld [vmem:[#allocation13 + $0x380] sm:$0xff]
    %v5611 = vld [vmem:[#allocation13 + $0x388] sm:$0xff]
    %v5612 = vld [vmem:[#allocation13 + $0x390] sm:$0xff]
    %v5613 = vld [vmem:[#allocation13 + $0x398] sm:$0xff]
    %v5614 = vld [vmem:[#allocation13 + $0x3a0] sm:$0xff]
    %v5615 = vld [vmem:[#allocation13 + $0x3a8] sm:$0xff]
    %v5616 = vld [vmem:[#allocation13 + $0x3b0] sm:$0xff]
    %v5617 = vld [vmem:[#allocation13 + $0x3b8] sm:$0xff]
    %v5618 = vld [vmem:[#allocation13 + $0x3c0] sm:$0xff]
    %v5619 = vld [vmem:[#allocation13 + $0x3c8] sm:$0xff]
    %v5620 = vld [vmem:[#allocation13 + $0x3d0] sm:$0xff]
    %v5621 = vld [vmem:[#allocation13 + $0x3d8] sm:$0xff]
    %v5622 = vld [vmem:[#allocation13 + $0x3e0] sm:$0xff]
    %v5623 = vld [vmem:[#allocation13 + $0x3e8] sm:$0xff]
    %v5624 = vld [vmem:[#allocation13 + $0x3f0] sm:$0xff]
    %v5625 = vld [vmem:[#allocation13 + $0x3f8] sm:$0xff]
    %v5626 = vld [vmem:[#allocation13 + $0x400] sm:$0xff]
    %v5627 = vld [vmem:[#allocation13 + $0x408] sm:$0xff]
    %v5628 = vld [vmem:[#allocation13 + $0x410] sm:$0xff]
    %v5629 = vld [vmem:[#allocation13 + $0x418] sm:$0xff]
    %v5630 = vld [vmem:[#allocation13 + $0x420] sm:$0xff]
    %v5631 = vld [vmem:[#allocation13 + $0x428] sm:$0xff]
    %v5632 = vld [vmem:[#allocation13 + $0x430] sm:$0xff]
    %v5633 = vld [vmem:[#allocation13 + $0x438] sm:$0xff]
    %v5634 = vld [vmem:[#allocation13 + $0x440] sm:$0xff]
    %v5635 = vld [vmem:[#allocation13 + $0x448] sm:$0xff]
    %v5636 = vld [vmem:[#allocation13 + $0x450] sm:$0xff]
    %v5637 = vld [vmem:[#allocation13 + $0x458] sm:$0xff]
    %v5638 = vld [vmem:[#allocation13 + $0x460] sm:$0xff]
    %v5639 = vld [vmem:[#allocation13 + $0x468] sm:$0xff]
    %v5640 = vld [vmem:[#allocation13 + $0x470] sm:$0xff]
    %v5641 = vld [vmem:[#allocation13 + $0x478] sm:$0xff]
    %v5642 = vld [vmem:[#allocation13 + $0x480] sm:$0xff]
    %v5643 = vld [vmem:[#allocation13 + $0x488] sm:$0xff]
    %v5644 = vld [vmem:[#allocation13 + $0x490] sm:$0xff]
    %v5645 = vld [vmem:[#allocation13 + $0x498] sm:$0xff]
    %v5646 = vld [vmem:[#allocation13 + $0x4a0] sm:$0xff]
    %v5647 = vld [vmem:[#allocation13 + $0x4a8] sm:$0xff]
    %v5648 = vld [vmem:[#allocation13 + $0x4b0] sm:$0xff]
    %v5649 = vld [vmem:[#allocation13 + $0x4b8] sm:$0xff]
    %v5650 = vld [vmem:[#allocation13 + $0x4c0] sm:$0xff]
    %v5651 = vld [vmem:[#allocation13 + $0x4c8] sm:$0xff]
    %v5652 = vld [vmem:[#allocation13 + $0x4d0] sm:$0xff]
    %v5653 = vld [vmem:[#allocation13 + $0x4d8] sm:$0xff]
    %v5654 = vld [vmem:[#allocation13 + $0x4e0] sm:$0xff]
    %v5655 = vld [vmem:[#allocation13 + $0x4e8] sm:$0xff]
    %v5656 = vld [vmem:[#allocation13 + $0x4f0] sm:$0xff]
    %v5657 = vld [vmem:[#allocation13 + $0x4f8] sm:$0xff]
    %v5658 = vld [vmem:[#allocation13 + $0x500] sm:$0xff]
    %v5659 = vld [vmem:[#allocation13 + $0x508] sm:$0xff]
    %v5660 = vld [vmem:[#allocation13 + $0x510] sm:$0xff]
    %v5661 = vld [vmem:[#allocation13 + $0x518] sm:$0xff]
    %v5662 = vld [vmem:[#allocation13 + $0x520] sm:$0xff]
    %v5663 = vld [vmem:[#allocation13 + $0x528] sm:$0xff]
    %v5664 = vld [vmem:[#allocation13 + $0x530] sm:$0xff]
    %v5665 = vld [vmem:[#allocation13 + $0x538] sm:$0xff]
    %v5666 = vld [vmem:[#allocation13 + $0x540] sm:$0xff]
    %v5667 = vld [vmem:[#allocation13 + $0x548] sm:$0xff]
    %v5668 = vld [vmem:[#allocation13 + $0x550] sm:$0xff]
    %v5669 = vld [vmem:[#allocation13 + $0x558] sm:$0xff]
    %v5670 = vld [vmem:[#allocation13 + $0x560] sm:$0xff]
    %v5671 = vld [vmem:[#allocation13 + $0x568] sm:$0xff]
    %v5672 = vld [vmem:[#allocation13 + $0x570] sm:$0xff]
    %v5673 = vld [vmem:[#allocation13 + $0x578] sm:$0xff]
    %v5674 = vld [vmem:[#allocation13 + $0x580] sm:$0xff]
    %v5675 = vld [vmem:[#allocation13 + $0x588] sm:$0xff]
    %v5676 = vld [vmem:[#allocation13 + $0x590] sm:$0xff]
    %v5677 = vld [vmem:[#allocation13 + $0x598] sm:$0xff]
    %v5678 = vld [vmem:[#allocation13 + $0x5a0] sm:$0xff]
    %v5679 = vld [vmem:[#allocation13 + $0x5a8] sm:$0xff]
    %v5680 = vld [vmem:[#allocation13 + $0x5b0] sm:$0xff]
    %v5681 = vld [vmem:[#allocation13 + $0x5b8] sm:$0xff]
    %v5682 = vld [vmem:[#allocation13 + $0x5c0] sm:$0xff]
    %v5683 = vld [vmem:[#allocation13 + $0x5c8] sm:$0xff]
    %v5684 = vld [vmem:[#allocation13 + $0x5d0] sm:$0xff]
    %v5685 = vld [vmem:[#allocation13 + $0x5d8] sm:$0xff]
    %v5686 = vld [vmem:[#allocation13 + $0x5e0] sm:$0xff]
    %v5687 = vld [vmem:[#allocation13 + $0x5e8] sm:$0xff]
    %v5688 = vld [vmem:[#allocation13 + $0x5f0] sm:$0xff]
    %v5689 = vld [vmem:[#allocation13 + $0x5f8] sm:$0xff]
    %v5690 = vld [vmem:[#allocation13 + $0x600] sm:$0xff]
    %v5691 = vld [vmem:[#allocation13 + $0x608] sm:$0xff]
    %v5692 = vld [vmem:[#allocation13 + $0x610] sm:$0xff]
    %v5693 = vld [vmem:[#allocation13 + $0x618] sm:$0xff]
    %v5694 = vld [vmem:[#allocation13 + $0x620] sm:$0xff]
    %v5695 = vld [vmem:[#allocation13 + $0x628] sm:$0xff]
    %v5696 = vld [vmem:[#allocation13 + $0x630] sm:$0xff]
    %v5697 = vld [vmem:[#allocation13 + $0x638] sm:$0xff]
    %v5698 = vld [vmem:[#allocation13 + $0x640] sm:$0xff]
    %v5699 = vld [vmem:[#allocation13 + $0x648] sm:$0xff]
    %v5700 = vld [vmem:[#allocation13 + $0x650] sm:$0xff]
    %v5701 = vld [vmem:[#allocation13 + $0x658] sm:$0xff]
    %v5702 = vld [vmem:[#allocation13 + $0x660] sm:$0xff]
    %v5703 = vld [vmem:[#allocation13 + $0x668] sm:$0xff]
    %v5704 = vld [vmem:[#allocation13 + $0x670] sm:$0xff]
    %v5705 = vld [vmem:[#allocation13 + $0x678] sm:$0xff]
    %v5706 = vld [vmem:[#allocation13 + $0x680] sm:$0xff]
    %v5707 = vld [vmem:[#allocation13 + $0x688] sm:$0xff]
    %v5708 = vld [vmem:[#allocation13 + $0x690] sm:$0xff]
    %v5709 = vld [vmem:[#allocation13 + $0x698] sm:$0xff]
    %v5710 = vld [vmem:[#allocation13 + $0x6a0] sm:$0xff]
    %v5711 = vld [vmem:[#allocation13 + $0x6a8] sm:$0xff]
    %v5712 = vld [vmem:[#allocation13 + $0x6b0] sm:$0xff]
    %v5713 = vld [vmem:[#allocation13 + $0x6b8] sm:$0xff]
    %v5714 = vld [vmem:[#allocation13 + $0x6c0] sm:$0xff]
    %v5715 = vld [vmem:[#allocation13 + $0x6c8] sm:$0xff]
    %v5716 = vld [vmem:[#allocation13 + $0x6d0] sm:$0xff]
    %v5717 = vld [vmem:[#allocation13 + $0x6d8] sm:$0xff]
    %v5718 = vld [vmem:[#allocation13 + $0x6e0] sm:$0xff]
    %v5719 = vld [vmem:[#allocation13 + $0x6e8] sm:$0xff]
    %v5720 = vld [vmem:[#allocation13 + $0x6f0] sm:$0xff]
    %v5721 = vld [vmem:[#allocation13 + $0x6f8] sm:$0xff]
    %v5722 = vld [vmem:[#allocation13 + $0x700] sm:$0xff]
    %v5723 = vld [vmem:[#allocation13 + $0x708] sm:$0xff]
    %v5724 = vld [vmem:[#allocation13 + $0x710] sm:$0xff]
    %v5725 = vld [vmem:[#allocation13 + $0x718] sm:$0xff]
    %v5726 = vld [vmem:[#allocation13 + $0x720] sm:$0xff]
    %v5727 = vld [vmem:[#allocation13 + $0x728] sm:$0xff]
    %v5728 = vld [vmem:[#allocation13 + $0x730] sm:$0xff]
    %v5729 = vld [vmem:[#allocation13 + $0x738] sm:$0xff]
    %v5730 = vld [vmem:[#allocation13 + $0x740] sm:$0xff]
    %v5731 = vld [vmem:[#allocation13 + $0x748] sm:$0xff]
    %v5732 = vld [vmem:[#allocation13 + $0x750] sm:$0xff]
    %v5733 = vld [vmem:[#allocation13 + $0x758] sm:$0xff]
    %v5734 = vld [vmem:[#allocation13 + $0x760] sm:$0xff]
    %v5735 = vld [vmem:[#allocation13 + $0x768] sm:$0xff]
    %v5736 = vld [vmem:[#allocation13 + $0x770] sm:$0xff]
    %v5737 = vld [vmem:[#allocation13 + $0x778] sm:$0xff]
    %v5738 = vld [vmem:[#allocation13 + $0x780] sm:$0xff]
    %v5739 = vld [vmem:[#allocation13 + $0x788] sm:$0xff]
    %v5740 = vld [vmem:[#allocation13 + $0x790] sm:$0xff]
    %v5741 = vld [vmem:[#allocation13 + $0x798] sm:$0xff]
    %v5742 = vld [vmem:[#allocation13 + $0x7a0] sm:$0xff]
    %v5743 = vld [vmem:[#allocation13 + $0x7a8] sm:$0xff]
    %v5744 = vld [vmem:[#allocation13 + $0x7b0] sm:$0xff]
    %v5745 = vld [vmem:[#allocation13 + $0x7b8] sm:$0xff]
    %v5746 = vld [vmem:[#allocation13 + $0x7c0] sm:$0xff]
    %v5747 = vld [vmem:[#allocation13 + $0x7c8] sm:$0xff]
    %v5748 = vld [vmem:[#allocation13 + $0x7d0] sm:$0xff]
    %v5749 = vld [vmem:[#allocation13 + $0x7d8] sm:$0xff]
    %v5750 = vld [vmem:[#allocation13 + $0x7e0] sm:$0xff]
    %v5751 = vld [vmem:[#allocation13 + $0x7e8] sm:$0xff]
    %v5752 = vld [vmem:[#allocation13 + $0x7f0] sm:$0xff]
    %v5753 = vld [vmem:[#allocation13 + $0x7f8] sm:$0xff]
    %v5754 = vld [vmem:[%s14] sm:$0xf]
    %v5756 = vperm.slane %v5754, 0
    %v5757 = vperm.slane %v5754, 1
    %v5758 = vperm.slane %v5754, 2
    %v5759 = vperm.slane %v5754, 3
    %v6020 = vunpack.c.l.b16 %v5498
    %v6021 = vunpack.c.h.b16 %v5498
    %v6022 = vunpack.c.l.b16 %v5499
    %v6023 = vunpack.c.h.b16 %v5499
    %v6024 = vunpack.c.l.b16 %v5500
    %v6025 = vunpack.c.h.b16 %v5500
    %v6026 = vunpack.c.l.b16 %v5501
    %v6027 = vunpack.c.h.b16 %v5501
    %v6028 = vunpack.c.l.b16 %v5502
    %v6029 = vunpack.c.h.b16 %v5502
    %v6030 = vunpack.c.l.b16 %v5503
    %v6031 = vunpack.c.h.b16 %v5503
    %v6032 = vunpack.c.l.b16 %v5504
    %v6033 = vunpack.c.h.b16 %v5504
    %v6034 = vunpack.c.l.b16 %v5505
    %v6035 = vunpack.c.h.b16 %v5505
    %v6036 = vunpack.c.l.b16 %v5506
    %v6037 = vunpack.c.h.b16 %v5506
    %v6038 = vunpack.c.l.b16 %v5507
    %v6039 = vunpack.c.h.b16 %v5507
    %v6040 = vunpack.c.l.b16 %v5508
    %v6041 = vunpack.c.h.b16 %v5508
    %v6042 = vunpack.c.l.b16 %v5509
    %v6043 = vunpack.c.h.b16 %v5509
    %v6044 = vunpack.c.l.b16 %v5510
    %v6045 = vunpack.c.h.b16 %v5510
    %v6046 = vunpack.c.l.b16 %v5511
    %v6047 = vunpack.c.h.b16 %v5511
    %v6048 = vunpack.c.l.b16 %v5512
    %v6049 = vunpack.c.h.b16 %v5512
    %v6050 = vunpack.c.l.b16 %v5513
    %v6051 = vunpack.c.h.b16 %v5513
    %v6052 = vunpack.c.l.b16 %v5514
    %v6053 = vunpack.c.h.b16 %v5514
    %v6054 = vunpack.c.l.b16 %v5515
    %v6055 = vunpack.c.h.b16 %v5515
    %v6056 = vunpack.c.l.b16 %v5516
    %v6057 = vunpack.c.h.b16 %v5516
    %v6058 = vunpack.c.l.b16 %v5517
    %v6059 = vunpack.c.h.b16 %v5517
    %v6060 = vunpack.c.l.b16 %v5518
    %v6061 = vunpack.c.h.b16 %v5518
    %v6062 = vunpack.c.l.b16 %v5519
    %v6063 = vunpack.c.h.b16 %v5519
    %v6064 = vunpack.c.l.b16 %v5520
    %v6065 = vunpack.c.h.b16 %v5520
    %v6066 = vunpack.c.l.b16 %v5521
    %v6067 = vunpack.c.h.b16 %v5521
    %v6068 = vunpack.c.l.b16 %v5522
    %v6069 = vunpack.c.h.b16 %v5522
    %v6070 = vunpack.c.l.b16 %v5523
    %v6071 = vunpack.c.h.b16 %v5523
    %v6072 = vunpack.c.l.b16 %v5524
    %v6073 = vunpack.c.h.b16 %v5524
    %v6074 = vunpack.c.l.b16 %v5525
    %v6075 = vunpack.c.h.b16 %v5525
    %v6076 = vunpack.c.l.b16 %v5526
    %v6077 = vunpack.c.h.b16 %v5526
    %v6078 = vunpack.c.l.b16 %v5527
    %v6079 = vunpack.c.h.b16 %v5527
    %v6080 = vunpack.c.l.b16 %v5528
    %v6081 = vunpack.c.h.b16 %v5528
    %v6082 = vunpack.c.l.b16 %v5529
    %v6083 = vunpack.c.h.b16 %v5529
    %v6084 = vunpack.c.l.b16 %v5530
    %v6085 = vunpack.c.h.b16 %v5530
    %v6086 = vunpack.c.l.b16 %v5531
    %v6087 = vunpack.c.h.b16 %v5531
    %v6088 = vunpack.c.l.b16 %v5532
    %v6089 = vunpack.c.h.b16 %v5532
    %v6090 = vunpack.c.l.b16 %v5533
    %v6091 = vunpack.c.h.b16 %v5533
    %v6092 = vunpack.c.l.b16 %v5534
    %v6093 = vunpack.c.h.b16 %v5534
    %v6094 = vunpack.c.l.b16 %v5535
    %v6095 = vunpack.c.h.b16 %v5535
    %v6096 = vunpack.c.l.b16 %v5536
    %v6097 = vunpack.c.h.b16 %v5536
    %v6098 = vunpack.c.l.b16 %v5537
    %v6099 = vunpack.c.h.b16 %v5537
    %v6100 = vunpack.c.l.b16 %v5538
    %v6101 = vunpack.c.h.b16 %v5538
    %v6102 = vunpack.c.l.b16 %v5539
    %v6103 = vunpack.c.h.b16 %v5539
    %v6104 = vunpack.c.l.b16 %v5540
    %v6105 = vunpack.c.h.b16 %v5540
    %v6106 = vunpack.c.l.b16 %v5541
    %v6107 = vunpack.c.h.b16 %v5541
    %v6108 = vunpack.c.l.b16 %v5542
    %v6109 = vunpack.c.h.b16 %v5542
    %v6110 = vunpack.c.l.b16 %v5543
    %v6111 = vunpack.c.h.b16 %v5543
    %v6112 = vunpack.c.l.b16 %v5544
    %v6113 = vunpack.c.h.b16 %v5544
    %v6114 = vunpack.c.l.b16 %v5545
    %v6115 = vunpack.c.h.b16 %v5545
    %v6116 = vunpack.c.l.b16 %v5546
    %v6117 = vunpack.c.h.b16 %v5546
    %v6118 = vunpack.c.l.b16 %v5547
    %v6119 = vunpack.c.h.b16 %v5547
    %v6120 = vunpack.c.l.b16 %v5548
    %v6121 = vunpack.c.h.b16 %v5548
    %v6122 = vunpack.c.l.b16 %v5549
    %v6123 = vunpack.c.h.b16 %v5549
    %v6124 = vunpack.c.l.b16 %v5550
    %v6125 = vunpack.c.h.b16 %v5550
    %v6126 = vunpack.c.l.b16 %v5551
    %v6127 = vunpack.c.h.b16 %v5551
    %v6128 = vunpack.c.l.b16 %v5552
    %v6129 = vunpack.c.h.b16 %v5552
    %v6130 = vunpack.c.l.b16 %v5553
    %v6131 = vunpack.c.h.b16 %v5553
    %v6132 = vunpack.c.l.b16 %v5554
    %v6133 = vunpack.c.h.b16 %v5554
    %v6134 = vunpack.c.l.b16 %v5555
    %v6135 = vunpack.c.h.b16 %v5555
    %v6136 = vunpack.c.l.b16 %v5556
    %v6137 = vunpack.c.h.b16 %v5556
    %v6138 = vunpack.c.l.b16 %v5557
    %v6139 = vunpack.c.h.b16 %v5557
    %v6140 = vunpack.c.l.b16 %v5558
    %v6141 = vunpack.c.h.b16 %v5558
    %v6142 = vunpack.c.l.b16 %v5559
    %v6143 = vunpack.c.h.b16 %v5559
    %v6144 = vunpack.c.l.b16 %v5560
    %v6145 = vunpack.c.h.b16 %v5560
    %v6146 = vunpack.c.l.b16 %v5561
    %v6147 = vunpack.c.h.b16 %v5561
    %v6148 = vunpack.c.l.b16 %v5562
    %v6149 = vunpack.c.h.b16 %v5562
    %v6150 = vunpack.c.l.b16 %v5563
    %v6151 = vunpack.c.h.b16 %v5563
    %v6152 = vunpack.c.l.b16 %v5564
    %v6153 = vunpack.c.h.b16 %v5564
    %v6154 = vunpack.c.l.b16 %v5565
    %v6155 = vunpack.c.h.b16 %v5565
    %v6156 = vunpack.c.l.b16 %v5566
    %v6157 = vunpack.c.h.b16 %v5566
    %v6158 = vunpack.c.l.b16 %v5567
    %v6159 = vunpack.c.h.b16 %v5567
    %v6160 = vunpack.c.l.b16 %v5568
    %v6161 = vunpack.c.h.b16 %v5568
    %v6162 = vunpack.c.l.b16 %v5569
    %v6163 = vunpack.c.h.b16 %v5569
    %v6164 = vunpack.c.l.b16 %v5570
    %v6165 = vunpack.c.h.b16 %v5570
    %v6166 = vunpack.c.l.b16 %v5571
    %v6167 = vunpack.c.h.b16 %v5571
    %v6168 = vunpack.c.l.b16 %v5572
    %v6169 = vunpack.c.h.b16 %v5572
    %v6170 = vunpack.c.l.b16 %v5573
    %v6171 = vunpack.c.h.b16 %v5573
    %v6172 = vunpack.c.l.b16 %v5574
    %v6173 = vunpack.c.h.b16 %v5574
    %v6174 = vunpack.c.l.b16 %v5575
    %v6175 = vunpack.c.h.b16 %v5575
    %v6176 = vunpack.c.l.b16 %v5576
    %v6177 = vunpack.c.h.b16 %v5576
    %v6178 = vunpack.c.l.b16 %v5577
    %v6179 = vunpack.c.h.b16 %v5577
    %v6180 = vunpack.c.l.b16 %v5578
    %v6181 = vunpack.c.h.b16 %v5578
    %v6182 = vunpack.c.l.b16 %v5579
    %v6183 = vunpack.c.h.b16 %v5579
    %v6184 = vunpack.c.l.b16 %v5580
    %v6185 = vunpack.c.h.b16 %v5580
    %v6186 = vunpack.c.l.b16 %v5581
    %v6187 = vunpack.c.h.b16 %v5581
    %v6188 = vunpack.c.l.b16 %v5582
    %v6189 = vunpack.c.h.b16 %v5582
    %v6190 = vunpack.c.l.b16 %v5583
    %v6191 = vunpack.c.h.b16 %v5583
    %v6192 = vunpack.c.l.b16 %v5584
    %v6193 = vunpack.c.h.b16 %v5584
    %v6194 = vunpack.c.l.b16 %v5585
    %v6195 = vunpack.c.h.b16 %v5585
    %v6196 = vunpack.c.l.b16 %v5586
    %v6197 = vunpack.c.h.b16 %v5586
    %v6198 = vunpack.c.l.b16 %v5587
    %v6199 = vunpack.c.h.b16 %v5587
    %v6200 = vunpack.c.l.b16 %v5588
    %v6201 = vunpack.c.h.b16 %v5588
    %v6202 = vunpack.c.l.b16 %v5589
    %v6203 = vunpack.c.h.b16 %v5589
    %v6204 = vunpack.c.l.b16 %v5590
    %v6205 = vunpack.c.h.b16 %v5590
    %v6206 = vunpack.c.l.b16 %v5591
    %v6207 = vunpack.c.h.b16 %v5591
    %v6208 = vunpack.c.l.b16 %v5592
    %v6209 = vunpack.c.h.b16 %v5592
    %v6210 = vunpack.c.l.b16 %v5593
    %v6211 = vunpack.c.h.b16 %v5593
    %v6212 = vunpack.c.l.b16 %v5594
    %v6213 = vunpack.c.h.b16 %v5594
    %v6214 = vunpack.c.l.b16 %v5595
    %v6215 = vunpack.c.h.b16 %v5595
    %v6216 = vunpack.c.l.b16 %v5596
    %v6217 = vunpack.c.h.b16 %v5596
    %v6218 = vunpack.c.l.b16 %v5597
    %v6219 = vunpack.c.h.b16 %v5597
    %v6220 = vunpack.c.l.b16 %v5598
    %v6221 = vunpack.c.h.b16 %v5598
    %v6222 = vunpack.c.l.b16 %v5599
    %v6223 = vunpack.c.h.b16 %v5599
    %v6224 = vunpack.c.l.b16 %v5600
    %v6225 = vunpack.c.h.b16 %v5600
    %v6226 = vunpack.c.l.b16 %v5601
    %v6227 = vunpack.c.h.b16 %v5601
    %v6228 = vunpack.c.l.b16 %v5602
    %v6229 = vunpack.c.h.b16 %v5602
    %v6230 = vunpack.c.l.b16 %v5603
    %v6231 = vunpack.c.h.b16 %v5603
    %v6232 = vunpack.c.l.b16 %v5604
    %v6233 = vunpack.c.h.b16 %v5604
    %v6234 = vunpack.c.l.b16 %v5605
    %v6235 = vunpack.c.h.b16 %v5605
    %v6236 = vunpack.c.l.b16 %v5606
    %v6237 = vunpack.c.h.b16 %v5606
    %v6238 = vunpack.c.l.b16 %v5607
    %v6239 = vunpack.c.h.b16 %v5607
    %v6240 = vunpack.c.l.b16 %v5608
    %v6241 = vunpack.c.h.b16 %v5608
    %v6242 = vunpack.c.l.b16 %v5609
    %v6243 = vunpack.c.h.b16 %v5609
    %v6244 = vunpack.c.l.b16 %v5610
    %v6245 = vunpack.c.h.b16 %v5610
    %v6246 = vunpack.c.l.b16 %v5611
    %v6247 = vunpack.c.h.b16 %v5611
    %v6248 = vunpack.c.l.b16 %v5612
    %v6249 = vunpack.c.h.b16 %v5612
    %v6250 = vunpack.c.l.b16 %v5613
    %v6251 = vunpack.c.h.b16 %v5613
    %v6252 = vunpack.c.l.b16 %v5614
    %v6253 = vunpack.c.h.b16 %v5614
    %v6254 = vunpack.c.l.b16 %v5615
    %v6255 = vunpack.c.h.b16 %v5615
    %v6256 = vunpack.c.l.b16 %v5616
    %v6257 = vunpack.c.h.b16 %v5616
    %v6258 = vunpack.c.l.b16 %v5617
    %v6259 = vunpack.c.h.b16 %v5617
    %v6260 = vunpack.c.l.b16 %v5618
    %v6261 = vunpack.c.h.b16 %v5618
    %v6262 = vunpack.c.l.b16 %v5619
    %v6263 = vunpack.c.h.b16 %v5619
    %v6264 = vunpack.c.l.b16 %v5620
    %v6265 = vunpack.c.h.b16 %v5620
    %v6266 = vunpack.c.l.b16 %v5621
    %v6267 = vunpack.c.h.b16 %v5621
    %v6268 = vunpack.c.l.b16 %v5622
    %v6269 = vunpack.c.h.b16 %v5622
    %v6270 = vunpack.c.l.b16 %v5623
    %v6271 = vunpack.c.h.b16 %v5623
    %v6272 = vunpack.c.l.b16 %v5624
    %v6273 = vunpack.c.h.b16 %v5624
    %v6274 = vunpack.c.l.b16 %v5625
    %v6275 = vunpack.c.h.b16 %v5625
    %v6276 = vunpack.c.l.b16 %v5626
    %v6277 = vunpack.c.h.b16 %v5626
    %v6278 = vunpack.c.l.b16 %v5627
    %v6279 = vunpack.c.h.b16 %v5627
    %v6280 = vunpack.c.l.b16 %v5628
    %v6281 = vunpack.c.h.b16 %v5628
    %v6282 = vunpack.c.l.b16 %v5629
    %v6283 = vunpack.c.h.b16 %v5629
    %v6284 = vunpack.c.l.b16 %v5630
    %v6285 = vunpack.c.h.b16 %v5630
    %v6286 = vunpack.c.l.b16 %v5631
    %v6287 = vunpack.c.h.b16 %v5631
    %v6288 = vunpack.c.l.b16 %v5632
    %v6289 = vunpack.c.h.b16 %v5632
    %v6290 = vunpack.c.l.b16 %v5633
    %v6291 = vunpack.c.h.b16 %v5633
    %v6292 = vunpack.c.l.b16 %v5634
    %v6293 = vunpack.c.h.b16 %v5634
    %v6294 = vunpack.c.l.b16 %v5635
    %v6295 = vunpack.c.h.b16 %v5635
    %v6296 = vunpack.c.l.b16 %v5636
    %v6297 = vunpack.c.h.b16 %v5636
    %v6298 = vunpack.c.l.b16 %v5637
    %v6299 = vunpack.c.h.b16 %v5637
    %v6300 = vunpack.c.l.b16 %v5638
    %v6301 = vunpack.c.h.b16 %v5638
    %v6302 = vunpack.c.l.b16 %v5639
    %v6303 = vunpack.c.h.b16 %v5639
    %v6304 = vunpack.c.l.b16 %v5640
    %v6305 = vunpack.c.h.b16 %v5640
    %v6306 = vunpack.c.l.b16 %v5641
    %v6307 = vunpack.c.h.b16 %v5641
    %v6308 = vunpack.c.l.b16 %v5642
    %v6309 = vunpack.c.h.b16 %v5642
    %v6310 = vunpack.c.l.b16 %v5643
    %v6311 = vunpack.c.h.b16 %v5643
    %v6312 = vunpack.c.l.b16 %v5644
    %v6313 = vunpack.c.h.b16 %v5644
    %v6314 = vunpack.c.l.b16 %v5645
    %v6315 = vunpack.c.h.b16 %v5645
    %v6316 = vunpack.c.l.b16 %v5646
    %v6317 = vunpack.c.h.b16 %v5646
    %v6318 = vunpack.c.l.b16 %v5647
    %v6319 = vunpack.c.h.b16 %v5647
    %v6320 = vunpack.c.l.b16 %v5648
    %v6321 = vunpack.c.h.b16 %v5648
    %v6322 = vunpack.c.l.b16 %v5649
    %v6323 = vunpack.c.h.b16 %v5649
    %v6324 = vunpack.c.l.b16 %v5650
    %v6325 = vunpack.c.h.b16 %v5650
    %v6326 = vunpack.c.l.b16 %v5651
    %v6327 = vunpack.c.h.b16 %v5651
    %v6328 = vunpack.c.l.b16 %v5652
    %v6329 = vunpack.c.h.b16 %v5652
    %v6330 = vunpack.c.l.b16 %v5653
    %v6331 = vunpack.c.h.b16 %v5653
    %v6332 = vunpack.c.l.b16 %v5654
    %v6333 = vunpack.c.h.b16 %v5654
    %v6334 = vunpack.c.l.b16 %v5655
    %v6335 = vunpack.c.h.b16 %v5655
    %v6336 = vunpack.c.l.b16 %v5656
    %v6337 = vunpack.c.h.b16 %v5656
    %v6338 = vunpack.c.l.b16 %v5657
    %v6339 = vunpack.c.h.b16 %v5657
    %v6340 = vunpack.c.l.b16 %v5658
    %v6341 = vunpack.c.h.b16 %v5658
    %v6342 = vunpack.c.l.b16 %v5659
    %v6343 = vunpack.c.h.b16 %v5659
    %v6344 = vunpack.c.l.b16 %v5660
    %v6345 = vunpack.c.h.b16 %v5660
    %v6346 = vunpack.c.l.b16 %v5661
    %v6347 = vunpack.c.h.b16 %v5661
    %v6348 = vunpack.c.l.b16 %v5662
    %v6349 = vunpack.c.h.b16 %v5662
    %v6350 = vunpack.c.l.b16 %v5663
    %v6351 = vunpack.c.h.b16 %v5663
    %v6352 = vunpack.c.l.b16 %v5664
    %v6353 = vunpack.c.h.b16 %v5664
    %v6354 = vunpack.c.l.b16 %v5665
    %v6355 = vunpack.c.h.b16 %v5665
    %v6356 = vunpack.c.l.b16 %v5666
    %v6357 = vunpack.c.h.b16 %v5666
    %v6358 = vunpack.c.l.b16 %v5667
    %v6359 = vunpack.c.h.b16 %v5667
    %v6360 = vunpack.c.l.b16 %v5668
    %v6361 = vunpack.c.h.b16 %v5668
    %v6362 = vunpack.c.l.b16 %v5669
    %v6363 = vunpack.c.h.b16 %v5669
    %v6364 = vunpack.c.l.b16 %v5670
    %v6365 = vunpack.c.h.b16 %v5670
    %v6366 = vunpack.c.l.b16 %v5671
    %v6367 = vunpack.c.h.b16 %v5671
    %v6368 = vunpack.c.l.b16 %v5672
    %v6369 = vunpack.c.h.b16 %v5672
    %v6370 = vunpack.c.l.b16 %v5673
    %v6371 = vunpack.c.h.b16 %v5673
    %v6372 = vunpack.c.l.b16 %v5674
    %v6373 = vunpack.c.h.b16 %v5674
    %v6374 = vunpack.c.l.b16 %v5675
    %v6375 = vunpack.c.h.b16 %v5675
    %v6376 = vunpack.c.l.b16 %v5676
    %v6377 = vunpack.c.h.b16 %v5676
    %v6378 = vunpack.c.l.b16 %v5677
    %v6379 = vunpack.c.h.b16 %v5677
    %v6380 = vunpack.c.l.b16 %v5678
    %v6381 = vunpack.c.h.b16 %v5678
    %v6382 = vunpack.c.l.b16 %v5679
    %v6383 = vunpack.c.h.b16 %v5679
    %v6384 = vunpack.c.l.b16 %v5680
    %v6385 = vunpack.c.h.b16 %v5680
    %v6386 = vunpack.c.l.b16 %v5681
    %v6387 = vunpack.c.h.b16 %v5681
    %v6388 = vunpack.c.l.b16 %v5682
    %v6389 = vunpack.c.h.b16 %v5682
    %v6390 = vunpack.c.l.b16 %v5683
    %v6391 = vunpack.c.h.b16 %v5683
    %v6392 = vunpack.c.l.b16 %v5684
    %v6393 = vunpack.c.h.b16 %v5684
    %v6394 = vunpack.c.l.b16 %v5685
    %v6395 = vunpack.c.h.b16 %v5685
    %v6396 = vunpack.c.l.b16 %v5686
    %v6397 = vunpack.c.h.b16 %v5686
    %v6398 = vunpack.c.l.b16 %v5687
    %v6399 = vunpack.c.h.b16 %v5687
    %v6400 = vunpack.c.l.b16 %v5688
    %v6401 = vunpack.c.h.b16 %v5688
    %v6402 = vunpack.c.l.b16 %v5689
    %v6403 = vunpack.c.h.b16 %v5689
    %v6404 = vunpack.c.l.b16 %v5690
    %v6405 = vunpack.c.h.b16 %v5690
    %v6406 = vunpack.c.l.b16 %v5691
    %v6407 = vunpack.c.h.b16 %v5691
    %v6408 = vunpack.c.l.b16 %v5692
    %v6409 = vunpack.c.h.b16 %v5692
    %v6410 = vunpack.c.l.b16 %v5693
    %v6411 = vunpack.c.h.b16 %v5693
    %v6412 = vunpack.c.l.b16 %v5694
    %v6413 = vunpack.c.h.b16 %v5694
    %v6414 = vunpack.c.l.b16 %v5695
    %v6415 = vunpack.c.h.b16 %v5695
    %v6416 = vunpack.c.l.b16 %v5696
    %v6417 = vunpack.c.h.b16 %v5696
    %v6418 = vunpack.c.l.b16 %v5697
    %v6419 = vunpack.c.h.b16 %v5697
    %v6420 = vunpack.c.l.b16 %v5698
    %v6421 = vunpack.c.h.b16 %v5698
    %v6422 = vunpack.c.l.b16 %v5699
    %v6423 = vunpack.c.h.b16 %v5699
    %v6424 = vunpack.c.l.b16 %v5700
    %v6425 = vunpack.c.h.b16 %v5700
    %v6426 = vunpack.c.l.b16 %v5701
    %v6427 = vunpack.c.h.b16 %v5701
    %v6428 = vunpack.c.l.b16 %v5702
    %v6429 = vunpack.c.h.b16 %v5702
    %v6430 = vunpack.c.l.b16 %v5703
    %v6431 = vunpack.c.h.b16 %v5703
    %v6432 = vunpack.c.l.b16 %v5704
    %v6433 = vunpack.c.h.b16 %v5704
    %v6434 = vunpack.c.l.b16 %v5705
    %v6435 = vunpack.c.h.b16 %v5705
    %v6436 = vunpack.c.l.b16 %v5706
    %v6437 = vunpack.c.h.b16 %v5706
    %v6438 = vunpack.c.l.b16 %v5707
    %v6439 = vunpack.c.h.b16 %v5707
    %v6440 = vunpack.c.l.b16 %v5708
    %v6441 = vunpack.c.h.b16 %v5708
    %v6442 = vunpack.c.l.b16 %v5709
    %v6443 = vunpack.c.h.b16 %v5709
    %v6444 = vunpack.c.l.b16 %v5710
    %v6445 = vunpack.c.h.b16 %v5710
    %v6446 = vunpack.c.l.b16 %v5711
    %v6447 = vunpack.c.h.b16 %v5711
    %v6448 = vunpack.c.l.b16 %v5712
    %v6449 = vunpack.c.h.b16 %v5712
    %v6450 = vunpack.c.l.b16 %v5713
    %v6451 = vunpack.c.h.b16 %v5713
    %v6452 = vunpack.c.l.b16 %v5714
    %v6453 = vunpack.c.h.b16 %v5714
    %v6454 = vunpack.c.l.b16 %v5715
    %v6455 = vunpack.c.h.b16 %v5715
    %v6456 = vunpack.c.l.b16 %v5716
    %v6457 = vunpack.c.h.b16 %v5716
    %v6458 = vunpack.c.l.b16 %v5717
    %v6459 = vunpack.c.h.b16 %v5717
    %v6460 = vunpack.c.l.b16 %v5718
    %v6461 = vunpack.c.h.b16 %v5718
    %v6462 = vunpack.c.l.b16 %v5719
    %v6463 = vunpack.c.h.b16 %v5719
    %v6464 = vunpack.c.l.b16 %v5720
    %v6465 = vunpack.c.h.b16 %v5720
    %v6466 = vunpack.c.l.b16 %v5721
    %v6467 = vunpack.c.h.b16 %v5721
    %v6468 = vunpack.c.l.b16 %v5722
    %v6469 = vunpack.c.h.b16 %v5722
    %v6470 = vunpack.c.l.b16 %v5723
    %v6471 = vunpack.c.h.b16 %v5723
    %v6472 = vunpack.c.l.b16 %v5724
    %v6473 = vunpack.c.h.b16 %v5724
    %v6474 = vunpack.c.l.b16 %v5725
    %v6475 = vunpack.c.h.b16 %v5725
    %v6476 = vunpack.c.l.b16 %v5726
    %v6477 = vunpack.c.h.b16 %v5726
    %v6478 = vunpack.c.l.b16 %v5727
    %v6479 = vunpack.c.h.b16 %v5727
    %v6480 = vunpack.c.l.b16 %v5728
    %v6481 = vunpack.c.h.b16 %v5728
    %v6482 = vunpack.c.l.b16 %v5729
    %v6483 = vunpack.c.h.b16 %v5729
    %v6484 = vunpack.c.l.b16 %v5730
    %v6485 = vunpack.c.h.b16 %v5730
    %v6486 = vunpack.c.l.b16 %v5731
    %v6487 = vunpack.c.h.b16 %v5731
    %v6488 = vunpack.c.l.b16 %v5732
    %v6489 = vunpack.c.h.b16 %v5732
    %v6490 = vunpack.c.l.b16 %v5733
    %v6491 = vunpack.c.h.b16 %v5733
    %v6492 = vunpack.c.l.b16 %v5734
    %v6493 = vunpack.c.h.b16 %v5734
    %v6494 = vunpack.c.l.b16 %v5735
    %v6495 = vunpack.c.h.b16 %v5735
    %v6496 = vunpack.c.l.b16 %v5736
    %v6497 = vunpack.c.h.b16 %v5736
    %v6498 = vunpack.c.l.b16 %v5737
    %v6499 = vunpack.c.h.b16 %v5737
    %v6500 = vunpack.c.l.b16 %v5738
    %v6501 = vunpack.c.h.b16 %v5738
    %v6502 = vunpack.c.l.b16 %v5739
    %v6503 = vunpack.c.h.b16 %v5739
    %v6504 = vunpack.c.l.b16 %v5740
    %v6505 = vunpack.c.h.b16 %v5740
    %v6506 = vunpack.c.l.b16 %v5741
    %v6507 = vunpack.c.h.b16 %v5741
    %v6508 = vunpack.c.l.b16 %v5742
    %v6509 = vunpack.c.h.b16 %v5742
    %v6510 = vunpack.c.l.b16 %v5743
    %v6511 = vunpack.c.h.b16 %v5743
    %v6512 = vunpack.c.l.b16 %v5744
    %v6513 = vunpack.c.h.b16 %v5744
    %v6514 = vunpack.c.l.b16 %v5745
    %v6515 = vunpack.c.h.b16 %v5745
    %v6516 = vunpack.c.l.b16 %v5746
    %v6517 = vunpack.c.h.b16 %v5746
    %v6518 = vunpack.c.l.b16 %v5747
    %v6519 = vunpack.c.h.b16 %v5747
    %v6520 = vunpack.c.l.b16 %v5748
    %v6521 = vunpack.c.h.b16 %v5748
    %v6522 = vunpack.c.l.b16 %v5749
    %v6523 = vunpack.c.h.b16 %v5749
    %v6524 = vunpack.c.l.b16 %v5750
    %v6525 = vunpack.c.h.b16 %v5750
    %v6526 = vunpack.c.l.b16 %v5751
    %v6527 = vunpack.c.h.b16 %v5751
    %v6528 = vunpack.c.l.b16 %v5752
    %v6529 = vunpack.c.h.b16 %v5752
    %v6530 = vunpack.c.l.b16 %v5753
    %v6531 = vunpack.c.h.b16 %v5753
    %v6532 = vpack.c.b16 %v6024, %v6020
    %v6533 = vpack.c.b16 %v6025, %v6021
    %v6534 = vpack.c.b16 %v6026, %v6022
    %v6535 = vpack.c.b16 %v6027, %v6023
    %v6536 = vpack.c.b16 %v6032, %v6028
    %v6537 = vpack.c.b16 %v6033, %v6029
    %v6538 = vpack.c.b16 %v6034, %v6030
    %v6539 = vpack.c.b16 %v6035, %v6031
    %v6540 = vpack.c.b16 %v6040, %v6036
    %v6541 = vpack.c.b16 %v6041, %v6037
    %v6542 = vpack.c.b16 %v6042, %v6038
    %v6543 = vpack.c.b16 %v6043, %v6039
    %v6544 = vpack.c.b16 %v6048, %v6044
    %v6545 = vpack.c.b16 %v6049, %v6045
    %v6546 = vpack.c.b16 %v6050, %v6046
    %v6547 = vpack.c.b16 %v6051, %v6047
    %v6548 = vpack.c.b16 %v6056, %v6052
    %v6549 = vpack.c.b16 %v6057, %v6053
    %v6550 = vpack.c.b16 %v6058, %v6054
    %v6551 = vpack.c.b16 %v6059, %v6055
    %v6552 = vpack.c.b16 %v6064, %v6060
    %v6553 = vpack.c.b16 %v6065, %v6061
    %v6554 = vpack.c.b16 %v6066, %v6062
    %v6555 = vpack.c.b16 %v6067, %v6063
    %v6556 = vpack.c.b16 %v6072, %v6068
    %v6557 = vpack.c.b16 %v6073, %v6069
    %v6558 = vpack.c.b16 %v6074, %v6070
    %v6559 = vpack.c.b16 %v6075, %v6071
    %v6560 = vpack.c.b16 %v6080, %v6076
    %v6561 = vpack.c.b16 %v6081, %v6077
    %v6562 = vpack.c.b16 %v6082, %v6078
    %v6563 = vpack.c.b16 %v6083, %v6079
    %v6564 = vpack.c.b16 %v6088, %v6084
    %v6565 = vpack.c.b16 %v6089, %v6085
    %v6566 = vpack.c.b16 %v6090, %v6086
    %v6567 = vpack.c.b16 %v6091, %v6087
    %v6568 = vpack.c.b16 %v6096, %v6092
    %v6569 = vpack.c.b16 %v6097, %v6093
    %v6570 = vpack.c.b16 %v6098, %v6094
    %v6571 = vpack.c.b16 %v6099, %v6095
    %v6572 = vpack.c.b16 %v6104, %v6100
    %v6573 = vpack.c.b16 %v6105, %v6101
    %v6574 = vpack.c.b16 %v6106, %v6102
    %v6575 = vpack.c.b16 %v6107, %v6103
    %v6576 = vpack.c.b16 %v6112, %v6108
    %v6577 = vpack.c.b16 %v6113, %v6109
    %v6578 = vpack.c.b16 %v6114, %v6110
    %v6579 = vpack.c.b16 %v6115, %v6111
    %v6580 = vpack.c.b16 %v6120, %v6116
    %v6581 = vpack.c.b16 %v6121, %v6117
    %v6582 = vpack.c.b16 %v6122, %v6118
    %v6583 = vpack.c.b16 %v6123, %v6119
    %v6584 = vpack.c.b16 %v6128, %v6124
    %v6585 = vpack.c.b16 %v6129, %v6125
    %v6586 = vpack.c.b16 %v6130, %v6126
    %v6587 = vpack.c.b16 %v6131, %v6127
    %v6588 = vpack.c.b16 %v6136, %v6132
    %v6589 = vpack.c.b16 %v6137, %v6133
    %v6590 = vpack.c.b16 %v6138, %v6134
    %v6591 = vpack.c.b16 %v6139, %v6135
    %v6592 = vpack.c.b16 %v6144, %v6140
    %v6593 = vpack.c.b16 %v6145, %v6141
    %v6594 = vpack.c.b16 %v6146, %v6142
    %v6595 = vpack.c.b16 %v6147, %v6143
    %v6596 = vpack.c.b16 %v6152, %v6148
    %v6597 = vpack.c.b16 %v6153, %v6149
    %v6598 = vpack.c.b16 %v6154, %v6150
    %v6599 = vpack.c.b16 %v6155, %v6151
    %v6600 = vpack.c.b16 %v6160, %v6156
    %v6601 = vpack.c.b16 %v6161, %v6157
    %v6602 = vpack.c.b16 %v6162, %v6158
    %v6603 = vpack.c.b16 %v6163, %v6159
    %v6604 = vpack.c.b16 %v6168, %v6164
    %v6605 = vpack.c.b16 %v6169, %v6165
    %v6606 = vpack.c.b16 %v6170, %v6166
    %v6607 = vpack.c.b16 %v6171, %v6167
    %v6608 = vpack.c.b16 %v6176, %v6172
    %v6609 = vpack.c.b16 %v6177, %v6173
    %v6610 = vpack.c.b16 %v6178, %v6174
    %v6611 = vpack.c.b16 %v6179, %v6175
    %v6612 = vpack.c.b16 %v6184, %v6180
    %v6613 = vpack.c.b16 %v6185, %v6181
    %v6614 = vpack.c.b16 %v6186, %v6182
    %v6615 = vpack.c.b16 %v6187, %v6183
    %v6616 = vpack.c.b16 %v6192, %v6188
    %v6617 = vpack.c.b16 %v6193, %v6189
    %v6618 = vpack.c.b16 %v6194, %v6190
    %v6619 = vpack.c.b16 %v6195, %v6191
    %v6620 = vpack.c.b16 %v6200, %v6196
    %v6621 = vpack.c.b16 %v6201, %v6197
    %v6622 = vpack.c.b16 %v6202, %v6198
    %v6623 = vpack.c.b16 %v6203, %v6199
    %v6624 = vpack.c.b16 %v6208, %v6204
    %v6625 = vpack.c.b16 %v6209, %v6205
    %v6626 = vpack.c.b16 %v6210, %v6206
    %v6627 = vpack.c.b16 %v6211, %v6207
    %v6628 = vpack.c.b16 %v6216, %v6212
    %v6629 = vpack.c.b16 %v6217, %v6213
    %v6630 = vpack.c.b16 %v6218, %v6214
    %v6631 = vpack.c.b16 %v6219, %v6215
    %v6632 = vpack.c.b16 %v6224, %v6220
    %v6633 = vpack.c.b16 %v6225, %v6221
    %v6634 = vpack.c.b16 %v6226, %v6222
    %v6635 = vpack.c.b16 %v6227, %v6223
    %v6636 = vpack.c.b16 %v6232, %v6228
    %v6637 = vpack.c.b16 %v6233, %v6229
    %v6638 = vpack.c.b16 %v6234, %v6230
    %v6639 = vpack.c.b16 %v6235, %v6231
    %v6640 = vpack.c.b16 %v6240, %v6236
    %v6641 = vpack.c.b16 %v6241, %v6237
    %v6642 = vpack.c.b16 %v6242, %v6238
    %v6643 = vpack.c.b16 %v6243, %v6239
    %v6644 = vpack.c.b16 %v6248, %v6244
    %v6645 = vpack.c.b16 %v6249, %v6245
    %v6646 = vpack.c.b16 %v6250, %v6246
    %v6647 = vpack.c.b16 %v6251, %v6247
    %v6648 = vpack.c.b16 %v6256, %v6252
    %v6649 = vpack.c.b16 %v6257, %v6253
    %v6650 = vpack.c.b16 %v6258, %v6254
    %v6651 = vpack.c.b16 %v6259, %v6255
    %v6652 = vpack.c.b16 %v6264, %v6260
    %v6653 = vpack.c.b16 %v6265, %v6261
    %v6654 = vpack.c.b16 %v6266, %v6262
    %v6655 = vpack.c.b16 %v6267, %v6263
    %v6656 = vpack.c.b16 %v6272, %v6268
    %v6657 = vpack.c.b16 %v6273, %v6269
    %v6658 = vpack.c.b16 %v6274, %v6270
    %v6659 = vpack.c.b16 %v6275, %v6271
    %v6660 = vpack.c.b16 %v6280, %v6276
    %v6661 = vpack.c.b16 %v6281, %v6277
    %v6662 = vpack.c.b16 %v6282, %v6278
    %v6663 = vpack.c.b16 %v6283, %v6279
    %v6664 = vpack.c.b16 %v6288, %v6284
    %v6665 = vpack.c.b16 %v6289, %v6285
    %v6666 = vpack.c.b16 %v6290, %v6286
    %v6667 = vpack.c.b16 %v6291, %v6287
    %v6668 = vpack.c.b16 %v6296, %v6292
    %v6669 = vpack.c.b16 %v6297, %v6293
    %v6670 = vpack.c.b16 %v6298, %v6294
    %v6671 = vpack.c.b16 %v6299, %v6295
    %v6672 = vpack.c.b16 %v6304, %v6300
    %v6673 = vpack.c.b16 %v6305, %v6301
    %v6674 = vpack.c.b16 %v6306, %v6302
    %v6675 = vpack.c.b16 %v6307, %v6303
    %v6676 = vpack.c.b16 %v6312, %v6308
    %v6677 = vpack.c.b16 %v6313, %v6309
    %v6678 = vpack.c.b16 %v6314, %v6310
    %v6679 = vpack.c.b16 %v6315, %v6311
    %v6680 = vpack.c.b16 %v6320, %v6316
    %v6681 = vpack.c.b16 %v6321, %v6317
    %v6682 = vpack.c.b16 %v6322, %v6318
    %v6683 = vpack.c.b16 %v6323, %v6319
    %v6684 = vpack.c.b16 %v6328, %v6324
    %v6685 = vpack.c.b16 %v6329, %v6325
    %v6686 = vpack.c.b16 %v6330, %v6326
    %v6687 = vpack.c.b16 %v6331, %v6327
    %v6688 = vpack.c.b16 %v6336, %v6332
    %v6689 = vpack.c.b16 %v6337, %v6333
    %v6690 = vpack.c.b16 %v6338, %v6334
    %v6691 = vpack.c.b16 %v6339, %v6335
    %v6692 = vpack.c.b16 %v6344, %v6340
    %v6693 = vpack.c.b16 %v6345, %v6341
    %v6694 = vpack.c.b16 %v6346, %v6342
    %v6695 = vpack.c.b16 %v6347, %v6343
    %v6696 = vpack.c.b16 %v6352, %v6348
    %v6697 = vpack.c.b16 %v6353, %v6349
    %v6698 = vpack.c.b16 %v6354, %v6350
    %v6699 = vpack.c.b16 %v6355, %v6351
    %v6700 = vpack.c.b16 %v6360, %v6356
    %v6701 = vpack.c.b16 %v6361, %v6357
    %v6702 = vpack.c.b16 %v6362, %v6358
    %v6703 = vpack.c.b16 %v6363, %v6359
    %v6704 = vpack.c.b16 %v6368, %v6364
    %v6705 = vpack.c.b16 %v6369, %v6365
    %v6706 = vpack.c.b16 %v6370, %v6366
    %v6707 = vpack.c.b16 %v6371, %v6367
    %v6708 = vpack.c.b16 %v6376, %v6372
    %v6709 = vpack.c.b16 %v6377, %v6373
    %v6710 = vpack.c.b16 %v6378, %v6374
    %v6711 = vpack.c.b16 %v6379, %v6375
    %v6712 = vpack.c.b16 %v6384, %v6380
    %v6713 = vpack.c.b16 %v6385, %v6381
    %v6714 = vpack.c.b16 %v6386, %v6382
    %v6715 = vpack.c.b16 %v6387, %v6383
    %v6716 = vpack.c.b16 %v6392, %v6388
    %v6717 = vpack.c.b16 %v6393, %v6389
    %v6718 = vpack.c.b16 %v6394, %v6390
    %v6719 = vpack.c.b16 %v6395, %v6391
    %v6720 = vpack.c.b16 %v6400, %v6396
    %v6721 = vpack.c.b16 %v6401, %v6397
    %v6722 = vpack.c.b16 %v6402, %v6398
    %v6723 = vpack.c.b16 %v6403, %v6399
    %v6724 = vpack.c.b16 %v6408, %v6404
    %v6725 = vpack.c.b16 %v6409, %v6405
    %v6726 = vpack.c.b16 %v6410, %v6406
    %v6727 = vpack.c.b16 %v6411, %v6407
    %v6728 = vpack.c.b16 %v6416, %v6412
    %v6729 = vpack.c.b16 %v6417, %v6413
    %v6730 = vpack.c.b16 %v6418, %v6414
    %v6731 = vpack.c.b16 %v6419, %v6415
    %v6732 = vpack.c.b16 %v6424, %v6420
    %v6733 = vpack.c.b16 %v6425, %v6421
    %v6734 = vpack.c.b16 %v6426, %v6422
    %v6735 = vpack.c.b16 %v6427, %v6423
    %v6736 = vpack.c.b16 %v6432, %v6428
    %v6737 = vpack.c.b16 %v6433, %v6429
    %v6738 = vpack.c.b16 %v6434, %v6430
    %v6739 = vpack.c.b16 %v6435, %v6431
    %v6740 = vpack.c.b16 %v6440, %v6436
    %v6741 = vpack.c.b16 %v6441, %v6437
    %v6742 = vpack.c.b16 %v6442, %v6438
    %v6743 = vpack.c.b16 %v6443, %v6439
    %v6744 = vpack.c.b16 %v6448, %v6444
    %v6745 = vpack.c.b16 %v6449, %v6445
    %v6746 = vpack.c.b16 %v6450, %v6446
    %v6747 = vpack.c.b16 %v6451, %v6447
    %v6748 = vpack.c.b16 %v6456, %v6452
    %v6749 = vpack.c.b16 %v6457, %v6453
    %v6750 = vpack.c.b16 %v6458, %v6454
    %v6751 = vpack.c.b16 %v6459, %v6455
    %v6752 = vpack.c.b16 %v6464, %v6460
    %v6753 = vpack.c.b16 %v6465, %v6461
    %v6754 = vpack.c.b16 %v6466, %v6462
    %v6755 = vpack.c.b16 %v6467, %v6463
    %v6756 = vpack.c.b16 %v6472, %v6468
    %v6757 = vpack.c.b16 %v6473, %v6469
    %v6758 = vpack.c.b16 %v6474, %v6470
    %v6759 = vpack.c.b16 %v6475, %v6471
    %v6760 = vpack.c.b16 %v6480, %v6476
    %v6761 = vpack.c.b16 %v6481, %v6477
    %v6762 = vpack.c.b16 %v6482, %v6478
    %v6763 = vpack.c.b16 %v6483, %v6479
    %v6764 = vpack.c.b16 %v6488, %v6484
    %v6765 = vpack.c.b16 %v6489, %v6485
    %v6766 = vpack.c.b16 %v6490, %v6486
    %v6767 = vpack.c.b16 %v6491, %v6487
    %v6768 = vpack.c.b16 %v6496, %v6492
    %v6769 = vpack.c.b16 %v6497, %v6493
    %v6770 = vpack.c.b16 %v6498, %v6494
    %v6771 = vpack.c.b16 %v6499, %v6495
    %v6772 = vpack.c.b16 %v6504, %v6500
    %v6773 = vpack.c.b16 %v6505, %v6501
    %v6774 = vpack.c.b16 %v6506, %v6502
    %v6775 = vpack.c.b16 %v6507, %v6503
    %v6776 = vpack.c.b16 %v6512, %v6508
    %v6777 = vpack.c.b16 %v6513, %v6509
    %v6778 = vpack.c.b16 %v6514, %v6510
    %v6779 = vpack.c.b16 %v6515, %v6511
    %v6780 = vpack.c.b16 %v6520, %v6516
    %v6781 = vpack.c.b16 %v6521, %v6517
    %v6782 = vpack.c.b16 %v6522, %v6518
    %v6783 = vpack.c.b16 %v6523, %v6519
    %v6784 = vpack.c.b16 %v6528, %v6524
    %v6785 = vpack.c.b16 %v6529, %v6525
    %v6786 = vpack.c.b16 %v6530, %v6526
    %v6787 = vpack.c.b16 %v6531, %v6527
    %7044 = vmatpush.bf16.msra.mxu0 %v6560
    %7045 = vmatpush.bf16.msra.mxu0 %v6556
    %7046 = vmatpush.bf16.msra.mxu0 %v6552
    %7047 = vmatpush.bf16.msra.mxu0 %v6548
    %7048 = vmatpush.bf16.msra.mxu0 %v6544
    %7049 = vmatpush.bf16.msra.mxu0 %v6540
    %7050 = vmatpush.bf16.msra.mxu0 %v6536
    %7051 = vmatpush.bf16.msra.mxu0 %v6532
    %7052 = vmatmul.bf16.gmra.mxu0 %v5490
    %v7053 = vpop.f32.mrf.mxu0
    %v7054 = vadd.f32 %v5756, %v7053
    %v7055 = vpop.f32.mrf.mxu0
    %7056 = vdwg.mxu0
    %7057 = vmatpush.bf16.msra.mxu0 %v6592
    %7058 = vmatpush.bf16.msra.mxu0 %v6588
    %7059 = vmatpush.bf16.msra.mxu0 %v6584
    %7060 = vmatpush.bf16.msra.mxu0 %v6580
    %7061 = vmatpush.bf16.msra.mxu0 %v6576
    %7062 = vmatpush.bf16.msra.mxu0 %v6572
    %7063 = vmatpush.bf16.msra.mxu0 %v6568
    %7064 = vmatpush.bf16.msra.mxu0 %v6564
    %7065 = vmatmul.bf16.gmra.mxu0 %v5491
    %v7066 = vpop.f32.mrf.mxu0
    %v7067 = vadd.f32 %v7054, %v7066
    %v7068 = vpop.f32.mrf.mxu0
    %7069 = vdwg.mxu0
    %7070 = vmatpush.bf16.msra.mxu0 %v6624
    %7071 = vmatpush.bf16.msra.mxu0 %v6620
    %7072 = vmatpush.bf16.msra.mxu0 %v6616
    %7073 = vmatpush.bf16.msra.mxu0 %v6612
    %7074 = vmatpush.bf16.msra.mxu0 %v6608
    %7075 = vmatpush.bf16.msra.mxu0 %v6604
    %7076 = vmatpush.bf16.msra.mxu0 %v6600
    %7077 = vmatpush.bf16.msra.mxu0 %v6596
    %7078 = vmatmul.bf16.gmra.mxu0 %v5492
    %v7079 = vpop.f32.mrf.mxu0
    %v7080 = vadd.f32 %v7067, %v7079
    %v7081 = vpop.f32.mrf.mxu0
    %7082 = vdwg.mxu0
    %7083 = vmatpush.bf16.msra.mxu0 %v6656
    %7084 = vmatpush.bf16.msra.mxu0 %v6652
    %7085 = vmatpush.bf16.msra.mxu0 %v6648
    %7086 = vmatpush.bf16.msra.mxu0 %v6644
    %7087 = vmatpush.bf16.msra.mxu0 %v6640
    %7088 = vmatpush.bf16.msra.mxu0 %v6636
    %7089 = vmatpush.bf16.msra.mxu0 %v6632
    %7090 = vmatpush.bf16.msra.mxu0 %v6628
    %7091 = vmatmul.bf16.gmra.mxu0 %v5493
    %v7092 = vpop.f32.mrf.mxu0
    %v7093 = vadd.f32 %v7080, %v7092
    %v7094 = vpop.f32.mrf.mxu0
    %7095 = vdwg.mxu0
    %7096 = vmatpush.bf16.msra.mxu0 %v6688
    %7097 = vmatpush.bf16.msra.mxu0 %v6684
    %7098 = vmatpush.bf16.msra.mxu0 %v6680
    %7099 = vmatpush.bf16.msra.mxu0 %v6676
    %7100 = vmatpush.bf16.msra.mxu0 %v6672
    %7101 = vmatpush.bf16.msra.mxu0 %v6668
    %7102 = vmatpush.bf16.msra.mxu0 %v6664
    %7103 = vmatpush.bf16.msra.mxu0 %v6660
    %7104 = vmatmul.bf16.gmra.mxu0 %v5494
    %v7105 = vpop.f32.mrf.mxu0
    %v7106 = vadd.f32 %v7093, %v7105
    %v7107 = vpop.f32.mrf.mxu0
    %7108 = vdwg.mxu0
    %7109 = vmatpush.bf16.msra.mxu0 %v6720
    %7110 = vmatpush.bf16.msra.mxu0 %v6716
    %7111 = vmatpush.bf16.msra.mxu0 %v6712
    %7112 = vmatpush.bf16.msra.mxu0 %v6708
    %7113 = vmatpush.bf16.msra.mxu0 %v6704
    %7114 = vmatpush.bf16.msra.mxu0 %v6700
    %7115 = vmatpush.bf16.msra.mxu0 %v6696
    %7116 = vmatpush.bf16.msra.mxu0 %v6692
    %7117 = vmatmul.bf16.gmra.mxu0 %v5495
    %v7118 = vpop.f32.mrf.mxu0
    %v7119 = vadd.f32 %v7106, %v7118
    %v7120 = vpop.f32.mrf.mxu0
    %7121 = vdwg.mxu0
    %7122 = vmatpush.bf16.msra.mxu0 %v6752
    %7123 = vmatpush.bf16.msra.mxu0 %v6748
    %7124 = vmatpush.bf16.msra.mxu0 %v6744
    %7125 = vmatpush.bf16.msra.mxu0 %v6740
    %7126 = vmatpush.bf16.msra.mxu0 %v6736
    %7127 = vmatpush.bf16.msra.mxu0 %v6732
    %7128 = vmatpush.bf16.msra.mxu0 %v6728
    %7129 = vmatpush.bf16.msra.mxu0 %v6724
    %7130 = vmatmul.bf16.gmra.mxu0 %v5496
    %v7131 = vpop.f32.mrf.mxu0
    %v7132 = vadd.f32 %v7119, %v7131
    %v7133 = vpop.f32.mrf.mxu0
    %7134 = vdwg.mxu0
    %7135 = vmatpush.bf16.msra.mxu0 %v6784
    %7136 = vmatpush.bf16.msra.mxu0 %v6780
    %7137 = vmatpush.bf16.msra.mxu0 %v6776
    %7138 = vmatpush.bf16.msra.mxu0 %v6772
    %7139 = vmatpush.bf16.msra.mxu0 %v6768
    %7140 = vmatpush.bf16.msra.mxu0 %v6764
    %7141 = vmatpush.bf16.msra.mxu0 %v6760
    %7142 = vmatpush.bf16.msra.mxu0 %v6756
    %7143 = vmatmul.bf16.gmra.mxu0 %v5497
    %v7144 = vpop.f32.mrf.mxu0
    %v7145 = vadd.f32 %v7132, %v7144
    %v7146 = vpop.f32.mrf.mxu0
    %7147 = vdwg.mxu0
    %7148 = vmatpush.bf16.msra.mxu0 %v6561
    %7149 = vmatpush.bf16.msra.mxu0 %v6557
    %7150 = vmatpush.bf16.msra.mxu0 %v6553
    %7151 = vmatpush.bf16.msra.mxu0 %v6549
    %7152 = vmatpush.bf16.msra.mxu0 %v6545
    %7153 = vmatpush.bf16.msra.mxu0 %v6541
    %7154 = vmatpush.bf16.msra.mxu0 %v6537
    %7155 = vmatpush.bf16.msra.mxu0 %v6533
    %7156 = vmatmul.bf16.gmra.mxu0 %v5490
    %v7157 = vpop.f32.mrf.mxu0
    %v7158 = vadd.f32 %v5757, %v7157
    %v7159 = vpop.f32.mrf.mxu0
    %7160 = vdwg.mxu0
    %7161 = vmatpush.bf16.msra.mxu0 %v6593
    %7162 = vmatpush.bf16.msra.mxu0 %v6589
    %7163 = vmatpush.bf16.msra.mxu0 %v6585
    %7164 = vmatpush.bf16.msra.mxu0 %v6581
    %7165 = vmatpush.bf16.msra.mxu0 %v6577
    %7166 = vmatpush.bf16.msra.mxu0 %v6573
    %7167 = vmatpush.bf16.msra.mxu0 %v6569
    %7168 = vmatpush.bf16.msra.mxu0 %v6565
    %7169 = vmatmul.bf16.gmra.mxu0 %v5491
    %v7170 = vpop.f32.mrf.mxu0
    %v7171 = vadd.f32 %v7158, %v7170
    %v7172 = vpop.f32.mrf.mxu0
    %7173 = vdwg.mxu0
    %7174 = vmatpush.bf16.msra.mxu0 %v6625
    %7175 = vmatpush.bf16.msra.mxu0 %v6621
    %7176 = vmatpush.bf16.msra.mxu0 %v6617
    %7177 = vmatpush.bf16.msra.mxu0 %v6613
    %7178 = vmatpush.bf16.msra.mxu0 %v6609
    %7179 = vmatpush.bf16.msra.mxu0 %v6605
    %7180 = vmatpush.bf16.msra.mxu0 %v6601
    %7181 = vmatpush.bf16.msra.mxu0 %v6597
    %7182 = vmatmul.bf16.gmra.mxu0 %v5492
    %v7183 = vpop.f32.mrf.mxu0
    %v7184 = vadd.f32 %v7171, %v7183
    %v7185 = vpop.f32.mrf.mxu0
    %7186 = vdwg.mxu0
    %7187 = vmatpush.bf16.msra.mxu0 %v6657
    %7188 = vmatpush.bf16.msra.mxu0 %v6653
    %7189 = vmatpush.bf16.msra.mxu0 %v6649
    %7190 = vmatpush.bf16.msra.mxu0 %v6645
    %7191 = vmatpush.bf16.msra.mxu0 %v6641
    %7192 = vmatpush.bf16.msra.mxu0 %v6637
    %7193 = vmatpush.bf16.msra.mxu0 %v6633
    %7194 = vmatpush.bf16.msra.mxu0 %v6629
    %7195 = vmatmul.bf16.gmra.mxu0 %v5493
    %v7196 = vpop.f32.mrf.mxu0
    %v7197 = vadd.f32 %v7184, %v7196
    %v7198 = vpop.f32.mrf.mxu0
    %7199 = vdwg.mxu0
    %7200 = vmatpush.bf16.msra.mxu0 %v6689
    %7201 = vmatpush.bf16.msra.mxu0 %v6685
    %7202 = vmatpush.bf16.msra.mxu0 %v6681
    %7203 = vmatpush.bf16.msra.mxu0 %v6677
    %7204 = vmatpush.bf16.msra.mxu0 %v6673
    %7205 = vmatpush.bf16.msra.mxu0 %v6669
    %7206 = vmatpush.bf16.msra.mxu0 %v6665
    %7207 = vmatpush.bf16.msra.mxu0 %v6661
    %7208 = vmatmul.bf16.gmra.mxu0 %v5494
    %v7209 = vpop.f32.mrf.mxu0
    %v7210 = vadd.f32 %v7197, %v7209
    %v7211 = vpop.f32.mrf.mxu0
    %7212 = vdwg.mxu0
    %7213 = vmatpush.bf16.msra.mxu0 %v6721
    %7214 = vmatpush.bf16.msra.mxu0 %v6717
    %7215 = vmatpush.bf16.msra.mxu0 %v6713
    %7216 = vmatpush.bf16.msra.mxu0 %v6709
    %7217 = vmatpush.bf16.msra.mxu0 %v6705
    %7218 = vmatpush.bf16.msra.mxu0 %v6701
    %7219 = vmatpush.bf16.msra.mxu0 %v6697
    %7220 = vmatpush.bf16.msra.mxu0 %v6693
    %7221 = vmatmul.bf16.gmra.mxu0 %v5495
    %v7222 = vpop.f32.mrf.mxu0
    %v7223 = vadd.f32 %v7210, %v7222
    %v7224 = vpop.f32.mrf.mxu0
    %7225 = vdwg.mxu0
    %7226 = vmatpush.bf16.msra.mxu0 %v6753
    %7227 = vmatpush.bf16.msra.mxu0 %v6749
    %7228 = vmatpush.bf16.msra.mxu0 %v6745
    %7229 = vmatpush.bf16.msra.mxu0 %v6741
    %7230 = vmatpush.bf16.msra.mxu0 %v6737
    %7231 = vmatpush.bf16.msra.mxu0 %v6733
    %7232 = vmatpush.bf16.msra.mxu0 %v6729
    %7233 = vmatpush.bf16.msra.mxu0 %v6725
    %7234 = vmatmul.bf16.gmra.mxu0 %v5496
    %v7235 = vpop.f32.mrf.mxu0
    %v7236 = vadd.f32 %v7223, %v7235
    %v7237 = vpop.f32.mrf.mxu0
    %7238 = vdwg.mxu0
    %7239 = vmatpush.bf16.msra.mxu0 %v6785
    %7240 = vmatpush.bf16.msra.mxu0 %v6781
    %7241 = vmatpush.bf16.msra.mxu0 %v6777
    %7242 = vmatpush.bf16.msra.mxu0 %v6773
    %7243 = vmatpush.bf16.msra.mxu0 %v6769
    %7244 = vmatpush.bf16.msra.mxu0 %v6765
    %7245 = vmatpush.bf16.msra.mxu0 %v6761
    %7246 = vmatpush.bf16.msra.mxu0 %v6757
    %7247 = vmatmul.bf16.gmra.mxu0 %v5497
    %v7248 = vpop.f32.mrf.mxu0
    %v7249 = vadd.f32 %v7236, %v7248
    %v7250 = vpop.f32.mrf.mxu0
    %7251 = vdwg.mxu0
    %7252 = vmatpush.bf16.msra.mxu0 %v6562
    %7253 = vmatpush.bf16.msra.mxu0 %v6558
    %7254 = vmatpush.bf16.msra.mxu0 %v6554
    %7255 = vmatpush.bf16.msra.mxu0 %v6550
    %7256 = vmatpush.bf16.msra.mxu0 %v6546
    %7257 = vmatpush.bf16.msra.mxu0 %v6542
    %7258 = vmatpush.bf16.msra.mxu0 %v6538
    %7259 = vmatpush.bf16.msra.mxu0 %v6534
    %7260 = vmatmul.bf16.gmra.mxu0 %v5490
    %v7261 = vpop.f32.mrf.mxu0
    %v7262 = vadd.f32 %v5758, %v7261
    %v7263 = vpop.f32.mrf.mxu0
    %7264 = vdwg.mxu0
    %7265 = vmatpush.bf16.msra.mxu0 %v6594
    %7266 = vmatpush.bf16.msra.mxu0 %v6590
    %7267 = vmatpush.bf16.msra.mxu0 %v6586
    %7268 = vmatpush.bf16.msra.mxu0 %v6582
    %7269 = vmatpush.bf16.msra.mxu0 %v6578
    %7270 = vmatpush.bf16.msra.mxu0 %v6574
    %7271 = vmatpush.bf16.msra.mxu0 %v6570
    %7272 = vmatpush.bf16.msra.mxu0 %v6566
    %7273 = vmatmul.bf16.gmra.mxu0 %v5491
    %v7274 = vpop.f32.mrf.mxu0
    %v7275 = vadd.f32 %v7262, %v7274
    %v7276 = vpop.f32.mrf.mxu0
    %7277 = vdwg.mxu0
    %7278 = vmatpush.bf16.msra.mxu0 %v6626
    %7279 = vmatpush.bf16.msra.mxu0 %v6622
    %7280 = vmatpush.bf16.msra.mxu0 %v6618
    %7281 = vmatpush.bf16.msra.mxu0 %v6614
    %7282 = vmatpush.bf16.msra.mxu0 %v6610
    %7283 = vmatpush.bf16.msra.mxu0 %v6606
    %7284 = vmatpush.bf16.msra.mxu0 %v6602
    %7285 = vmatpush.bf16.msra.mxu0 %v6598
    %7286 = vmatmul.bf16.gmra.mxu0 %v5492
    %v7287 = vpop.f32.mrf.mxu0
    %v7288 = vadd.f32 %v7275, %v7287
    %v7289 = vpop.f32.mrf.mxu0
    %7290 = vdwg.mxu0
    %7291 = vmatpush.bf16.msra.mxu0 %v6658
    %7292 = vmatpush.bf16.msra.mxu0 %v6654
    %7293 = vmatpush.bf16.msra.mxu0 %v6650
    %7294 = vmatpush.bf16.msra.mxu0 %v6646
    %7295 = vmatpush.bf16.msra.mxu0 %v6642
    %7296 = vmatpush.bf16.msra.mxu0 %v6638
    %7297 = vmatpush.bf16.msra.mxu0 %v6634
    %7298 = vmatpush.bf16.msra.mxu0 %v6630
    %7299 = vmatmul.bf16.gmra.mxu0 %v5493
    %v7300 = vpop.f32.mrf.mxu0
    %v7301 = vadd.f32 %v7288, %v7300
    %v7302 = vpop.f32.mrf.mxu0
    %7303 = vdwg.mxu0
    %7304 = vmatpush.bf16.msra.mxu0 %v6690
    %7305 = vmatpush.bf16.msra.mxu0 %v6686
    %7306 = vmatpush.bf16.msra.mxu0 %v6682
    %7307 = vmatpush.bf16.msra.mxu0 %v6678
    %7308 = vmatpush.bf16.msra.mxu0 %v6674
    %7309 = vmatpush.bf16.msra.mxu0 %v6670
    %7310 = vmatpush.bf16.msra.mxu0 %v6666
    %7311 = vmatpush.bf16.msra.mxu0 %v6662
    %7312 = vmatmul.bf16.gmra.mxu0 %v5494
    %v7313 = vpop.f32.mrf.mxu0
    %v7314 = vadd.f32 %v7301, %v7313
    %v7315 = vpop.f32.mrf.mxu0
    %7316 = vdwg.mxu0
    %7317 = vmatpush.bf16.msra.mxu0 %v6722
    %7318 = vmatpush.bf16.msra.mxu0 %v6718
    %7319 = vmatpush.bf16.msra.mxu0 %v6714
    %7320 = vmatpush.bf16.msra.mxu0 %v6710
    %7321 = vmatpush.bf16.msra.mxu0 %v6706
    %7322 = vmatpush.bf16.msra.mxu0 %v6702
    %7323 = vmatpush.bf16.msra.mxu0 %v6698
    %7324 = vmatpush.bf16.msra.mxu0 %v6694
    %7325 = vmatmul.bf16.gmra.mxu0 %v5495
    %v7326 = vpop.f32.mrf.mxu0
    %v7327 = vadd.f32 %v7314, %v7326
    %v7328 = vpop.f32.mrf.mxu0
    %7329 = vdwg.mxu0
    %7330 = vmatpush.bf16.msra.mxu0 %v6754
    %7331 = vmatpush.bf16.msra.mxu0 %v6750
    %7332 = vmatpush.bf16.msra.mxu0 %v6746
    %7333 = vmatpush.bf16.msra.mxu0 %v6742
    %7334 = vmatpush.bf16.msra.mxu0 %v6738
    %7335 = vmatpush.bf16.msra.mxu0 %v6734
    %7336 = vmatpush.bf16.msra.mxu0 %v6730
    %7337 = vmatpush.bf16.msra.mxu0 %v6726
    %7338 = vmatmul.bf16.gmra.mxu0 %v5496
    %v7339 = vpop.f32.mrf.mxu0
    %v7340 = vadd.f32 %v7327, %v7339
    %v7341 = vpop.f32.mrf.mxu0
    %7342 = vdwg.mxu0
    %7343 = vmatpush.bf16.msra.mxu0 %v6786
    %7344 = vmatpush.bf16.msra.mxu0 %v6782
    %7345 = vmatpush.bf16.msra.mxu0 %v6778
    %7346 = vmatpush.bf16.msra.mxu0 %v6774
    %7347 = vmatpush.bf16.msra.mxu0 %v6770
    %7348 = vmatpush.bf16.msra.mxu0 %v6766
    %7349 = vmatpush.bf16.msra.mxu0 %v6762
    %7350 = vmatpush.bf16.msra.mxu0 %v6758
    %7351 = vmatmul.bf16.gmra.mxu0 %v5497
    %v7352 = vpop.f32.mrf.mxu0
    %v7353 = vadd.f32 %v7340, %v7352
    %v7354 = vpop.f32.mrf.mxu0
    %7355 = vdwg.mxu0
    %7356 = vmatpush.bf16.msra.mxu0 %v6563
    %7357 = vmatpush.bf16.msra.mxu0 %v6559
    %7358 = vmatpush.bf16.msra.mxu0 %v6555
    %7359 = vmatpush.bf16.msra.mxu0 %v6551
    %7360 = vmatpush.bf16.msra.mxu0 %v6547
    %7361 = vmatpush.bf16.msra.mxu0 %v6543
    %7362 = vmatpush.bf16.msra.mxu0 %v6539
    %7363 = vmatpush.bf16.msra.mxu0 %v6535
    %7364 = vmatmul.bf16.gmra.mxu0 %v5490
    %v7365 = vpop.f32.mrf.mxu0
    %v7366 = vadd.f32 %v5759, %v7365
    %v7367 = vpop.f32.mrf.mxu0
    %7368 = vdwg.mxu0
    %7369 = vmatpush.bf16.msra.mxu0 %v6595
    %7370 = vmatpush.bf16.msra.mxu0 %v6591
    %7371 = vmatpush.bf16.msra.mxu0 %v6587
    %7372 = vmatpush.bf16.msra.mxu0 %v6583
    %7373 = vmatpush.bf16.msra.mxu0 %v6579
    %7374 = vmatpush.bf16.msra.mxu0 %v6575
    %7375 = vmatpush.bf16.msra.mxu0 %v6571
    %7376 = vmatpush.bf16.msra.mxu0 %v6567
    %7377 = vmatmul.bf16.gmra.mxu0 %v5491
    %v7378 = vpop.f32.mrf.mxu0
    %v7379 = vadd.f32 %v7366, %v7378
    %v7380 = vpop.f32.mrf.mxu0
    %7381 = vdwg.mxu0
    %7382 = vmatpush.bf16.msra.mxu0 %v6627
    %7383 = vmatpush.bf16.msra.mxu0 %v6623
    %7384 = vmatpush.bf16.msra.mxu0 %v6619
    %7385 = vmatpush.bf16.msra.mxu0 %v6615
    %7386 = vmatpush.bf16.msra.mxu0 %v6611
    %7387 = vmatpush.bf16.msra.mxu0 %v6607
    %7388 = vmatpush.bf16.msra.mxu0 %v6603
    %7389 = vmatpush.bf16.msra.mxu0 %v6599
    %7390 = vmatmul.bf16.gmra.mxu0 %v5492
    %v7391 = vpop.f32.mrf.mxu0
    %v7392 = vadd.f32 %v7379, %v7391
    %v7393 = vpop.f32.mrf.mxu0
    %7394 = vdwg.mxu0
    %7395 = vmatpush.bf16.msra.mxu0 %v6659
    %7396 = vmatpush.bf16.msra.mxu0 %v6655
    %7397 = vmatpush.bf16.msra.mxu0 %v6651
    %7398 = vmatpush.bf16.msra.mxu0 %v6647
    %7399 = vmatpush.bf16.msra.mxu0 %v6643
    %7400 = vmatpush.bf16.msra.mxu0 %v6639
    %7401 = vmatpush.bf16.msra.mxu0 %v6635
    %7402 = vmatpush.bf16.msra.mxu0 %v6631
    %7403 = vmatmul.bf16.gmra.mxu0 %v5493
    %v7404 = vpop.f32.mrf.mxu0
    %v7405 = vadd.f32 %v7392, %v7404
    %v7406 = vpop.f32.mrf.mxu0
    %7407 = vdwg.mxu0
    %7408 = vmatpush.bf16.msra.mxu0 %v6691
    %7409 = vmatpush.bf16.msra.mxu0 %v6687
    %7410 = vmatpush.bf16.msra.mxu0 %v6683
    %7411 = vmatpush.bf16.msra.mxu0 %v6679
    %7412 = vmatpush.bf16.msra.mxu0 %v6675
    %7413 = vmatpush.bf16.msra.mxu0 %v6671
    %7414 = vmatpush.bf16.msra.mxu0 %v6667
    %7415 = vmatpush.bf16.msra.mxu0 %v6663
    %7416 = vmatmul.bf16.gmra.mxu0 %v5494
    %v7417 = vpop.f32.mrf.mxu0
    %v7418 = vadd.f32 %v7405, %v7417
    %v7419 = vpop.f32.mrf.mxu0
    %7420 = vdwg.mxu0
    %7421 = vmatpush.bf16.msra.mxu0 %v6723
    %7422 = vmatpush.bf16.msra.mxu0 %v6719
    %7423 = vmatpush.bf16.msra.mxu0 %v6715
    %7424 = vmatpush.bf16.msra.mxu0 %v6711
    %7425 = vmatpush.bf16.msra.mxu0 %v6707
    %7426 = vmatpush.bf16.msra.mxu0 %v6703
    %7427 = vmatpush.bf16.msra.mxu0 %v6699
    %7428 = vmatpush.bf16.msra.mxu0 %v6695
    %7429 = vmatmul.bf16.gmra.mxu0 %v5495
    %v7430 = vpop.f32.mrf.mxu0
    %v7431 = vadd.f32 %v7418, %v7430
    %v7432 = vpop.f32.mrf.mxu0
    %7433 = vdwg.mxu0
    %7434 = vmatpush.bf16.msra.mxu0 %v6755
    %7435 = vmatpush.bf16.msra.mxu0 %v6751
    %7436 = vmatpush.bf16.msra.mxu0 %v6747
    %7437 = vmatpush.bf16.msra.mxu0 %v6743
    %7438 = vmatpush.bf16.msra.mxu0 %v6739
    %7439 = vmatpush.bf16.msra.mxu0 %v6735
    %7440 = vmatpush.bf16.msra.mxu0 %v6731
    %7441 = vmatpush.bf16.msra.mxu0 %v6727
    %7442 = vmatmul.bf16.gmra.mxu0 %v5496
    %v7443 = vpop.f32.mrf.mxu0
    %v7444 = vadd.f32 %v7431, %v7443
    %v7445 = vpop.f32.mrf.mxu0
    %7446 = vdwg.mxu0
    %7447 = vmatpush.bf16.msra.mxu0 %v6787
    %7448 = vmatpush.bf16.msra.mxu0 %v6783
    %7449 = vmatpush.bf16.msra.mxu0 %v6779
    %7450 = vmatpush.bf16.msra.mxu0 %v6775
    %7451 = vmatpush.bf16.msra.mxu0 %v6771
    %7452 = vmatpush.bf16.msra.mxu0 %v6767
    %7453 = vmatpush.bf16.msra.mxu0 %v6763
    %7454 = vmatpush.bf16.msra.mxu0 %v6759
    %7455 = vmatmul.bf16.gmra.mxu0 %v5497
    %v7456 = vpop.f32.mrf.mxu0
    %v7457 = vadd.f32 %v7444, %v7456
    %v7458 = vpop.f32.mrf.mxu0
    %7459 = vdwg.mxu0
    %v7460 = vmax.f32 %v7145, 0.0
    %v7461 = vmax.f32 %v7249, 0.0
    %v7462 = vmax.f32 %v7353, 0.0
    %v7463 = vmax.f32 %v7457, 0.0
    %v7464 = vpack.c.bf16 %v7460, %v7460
    %v7465 = vpack.c.bf16 %v7461, %v7461
    %v7466 = vpack.c.bf16 %v7462, %v7462
    %v7467 = vpack.c.bf16 %v7463, %v7463
    %v7468 = vld [vmem:[#allocation14] sm:$0xf]
    %v7469 = vld [vmem:[#allocation14 + $0x4] sm:$0xf]
    %v7470 = vld [vmem:[#allocation14 + $0x8] sm:$0xf]
    %v7471 = vld [vmem:[#allocation14 + $0xc] sm:$0xf]
    %v7472 = vld [vmem:[#allocation14 + $0x10] sm:$0xf]
    %v7473 = vld [vmem:[#allocation14 + $0x14] sm:$0xf]
    %v7474 = vld [vmem:[#allocation14 + $0x18] sm:$0xf]
    %v7475 = vld [vmem:[#allocation14 + $0x1c] sm:$0xf]
    %v7476 = vld [vmem:[#allocation14 + $0x20] sm:$0xf]
    %v7477 = vld [vmem:[#allocation14 + $0x24] sm:$0xf]
    %v7478 = vld [vmem:[#allocation14 + $0x28] sm:$0xf]
    %v7479 = vld [vmem:[#allocation14 + $0x2c] sm:$0xf]
    %v7480 = vld [vmem:[#allocation14 + $0x30] sm:$0xf]
    %v7481 = vld [vmem:[#allocation14 + $0x34] sm:$0xf]
    %v7482 = vld [vmem:[#allocation14 + $0x38] sm:$0xf]
    %v7483 = vld [vmem:[#allocation14 + $0x3c] sm:$0xf]
    %v7484 = vld [vmem:[#allocation14 + $0x40] sm:$0xf]
    %v7485 = vld [vmem:[#allocation14 + $0x44] sm:$0xf]
    %v7486 = vld [vmem:[#allocation14 + $0x48] sm:$0xf]
    %v7487 = vld [vmem:[#allocation14 + $0x4c] sm:$0xf]
    %v7488 = vld [vmem:[#allocation14 + $0x50] sm:$0xf]
    %v7489 = vld [vmem:[#allocation14 + $0x54] sm:$0xf]
    %v7490 = vld [vmem:[#allocation14 + $0x58] sm:$0xf]
    %v7491 = vld [vmem:[#allocation14 + $0x5c] sm:$0xf]
    %v7492 = vld [vmem:[#allocation14 + $0x60] sm:$0xf]
    %v7493 = vld [vmem:[#allocation14 + $0x64] sm:$0xf]
    %v7494 = vld [vmem:[#allocation14 + $0x68] sm:$0xf]
    %v7495 = vld [vmem:[#allocation14 + $0x6c] sm:$0xf]
    %v7496 = vld [vmem:[#allocation14 + $0x70] sm:$0xf]
    %v7497 = vld [vmem:[#allocation14 + $0x74] sm:$0xf]
    %v7498 = vld [vmem:[#allocation14 + $0x78] sm:$0xf]
    %v7499 = vld [vmem:[#allocation14 + $0x7c] sm:$0xf]
    %v7500 = vld [vmem:[#allocation14 + $0x80] sm:$0xf]
    %v7501 = vld [vmem:[#allocation14 + $0x84] sm:$0xf]
    %v7502 = vld [vmem:[#allocation14 + $0x88] sm:$0xf]
    %v7503 = vld [vmem:[#allocation14 + $0x8c] sm:$0xf]
    %v7504 = vld [vmem:[#allocation14 + $0x90] sm:$0xf]
    %v7505 = vld [vmem:[#allocation14 + $0x94] sm:$0xf]
    %v7506 = vld [vmem:[#allocation14 + $0x98] sm:$0xf]
    %v7507 = vld [vmem:[#allocation14 + $0x9c] sm:$0xf]
    %v7508 = vld [vmem:[#allocation14 + $0xa0] sm:$0xf]
    %v7509 = vld [vmem:[#allocation14 + $0xa4] sm:$0xf]
    %v7510 = vld [vmem:[#allocation14 + $0xa8] sm:$0xf]
    %v7511 = vld [vmem:[#allocation14 + $0xac] sm:$0xf]
    %v7512 = vld [vmem:[#allocation14 + $0xb0] sm:$0xf]
    %v7513 = vld [vmem:[#allocation14 + $0xb4] sm:$0xf]
    %v7514 = vld [vmem:[#allocation14 + $0xb8] sm:$0xf]
    %v7515 = vld [vmem:[#allocation14 + $0xbc] sm:$0xf]
    %v7516 = vld [vmem:[#allocation14 + $0xc0] sm:$0xf]
    %v7517 = vld [vmem:[#allocation14 + $0xc4] sm:$0xf]
    %v7518 = vld [vmem:[#allocation14 + $0xc8] sm:$0xf]
    %v7519 = vld [vmem:[#allocation14 + $0xcc] sm:$0xf]
    %v7520 = vld [vmem:[#allocation14 + $0xd0] sm:$0xf]
    %v7521 = vld [vmem:[#allocation14 + $0xd4] sm:$0xf]
    %v7522 = vld [vmem:[#allocation14 + $0xd8] sm:$0xf]
    %v7523 = vld [vmem:[#allocation14 + $0xdc] sm:$0xf]
    %v7524 = vld [vmem:[#allocation14 + $0xe0] sm:$0xf]
    %v7525 = vld [vmem:[#allocation14 + $0xe4] sm:$0xf]
    %v7526 = vld [vmem:[#allocation14 + $0xe8] sm:$0xf]
    %v7527 = vld [vmem:[#allocation14 + $0xec] sm:$0xf]
    %v7528 = vld [vmem:[#allocation14 + $0xf0] sm:$0xf]
    %v7529 = vld [vmem:[#allocation14 + $0xf4] sm:$0xf]
    %v7530 = vld [vmem:[#allocation14 + $0xf8] sm:$0xf]
    %v7531 = vld [vmem:[#allocation14 + $0xfc] sm:$0xf]
    %v7532 = vld [vmem:[%s16] sm:$0x1]
    %v7534 = vperm.slane %v7532, 0
    %v7600 = vunpack.c.l.b16 %v7468
    %v7601 = vunpack.c.l.b16 %v7469
    %v7602 = vunpack.c.l.b16 %v7470
    %v7603 = vunpack.c.l.b16 %v7471
    %v7604 = vunpack.c.l.b16 %v7472
    %v7605 = vunpack.c.l.b16 %v7473
    %v7606 = vunpack.c.l.b16 %v7474
    %v7607 = vunpack.c.l.b16 %v7475
    %v7608 = vunpack.c.l.b16 %v7476
    %v7609 = vunpack.c.l.b16 %v7477
    %v7610 = vunpack.c.l.b16 %v7478
    %v7611 = vunpack.c.l.b16 %v7479
    %v7612 = vunpack.c.l.b16 %v7480
    %v7613 = vunpack.c.l.b16 %v7481
    %v7614 = vunpack.c.l.b16 %v7482
    %v7615 = vunpack.c.l.b16 %v7483
    %v7616 = vunpack.c.l.b16 %v7484
    %v7617 = vunpack.c.l.b16 %v7485
    %v7618 = vunpack.c.l.b16 %v7486
    %v7619 = vunpack.c.l.b16 %v7487
    %v7620 = vunpack.c.l.b16 %v7488
    %v7621 = vunpack.c.l.b16 %v7489
    %v7622 = vunpack.c.l.b16 %v7490
    %v7623 = vunpack.c.l.b16 %v7491
    %v7624 = vunpack.c.l.b16 %v7492
    %v7625 = vunpack.c.l.b16 %v7493
    %v7626 = vunpack.c.l.b16 %v7494
    %v7627 = vunpack.c.l.b16 %v7495
    %v7628 = vunpack.c.l.b16 %v7496
    %v7629 = vunpack.c.l.b16 %v7497
    %v7630 = vunpack.c.l.b16 %v7498
    %v7631 = vunpack.c.l.b16 %v7499
    %v7632 = vunpack.c.l.b16 %v7500
    %v7633 = vunpack.c.l.b16 %v7501
    %v7634 = vunpack.c.l.b16 %v7502
    %v7635 = vunpack.c.l.b16 %v7503
    %v7636 = vunpack.c.l.b16 %v7504
    %v7637 = vunpack.c.l.b16 %v7505
    %v7638 = vunpack.c.l.b16 %v7506
    %v7639 = vunpack.c.l.b16 %v7507
    %v7640 = vunpack.c.l.b16 %v7508
    %v7641 = vunpack.c.l.b16 %v7509
    %v7642 = vunpack.c.l.b16 %v7510
    %v7643 = vunpack.c.l.b16 %v7511
    %v7644 = vunpack.c.l.b16 %v7512
    %v7645 = vunpack.c.l.b16 %v7513
    %v7646 = vunpack.c.l.b16 %v7514
    %v7647 = vunpack.c.l.b16 %v7515
    %v7648 = vunpack.c.l.b16 %v7516
    %v7649 = vunpack.c.l.b16 %v7517
    %v7650 = vunpack.c.l.b16 %v7518
    %v7651 = vunpack.c.l.b16 %v7519
    %v7652 = vunpack.c.l.b16 %v7520
    %v7653 = vunpack.c.l.b16 %v7521
    %v7654 = vunpack.c.l.b16 %v7522
    %v7655 = vunpack.c.l.b16 %v7523
    %v7656 = vunpack.c.l.b16 %v7524
    %v7657 = vunpack.c.l.b16 %v7525
    %v7658 = vunpack.c.l.b16 %v7526
    %v7659 = vunpack.c.l.b16 %v7527
    %v7660 = vunpack.c.l.b16 %v7528
    %v7661 = vunpack.c.l.b16 %v7529
    %v7662 = vunpack.c.l.b16 %v7530
    %v7663 = vunpack.c.l.b16 %v7531
    %v7664 = vpack.c.b16 %v7601, %v7600
    %v7665 = vpack.c.b16 %v7603, %v7602
    %v7666 = vpack.c.b16 %v7605, %v7604
    %v7667 = vpack.c.b16 %v7607, %v7606
    %v7668 = vpack.c.b16 %v7609, %v7608
    %v7669 = vpack.c.b16 %v7611, %v7610
    %v7670 = vpack.c.b16 %v7613, %v7612
    %v7671 = vpack.c.b16 %v7615, %v7614
    %v7672 = vpack.c.b16 %v7617, %v7616
    %v7673 = vpack.c.b16 %v7619, %v7618
    %v7674 = vpack.c.b16 %v7621, %v7620
    %v7675 = vpack.c.b16 %v7623, %v7622
    %v7676 = vpack.c.b16 %v7625, %v7624
    %v7677 = vpack.c.b16 %v7627, %v7626
    %v7678 = vpack.c.b16 %v7629, %v7628
    %v7679 = vpack.c.b16 %v7631, %v7630
    %v7680 = vpack.c.b16 %v7633, %v7632
    %v7681 = vpack.c.b16 %v7635, %v7634
    %v7682 = vpack.c.b16 %v7637, %v7636
    %v7683 = vpack.c.b16 %v7639, %v7638
    %v7684 = vpack.c.b16 %v7641, %v7640
    %v7685 = vpack.c.b16 %v7643, %v7642
    %v7686 = vpack.c.b16 %v7645, %v7644
    %v7687 = vpack.c.b16 %v7647, %v7646
    %v7688 = vpack.c.b16 %v7649, %v7648
    %v7689 = vpack.c.b16 %v7651, %v7650
    %v7690 = vpack.c.b16 %v7653, %v7652
    %v7691 = vpack.c.b16 %v7655, %v7654
    %v7692 = vpack.c.b16 %v7657, %v7656
    %v7693 = vpack.c.b16 %v7659, %v7658
    %v7694 = vpack.c.b16 %v7661, %v7660
    %v7695 = vpack.c.b16 %v7663, %v7662
    %7728 = vmatpush.bf16.msra.mxu0 %v7671
    %7729 = vmatpush.bf16.msra.mxu0 %v7670
    %7730 = vmatpush.bf16.msra.mxu0 %v7669
    %7731 = vmatpush.bf16.msra.mxu0 %v7668
    %7732 = vmatpush.bf16.msra.mxu0 %v7667
    %7733 = vmatpush.bf16.msra.mxu0 %v7666
    %7734 = vmatpush.bf16.msra.mxu0 %v7665
    %7735 = vmatpush.bf16.msra.mxu0 %v7664
    %7736 = vmatmul.bf16.gmra.mxu0 %v7464
    %v7737 = vpop.f32.mrf.mxu0
    %v7738 = vadd.f32 %v7534, %v7737
    %v7739 = vpop.f32.mrf.mxu0
    %7740 = vdwg.mxu0
    %7741 = vmatpush.bf16.msra.mxu0 %v7679
    %7742 = vmatpush.bf16.msra.mxu0 %v7678
    %7743 = vmatpush.bf16.msra.mxu0 %v7677
    %7744 = vmatpush.bf16.msra.mxu0 %v7676
    %7745 = vmatpush.bf16.msra.mxu0 %v7675
    %7746 = vmatpush.bf16.msra.mxu0 %v7674
    %7747 = vmatpush.bf16.msra.mxu0 %v7673
    %7748 = vmatpush.bf16.msra.mxu0 %v7672
    %7749 = vmatmul.bf16.gmra.mxu0 %v7465
    %v7750 = vpop.f32.mrf.mxu0
    %v7751 = vadd.f32 %v7738, %v7750
    %v7752 = vpop.f32.mrf.mxu0
    %7753 = vdwg.mxu0
    %7754 = vmatpush.bf16.msra.mxu0 %v7687
    %7755 = vmatpush.bf16.msra.mxu0 %v7686
    %7756 = vmatpush.bf16.msra.mxu0 %v7685
    %7757 = vmatpush.bf16.msra.mxu0 %v7684
    %7758 = vmatpush.bf16.msra.mxu0 %v7683
    %7759 = vmatpush.bf16.msra.mxu0 %v7682
    %7760 = vmatpush.bf16.msra.mxu0 %v7681
    %7761 = vmatpush.bf16.msra.mxu0 %v7680
    %7762 = vmatmul.bf16.gmra.mxu0 %v7466
    %v7763 = vpop.f32.mrf.mxu0
    %v7764 = vadd.f32 %v7751, %v7763
    %v7765 = vpop.f32.mrf.mxu0
    %7766 = vdwg.mxu0
    %7767 = vmatpush.bf16.msra.mxu0 %v7695
    %7768 = vmatpush.bf16.msra.mxu0 %v7694
    %7769 = vmatpush.bf16.msra.mxu0 %v7693
    %7770 = vmatpush.bf16.msra.mxu0 %v7692
    %7771 = vmatpush.bf16.msra.mxu0 %v7691
    %7772 = vmatpush.bf16.msra.mxu0 %v7690
    %7773 = vmatpush.bf16.msra.mxu0 %v7689
    %7774 = vmatpush.bf16.msra.mxu0 %v7688
    %7775 = vmatmul.bf16.gmra.mxu0 %v7467
    %v7776 = vpop.f32.mrf.mxu0
    %v7777 = vadd.f32 %v7764, %v7776
    %v7778 = vpop.f32.mrf.mxu0
    %7779 = vdwg.mxu0
    %7780 = vst [vmem:[#allocation16] sm:$0x3] %v7777
    // Predicated region
    $region102: #{tpu_custom_call.1} parent=1 // pred_check
      _
    $region103: #{tpu_custom_call.1} parent=1 // pred_check_branch
      %7782 = sbr.rel (0) target = $region105
    $region104: #{tpu_custom_call.1} parent=1 // pred_region
      %7784 = vsyncadd [#allocation4], 0
      %s7786 = sshll.u32 [#allocation16], 4
      %s7787 = int_to_ptr.vmem [resolvable:$true] %s7786
      %s7788 = sshll.u32 %s17, 4
      %s7789 = int_to_ptr.hbm [resolvable:$true] %s7788
      %7791 = dma.vmem_to_hbm [thread:$0]  %s7787, 32, %s7789, [#allocation4]
    $region105: #{tpu_custom_call.1} parent=1 // pred_fallthru
      _
    // Predicated region
    $region106: #{tpu_custom_call.1} parent=1 // pred_check
      _
    $region107: #{tpu_custom_call.1} parent=1 // pred_check_branch
      %7793 = sbr.rel (0) target = $region109
    $region108: #{tpu_custom_call.1} parent=1 // pred_region
      %7795 = dma.done [#allocation4], 32
    $region109: #{tpu_custom_call.1} parent=1 // pred_fallthru
      _
    %7796 = vsyncpa [#allocation3], 1
    %7797 = vsyncpa [#allocation6], 1
    %7798 = vsyncpa [#allocation9], 1
    %7799 = vsyncpa [#allocation12], 1
    %7800 = vsyncpa [#allocation15], 1
    %7801 = vsyncpa [#allocation4], 1

</llo_original>
